<compile_context>
chip_gen: v6e
topology: v6e:2x2x1
jax: 0.10.0
libtpu: 0.0.40
codegen_flags: <defaults>
</compile_context>

<pallas_src>
import functools
import numpy as np
import jax
import jax.numpy as jnp
from jax.experimental import pallas as pl
from jax.experimental.pallas import tpu as pltpu

EPS = 1e-5


def _fold_bn(w, stats):
    """Fold inference-mode BatchNorm2d into a conv weight (OIHW) + bias."""
    gamma, beta, mean, var = stats
    scale = gamma / jnp.sqrt(var + EPS)
    return w * scale[:, None, None, None], beta - mean * scale


def prepare_strip_pooling_params(p, compute_dtype=jnp.bfloat16):
    """Fold BN into the conv weights and lay them out as per-tap GEMM matrices.

    Hoisted out of the per-call hot path: run once, reuse for every forward call.
    Weights go to `compute_dtype` (bf16 by default -> 2x MXU throughput on v6e/v7x);
    biases stay in f32.
    """
    f32 = jnp.float32
    w1f, b1 = _fold_bn(p["w1"], p["bn1"])   # (Ci, C , 1, 1)
    w2f, b2 = _fold_bn(p["w2"], p["bn2"])   # (Ci, Ci, 1, 3)
    w3f, b3 = _fold_bn(p["w3"], p["bn3"])   # (Ci, Ci, 3, 1)
    w4f, b4 = _fold_bn(p["w4"], p["bn4"])   # (Ci, Ci, 3, 3)
    w5f, b5 = _fold_bn(p["w5"], p["bn5"])   # (C , Ci, 1, 1)
    cd = compute_dtype
    return {
        "w1": w1f[:, :, 0, 0].T.astype(cd),                                   # (C, Ci)
        "w2": jnp.stack([w2f[:, :, 0, k].T for k in range(3)]).astype(cd),    # (3, Ci, Ci)
        "w3": jnp.stack([w3f[:, :, k, 0].T for k in range(3)]).astype(cd),    # (3, Ci, Ci)
        "w4": jnp.stack([w4f[:, :, kh, kw].T
                         for kh in range(3) for kw in range(3)]).astype(cd),  # (9, Ci, Ci)
        "w5": w5f[:, :, 0, 0].T.astype(cd),                                   # (Ci, C)
        "b1": b1[None, :].astype(f32), "b2": b2[None, :].astype(f32),
        "b3": b3[None, :].astype(f32), "b4": b4[None, :].astype(f32),
        "b5": b5[None, :].astype(f32),
    }


def _pick_tb(n, hw):
    """Samples per grid step: enough rows (TB*H*W) to fill the MXU M dimension,
    while keeping >= 2 grid steps when possible so both v7x TensorCores get work."""
    best = 1
    for cand in range(1, n + 1):
        if n % cand:
            continue
        if cand * hw > max(512, hw):            # don't blow up the VMEM block needlessly
            continue
        if n > 1 and n // cand < 2:             # keep the grid >= 2 steps (megacore)
            continue
        best = cand
    return best


def strip_pooling_pallas_nhwc(x_nhwc, prep, *, tb=None):
    """StripPooling forward on NHWC input using prepared (BN-folded) params."""
    N, H, W, C = x_nhwc.shape
    Ci = prep["w1"].shape[1]
    HW = H * W
    tb = _pick_tb(N, HW) if tb is None else tb
    assert N % tb == 0, "batch must be divisible by tb"
    R = tb * HW
    f32 = jnp.float32
    cdt = prep["w1"].dtype                       # MXU compute dtype (bf16 by default)

    # Static per-row spatial coordinates for the zero-padding masks applied after the
    # rolls (tiny i32 constants, stay resident in VMEM).
    wi_p1 = jnp.asarray((np.arange(tb * W, dtype=np.int32) % W).reshape(-1, 1))
    hi_p2 = jnp.asarray((np.arange(tb * H, dtype=np.int32) % H).reshape(-1, 1))
    pos = np.arange(R, dtype=np.int32) % HW
    hi_s = jnp.asarray((pos // W).reshape(-1, 1))
    wi_s = jnp.asarray((pos % W).reshape(-1, 1))

    dot = functools.partial(jnp.dot, preferred_element_type=jnp.float32)

    def kernel(x_ref, w1_ref, b1_ref, w2_ref, b2_ref, w3_ref, b3_ref,
               w4_ref, b4_ref, w5_ref, b5_ref,
               wi1_ref, hi2_ref, his_ref, wis_ref, o_ref):

        def tap(a, d, valid):
            """out[r] = a[r + d] (row shift via XLU sublane roll), zeroed outside
            `valid` (zero padding / cross-sample boundary), cast to the MXU dtype."""
            y = a if d == 0 else pltpu.roll(a, (-d) % a.shape[0], 0)
            if valid is not None:
                y = jnp.where(valid, y, 0.0)
            return y.astype(cdt)

        x = x_ref[...].reshape(R, C)                                          # f32
        # conv1 (1x1) + BN + ReLU   -- plain (C, Ci) GEMM on (R, C)
        x1 = jnp.maximum(dot(x.astype(cdt), w1_ref[...]) + b1_ref[...], 0.0)  # (R, Ci)

        x1v = x1.reshape(tb, H, W, Ci)
        p1 = jnp.mean(x1v, axis=1).reshape(tb * W, Ci)   # strip pool over H
        p2 = jnp.mean(x1v, axis=2).reshape(tb * H, Ci)   # strip pool over W

        # conv2: (1x3) along W on the H-pooled strip, + BN
        wi1 = wi1_ref[...]
        y2 = (dot(tap(p1, -1, wi1 >= 1), w2_ref[0])
              + dot(p1.astype(cdt), w2_ref[1])
              + dot(tap(p1, 1, wi1 <= W - 2), w2_ref[2])
              + b2_ref[...])                             # (tb*W, Ci)

        # conv3: (3x1) along H on the W-pooled strip, + BN
        hi2 = hi2_ref[...]
        y3 = (dot(tap(p2, -1, hi2 >= 1), w3_ref[0])
              + dot(p2.astype(cdt), w3_ref[1])
              + dot(tap(p2, 1, hi2 <= H - 2), w3_ref[2])
              + b3_ref[...])                             # (tb*H, Ci)

        # bilinear (align_corners) upsample from a size-1 axis == broadcast; add; ReLU
        s = jnp.maximum(y2.reshape(tb, 1, W, Ci) + y3.reshape(tb, H, 1, Ci),
                        0.0).reshape(R, Ci)

        # conv4 (3x3) + BN + ReLU: 9 per-tap (Ci, Ci) GEMMs on rolled+masked rows
        hh, ww = his_ref[...], wis_ref[...]
        acc = None
        for kh in range(3):
            for kw in range(3):
                dh, dw = kh - 1, kw - 1
                valid = None
                if dh == -1:
                    valid = hh >= 1
                elif dh == 1:
                    valid = hh <= H - 2
                if dw == -1:
                    vw = ww >= 1
                    valid = vw if valid is None else jnp.logical_and(valid, vw)
                elif dw == 1:
                    vw = ww <= W - 2
                    valid = vw if valid is None else jnp.logical_and(valid, vw)
                t = dot(tap(s, dh * W + dw, valid), w4_ref[kh * 3 + kw])
                acc = t if acc is None else acc + t
        x4 = jnp.maximum(acc + b4_ref[...], 0.0)                              # (R, Ci)

        # conv5 (1x1) + BN, residual add, final ReLU
        out5 = dot(x4.astype(cdt), w5_ref[...]) + b5_ref[...]                 # (R, C)
        o_ref[...] = jnp.maximum(x + out5, 0.0).reshape(tb, HW, C)

    def const_spec(shape):
        zeros = (0,) * len(shape)
        return pl.BlockSpec(shape, lambda n, z=zeros: z)

    x3d = x_nhwc.reshape(N, HW, C).astype(f32)           # free reshape (merges H, W)

    out = pl.pallas_call(
        kernel,
        out_shape=jax.ShapeDtypeStruct((N, HW, C), f32),
        grid=(N // tb,),
        in_specs=[
            pl.BlockSpec((tb, HW, C), lambda n: (n, 0, 0)),   # x (TB samples / step)
            const_spec((C, Ci)),        # w1
            const_spec((1, Ci)),        # b1
            const_spec((3, Ci, Ci)),    # w2 taps
            const_spec((1, Ci)),        # b2
            const_spec((3, Ci, Ci)),    # w3 taps
            const_spec((1, Ci)),        # b3
            const_spec((9, Ci, Ci)),    # w4 taps
            const_spec((1, Ci)),        # b4
            const_spec((Ci, C)),        # w5
            const_spec((1, C)),         # b5
            const_spec((tb * W, 1)),    # w coords (conv2 masks)
            const_spec((tb * H, 1)),    # h coords (conv3 masks)
            const_spec((R, 1)),         # h coords (conv4 masks)
            const_spec((R, 1)),         # w coords (conv4 masks)
        ],
        out_specs=pl.BlockSpec((tb, HW, C), lambda n: (n, 0, 0)),
        compiler_params=pltpu.CompilerParams(
            dimension_semantics=("parallel",),
            vmem_limit_bytes=32 * 1024 * 1024),
    )(x3d, prep["w1"], prep["b1"], prep["w2"], prep["b2"], prep["w3"], prep["b3"],
      prep["w4"], prep["b4"], prep["w5"], prep["b5"], wi_p1, hi_p2, hi_s, wi_s)

    return out.reshape(N, H, W, C)


def strip_pooling_pallas(x_nchw, params, *, tb=None):
    """NCHW adapter matching the PyTorch module interface.  Prefer the NHWC entry point
    plus a one-time prepare_strip_pooling_params(): the two transposes here are full HBM
    round trips outside the kernel."""
    prep = prepare_strip_pooling_params(params)
    out = strip_pooling_pallas_nhwc(jnp.transpose(x_nchw, (0, 2, 3, 1)), prep, tb=tb)
    return jnp.transpose(out, (0, 3, 1, 2))


# ---------- pure-JAX reference (NCHW, same as the PyTorch module in eval mode) ----------
def strip_pooling_ref(x, p):
    hp = jax.lax.Precision.HIGHEST

    def conv(t, w, pad):
        return jax.lax.conv_general_dilated(
            t, w, (1, 1), pad, dimension_numbers=("NCHW", "OIHW", "NCHW"), precision=hp)

    def bn(t, stats):
        g, b, m, v = stats
        sc = (g / jnp.sqrt(v + EPS))[None, :, None, None]
        return (t - m[None, :, None, None]) * sc + b[None, :, None, None]

    relu = lambda t: jnp.maximum(t, 0.0)
    x1 = relu(bn(conv(x, p["w1"], [(0, 0), (0, 0)]), p["bn1"]))
    x2 = bn(conv(jnp.mean(x1, axis=2, keepdims=True), p["w2"], [(0, 0), (1, 1)]), p["bn2"])
    x2 = jnp.broadcast_to(x2, x1.shape)   # bilinear, align_corners=True, from H=1
    x3 = bn(conv(jnp.mean(x1, axis=3, keepdims=True), p["w3"], [(1, 1), (0, 0)]), p["bn3"])
    x3 = jnp.broadcast_to(x3, x1.shape)   # bilinear, align_corners=True, from W=1
    x4 = relu(bn(conv(relu(x2 + x3), p["w4"], [(1, 1), (1, 1)]), p["bn4"]))
    out = bn(conv(x4, p["w5"], [(0, 0), (0, 0)]), p["bn5"])
    return relu(x + out)


if __name__ == "__main__":
    N, C, H, W = 2, 16, 16, 16
    Ci = C // 4
    key = jax.random.PRNGKey(0)
    ks = jax.random.split(key, 11)

    def conv_w(k, co, ci, kh, kw):
        return jax.random.normal(k, (co, ci, kh, kw), jnp.float32) * 0.1

    def bn_p(k, c):
        k1, k2, k3, k4 = jax.random.split(k, 4)
        return (jax.random.uniform(k1, (c,), jnp.float32, minval=0.5, maxval=1.5),  # gamma
                jax.random.normal(k2, (c,), jnp.float32) * 0.1,                      # beta
                jax.random.normal(k3, (c,), jnp.float32) * 0.1,                      # running mean
                jax.random.uniform(k4, (c,), jnp.float32, minval=0.5, maxval=1.5))   # running var

    params = {
        "w1": conv_w(ks[0], Ci, C, 1, 1), "bn1": bn_p(ks[1], Ci),
        "w2": conv_w(ks[2], Ci, Ci, 1, 3), "bn2": bn_p(ks[3], Ci),
        "w3": conv_w(ks[4], Ci, Ci, 3, 1), "bn3": bn_p(ks[5], Ci),
        "w4": conv_w(ks[6], Ci, Ci, 3, 3), "bn4": bn_p(ks[7], Ci),
        "w5": conv_w(ks[8], C, Ci, 1, 1), "bn5": bn_p(ks[9], C),
    }
    x_nchw = jax.random.normal(ks[10], (N, C, H, W), jnp.float32)

    prep = prepare_strip_pooling_params(params)            # hoisted: runs once
    x_nhwc = jnp.transpose(x_nchw, (0, 2, 3, 1))           # test-harness layout adaptation only
    out_nhwc = jax.block_until_ready(strip_pooling_pallas_nhwc(x_nhwc, prep))

    ref_nhwc = jnp.transpose(
        jax.block_until_ready(strip_pooling_ref(x_nchw, params)), (0, 2, 3, 1))
    np.testing.assert_allclose(np.asarray(out_nhwc), np.asarray(ref_nhwc),
                               rtol=2e-2, atol=2e-2)
    print("KERNEL_OK")
</pallas_src>

<mosaic_0001>
module attributes {stable_mosaic.version = 11 : i64} {
  func.func @kernel(%arg0: i32, %arg1: memref<1x256x16xf32, #tpu.memory_space<vmem>>, %arg2: memref<16x4xbf16, #tpu.memory_space<vmem>>, %arg3: memref<1x4xf32, #tpu.memory_space<vmem>>, %arg4: memref<3x4x4xbf16, #tpu.memory_space<vmem>>, %arg5: memref<1x4xf32, #tpu.memory_space<vmem>>, %arg6: memref<3x4x4xbf16, #tpu.memory_space<vmem>>, %arg7: memref<1x4xf32, #tpu.memory_space<vmem>>, %arg8: memref<9x4x4xbf16, #tpu.memory_space<vmem>>, %arg9: memref<1x4xf32, #tpu.memory_space<vmem>>, %arg10: memref<4x16xbf16, #tpu.memory_space<vmem>>, %arg11: memref<1x16xf32, #tpu.memory_space<vmem>>, %arg12: memref<16x1xi32, #tpu.memory_space<vmem>>, %arg13: memref<16x1xi32, #tpu.memory_space<vmem>>, %arg14: memref<256x1xi32, #tpu.memory_space<vmem>>, %arg15: memref<256x1xi32, #tpu.memory_space<vmem>>, %arg16: memref<1x256x16xf32, #tpu.memory_space<vmem>>) attributes {dimension_semantics = [#tpu.dimension_semantics<parallel>], iteration_bounds = array<i64: 2>, scalar_prefetch = 0 : i64, scratch_operands = 0 : i64, tpu.core_type = #tpu.core_type<tc>, window_params = [{transform_indices = @transform_0, window_bounds = array<i64: 1, 256, 16>}, {pipeline_mode = #tpu.pipeline_mode<synchronous>, transform_indices = @transform_1, window_bounds = array<i64: 16, 4>}, {pipeline_mode = #tpu.pipeline_mode<synchronous>, transform_indices = @transform_2, window_bounds = array<i64: 1, 4>}, {pipeline_mode = #tpu.pipeline_mode<synchronous>, transform_indices = @transform_3, window_bounds = array<i64: 3, 4, 4>}, {pipeline_mode = #tpu.pipeline_mode<synchronous>, transform_indices = @transform_4, window_bounds = array<i64: 1, 4>}, {pipeline_mode = #tpu.pipeline_mode<synchronous>, transform_indices = @transform_5, window_bounds = array<i64: 3, 4, 4>}, {pipeline_mode = #tpu.pipeline_mode<synchronous>, transform_indices = @transform_6, window_bounds = array<i64: 1, 4>}, {pipeline_mode = #tpu.pipeline_mode<synchronous>, transform_indices = @transform_7, window_bounds = array<i64: 9, 4, 4>}, {pipeline_mode = #tpu.pipeline_mode<synchronous>, transform_indices = @transform_8, window_bounds = array<i64: 1, 4>}, {pipeline_mode = #tpu.pipeline_mode<synchronous>, transform_indices = @transform_9, window_bounds = array<i64: 4, 16>}, {pipeline_mode = #tpu.pipeline_mode<synchronous>, transform_indices = @transform_10, window_bounds = array<i64: 1, 16>}, {pipeline_mode = #tpu.pipeline_mode<synchronous>, transform_indices = @transform_11, window_bounds = array<i64: 16, 1>}, {pipeline_mode = #tpu.pipeline_mode<synchronous>, transform_indices = @transform_12, window_bounds = array<i64: 16, 1>}, {pipeline_mode = #tpu.pipeline_mode<synchronous>, transform_indices = @transform_13, window_bounds = array<i64: 256, 1>}, {pipeline_mode = #tpu.pipeline_mode<synchronous>, transform_indices = @transform_14, window_bounds = array<i64: 256, 1>}, {transform_indices = @transform_15, window_bounds = array<i64: 1, 256, 16>}]} {
    %c0 = arith.constant 0 : index
    %c0_0 = arith.constant 0 : index
    %c0_1 = arith.constant 0 : index
    %0 = vector.load %arg1[%c0, %c0_0, %c0_1] : memref<1x256x16xf32, #tpu.memory_space<vmem>>, vector<1x256x16xf32>
    %1 = vector.shape_cast %0 : vector<1x256x16xf32> to vector<256x16xf32>
    %2 = arith.truncf %1 : vector<256x16xf32> to vector<256x16xbf16>
    %c0_2 = arith.constant 0 : index
    %c0_3 = arith.constant 0 : index
    %3 = vector.load %arg2[%c0_2, %c0_3] : memref<16x4xbf16, #tpu.memory_space<vmem>>, vector<16x4xbf16>
    %cst = arith.constant dense<0.000000e+00> : vector<256x4xf32>
    %4 = tpu.matmul %2, %3, %cst {dimension_numbers = #tpu.dot_dimension_numbers<[1], [0], [0], [1], [0, 0, 1, 1], [], []>} : vector<256x16xbf16>, vector<16x4xbf16>, vector<256x4xf32> -> vector<256x4xf32>
    %c0_4 = arith.constant 0 : index
    %c0_5 = arith.constant 0 : index
    %5 = vector.load %arg3[%c0_4, %c0_5] : memref<1x4xf32, #tpu.memory_space<vmem>>, vector<1x4xf32>
    %6 = vector.broadcast %5 : vector<1x4xf32> to vector<256x4xf32>
    %7 = arith.addf %4, %6 : vector<256x4xf32>
    %cst_6 = arith.constant 0.000000e+00 : f32
    %8 = vector.broadcast %cst_6 : f32 to vector<256x4xf32>
    %9 = arith.maximumf %7, %8 : vector<256x4xf32>
    %10 = vector.shape_cast %9 : vector<256x4xf32> to vector<1x16x16x4xf32>
    %cst_7 = arith.constant dense<0.000000e+00> : vector<1x16x4xf32>
    %11 = vector.multi_reduction <add>, %10, %cst_7 [1] : vector<1x16x16x4xf32> to vector<1x16x4xf32>
    %cst_8 = arith.constant 1.600000e+01 : f32
    %12 = vector.broadcast %cst_8 : f32 to vector<1x16x4xf32>
    %13 = arith.divf %11, %12 : vector<1x16x4xf32>
    %14 = vector.shape_cast %13 : vector<1x16x4xf32> to vector<16x4xf32>
    %cst_9 = arith.constant dense<0.000000e+00> : vector<1x16x4xf32>
    %15 = vector.multi_reduction <add>, %10, %cst_9 [2] : vector<1x16x16x4xf32> to vector<1x16x4xf32>
    %cst_10 = arith.constant 1.600000e+01 : f32
    %16 = vector.broadcast %cst_10 : f32 to vector<1x16x4xf32>
    %17 = arith.divf %15, %16 : vector<1x16x4xf32>
    %18 = vector.shape_cast %17 : vector<1x16x4xf32> to vector<16x4xf32>
    %c0_11 = arith.constant 0 : index
    %c0_12 = arith.constant 0 : index
    %19 = vector.load %arg12[%c0_11, %c0_12] : memref<16x1xi32, #tpu.memory_space<vmem>>, vector<16x1xi32>
    %c1_i32 = arith.constant 1 : i32
    %20 = vector.broadcast %c1_i32 : i32 to vector<16x1xi32>
    %21 = arith.cmpi sge, %19, %20 : vector<16x1xi32>
    %c1_i32_13 = arith.constant 1 : i32
    %22 = tpu.dynamic_rotate %14 by %c1_i32_13 dim 0 : vector<16x4xf32>, i32 -> vector<16x4xf32>
    %cst_14 = arith.constant 0.000000e+00 : f32
    %23 = vector.shape_cast %21 : vector<16x1xi1> to vector<16x1xi1>
    %24 = vector.broadcast %23 : vector<16x1xi1> to vector<16x4xi1>
    %25 = vector.broadcast %cst_14 : f32 to vector<16x4xf32>
    %26 = arith.select %24, %22, %25 : vector<16x4xi1>, vector<16x4xf32>
    %27 = arith.truncf %26 : vector<16x4xf32> to vector<16x4xbf16>
    %c0_15 = arith.constant 0 : index
    %c0_16 = arith.constant 0 : index
    %c0_17 = arith.constant 0 : index
    %28 = vector.load %arg4[%c0_15, %c0_16, %c0_17] : memref<3x4x4xbf16, #tpu.memory_space<vmem>>, vector<1x4x4xbf16>
    %29 = vector.shape_cast %28 : vector<1x4x4xbf16> to vector<4x4xbf16>
    %cst_18 = arith.constant dense<0.000000e+00> : vector<16x4xf32>
    %30 = tpu.matmul %27, %29, %cst_18 {dimension_numbers = #tpu.dot_dimension_numbers<[1], [0], [0], [1], [0, 0, 1, 1], [], []>} : vector<16x4xbf16>, vector<4x4xbf16>, vector<16x4xf32> -> vector<16x4xf32>
    %31 = arith.truncf %14 : vector<16x4xf32> to vector<16x4xbf16>
    %c1 = arith.constant 1 : index
    %c0_19 = arith.constant 0 : index
    %c0_20 = arith.constant 0 : index
    %32 = vector.load %arg4[%c1, %c0_19, %c0_20] : memref<3x4x4xbf16, #tpu.memory_space<vmem>>, vector<1x4x4xbf16>
    %33 = vector.shape_cast %32 : vector<1x4x4xbf16> to vector<4x4xbf16>
    %cst_21 = arith.constant dense<0.000000e+00> : vector<16x4xf32>
    %34 = tpu.matmul %31, %33, %cst_21 {dimension_numbers = #tpu.dot_dimension_numbers<[1], [0], [0], [1], [0, 0, 1, 1], [], []>} : vector<16x4xbf16>, vector<4x4xbf16>, vector<16x4xf32> -> vector<16x4xf32>
    %35 = arith.addf %30, %34 : vector<16x4xf32>
    %c14_i32 = arith.constant 14 : i32
    %36 = vector.broadcast %c14_i32 : i32 to vector<16x1xi32>
    %37 = arith.cmpi sle, %19, %36 : vector<16x1xi32>
    %c15_i32 = arith.constant 15 : i32
    %38 = tpu.dynamic_rotate %14 by %c15_i32 dim 0 : vector<16x4xf32>, i32 -> vector<16x4xf32>
    %cst_22 = arith.constant 0.000000e+00 : f32
    %39 = vector.shape_cast %37 : vector<16x1xi1> to vector<16x1xi1>
    %40 = vector.broadcast %39 : vector<16x1xi1> to vector<16x4xi1>
    %41 = vector.broadcast %cst_22 : f32 to vector<16x4xf32>
    %42 = arith.select %40, %38, %41 : vector<16x4xi1>, vector<16x4xf32>
    %43 = arith.truncf %42 : vector<16x4xf32> to vector<16x4xbf16>
    %c2 = arith.constant 2 : index
    %c0_23 = arith.constant 0 : index
    %c0_24 = arith.constant 0 : index
    %44 = vector.load %arg4[%c2, %c0_23, %c0_24] : memref<3x4x4xbf16, #tpu.memory_space<vmem>>, vector<1x4x4xbf16>
    %45 = vector.shape_cast %44 : vector<1x4x4xbf16> to vector<4x4xbf16>
    %cst_25 = arith.constant dense<0.000000e+00> : vector<16x4xf32>
    %46 = tpu.matmul %43, %45, %cst_25 {dimension_numbers = #tpu.dot_dimension_numbers<[1], [0], [0], [1], [0, 0, 1, 1], [], []>} : vector<16x4xbf16>, vector<4x4xbf16>, vector<16x4xf32> -> vector<16x4xf32>
    %47 = arith.addf %35, %46 : vector<16x4xf32>
    %c0_26 = arith.constant 0 : index
    %c0_27 = arith.constant 0 : index
    %48 = vector.load %arg5[%c0_26, %c0_27] : memref<1x4xf32, #tpu.memory_space<vmem>>, vector<1x4xf32>
    %49 = vector.broadcast %48 : vector<1x4xf32> to vector<16x4xf32>
    %50 = arith.addf %47, %49 : vector<16x4xf32>
    %c0_28 = arith.constant 0 : index
    %c0_29 = arith.constant 0 : index
    %51 = vector.load %arg13[%c0_28, %c0_29] : memref<16x1xi32, #tpu.memory_space<vmem>>, vector<16x1xi32>
    %c1_i32_30 = arith.constant 1 : i32
    %52 = vector.broadcast %c1_i32_30 : i32 to vector<16x1xi32>
    %53 = arith.cmpi sge, %51, %52 : vector<16x1xi32>
    %c1_i32_31 = arith.constant 1 : i32
    %54 = tpu.dynamic_rotate %18 by %c1_i32_31 dim 0 : vector<16x4xf32>, i32 -> vector<16x4xf32>
    %cst_32 = arith.constant 0.000000e+00 : f32
    %55 = vector.shape_cast %53 : vector<16x1xi1> to vector<16x1xi1>
    %56 = vector.broadcast %55 : vector<16x1xi1> to vector<16x4xi1>
    %57 = vector.broadcast %cst_32 : f32 to vector<16x4xf32>
    %58 = arith.select %56, %54, %57 : vector<16x4xi1>, vector<16x4xf32>
    %59 = arith.truncf %58 : vector<16x4xf32> to vector<16x4xbf16>
    %c0_33 = arith.constant 0 : index
    %c0_34 = arith.constant 0 : index
    %c0_35 = arith.constant 0 : index
    %60 = vector.load %arg6[%c0_33, %c0_34, %c0_35] : memref<3x4x4xbf16, #tpu.memory_space<vmem>>, vector<1x4x4xbf16>
    %61 = vector.shape_cast %60 : vector<1x4x4xbf16> to vector<4x4xbf16>
    %cst_36 = arith.constant dense<0.000000e+00> : vector<16x4xf32>
    %62 = tpu.matmul %59, %61, %cst_36 {dimension_numbers = #tpu.dot_dimension_numbers<[1], [0], [0], [1], [0, 0, 1, 1], [], []>} : vector<16x4xbf16>, vector<4x4xbf16>, vector<16x4xf32> -> vector<16x4xf32>
    %63 = arith.truncf %18 : vector<16x4xf32> to vector<16x4xbf16>
    %c1_37 = arith.constant 1 : index
    %c0_38 = arith.constant 0 : index
    %c0_39 = arith.constant 0 : index
    %64 = vector.load %arg6[%c1_37, %c0_38, %c0_39] : memref<3x4x4xbf16, #tpu.memory_space<vmem>>, vector<1x4x4xbf16>
    %65 = vector.shape_cast %64 : vector<1x4x4xbf16> to vector<4x4xbf16>
    %cst_40 = arith.constant dense<0.000000e+00> : vector<16x4xf32>
    %66 = tpu.matmul %63, %65, %cst_40 {dimension_numbers = #tpu.dot_dimension_numbers<[1], [0], [0], [1], [0, 0, 1, 1], [], []>} : vector<16x4xbf16>, vector<4x4xbf16>, vector<16x4xf32> -> vector<16x4xf32>
    %67 = arith.addf %62, %66 : vector<16x4xf32>
    %c14_i32_41 = arith.constant 14 : i32
    %68 = vector.broadcast %c14_i32_41 : i32 to vector<16x1xi32>
    %69 = arith.cmpi sle, %51, %68 : vector<16x1xi32>
    %c15_i32_42 = arith.constant 15 : i32
    %70 = tpu.dynamic_rotate %18 by %c15_i32_42 dim 0 : vector<16x4xf32>, i32 -> vector<16x4xf32>
    %cst_43 = arith.constant 0.000000e+00 : f32
    %71 = vector.shape_cast %69 : vector<16x1xi1> to vector<16x1xi1>
    %72 = vector.broadcast %71 : vector<16x1xi1> to vector<16x4xi1>
    %73 = vector.broadcast %cst_43 : f32 to vector<16x4xf32>
    %74 = arith.select %72, %70, %73 : vector<16x4xi1>, vector<16x4xf32>
    %75 = arith.truncf %74 : vector<16x4xf32> to vector<16x4xbf16>
    %c2_44 = arith.constant 2 : index
    %c0_45 = arith.constant 0 : index
    %c0_46 = arith.constant 0 : index
    %76 = vector.load %arg6[%c2_44, %c0_45, %c0_46] : memref<3x4x4xbf16, #tpu.memory_space<vmem>>, vector<1x4x4xbf16>
    %77 = vector.shape_cast %76 : vector<1x4x4xbf16> to vector<4x4xbf16>
    %cst_47 = arith.constant dense<0.000000e+00> : vector<16x4xf32>
    %78 = tpu.matmul %75, %77, %cst_47 {dimension_numbers = #tpu.dot_dimension_numbers<[1], [0], [0], [1], [0, 0, 1, 1], [], []>} : vector<16x4xbf16>, vector<4x4xbf16>, vector<16x4xf32> -> vector<16x4xf32>
    %79 = arith.addf %67, %78 : vector<16x4xf32>
    %c0_48 = arith.constant 0 : index
    %c0_49 = arith.constant 0 : index
    %80 = vector.load %arg7[%c0_48, %c0_49] : memref<1x4xf32, #tpu.memory_space<vmem>>, vector<1x4xf32>
    %81 = vector.broadcast %80 : vector<1x4xf32> to vector<16x4xf32>
    %82 = arith.addf %79, %81 : vector<16x4xf32>
    %83 = vector.shape_cast %50 : vector<16x4xf32> to vector<1x1x16x4xf32>
    %84 = vector.shape_cast %82 : vector<16x4xf32> to vector<1x16x1x4xf32>
    %85 = vector.broadcast %83 : vector<1x1x16x4xf32> to vector<1x16x16x4xf32>
    %86 = vector.broadcast %84 : vector<1x16x1x4xf32> to vector<1x16x16x4xf32>
    %87 = arith.addf %85, %86 : vector<1x16x16x4xf32>
    %cst_50 = arith.constant 0.000000e+00 : f32
    %88 = vector.broadcast %cst_50 : f32 to vector<1x16x16x4xf32>
    %89 = arith.maximumf %87, %88 : vector<1x16x16x4xf32>
    %90 = vector.shape_cast %89 : vector<1x16x16x4xf32> to vector<256x4xf32>
    %c0_51 = arith.constant 0 : index
    %c0_52 = arith.constant 0 : index
    %91 = vector.load %arg14[%c0_51, %c0_52] : memref<256x1xi32, #tpu.memory_space<vmem>>, vector<256x1xi32>
    %c0_53 = arith.constant 0 : index
    %c0_54 = arith.constant 0 : index
    %92 = vector.load %arg15[%c0_53, %c0_54] : memref<256x1xi32, #tpu.memory_space<vmem>>, vector<256x1xi32>
    %c1_i32_55 = arith.constant 1 : i32
    %93 = vector.broadcast %c1_i32_55 : i32 to vector<256x1xi32>
    %94 = arith.cmpi sge, %91, %93 : vector<256x1xi32>
    %c1_i32_56 = arith.constant 1 : i32
    %95 = vector.broadcast %c1_i32_56 : i32 to vector<256x1xi32>
    %96 = arith.cmpi sge, %92, %95 : vector<256x1xi32>
    %97 = arith.andi %94, %96 : vector<256x1xi1>
    %c17_i32 = arith.constant 17 : i32
    %98 = tpu.dynamic_rotate %90 by %c17_i32 dim 0 : vector<256x4xf32>, i32 -> vector<256x4xf32>
    %cst_57 = arith.constant 0.000000e+00 : f32
    %99 = vector.shape_cast %97 : vector<256x1xi1> to vector<256x1xi1>
    %100 = vector.broadcast %99 : vector<256x1xi1> to vector<256x4xi1>
    %101 = vector.broadcast %cst_57 : f32 to vector<256x4xf32>
    %102 = arith.select %100, %98, %101 : vector<256x4xi1>, vector<256x4xf32>
    %103 = arith.truncf %102 : vector<256x4xf32> to vector<256x4xbf16>
    %c0_58 = arith.constant 0 : index
    %c0_59 = arith.constant 0 : index
    %c0_60 = arith.constant 0 : index
    %104 = vector.load %arg8[%c0_58, %c0_59, %c0_60] : memref<9x4x4xbf16, #tpu.memory_space<vmem>>, vector<1x4x4xbf16>
    %105 = vector.shape_cast %104 : vector<1x4x4xbf16> to vector<4x4xbf16>
    %cst_61 = arith.constant dense<0.000000e+00> : vector<256x4xf32>
    %106 = tpu.matmul %103, %105, %cst_61 {dimension_numbers = #tpu.dot_dimension_numbers<[1], [0], [0], [1], [0, 0, 1, 1], [], []>} : vector<256x4xbf16>, vector<4x4xbf16>, vector<256x4xf32> -> vector<256x4xf32>
    %c1_i32_62 = arith.constant 1 : i32
    %107 = vector.broadcast %c1_i32_62 : i32 to vector<256x1xi32>
    %108 = arith.cmpi sge, %91, %107 : vector<256x1xi32>
    %c16_i32 = arith.constant 16 : i32
    %109 = tpu.dynamic_rotate %90 by %c16_i32 dim 0 : vector<256x4xf32>, i32 -> vector<256x4xf32>
    %cst_63 = arith.constant 0.000000e+00 : f32
    %110 = vector.shape_cast %108 : vector<256x1xi1> to vector<256x1xi1>
    %111 = vector.broadcast %110 : vector<256x1xi1> to vector<256x4xi1>
    %112 = vector.broadcast %cst_63 : f32 to vector<256x4xf32>
    %113 = arith.select %111, %109, %112 : vector<256x4xi1>, vector<256x4xf32>
    %114 = arith.truncf %113 : vector<256x4xf32> to vector<256x4xbf16>
    %c1_64 = arith.constant 1 : index
    %c0_65 = arith.constant 0 : index
    %c0_66 = arith.constant 0 : index
    %115 = vector.load %arg8[%c1_64, %c0_65, %c0_66] : memref<9x4x4xbf16, #tpu.memory_space<vmem>>, vector<1x4x4xbf16>
    %116 = vector.shape_cast %115 : vector<1x4x4xbf16> to vector<4x4xbf16>
    %cst_67 = arith.constant dense<0.000000e+00> : vector<256x4xf32>
    %117 = tpu.matmul %114, %116, %cst_67 {dimension_numbers = #tpu.dot_dimension_numbers<[1], [0], [0], [1], [0, 0, 1, 1], [], []>} : vector<256x4xbf16>, vector<4x4xbf16>, vector<256x4xf32> -> vector<256x4xf32>
    %118 = arith.addf %106, %117 : vector<256x4xf32>
    %c1_i32_68 = arith.constant 1 : i32
    %119 = vector.broadcast %c1_i32_68 : i32 to vector<256x1xi32>
    %120 = arith.cmpi sge, %91, %119 : vector<256x1xi32>
    %c14_i32_69 = arith.constant 14 : i32
    %121 = vector.broadcast %c14_i32_69 : i32 to vector<256x1xi32>
    %122 = arith.cmpi sle, %92, %121 : vector<256x1xi32>
    %123 = arith.andi %120, %122 : vector<256x1xi1>
    %c15_i32_70 = arith.constant 15 : i32
    %124 = tpu.dynamic_rotate %90 by %c15_i32_70 dim 0 : vector<256x4xf32>, i32 -> vector<256x4xf32>
    %cst_71 = arith.constant 0.000000e+00 : f32
    %125 = vector.shape_cast %123 : vector<256x1xi1> to vector<256x1xi1>
    %126 = vector.broadcast %125 : vector<256x1xi1> to vector<256x4xi1>
    %127 = vector.broadcast %cst_71 : f32 to vector<256x4xf32>
    %128 = arith.select %126, %124, %127 : vector<256x4xi1>, vector<256x4xf32>
    %129 = arith.truncf %128 : vector<256x4xf32> to vector<256x4xbf16>
    %c2_72 = arith.constant 2 : index
    %c0_73 = arith.constant 0 : index
    %c0_74 = arith.constant 0 : index
    %130 = vector.load %arg8[%c2_72, %c0_73, %c0_74] : memref<9x4x4xbf16, #tpu.memory_space<vmem>>, vector<1x4x4xbf16>
    %131 = vector.shape_cast %130 : vector<1x4x4xbf16> to vector<4x4xbf16>
    %cst_75 = arith.constant dense<0.000000e+00> : vector<256x4xf32>
    %132 = tpu.matmul %129, %131, %cst_75 {dimension_numbers = #tpu.dot_dimension_numbers<[1], [0], [0], [1], [0, 0, 1, 1], [], []>} : vector<256x4xbf16>, vector<4x4xbf16>, vector<256x4xf32> -> vector<256x4xf32>
    %133 = arith.addf %118, %132 : vector<256x4xf32>
    %c1_i32_76 = arith.constant 1 : i32
    %134 = vector.broadcast %c1_i32_76 : i32 to vector<256x1xi32>
    %135 = arith.cmpi sge, %92, %134 : vector<256x1xi32>
    %c1_i32_77 = arith.constant 1 : i32
    %136 = tpu.dynamic_rotate %90 by %c1_i32_77 dim 0 : vector<256x4xf32>, i32 -> vector<256x4xf32>
    %cst_78 = arith.constant 0.000000e+00 : f32
    %137 = vector.shape_cast %135 : vector<256x1xi1> to vector<256x1xi1>
    %138 = vector.broadcast %137 : vector<256x1xi1> to vector<256x4xi1>
    %139 = vector.broadcast %cst_78 : f32 to vector<256x4xf32>
    %140 = arith.select %138, %136, %139 : vector<256x4xi1>, vector<256x4xf32>
    %141 = arith.truncf %140 : vector<256x4xf32> to vector<256x4xbf16>
    %c3 = arith.constant 3 : index
    %c0_79 = arith.constant 0 : index
    %c0_80 = arith.constant 0 : index
    %142 = vector.load %arg8[%c3, %c0_79, %c0_80] : memref<9x4x4xbf16, #tpu.memory_space<vmem>>, vector<1x4x4xbf16>
    %143 = vector.shape_cast %142 : vector<1x4x4xbf16> to vector<4x4xbf16>
    %cst_81 = arith.constant dense<0.000000e+00> : vector<256x4xf32>
    %144 = tpu.matmul %141, %143, %cst_81 {dimension_numbers = #tpu.dot_dimension_numbers<[1], [0], [0], [1], [0, 0, 1, 1], [], []>} : vector<256x4xbf16>, vector<4x4xbf16>, vector<256x4xf32> -> vector<256x4xf32>
    %145 = arith.addf %133, %144 : vector<256x4xf32>
    %146 = arith.truncf %90 : vector<256x4xf32> to vector<256x4xbf16>
    %c4 = arith.constant 4 : index
    %c0_82 = arith.constant 0 : index
    %c0_83 = arith.constant 0 : index
    %147 = vector.load %arg8[%c4, %c0_82, %c0_83] : memref<9x4x4xbf16, #tpu.memory_space<vmem>>, vector<1x4x4xbf16>
    %148 = vector.shape_cast %147 : vector<1x4x4xbf16> to vector<4x4xbf16>
    %cst_84 = arith.constant dense<0.000000e+00> : vector<256x4xf32>
    %149 = tpu.matmul %146, %148, %cst_84 {dimension_numbers = #tpu.dot_dimension_numbers<[1], [0], [0], [1], [0, 0, 1, 1], [], []>} : vector<256x4xbf16>, vector<4x4xbf16>, vector<256x4xf32> -> vector<256x4xf32>
    %150 = arith.addf %145, %149 : vector<256x4xf32>
    %c14_i32_85 = arith.constant 14 : i32
    %151 = vector.broadcast %c14_i32_85 : i32 to vector<256x1xi32>
    %152 = arith.cmpi sle, %92, %151 : vector<256x1xi32>
    %c255_i32 = arith.constant 255 : i32
    %153 = tpu.dynamic_rotate %90 by %c255_i32 dim 0 : vector<256x4xf32>, i32 -> vector<256x4xf32>
    %cst_86 = arith.constant 0.000000e+00 : f32
    %154 = vector.shape_cast %152 : vector<256x1xi1> to vector<256x1xi1>
    %155 = vector.broadcast %154 : vector<256x1xi1> to vector<256x4xi1>
    %156 = vector.broadcast %cst_86 : f32 to vector<256x4xf32>
    %157 = arith.select %155, %153, %156 : vector<256x4xi1>, vector<256x4xf32>
    %158 = arith.truncf %157 : vector<256x4xf32> to vector<256x4xbf16>
    %c5 = arith.constant 5 : index
    %c0_87 = arith.constant 0 : index
    %c0_88 = arith.constant 0 : index
    %159 = vector.load %arg8[%c5, %c0_87, %c0_88] : memref<9x4x4xbf16, #tpu.memory_space<vmem>>, vector<1x4x4xbf16>
    %160 = vector.shape_cast %159 : vector<1x4x4xbf16> to vector<4x4xbf16>
    %cst_89 = arith.constant dense<0.000000e+00> : vector<256x4xf32>
    %161 = tpu.matmul %158, %160, %cst_89 {dimension_numbers = #tpu.dot_dimension_numbers<[1], [0], [0], [1], [0, 0, 1, 1], [], []>} : vector<256x4xbf16>, vector<4x4xbf16>, vector<256x4xf32> -> vector<256x4xf32>
    %162 = arith.addf %150, %161 : vector<256x4xf32>
    %c14_i32_90 = arith.constant 14 : i32
    %163 = vector.broadcast %c14_i32_90 : i32 to vector<256x1xi32>
    %164 = arith.cmpi sle, %91, %163 : vector<256x1xi32>
    %c1_i32_91 = arith.constant 1 : i32
    %165 = vector.broadcast %c1_i32_91 : i32 to vector<256x1xi32>
    %166 = arith.cmpi sge, %92, %165 : vector<256x1xi32>
    %167 = arith.andi %164, %166 : vector<256x1xi1>
    %c241_i32 = arith.constant 241 : i32
    %168 = tpu.dynamic_rotate %90 by %c241_i32 dim 0 : vector<256x4xf32>, i32 -> vector<256x4xf32>
    %cst_92 = arith.constant 0.000000e+00 : f32
    %169 = vector.shape_cast %167 : vector<256x1xi1> to vector<256x1xi1>
    %170 = vector.broadcast %169 : vector<256x1xi1> to vector<256x4xi1>
    %171 = vector.broadcast %cst_92 : f32 to vector<256x4xf32>
    %172 = arith.select %170, %168, %171 : vector<256x4xi1>, vector<256x4xf32>
    %173 = arith.truncf %172 : vector<256x4xf32> to vector<256x4xbf16>
    %c6 = arith.constant 6 : index
    %c0_93 = arith.constant 0 : index
    %c0_94 = arith.constant 0 : index
    %174 = vector.load %arg8[%c6, %c0_93, %c0_94] : memref<9x4x4xbf16, #tpu.memory_space<vmem>>, vector<1x4x4xbf16>
    %175 = vector.shape_cast %174 : vector<1x4x4xbf16> to vector<4x4xbf16>
    %cst_95 = arith.constant dense<0.000000e+00> : vector<256x4xf32>
    %176 = tpu.matmul %173, %175, %cst_95 {dimension_numbers = #tpu.dot_dimension_numbers<[1], [0], [0], [1], [0, 0, 1, 1], [], []>} : vector<256x4xbf16>, vector<4x4xbf16>, vector<256x4xf32> -> vector<256x4xf32>
    %177 = arith.addf %162, %176 : vector<256x4xf32>
    %c14_i32_96 = arith.constant 14 : i32
    %178 = vector.broadcast %c14_i32_96 : i32 to vector<256x1xi32>
    %179 = arith.cmpi sle, %91, %178 : vector<256x1xi32>
    %c240_i32 = arith.constant 240 : i32
    %180 = tpu.dynamic_rotate %90 by %c240_i32 dim 0 : vector<256x4xf32>, i32 -> vector<256x4xf32>
    %cst_97 = arith.constant 0.000000e+00 : f32
    %181 = vector.shape_cast %179 : vector<256x1xi1> to vector<256x1xi1>
    %182 = vector.broadcast %181 : vector<256x1xi1> to vector<256x4xi1>
    %183 = vector.broadcast %cst_97 : f32 to vector<256x4xf32>
    %184 = arith.select %182, %180, %183 : vector<256x4xi1>, vector<256x4xf32>
    %185 = arith.truncf %184 : vector<256x4xf32> to vector<256x4xbf16>
    %c7 = arith.constant 7 : index
    %c0_98 = arith.constant 0 : index
    %c0_99 = arith.constant 0 : index
    %186 = vector.load %arg8[%c7, %c0_98, %c0_99] : memref<9x4x4xbf16, #tpu.memory_space<vmem>>, vector<1x4x4xbf16>
    %187 = vector.shape_cast %186 : vector<1x4x4xbf16> to vector<4x4xbf16>
    %cst_100 = arith.constant dense<0.000000e+00> : vector<256x4xf32>
    %188 = tpu.matmul %185, %187, %cst_100 {dimension_numbers = #tpu.dot_dimension_numbers<[1], [0], [0], [1], [0, 0, 1, 1], [], []>} : vector<256x4xbf16>, vector<4x4xbf16>, vector<256x4xf32> -> vector<256x4xf32>
    %189 = arith.addf %177, %188 : vector<256x4xf32>
    %c14_i32_101 = arith.constant 14 : i32
    %190 = vector.broadcast %c14_i32_101 : i32 to vector<256x1xi32>
    %191 = arith.cmpi sle, %91, %190 : vector<256x1xi32>
    %c14_i32_102 = arith.constant 14 : i32
    %192 = vector.broadcast %c14_i32_102 : i32 to vector<256x1xi32>
    %193 = arith.cmpi sle, %92, %192 : vector<256x1xi32>
    %194 = arith.andi %191, %193 : vector<256x1xi1>
    %c239_i32 = arith.constant 239 : i32
    %195 = tpu.dynamic_rotate %90 by %c239_i32 dim 0 : vector<256x4xf32>, i32 -> vector<256x4xf32>
    %cst_103 = arith.constant 0.000000e+00 : f32
    %196 = vector.shape_cast %194 : vector<256x1xi1> to vector<256x1xi1>
    %197 = vector.broadcast %196 : vector<256x1xi1> to vector<256x4xi1>
    %198 = vector.broadcast %cst_103 : f32 to vector<256x4xf32>
    %199 = arith.select %197, %195, %198 : vector<256x4xi1>, vector<256x4xf32>
    %200 = arith.truncf %199 : vector<256x4xf32> to vector<256x4xbf16>
    %c8 = arith.constant 8 : index
    %c0_104 = arith.constant 0 : index
    %c0_105 = arith.constant 0 : index
    %201 = vector.load %arg8[%c8, %c0_104, %c0_105] : memref<9x4x4xbf16, #tpu.memory_space<vmem>>, vector<1x4x4xbf16>
    %202 = vector.shape_cast %201 : vector<1x4x4xbf16> to vector<4x4xbf16>
    %cst_106 = arith.constant dense<0.000000e+00> : vector<256x4xf32>
    %203 = tpu.matmul %200, %202, %cst_106 {dimension_numbers = #tpu.dot_dimension_numbers<[1], [0], [0], [1], [0, 0, 1, 1], [], []>} : vector<256x4xbf16>, vector<4x4xbf16>, vector<256x4xf32> -> vector<256x4xf32>
    %204 = arith.addf %189, %203 : vector<256x4xf32>
    %c0_107 = arith.constant 0 : index
    %c0_108 = arith.constant 0 : index
    %205 = vector.load %arg9[%c0_107, %c0_108] : memref<1x4xf32, #tpu.memory_space<vmem>>, vector<1x4xf32>
    %206 = vector.broadcast %205 : vector<1x4xf32> to vector<256x4xf32>
    %207 = arith.addf %204, %206 : vector<256x4xf32>
    %cst_109 = arith.constant 0.000000e+00 : f32
    %208 = vector.broadcast %cst_109 : f32 to vector<256x4xf32>
    %209 = arith.maximumf %207, %208 : vector<256x4xf32>
    %210 = arith.truncf %209 : vector<256x4xf32> to vector<256x4xbf16>
    %c0_110 = arith.constant 0 : index
    %c0_111 = arith.constant 0 : index
    %211 = vector.load %arg10[%c0_110, %c0_111] : memref<4x16xbf16, #tpu.memory_space<vmem>>, vector<4x16xbf16>
    %cst_112 = arith.constant dense<0.000000e+00> : vector<256x16xf32>
    %212 = tpu.matmul %210, %211, %cst_112 {dimension_numbers = #tpu.dot_dimension_numbers<[1], [0], [0], [1], [0, 0, 1, 1], [], []>} : vector<256x4xbf16>, vector<4x16xbf16>, vector<256x16xf32> -> vector<256x16xf32>
    %c0_113 = arith.constant 0 : index
    %c0_114 = arith.constant 0 : index
    %213 = vector.load %arg11[%c0_113, %c0_114] : memref<1x16xf32, #tpu.memory_space<vmem>>, vector<1x16xf32>
    %214 = vector.broadcast %213 : vector<1x16xf32> to vector<256x16xf32>
    %215 = arith.addf %212, %214 : vector<256x16xf32>
    %216 = arith.addf %1, %215 : vector<256x16xf32>
    %cst_115 = arith.constant 0.000000e+00 : f32
    %217 = vector.broadcast %cst_115 : f32 to vector<256x16xf32>
    %218 = arith.maximumf %216, %217 : vector<256x16xf32>
    %219 = vector.shape_cast %218 : vector<256x16xf32> to vector<1x256x16xf32>
    %c0_116 = arith.constant 0 : index
    %c0_117 = arith.constant 0 : index
    %c0_118 = arith.constant 0 : index
    %220 = vector.load %arg16[%c0_116, %c0_117, %c0_118] : memref<1x256x16xf32, #tpu.memory_space<vmem>>, vector<1x256x16xf32>
    tpu.vector_store %arg16[%c0_116, %c0_117, %c0_118], %219 {strides = array<i32>} : memref<1x256x16xf32, #tpu.memory_space<vmem>>, vector<1x256x16xf32>,
    return
  }
  func.func @transform_0(%arg0: i32) -> (i32, i32, i32) {
    %c0_i32 = arith.constant 0 : i32
    %c0_i32_0 = arith.constant 0 : i32
    %c0_i32_1 = arith.constant 0 : i32
    return %arg0, %c0_i32, %c0_i32_0 : i32, i32, i32
  }
  func.func @transform_1(%arg0: i32) -> (i32, i32) {
    %c0_i32 = arith.constant 0 : i32
    %c0_i32_0 = arith.constant 0 : i32
    %c0_i32_1 = arith.constant 0 : i32
    return %c0_i32, %c0_i32_0 : i32, i32
  }
  func.func @transform_2(%arg0: i32) -> (i32, i32) {
    %c0_i32 = arith.constant 0 : i32
    %c0_i32_0 = arith.constant 0 : i32
    %c0_i32_1 = arith.constant 0 : i32
    return %c0_i32, %c0_i32_0 : i32, i32
  }
  func.func @transform_3(%arg0: i32) -> (i32, i32, i32) {
    %c0_i32 = arith.constant 0 : i32
    %c0_i32_0 = arith.constant 0 : i32
    %c0_i32_1 = arith.constant 0 : i32
    %c0_i32_2 = arith.constant 0 : i32
    return %c0_i32, %c0_i32_0, %c0_i32_1 : i32, i32, i32
  }
  func.func @transform_4(%arg0: i32) -> (i32, i32) {
    %c0_i32 = arith.constant 0 : i32
    %c0_i32_0 = arith.constant 0 : i32
    %c0_i32_1 = arith.constant 0 : i32
    return %c0_i32, %c0_i32_0 : i32, i32
  }
  func.func @transform_5(%arg0: i32) -> (i32, i32, i32) {
    %c0_i32 = arith.constant 0 : i32
    %c0_i32_0 = arith.constant 0 : i32
    %c0_i32_1 = arith.constant 0 : i32
    %c0_i32_2 = arith.constant 0 : i32
    return %c0_i32, %c0_i32_0, %c0_i32_1 : i32, i32, i32
  }
  func.func @transform_6(%arg0: i32) -> (i32, i32) {
    %c0_i32 = arith.constant 0 : i32
    %c0_i32_0 = arith.constant 0 : i32
    %c0_i32_1 = arith.constant 0 : i32
    return %c0_i32, %c0_i32_0 : i32, i32
  }
  func.func @transform_7(%arg0: i32) -> (i32, i32, i32) {
    %c0_i32 = arith.constant 0 : i32
    %c0_i32_0 = arith.constant 0 : i32
    %c0_i32_1 = arith.constant 0 : i32
    %c0_i32_2 = arith.constant 0 : i32
    return %c0_i32, %c0_i32_0, %c0_i32_1 : i32, i32, i32
  }
  func.func @transform_8(%arg0: i32) -> (i32, i32) {
    %c0_i32 = arith.constant 0 : i32
    %c0_i32_0 = arith.constant 0 : i32
    %c0_i32_1 = arith.constant 0 : i32
    return %c0_i32, %c0_i32_0 : i32, i32
  }
  func.func @transform_9(%arg0: i32) -> (i32, i32) {
    %c0_i32 = arith.constant 0 : i32
    %c0_i32_0 = arith.constant 0 : i32
    %c0_i32_1 = arith.constant 0 : i32
    return %c0_i32, %c0_i32_0 : i32, i32
  }
  func.func @transform_10(%arg0: i32) -> (i32, i32) {
    %c0_i32 = arith.constant 0 : i32
    %c0_i32_0 = arith.constant 0 : i32
    %c0_i32_1 = arith.constant 0 : i32
    return %c0_i32, %c0_i32_0 : i32, i32
  }
  func.func @transform_11(%arg0: i32) -> (i32, i32) {
    %c0_i32 = arith.constant 0 : i32
    %c0_i32_0 = arith.constant 0 : i32
    %c0_i32_1 = arith.constant 0 : i32
    return %c0_i32, %c0_i32_0 : i32, i32
  }
  func.func @transform_12(%arg0: i32) -> (i32, i32) {
    %c0_i32 = arith.constant 0 : i32
    %c0_i32_0 = arith.constant 0 : i32
    %c0_i32_1 = arith.constant 0 : i32
    return %c0_i32, %c0_i32_0 : i32, i32
  }
  func.func @transform_13(%arg0: i32) -> (i32, i32) {
    %c0_i32 = arith.constant 0 : i32
    %c0_i32_0 = arith.constant 0 : i32
    %c0_i32_1 = arith.constant 0 : i32
    return %c0_i32, %c0_i32_0 : i32, i32
  }
  func.func @transform_14(%arg0: i32) -> (i32, i32) {
    %c0_i32 = arith.constant 0 : i32
    %c0_i32_0 = arith.constant 0 : i32
    %c0_i32_1 = arith.constant 0 : i32
    return %c0_i32, %c0_i32_0 : i32, i32
  }
  func.func @transform_15(%arg0: i32) -> (i32, i32, i32) {
    %c0_i32 = arith.constant 0 : i32
    %c0_i32_0 = arith.constant 0 : i32
    %c0_i32_1 = arith.constant 0 : i32
    return %arg0, %c0_i32, %c0_i32_0 : i32, i32, i32
  }
}

</mosaic_0001>

<llo_original>
// kernel: tpu_custom_call.1
$region0: #{tpu_custom_call.1}
  #allocation0 [shape = 'u32[]', space=smem, size = 0x4, offset = 0x4, fixed_abs, tag = 'smem constant byte address 0x4 - core index']
  #allocation1 [shape = 'u32[144,128]{1,0:T(1,128)}', space=vmem, size = 0x12000, scoped, tag = 'internal scratch']
  %s0 = inlined_call_operand.vmem [shape: f32[2,256,16], index: 0, kind: input, shape index: {}]
  %s1 = inlined_call_operand.vmem [shape: bf16[16,4], index: 1, kind: input, shape index: {}]
  %s2 = inlined_call_operand.vmem [shape: f32[1,4], index: 2, kind: input, shape index: {}]
  %s3 = inlined_call_operand.vmem [shape: bf16[3,4,4], index: 3, kind: input, shape index: {}]
  %s4 = inlined_call_operand.vmem [shape: f32[1,4], index: 4, kind: input, shape index: {}]
  %s5 = inlined_call_operand.vmem [shape: bf16[3,4,4], index: 5, kind: input, shape index: {}]
  %s6 = inlined_call_operand.vmem [shape: f32[1,4], index: 6, kind: input, shape index: {}]
  %s7 = inlined_call_operand.vmem [shape: bf16[9,4,4], index: 7, kind: input, shape index: {}]
  %s8 = inlined_call_operand.vmem [shape: f32[1,4], index: 8, kind: input, shape index: {}]
  %s9 = inlined_call_operand.vmem [shape: bf16[4,16], index: 9, kind: input, shape index: {}]
  %s10 = inlined_call_operand.vmem [shape: f32[1,16], index: 10, kind: input, shape index: {}]
  %s11 = inlined_call_operand.vmem [shape: s32[16,1], index: 11, kind: input, shape index: {}]
  %s12 = inlined_call_operand.vmem [shape: s32[16,1], index: 12, kind: input, shape index: {}]
  %s13 = inlined_call_operand.vmem [shape: s32[256,1], index: 13, kind: input, shape index: {}]
  %s14 = inlined_call_operand.vmem [shape: s32[256,1], index: 14, kind: input, shape index: {}]
  %s15 = inlined_call_operand.vmem [shape: f32[2,256,16], index: 15, kind: output, shape index: {}]
  %s16 = sld [smem:[#allocation0]]
  $region93: #{tpu_custom_call.1} parent=0
    _
  %s18 = ssub.s32 1, %s16
  %s19 = scalar_select 0, %s18, %s16
  loop: start=0, step=1, limit=4
  $region2: #{tpu_custom_call.1} parent=0 // loop_pre_header
    _
  $region3: #{tpu_custom_call.1} parent=0 // loop_header
    %s21 = sphi 0, %s25
    %p22 = scmp.ge.s32.totalorder %s21, 4
    %s31 = sphi 0, %s33
    %s34 = sphi 0, %s31
    %s35 = sphi 0, %s34
    %s51 = sphi 0, %s35
    %s55 = sphi 0, %s55
    %s57 = sphi 0, %s55
    %s58 = sphi 0, %s57
    %s72 = sphi 0, %s58
    %s76 = sphi 0, %s76
    %s78 = sphi 0, %s76
    %s79 = sphi 0, %s78
    %s93 = sphi 0, %s79
    %s97 = sphi 0, %s97
    %s99 = sphi 0, %s97
    %s100 = sphi 0, %s99
    %s114 = sphi 0, %s100
    %s118 = sphi 0, %s118
    %s120 = sphi 0, %s118
    %s121 = sphi 0, %s120
    %s135 = sphi 0, %s121
    %s139 = sphi 0, %s139
    %s141 = sphi 0, %s139
    %s142 = sphi 0, %s141
    %s156 = sphi 0, %s142
    %s160 = sphi 0, %s160
    %s162 = sphi 0, %s160
    %s163 = sphi 0, %s162
    %s177 = sphi 0, %s163
    %s181 = sphi 0, %s181
    %s183 = sphi 0, %s181
    %s184 = sphi 0, %s183
    %s198 = sphi 0, %s184
    %s202 = sphi 0, %s202
    %s204 = sphi 0, %s202
    %s205 = sphi 0, %s204
    %s219 = sphi 0, %s205
    %s223 = sphi 0, %s223
    %s225 = sphi 0, %s223
    %s226 = sphi 0, %s225
    %s240 = sphi 0, %s226
    %s244 = sphi 0, %s244
    %s246 = sphi 0, %s244
    %s247 = sphi 0, %s246
    %s261 = sphi 0, %s247
    %s265 = sphi 0, %s265
    %s267 = sphi 0, %s265
    %s268 = sphi 0, %s267
    %s282 = sphi 0, %s268
    %s286 = sphi 0, %s286
    %s288 = sphi 0, %s286
    %s289 = sphi 0, %s288
    %s303 = sphi 0, %s289
    %s307 = sphi 0, %s307
    %s309 = sphi 0, %s307
    %s310 = sphi 0, %s309
    %s324 = sphi 0, %s310
    %s328 = sphi 0, %s328
    %s330 = sphi 0, %s328
    %s331 = sphi 0, %s330
    %s345 = sphi 0, %s331
    %s351 = sphi 0, %s353
    %s354 = sphi 0, %s351
    %s355 = sphi 0, %s354
    %s371 = sphi 0, %s355
  $region4: #{tpu_custom_call.1} parent=0 // loop_header_branch
    %24 = sbr.rel (%p22) target = $region8
  $region5: #{tpu_custom_call.1} parent=0 // loop_body
    %s26 = ssub.s32 %s21, 1
    %s27 = ssub.s32 %s21, 2
    %s28 = sadd.s32 %s21, 1
    %s29 = ssub.s32 %s21, %s28
    %p30 = scmp.eq.s32.totalorder %s29, 0
    %s32 = sadd.s32 %s31, 1
    %s33 = scalar_select %p30, %s31, %s32
    %p36 = pneg %p30
    %p37 = scmp.eq.s32.totalorder %s21, 1
    %p38 = por %p36, %p37
    %p39 = scmp.ne.s32.totalorder %s31, %s34
    %p40 = scmp.eq.s32.totalorder %s21, 0
    %p41 = por %p39, %p40
    %p42 = scmp.ne.s32.totalorder %s31, %s34
    %p43 = scmp.eq.s32.totalorder %s26, 1
    %p44 = por %p42, %p43
    %p45 = scmp.ne.s32.totalorder %s34, %s35
    %p46 = scmp.eq.s32.totalorder %s26, 0
    %p47 = por %p45, %p46
    %p48 = scmp.ne.s32.totalorder %s34, %s35
    %p49 = scmp.eq.s32.totalorder %s27, 1
    %p50 = por %p48, %p49
    %p52 = scmp.ne.s32.totalorder %s35, %s51
    %p53 = scmp.eq.s32.totalorder %s27, 0
    %p54 = por %p52, %p53
    %s56 = sadd.s32 %s55, 1
    %p59 = scmp.eq.s32.totalorder %s21, 1
    %p60 = scmp.ne.s32.totalorder %s55, %s57
    %p61 = scmp.eq.s32.totalorder %s21, 0
    %p62 = por %p60, %p61
    %p63 = scmp.ne.s32.totalorder %s55, %s57
    %p64 = scmp.eq.s32.totalorder %s26, 1
    %p65 = por %p63, %p64
    %p66 = scmp.ne.s32.totalorder %s57, %s58
    %p67 = scmp.eq.s32.totalorder %s26, 0
    %p68 = por %p66, %p67
    %p69 = scmp.ne.s32.totalorder %s57, %s58
    %p70 = scmp.eq.s32.totalorder %s27, 1
    %p71 = por %p69, %p70
    %p73 = scmp.ne.s32.totalorder %s58, %s72
    %p74 = scmp.eq.s32.totalorder %s27, 0
    %p75 = por %p73, %p74
    %s77 = sadd.s32 %s76, 1
    %p80 = scmp.eq.s32.totalorder %s21, 1
    %p81 = scmp.ne.s32.totalorder %s76, %s78
    %p82 = scmp.eq.s32.totalorder %s21, 0
    %p83 = por %p81, %p82
    %p84 = scmp.ne.s32.totalorder %s76, %s78
    %p85 = scmp.eq.s32.totalorder %s26, 1
    %p86 = por %p84, %p85
    %p87 = scmp.ne.s32.totalorder %s78, %s79
    %p88 = scmp.eq.s32.totalorder %s26, 0
    %p89 = por %p87, %p88
    %p90 = scmp.ne.s32.totalorder %s78, %s79
    %p91 = scmp.eq.s32.totalorder %s27, 1
    %p92 = por %p90, %p91
    %p94 = scmp.ne.s32.totalorder %s79, %s93
    %p95 = scmp.eq.s32.totalorder %s27, 0
    %p96 = por %p94, %p95
    %s98 = sadd.s32 %s97, 1
    %p101 = scmp.eq.s32.totalorder %s21, 1
    %p102 = scmp.ne.s32.totalorder %s97, %s99
    %p103 = scmp.eq.s32.totalorder %s21, 0
    %p104 = por %p102, %p103
    %p105 = scmp.ne.s32.totalorder %s97, %s99
    %p106 = scmp.eq.s32.totalorder %s26, 1
    %p107 = por %p105, %p106
    %p108 = scmp.ne.s32.totalorder %s99, %s100
    %p109 = scmp.eq.s32.totalorder %s26, 0
    %p110 = por %p108, %p109
    %p111 = scmp.ne.s32.totalorder %s99, %s100
    %p112 = scmp.eq.s32.totalorder %s27, 1
    %p113 = por %p111, %p112
    %p115 = scmp.ne.s32.totalorder %s100, %s114
    %p116 = scmp.eq.s32.totalorder %s27, 0
    %p117 = por %p115, %p116
    %s119 = sadd.s32 %s118, 1
    %p122 = scmp.eq.s32.totalorder %s21, 1
    %p123 = scmp.ne.s32.totalorder %s118, %s120
    %p124 = scmp.eq.s32.totalorder %s21, 0
    %p125 = por %p123, %p124
    %p126 = scmp.ne.s32.totalorder %s118, %s120
    %p127 = scmp.eq.s32.totalorder %s26, 1
    %p128 = por %p126, %p127
    %p129 = scmp.ne.s32.totalorder %s120, %s121
    %p130 = scmp.eq.s32.totalorder %s26, 0
    %p131 = por %p129, %p130
    %p132 = scmp.ne.s32.totalorder %s120, %s121
    %p133 = scmp.eq.s32.totalorder %s27, 1
    %p134 = por %p132, %p133
    %p136 = scmp.ne.s32.totalorder %s121, %s135
    %p137 = scmp.eq.s32.totalorder %s27, 0
    %p138 = por %p136, %p137
    %s140 = sadd.s32 %s139, 1
    %p143 = scmp.eq.s32.totalorder %s21, 1
    %p144 = scmp.ne.s32.totalorder %s139, %s141
    %p145 = scmp.eq.s32.totalorder %s21, 0
    %p146 = por %p144, %p145
    %p147 = scmp.ne.s32.totalorder %s139, %s141
    %p148 = scmp.eq.s32.totalorder %s26, 1
    %p149 = por %p147, %p148
    %p150 = scmp.ne.s32.totalorder %s141, %s142
    %p151 = scmp.eq.s32.totalorder %s26, 0
    %p152 = por %p150, %p151
    %p153 = scmp.ne.s32.totalorder %s141, %s142
    %p154 = scmp.eq.s32.totalorder %s27, 1
    %p155 = por %p153, %p154
    %p157 = scmp.ne.s32.totalorder %s142, %s156
    %p158 = scmp.eq.s32.totalorder %s27, 0
    %p159 = por %p157, %p158
    %s161 = sadd.s32 %s160, 1
    %p164 = scmp.eq.s32.totalorder %s21, 1
    %p165 = scmp.ne.s32.totalorder %s160, %s162
    %p166 = scmp.eq.s32.totalorder %s21, 0
    %p167 = por %p165, %p166
    %p168 = scmp.ne.s32.totalorder %s160, %s162
    %p169 = scmp.eq.s32.totalorder %s26, 1
    %p170 = por %p168, %p169
    %p171 = scmp.ne.s32.totalorder %s162, %s163
    %p172 = scmp.eq.s32.totalorder %s26, 0
    %p173 = por %p171, %p172
    %p174 = scmp.ne.s32.totalorder %s162, %s163
    %p175 = scmp.eq.s32.totalorder %s27, 1
    %p176 = por %p174, %p175
    %p178 = scmp.ne.s32.totalorder %s163, %s177
    %p179 = scmp.eq.s32.totalorder %s27, 0
    %p180 = por %p178, %p179
    %s182 = sadd.s32 %s181, 1
    %p185 = scmp.eq.s32.totalorder %s21, 1
    %p186 = scmp.ne.s32.totalorder %s181, %s183
    %p187 = scmp.eq.s32.totalorder %s21, 0
    %p188 = por %p186, %p187
    %p189 = scmp.ne.s32.totalorder %s181, %s183
    %p190 = scmp.eq.s32.totalorder %s26, 1
    %p191 = por %p189, %p190
    %p192 = scmp.ne.s32.totalorder %s183, %s184
    %p193 = scmp.eq.s32.totalorder %s26, 0
    %p194 = por %p192, %p193
    %p195 = scmp.ne.s32.totalorder %s183, %s184
    %p196 = scmp.eq.s32.totalorder %s27, 1
    %p197 = por %p195, %p196
    %p199 = scmp.ne.s32.totalorder %s184, %s198
    %p200 = scmp.eq.s32.totalorder %s27, 0
    %p201 = por %p199, %p200
    %s203 = sadd.s32 %s202, 1
    %p206 = scmp.eq.s32.totalorder %s21, 1
    %p207 = scmp.ne.s32.totalorder %s202, %s204
    %p208 = scmp.eq.s32.totalorder %s21, 0
    %p209 = por %p207, %p208
    %p210 = scmp.ne.s32.totalorder %s202, %s204
    %p211 = scmp.eq.s32.totalorder %s26, 1
    %p212 = por %p210, %p211
    %p213 = scmp.ne.s32.totalorder %s204, %s205
    %p214 = scmp.eq.s32.totalorder %s26, 0
    %p215 = por %p213, %p214
    %p216 = scmp.ne.s32.totalorder %s204, %s205
    %p217 = scmp.eq.s32.totalorder %s27, 1
    %p218 = por %p216, %p217
    %p220 = scmp.ne.s32.totalorder %s205, %s219
    %p221 = scmp.eq.s32.totalorder %s27, 0
    %p222 = por %p220, %p221
    %s224 = sadd.s32 %s223, 1
    %p227 = scmp.eq.s32.totalorder %s21, 1
    %p228 = scmp.ne.s32.totalorder %s223, %s225
    %p229 = scmp.eq.s32.totalorder %s21, 0
    %p230 = por %p228, %p229
    %p231 = scmp.ne.s32.totalorder %s223, %s225
    %p232 = scmp.eq.s32.totalorder %s26, 1
    %p233 = por %p231, %p232
    %p234 = scmp.ne.s32.totalorder %s225, %s226
    %p235 = scmp.eq.s32.totalorder %s26, 0
    %p236 = por %p234, %p235
    %p237 = scmp.ne.s32.totalorder %s225, %s226
    %p238 = scmp.eq.s32.totalorder %s27, 1
    %p239 = por %p237, %p238
    %p241 = scmp.ne.s32.totalorder %s226, %s240
    %p242 = scmp.eq.s32.totalorder %s27, 0
    %p243 = por %p241, %p242
    %s245 = sadd.s32 %s244, 1
    %p248 = scmp.eq.s32.totalorder %s21, 1
    %p249 = scmp.ne.s32.totalorder %s244, %s246
    %p250 = scmp.eq.s32.totalorder %s21, 0
    %p251 = por %p249, %p250
    %p252 = scmp.ne.s32.totalorder %s244, %s246
    %p253 = scmp.eq.s32.totalorder %s26, 1
    %p254 = por %p252, %p253
    %p255 = scmp.ne.s32.totalorder %s246, %s247
    %p256 = scmp.eq.s32.totalorder %s26, 0
    %p257 = por %p255, %p256
    %p258 = scmp.ne.s32.totalorder %s246, %s247
    %p259 = scmp.eq.s32.totalorder %s27, 1
    %p260 = por %p258, %p259
    %p262 = scmp.ne.s32.totalorder %s247, %s261
    %p263 = scmp.eq.s32.totalorder %s27, 0
    %p264 = por %p262, %p263
    %s266 = sadd.s32 %s265, 1
    %p269 = scmp.eq.s32.totalorder %s21, 1
    %p270 = scmp.ne.s32.totalorder %s265, %s267
    %p271 = scmp.eq.s32.totalorder %s21, 0
    %p272 = por %p270, %p271
    %p273 = scmp.ne.s32.totalorder %s265, %s267
    %p274 = scmp.eq.s32.totalorder %s26, 1
    %p275 = por %p273, %p274
    %p276 = scmp.ne.s32.totalorder %s267, %s268
    %p277 = scmp.eq.s32.totalorder %s26, 0
    %p278 = por %p276, %p277
    %p279 = scmp.ne.s32.totalorder %s267, %s268
    %p280 = scmp.eq.s32.totalorder %s27, 1
    %p281 = por %p279, %p280
    %p283 = scmp.ne.s32.totalorder %s268, %s282
    %p284 = scmp.eq.s32.totalorder %s27, 0
    %p285 = por %p283, %p284
    %s287 = sadd.s32 %s286, 1
    %p290 = scmp.eq.s32.totalorder %s21, 1
    %p291 = scmp.ne.s32.totalorder %s286, %s288
    %p292 = scmp.eq.s32.totalorder %s21, 0
    %p293 = por %p291, %p292
    %p294 = scmp.ne.s32.totalorder %s286, %s288
    %p295 = scmp.eq.s32.totalorder %s26, 1
    %p296 = por %p294, %p295
    %p297 = scmp.ne.s32.totalorder %s288, %s289
    %p298 = scmp.eq.s32.totalorder %s26, 0
    %p299 = por %p297, %p298
    %p300 = scmp.ne.s32.totalorder %s288, %s289
    %p301 = scmp.eq.s32.totalorder %s27, 1
    %p302 = por %p300, %p301
    %p304 = scmp.ne.s32.totalorder %s289, %s303
    %p305 = scmp.eq.s32.totalorder %s27, 0
    %p306 = por %p304, %p305
    %s308 = sadd.s32 %s307, 1
    %p311 = scmp.eq.s32.totalorder %s21, 1
    %p312 = scmp.ne.s32.totalorder %s307, %s309
    %p313 = scmp.eq.s32.totalorder %s21, 0
    %p314 = por %p312, %p313
    %p315 = scmp.ne.s32.totalorder %s307, %s309
    %p316 = scmp.eq.s32.totalorder %s26, 1
    %p317 = por %p315, %p316
    %p318 = scmp.ne.s32.totalorder %s309, %s310
    %p319 = scmp.eq.s32.totalorder %s26, 0
    %p320 = por %p318, %p319
    %p321 = scmp.ne.s32.totalorder %s309, %s310
    %p322 = scmp.eq.s32.totalorder %s27, 1
    %p323 = por %p321, %p322
    %p325 = scmp.ne.s32.totalorder %s310, %s324
    %p326 = scmp.eq.s32.totalorder %s27, 0
    %p327 = por %p325, %p326
    %s329 = sadd.s32 %s328, 1
    %p332 = scmp.eq.s32.totalorder %s21, 1
    %p333 = scmp.ne.s32.totalorder %s328, %s330
    %p334 = scmp.eq.s32.totalorder %s21, 0
    %p335 = por %p333, %p334
    %p336 = scmp.ne.s32.totalorder %s328, %s330
    %p337 = scmp.eq.s32.totalorder %s26, 1
    %p338 = por %p336, %p337
    %p339 = scmp.ne.s32.totalorder %s330, %s331
    %p340 = scmp.eq.s32.totalorder %s26, 0
    %p341 = por %p339, %p340
    %p342 = scmp.ne.s32.totalorder %s330, %s331
    %p343 = scmp.eq.s32.totalorder %s27, 1
    %p344 = por %p342, %p343
    %p346 = scmp.ne.s32.totalorder %s331, %s345
    %p347 = scmp.eq.s32.totalorder %s27, 0
    %p348 = por %p346, %p347
    %s349 = ssub.s32 %s21, %s28
    %p350 = scmp.eq.s32.totalorder %s349, 0
    %s352 = sadd.s32 %s351, 1
    %s353 = scalar_select %p350, %s351, %s352
    %p356 = pneg %p350
    %p357 = scmp.eq.s32.totalorder %s21, 1
    %p358 = por %p356, %p357
    %p359 = scmp.ne.s32.totalorder %s351, %s354
    %p360 = scmp.eq.s32.totalorder %s21, 0
    %p361 = por %p359, %p360
    %p362 = scmp.ne.s32.totalorder %s351, %s354
    %p363 = scmp.eq.s32.totalorder %s26, 1
    %p364 = por %p362, %p363
    %p365 = scmp.ne.s32.totalorder %s354, %s355
    %p366 = scmp.eq.s32.totalorder %s26, 0
    %p367 = por %p365, %p366
    %p368 = scmp.ne.s32.totalorder %s354, %s355
    %p369 = scmp.eq.s32.totalorder %s27, 1
    %p370 = por %p368, %p369
    %p372 = scmp.ne.s32.totalorder %s355, %s371
    %p373 = scmp.eq.s32.totalorder %s27, 0
    %p374 = por %p372, %p373
    %p375 = scmp.le.s32.totalorder 1, %s21
    %p376 = scmp.lt.s32.totalorder %s21, 3
    %p377 = pnand %p375, %p376
    %p378 = pneg %p377
    // Predicated region
    $region9: #{tpu_custom_call.1} parent=5 // pred_check
      _
    $region10: #{tpu_custom_call.1} parent=5 // pred_check_branch
      %380 = sbr.rel (%p377) target = $region12
    $region11: #{tpu_custom_call.1} parent=5 // pred_region
      %s381 = ssub.s32 %s21, 1
      // Predicated region
      $region13: #{tpu_custom_call.1} parent=11 // pred_check
        %p382 = pneg %p68
      $region14: #{tpu_custom_call.1} parent=11 // pred_check_branch
        %384 = sbr.rel (%p382) target = $region16
      $region15: #{tpu_custom_call.1} parent=11 // pred_region
        _
      $region16: #{tpu_custom_call.1} parent=11 // pred_fallthru
        _
      // Predicated region
      $region17: #{tpu_custom_call.1} parent=11 // pred_check
        %p385 = pneg %p89
      $region18: #{tpu_custom_call.1} parent=11 // pred_check_branch
        %387 = sbr.rel (%p385) target = $region20
      $region19: #{tpu_custom_call.1} parent=11 // pred_region
        _
      $region20: #{tpu_custom_call.1} parent=11 // pred_fallthru
        _
      // Predicated region
      $region21: #{tpu_custom_call.1} parent=11 // pred_check
        %p388 = pneg %p110
      $region22: #{tpu_custom_call.1} parent=11 // pred_check_branch
        %390 = sbr.rel (%p388) target = $region24
      $region23: #{tpu_custom_call.1} parent=11 // pred_region
        _
      $region24: #{tpu_custom_call.1} parent=11 // pred_fallthru
        _
      // Predicated region
      $region25: #{tpu_custom_call.1} parent=11 // pred_check
        %p391 = pneg %p131
      $region26: #{tpu_custom_call.1} parent=11 // pred_check_branch
        %393 = sbr.rel (%p391) target = $region28
      $region27: #{tpu_custom_call.1} parent=11 // pred_region
        _
      $region28: #{tpu_custom_call.1} parent=11 // pred_fallthru
        _
      // Predicated region
      $region29: #{tpu_custom_call.1} parent=11 // pred_check
        %p394 = pneg %p152
      $region30: #{tpu_custom_call.1} parent=11 // pred_check_branch
        %396 = sbr.rel (%p394) target = $region32
      $region31: #{tpu_custom_call.1} parent=11 // pred_region
        _
      $region32: #{tpu_custom_call.1} parent=11 // pred_fallthru
        _
      // Predicated region
      $region33: #{tpu_custom_call.1} parent=11 // pred_check
        %p397 = pneg %p173
      $region34: #{tpu_custom_call.1} parent=11 // pred_check_branch
        %399 = sbr.rel (%p397) target = $region36
      $region35: #{tpu_custom_call.1} parent=11 // pred_region
        _
      $region36: #{tpu_custom_call.1} parent=11 // pred_fallthru
        _
      // Predicated region
      $region37: #{tpu_custom_call.1} parent=11 // pred_check
        %p400 = pneg %p194
      $region38: #{tpu_custom_call.1} parent=11 // pred_check_branch
        %402 = sbr.rel (%p400) target = $region40
      $region39: #{tpu_custom_call.1} parent=11 // pred_region
        _
      $region40: #{tpu_custom_call.1} parent=11 // pred_fallthru
        _
      // Predicated region
      $region41: #{tpu_custom_call.1} parent=11 // pred_check
        %p403 = pneg %p215
      $region42: #{tpu_custom_call.1} parent=11 // pred_check_branch
        %405 = sbr.rel (%p403) target = $region44
      $region43: #{tpu_custom_call.1} parent=11 // pred_region
        _
      $region44: #{tpu_custom_call.1} parent=11 // pred_fallthru
        _
      // Predicated region
      $region45: #{tpu_custom_call.1} parent=11 // pred_check
        %p406 = pneg %p236
      $region46: #{tpu_custom_call.1} parent=11 // pred_check_branch
        %408 = sbr.rel (%p406) target = $region48
      $region47: #{tpu_custom_call.1} parent=11 // pred_region
        _
      $region48: #{tpu_custom_call.1} parent=11 // pred_fallthru
        _
      // Predicated region
      $region49: #{tpu_custom_call.1} parent=11 // pred_check
        %p409 = pneg %p257
      $region50: #{tpu_custom_call.1} parent=11 // pred_check_branch
        %411 = sbr.rel (%p409) target = $region52
      $region51: #{tpu_custom_call.1} parent=11 // pred_region
        _
      $region52: #{tpu_custom_call.1} parent=11 // pred_fallthru
        _
      // Predicated region
      $region53: #{tpu_custom_call.1} parent=11 // pred_check
        %p412 = pneg %p278
      $region54: #{tpu_custom_call.1} parent=11 // pred_check_branch
        %414 = sbr.rel (%p412) target = $region56
      $region55: #{tpu_custom_call.1} parent=11 // pred_region
        _
      $region56: #{tpu_custom_call.1} parent=11 // pred_fallthru
        _
      // Predicated region
      $region57: #{tpu_custom_call.1} parent=11 // pred_check
        %p415 = pneg %p299
      $region58: #{tpu_custom_call.1} parent=11 // pred_check_branch
        %417 = sbr.rel (%p415) target = $region60
      $region59: #{tpu_custom_call.1} parent=11 // pred_region
        _
      $region60: #{tpu_custom_call.1} parent=11 // pred_fallthru
        _
      // Predicated region
      $region61: #{tpu_custom_call.1} parent=11 // pred_check
        %p418 = pneg %p320
      $region62: #{tpu_custom_call.1} parent=11 // pred_check_branch
        %420 = sbr.rel (%p418) target = $region64
      $region63: #{tpu_custom_call.1} parent=11 // pred_region
        _
      $region64: #{tpu_custom_call.1} parent=11 // pred_fallthru
        _
      // Predicated region
      $region65: #{tpu_custom_call.1} parent=11 // pred_check
        %p421 = pneg %p341
      $region66: #{tpu_custom_call.1} parent=11 // pred_check_branch
        %423 = sbr.rel (%p421) target = $region68
      $region67: #{tpu_custom_call.1} parent=11 // pred_region
        _
      $region68: #{tpu_custom_call.1} parent=11 // pred_fallthru
        _
    $region12: #{tpu_custom_call.1} parent=5 // pred_fallthru
      _
    %p424 = scmp.lt.s32.totalorder %s21, 2
    // Predicated region
    $region69: #{tpu_custom_call.1} parent=5 // pred_check
      %p425 = pneg %p424
    $region70: #{tpu_custom_call.1} parent=5 // pred_check_branch
      %427 = sbr.rel (%p425) target = $region72
    $region71: #{tpu_custom_call.1} parent=5 // pred_region
      // Predicated region
      $region73: #{tpu_custom_call.1} parent=71 // pred_check
        %p428 = pneg %p41
      $region74: #{tpu_custom_call.1} parent=71 // pred_check_branch
        %430 = sbr.rel (%p428) target = $region76
      $region75: #{tpu_custom_call.1} parent=71 // pred_region
        %p431 = scmp.lt.s32.totalorder %s21, 1
        %s432 = scalar_select %p431, %s21, 1
        %s433 = smul.addr %s432, 32
        %s434 = smul.addr %s433, 8
        %s435 = scalar_lea.vmem %s0, %s434
      $region76: #{tpu_custom_call.1} parent=71 // pred_fallthru
        _
    $region72: #{tpu_custom_call.1} parent=5 // pred_fallthru
      _
    %p436 = scmp.le.s32.totalorder 1, %s21
    %p437 = scmp.lt.s32.totalorder %s21, 3
    %p438 = pnand %p436, %p437
    %p439 = pneg %p438
    // Predicated region
    $region77: #{tpu_custom_call.1} parent=5 // pred_check
      _
    $region78: #{tpu_custom_call.1} parent=5 // pred_check_branch
      %441 = sbr.rel (%p438) target = $region80
    $region79: #{tpu_custom_call.1} parent=5 // pred_region
      %s442 = ssub.s32 %s21, 1
      %p443 = scmp.lt.s32.totalorder %s26, 1
      %s444 = scalar_select %p443, %s26, 1
      %s445 = smul.addr %s444, 32
      %s446 = smul.addr %s445, 8
      %s447 = scalar_lea.vmem %s0, %s446
      %p448 = pneg %p47
      %p449 = pneg %p44
      %p450 = pneg %p68
      %p451 = pneg %p65
      %p452 = pneg %p89
      %p453 = pneg %p86
      %p454 = pneg %p110
      %p455 = pneg %p107
      %p456 = pneg %p131
      %p457 = pneg %p128
      %p458 = pneg %p152
      %p459 = pneg %p149
      %p460 = pneg %p173
      %p461 = pneg %p170
      %p462 = pneg %p194
      %p463 = pneg %p191
      %p464 = pneg %p215
      %p465 = pneg %p212
      %p466 = pneg %p236
      %p467 = pneg %p233
      %p468 = pneg %p257
      %p469 = pneg %p254
      %p470 = pneg %p278
      %p471 = pneg %p275
      %p472 = pneg %p299
      %p473 = pneg %p296
      %p474 = pneg %p320
      %p475 = pneg %p317
      %p476 = pneg %p341
      %p477 = pneg %p338
      %p478 = pneg %p367
      %p479 = pneg %p364
      %p480 = scmp.lt.s32.totalorder %s26, 1
      %s481 = scalar_select %p480, %s26, 1
      %s482 = smul.addr %s481, 32
      %s483 = smul.addr %s482, 8
      %s484 = scalar_lea.vmem %s15, %s483
      %p485 = scmp.lt.s32.totalorder %s26, 1
      %s486 = scalar_select %p485, %s26, 1
      %s487 = smul.addr %s486, 32
      %s488 = smul.addr %s487, 8
      %s489 = scalar_lea.vmem %s0, %s488
      %p490 = scmp.lt.s32.totalorder %s26, 1
      %s491 = scalar_select %p490, %s26, 1
      %s492 = smul.addr %s491, 32
      %s493 = smul.addr %s492, 8
      %s494 = scalar_lea.vmem %s15, %s493
      %v496 = vld [vmem:[%s489] sm:$0xff]
      %v497 = vld [vmem:[%s489 + $0x8] sm:$0xff]
      %v498 = vld [vmem:[%s489 + $0x10] sm:$0xff]
      %v499 = vld [vmem:[%s489 + $0x18] sm:$0xff]
      %v500 = vld [vmem:[%s489 + $0x20] sm:$0xff]
      %v501 = vld [vmem:[%s489 + $0x28] sm:$0xff]
      %v502 = vld [vmem:[%s489 + $0x30] sm:$0xff]
      %v503 = vld [vmem:[%s489 + $0x38] sm:$0xff]
      %v504 = vld [vmem:[%s489 + $0x40] sm:$0xff]
      %v505 = vld [vmem:[%s489 + $0x48] sm:$0xff]
      %v506 = vld [vmem:[%s489 + $0x50] sm:$0xff]
      %v507 = vld [vmem:[%s489 + $0x58] sm:$0xff]
      %v508 = vld [vmem:[%s489 + $0x60] sm:$0xff]
      %v509 = vld [vmem:[%s489 + $0x68] sm:$0xff]
      %v510 = vld [vmem:[%s489 + $0x70] sm:$0xff]
      %v511 = vld [vmem:[%s489 + $0x78] sm:$0xff]
      %v512 = vld [vmem:[%s489 + $0x80] sm:$0xff]
      %v513 = vld [vmem:[%s489 + $0x88] sm:$0xff]
      %v514 = vld [vmem:[%s489 + $0x90] sm:$0xff]
      %v515 = vld [vmem:[%s489 + $0x98] sm:$0xff]
      %v516 = vld [vmem:[%s489 + $0xa0] sm:$0xff]
      %v517 = vld [vmem:[%s489 + $0xa8] sm:$0xff]
      %v518 = vld [vmem:[%s489 + $0xb0] sm:$0xff]
      %v519 = vld [vmem:[%s489 + $0xb8] sm:$0xff]
      %v520 = vld [vmem:[%s489 + $0xc0] sm:$0xff]
      %v521 = vld [vmem:[%s489 + $0xc8] sm:$0xff]
      %v522 = vld [vmem:[%s489 + $0xd0] sm:$0xff]
      %v523 = vld [vmem:[%s489 + $0xd8] sm:$0xff]
      %v524 = vld [vmem:[%s489 + $0xe0] sm:$0xff]
      %v525 = vld [vmem:[%s489 + $0xe8] sm:$0xff]
      %v526 = vld [vmem:[%s489 + $0xf0] sm:$0xff]
      %v527 = vld [vmem:[%s489 + $0xf8] sm:$0xff]
      %v528 = vpack.c.bf16 %v497, %v496
      %v529 = vpack.c.bf16 %v499, %v498
      %v530 = vpack.c.bf16 %v501, %v500
      %v531 = vpack.c.bf16 %v503, %v502
      %v532 = vpack.c.bf16 %v505, %v504
      %v533 = vpack.c.bf16 %v507, %v506
      %v534 = vpack.c.bf16 %v509, %v508
      %v535 = vpack.c.bf16 %v511, %v510
      %v536 = vpack.c.bf16 %v513, %v512
      %v537 = vpack.c.bf16 %v515, %v514
      %v538 = vpack.c.bf16 %v517, %v516
      %v539 = vpack.c.bf16 %v519, %v518
      %v540 = vpack.c.bf16 %v521, %v520
      %v541 = vpack.c.bf16 %v523, %v522
      %v542 = vpack.c.bf16 %v525, %v524
      %v543 = vpack.c.bf16 %v527, %v526
      %v544 = vld [vmem:[%s1] sm:$0xf]
      %v545 = vld [vmem:[%s1 + $0x4] sm:$0xf]
      %v546 = vld [vmem:[%s2] sm:$0x1]
      %v548 = vlaneseq
      %v549 = vshrl.u32 %v548, 7
      %v550 = vsub.s32 0, %v549
      %v551 = vrot.slane %v546, %v550
      %v555 = vunpack.c.l.b16 %v544
      %v556 = vunpack.c.l.b16 %v545
      %v557 = vpack.c.b16 %v556, %v555
      %vm559 = vcmask 130048
      %v561 = vsel %vm559, %v528, 0
      %v564 = vsel %vm559, %v529, 0
      %v567 = vsel %vm559, %v530, 0
      %v570 = vsel %vm559, %v531, 0
      %v573 = vsel %vm559, %v532, 0
      %v576 = vsel %vm559, %v533, 0
      %v579 = vsel %vm559, %v534, 0
      %v582 = vsel %vm559, %v535, 0
      %v585 = vsel %vm559, %v536, 0
      %v588 = vsel %vm559, %v537, 0
      %v591 = vsel %vm559, %v538, 0
      %v594 = vsel %vm559, %v539, 0
      %v597 = vsel %vm559, %v540, 0
      %v600 = vsel %vm559, %v541, 0
      %v603 = vsel %vm559, %v542, 0
      %v606 = vsel %vm559, %v543, 0
      %608 = vmatprep.subr.bf16.mxu0 0
      %609 = vmatpush1.bf16.msra.mxu0 0
      %610 = vmatprep.subr.bf16.mxu0 0
      %611 = vmatpush1.bf16.msra.mxu0 0
      %612 = vmatprep.subr.bf16.mxu0 0
      %613 = vmatpush1.bf16.msra.mxu0 0
      %614 = vmatprep.subr.bf16.mxu0 0
      %615 = vmatpush1.bf16.msra.mxu0 0
      %616 = vmatprep.subr.bf16.mxu0 0
      %617 = vmatpush1.bf16.msra.mxu0 0
      %618 = vmatprep.subr.bf16.mxu0 0
      %619 = vmatpush1.bf16.msra.mxu0 0
      %620 = vmatprep.subr.bf16.mxu0 0
      %621 = vmatpush1.bf16.msra.mxu0 0
      %622 = vmatprep.subr.bf16.mxu0 0
      %623 = vmatpush1.bf16.msra.mxu0 %v557
      %624 = vmatprep.subr.bf16.mxu0 0
      %625 = vmatpush2.bf16.msra.mxu0 0
      %626 = vmatprep.subr.bf16.mxu0 0
      %627 = vmatpush2.bf16.msra.mxu0 0
      %628 = vmatprep.subr.bf16.mxu0 0
      %629 = vmatpush2.bf16.msra.mxu0 0
      %630 = vmatprep.subr.bf16.mxu0 0
      %631 = vmatpush2.bf16.msra.mxu0 0
      %632 = vmatprep.subr.bf16.mxu0 0
      %633 = vmatpush2.bf16.msra.mxu0 0
      %634 = vmatprep.subr.bf16.mxu0 0
      %635 = vmatpush2.bf16.msra.mxu0 0
      %636 = vmatprep.subr.bf16.mxu0 0
      %637 = vmatpush2.bf16.msra.mxu0 0
      %638 = vmatprep.subr.bf16.mxu0 0
      %639 = vmatpush2.bf16.msra.mxu0 0
      %640 = vmatprep.mubr.bf16.mxu0 0
      %641 = vmatmul.mubr.bf16.gmra.mxu0 %v561
      %v642 = vpop.f32.mrf.mxu0
      %v643 = vadd.f32 %v551, %v642
      %v644 = vpop.f32.mrf.mxu0
      %v645 = vpop.f32.mrf.mxu0
      %v646 = vadd.f32 %v551, %v645
      %v647 = vpop.f32.mrf.mxu0
      %648 = vmatprep.mubr.bf16.mxu0 0
      %649 = vmatmul.mubr.bf16.gmra.mxu0 %v564
      %v650 = vpop.f32.mrf.mxu0
      %v651 = vadd.f32 %v551, %v650
      %v652 = vpop.f32.mrf.mxu0
      %v653 = vpop.f32.mrf.mxu0
      %v654 = vadd.f32 %v551, %v653
      %v655 = vpop.f32.mrf.mxu0
      %656 = vmatprep.mubr.bf16.mxu0 0
      %657 = vmatmul.mubr.bf16.gmra.mxu0 %v567
      %v658 = vpop.f32.mrf.mxu0
      %v659 = vadd.f32 %v551, %v658
      %v660 = vpop.f32.mrf.mxu0
      %v661 = vpop.f32.mrf.mxu0
      %v662 = vadd.f32 %v551, %v661
      %v663 = vpop.f32.mrf.mxu0
      %664 = vmatprep.mubr.bf16.mxu0 0
      %665 = vmatmul.mubr.bf16.gmra.mxu0 %v570
      %v666 = vpop.f32.mrf.mxu0
      %v667 = vadd.f32 %v551, %v666
      %v668 = vpop.f32.mrf.mxu0
      %v669 = vpop.f32.mrf.mxu0
      %v670 = vadd.f32 %v551, %v669
      %v671 = vpop.f32.mrf.mxu0
      %672 = vmatprep.mubr.bf16.mxu0 0
      %673 = vmatmul.mubr.bf16.gmra.mxu0 %v573
      %v674 = vpop.f32.mrf.mxu0
      %v675 = vadd.f32 %v551, %v674
      %v676 = vpop.f32.mrf.mxu0
      %v677 = vpop.f32.mrf.mxu0
      %v678 = vadd.f32 %v551, %v677
      %v679 = vpop.f32.mrf.mxu0
      %680 = vmatprep.mubr.bf16.mxu0 0
      %681 = vmatmul.mubr.bf16.gmra.mxu0 %v576
      %v682 = vpop.f32.mrf.mxu0
      %v683 = vadd.f32 %v551, %v682
      %v684 = vpop.f32.mrf.mxu0
      %v685 = vpop.f32.mrf.mxu0
      %v686 = vadd.f32 %v551, %v685
      %v687 = vpop.f32.mrf.mxu0
      %688 = vmatprep.mubr.bf16.mxu0 0
      %689 = vmatmul.mubr.bf16.gmra.mxu0 %v579
      %v690 = vpop.f32.mrf.mxu0
      %v691 = vadd.f32 %v551, %v690
      %v692 = vpop.f32.mrf.mxu0
      %v693 = vpop.f32.mrf.mxu0
      %v694 = vadd.f32 %v551, %v693
      %v695 = vpop.f32.mrf.mxu0
      %696 = vmatprep.mubr.bf16.mxu0 0
      %697 = vmatmul.mubr.bf16.gmra.mxu0 %v582
      %v698 = vpop.f32.mrf.mxu0
      %v699 = vadd.f32 %v551, %v698
      %v700 = vpop.f32.mrf.mxu0
      %v701 = vpop.f32.mrf.mxu0
      %v702 = vadd.f32 %v551, %v701
      %v703 = vpop.f32.mrf.mxu0
      %704 = vmatprep.mubr.bf16.mxu0 0
      %705 = vmatmul.mubr.bf16.gmra.mxu0 %v585
      %v706 = vpop.f32.mrf.mxu0
      %v707 = vadd.f32 %v551, %v706
      %v708 = vpop.f32.mrf.mxu0
      %v709 = vpop.f32.mrf.mxu0
      %v710 = vadd.f32 %v551, %v709
      %v711 = vpop.f32.mrf.mxu0
      %712 = vmatprep.mubr.bf16.mxu0 0
      %713 = vmatmul.mubr.bf16.gmra.mxu0 %v588
      %v714 = vpop.f32.mrf.mxu0
      %v715 = vadd.f32 %v551, %v714
      %v716 = vpop.f32.mrf.mxu0
      %v717 = vpop.f32.mrf.mxu0
      %v718 = vadd.f32 %v551, %v717
      %v719 = vpop.f32.mrf.mxu0
      %720 = vmatprep.mubr.bf16.mxu0 0
      %721 = vmatmul.mubr.bf16.gmra.mxu0 %v591
      %v722 = vpop.f32.mrf.mxu0
      %v723 = vadd.f32 %v551, %v722
      %v724 = vpop.f32.mrf.mxu0
      %v725 = vpop.f32.mrf.mxu0
      %v726 = vadd.f32 %v551, %v725
      %v727 = vpop.f32.mrf.mxu0
      %728 = vmatprep.mubr.bf16.mxu0 0
      %729 = vmatmul.mubr.bf16.gmra.mxu0 %v594
      %v730 = vpop.f32.mrf.mxu0
      %v731 = vadd.f32 %v551, %v730
      %v732 = vpop.f32.mrf.mxu0
      %v733 = vpop.f32.mrf.mxu0
      %v734 = vadd.f32 %v551, %v733
      %v735 = vpop.f32.mrf.mxu0
      %736 = vmatprep.mubr.bf16.mxu0 0
      %737 = vmatmul.mubr.bf16.gmra.mxu0 %v597
      %v738 = vpop.f32.mrf.mxu0
      %v739 = vadd.f32 %v551, %v738
      %v740 = vpop.f32.mrf.mxu0
      %v741 = vpop.f32.mrf.mxu0
      %v742 = vadd.f32 %v551, %v741
      %v743 = vpop.f32.mrf.mxu0
      %744 = vmatprep.mubr.bf16.mxu0 0
      %745 = vmatmul.mubr.bf16.gmra.mxu0 %v600
      %v746 = vpop.f32.mrf.mxu0
      %v747 = vadd.f32 %v551, %v746
      %v748 = vpop.f32.mrf.mxu0
      %v749 = vpop.f32.mrf.mxu0
      %v750 = vadd.f32 %v551, %v749
      %v751 = vpop.f32.mrf.mxu0
      %752 = vmatprep.mubr.bf16.mxu0 0
      %753 = vmatmul.mubr.bf16.gmra.mxu0 %v603
      %v754 = vpop.f32.mrf.mxu0
      %v755 = vadd.f32 %v551, %v754
      %v756 = vpop.f32.mrf.mxu0
      %v757 = vpop.f32.mrf.mxu0
      %v758 = vadd.f32 %v551, %v757
      %v759 = vpop.f32.mrf.mxu0
      %760 = vmatprep.mubr.bf16.mxu0 0
      %761 = vmatmul.mubr.bf16.gmra.mxu0 %v606
      %v762 = vpop.f32.mrf.mxu0
      %v763 = vadd.f32 %v551, %v762
      %v764 = vpop.f32.mrf.mxu0
      %v765 = vpop.f32.mrf.mxu0
      %v766 = vadd.f32 %v551, %v765
      %v767 = vpop.f32.mrf.mxu0
      %768 = vdwg.mxu0
      %v769 = vmax.f32 %v643, 0.0
      %v770 = vmax.f32 %v646, 0.0
      %v771 = vmax.f32 %v651, 0.0
      %v772 = vmax.f32 %v654, 0.0
      %v773 = vmax.f32 %v659, 0.0
      %v774 = vmax.f32 %v662, 0.0
      %v775 = vmax.f32 %v667, 0.0
      %v776 = vmax.f32 %v670, 0.0
      %v777 = vmax.f32 %v675, 0.0
      %v778 = vmax.f32 %v678, 0.0
      %v779 = vmax.f32 %v683, 0.0
      %v780 = vmax.f32 %v686, 0.0
      %v781 = vmax.f32 %v691, 0.0
      %v782 = vmax.f32 %v694, 0.0
      %v783 = vmax.f32 %v699, 0.0
      %v784 = vmax.f32 %v702, 0.0
      %v785 = vmax.f32 %v707, 0.0
      %v786 = vmax.f32 %v710, 0.0
      %v787 = vmax.f32 %v715, 0.0
      %v788 = vmax.f32 %v718, 0.0
      %v789 = vmax.f32 %v723, 0.0
      %v790 = vmax.f32 %v726, 0.0
      %v791 = vmax.f32 %v731, 0.0
      %v792 = vmax.f32 %v734, 0.0
      %v793 = vmax.f32 %v739, 0.0
      %v794 = vmax.f32 %v742, 0.0
      %v795 = vmax.f32 %v747, 0.0
      %v796 = vmax.f32 %v750, 0.0
      %v797 = vmax.f32 %v755, 0.0
      %v798 = vmax.f32 %v758, 0.0
      %v799 = vmax.f32 %v763, 0.0
      %v800 = vmax.f32 %v766, 0.0
      %vm801 = vcmask 31744
      %v802 = vsel %vm801, %v769, 0.0
      %v803 = vsel %vm801, %v771, 0.0
      %v804 = vadd.f32 %v802, %v803
      %v805 = vsel %vm801, %v773, 0.0
      %v806 = vadd.f32 %v804, %v805
      %v807 = vsel %vm801, %v775, 0.0
      %v808 = vadd.f32 %v806, %v807
      %v809 = vsel %vm801, %v777, 0.0
      %v810 = vadd.f32 %v808, %v809
      %v811 = vsel %vm801, %v779, 0.0
      %v812 = vadd.f32 %v810, %v811
      %v813 = vsel %vm801, %v781, 0.0
      %v814 = vadd.f32 %v812, %v813
      %v815 = vsel %vm801, %v783, 0.0
      %v816 = vadd.f32 %v814, %v815
      %v817 = vsel %vm801, %v785, 0.0
      %v818 = vadd.f32 %v816, %v817
      %v819 = vsel %vm801, %v787, 0.0
      %v820 = vadd.f32 %v818, %v819
      %v821 = vsel %vm801, %v789, 0.0
      %v822 = vadd.f32 %v820, %v821
      %v823 = vsel %vm801, %v791, 0.0
      %v824 = vadd.f32 %v822, %v823
      %v825 = vsel %vm801, %v793, 0.0
      %v826 = vadd.f32 %v824, %v825
      %v827 = vsel %vm801, %v795, 0.0
      %v828 = vadd.f32 %v826, %v827
      %v829 = vsel %vm801, %v797, 0.0
      %v830 = vadd.f32 %v828, %v829
      %v831 = vsel %vm801, %v799, 0.0
      %v832 = vadd.f32 %v830, %v831
      %v833 = vsel %vm801, %v770, 0.0
      %v834 = vsel %vm801, %v772, 0.0
      %v835 = vadd.f32 %v833, %v834
      %v836 = vsel %vm801, %v774, 0.0
      %v837 = vadd.f32 %v835, %v836
      %v838 = vsel %vm801, %v776, 0.0
      %v839 = vadd.f32 %v837, %v838
      %v840 = vsel %vm801, %v778, 0.0
      %v841 = vadd.f32 %v839, %v840
      %v842 = vsel %vm801, %v780, 0.0
      %v843 = vadd.f32 %v841, %v842
      %v844 = vsel %vm801, %v782, 0.0
      %v845 = vadd.f32 %v843, %v844
      %v846 = vsel %vm801, %v784, 0.0
      %v847 = vadd.f32 %v845, %v846
      %v848 = vsel %vm801, %v786, 0.0
      %v849 = vadd.f32 %v847, %v848
      %v850 = vsel %vm801, %v788, 0.0
      %v851 = vadd.f32 %v849, %v850
      %v852 = vsel %vm801, %v790, 0.0
      %v853 = vadd.f32 %v851, %v852
      %v854 = vsel %vm801, %v792, 0.0
      %v855 = vadd.f32 %v853, %v854
      %v856 = vsel %vm801, %v794, 0.0
      %v857 = vadd.f32 %v855, %v856
      %v858 = vsel %vm801, %v796, 0.0
      %v859 = vadd.f32 %v857, %v858
      %v860 = vsel %vm801, %v798, 0.0
      %v861 = vadd.f32 %v859, %v860
      %v862 = vsel %vm801, %v800, 0.0
      %v863 = vadd.f32 %v861, %v862
      %v864 = vrcp.pop 16.0
      %v865 = vmul.f32 %v832, %v864
      %v866 = vmul.f32 %v863, %v864
      %v867 = vadd.f32 %v802, %v833
      %v868 = vrot.slane %v867, 4
      %v869 = vadd.f32 %v867, %v868
      %v870 = vrot.slane %v869, 2
      %v871 = vadd.f32 %v869, %v870
      %v872 = vrot.slane %v871, 1
      %v873 = vadd.f32 %v871, %v872
      %v874 = vadd.f32 %v803, %v834
      %v875 = vrot.slane %v874, 4
      %v876 = vadd.f32 %v874, %v875
      %v877 = vrot.slane %v876, 2
      %v878 = vadd.f32 %v876, %v877
      %v879 = vrot.slane %v878, 1
      %v880 = vadd.f32 %v878, %v879
      %v881 = vadd.f32 %v805, %v836
      %v882 = vrot.slane %v881, 4
      %v883 = vadd.f32 %v881, %v882
      %v884 = vrot.slane %v883, 2
      %v885 = vadd.f32 %v883, %v884
      %v886 = vrot.slane %v885, 1
      %v887 = vadd.f32 %v885, %v886
      %v888 = vadd.f32 %v807, %v838
      %v889 = vrot.slane %v888, 4
      %v890 = vadd.f32 %v888, %v889
      %v891 = vrot.slane %v890, 2
      %v892 = vadd.f32 %v890, %v891
      %v893 = vrot.slane %v892, 1
      %v894 = vadd.f32 %v892, %v893
      %v895 = vadd.f32 %v809, %v840
      %v896 = vrot.slane %v895, 4
      %v897 = vadd.f32 %v895, %v896
      %v898 = vrot.slane %v897, 2
      %v899 = vadd.f32 %v897, %v898
      %v900 = vrot.slane %v899, 1
      %v901 = vadd.f32 %v899, %v900
      %v902 = vadd.f32 %v811, %v842
      %v903 = vrot.slane %v902, 4
      %v904 = vadd.f32 %v902, %v903
      %v905 = vrot.slane %v904, 2
      %v906 = vadd.f32 %v904, %v905
      %v907 = vrot.slane %v906, 1
      %v908 = vadd.f32 %v906, %v907
      %v909 = vadd.f32 %v813, %v844
      %v910 = vrot.slane %v909, 4
      %v911 = vadd.f32 %v909, %v910
      %v912 = vrot.slane %v911, 2
      %v913 = vadd.f32 %v911, %v912
      %v914 = vrot.slane %v913, 1
      %v915 = vadd.f32 %v913, %v914
      %v916 = vadd.f32 %v815, %v846
      %v917 = vrot.slane %v916, 4
      %v918 = vadd.f32 %v916, %v917
      %v919 = vrot.slane %v918, 2
      %v920 = vadd.f32 %v918, %v919
      %v921 = vrot.slane %v920, 1
      %v922 = vadd.f32 %v920, %v921
      %v923 = vadd.f32 %v817, %v848
      %v924 = vrot.slane %v923, 4
      %v925 = vadd.f32 %v923, %v924
      %v926 = vrot.slane %v925, 2
      %v927 = vadd.f32 %v925, %v926
      %v928 = vrot.slane %v927, 1
      %v929 = vadd.f32 %v927, %v928
      %v930 = vadd.f32 %v819, %v850
      %v931 = vrot.slane %v930, 4
      %v932 = vadd.f32 %v930, %v931
      %v933 = vrot.slane %v932, 2
      %v934 = vadd.f32 %v932, %v933
      %v935 = vrot.slane %v934, 1
      %v936 = vadd.f32 %v934, %v935
      %v937 = vadd.f32 %v821, %v852
      %v938 = vrot.slane %v937, 4
      %v939 = vadd.f32 %v937, %v938
      %v940 = vrot.slane %v939, 2
      %v941 = vadd.f32 %v939, %v940
      %v942 = vrot.slane %v941, 1
      %v943 = vadd.f32 %v941, %v942
      %v944 = vadd.f32 %v823, %v854
      %v945 = vrot.slane %v944, 4
      %v946 = vadd.f32 %v944, %v945
      %v947 = vrot.slane %v946, 2
      %v948 = vadd.f32 %v946, %v947
      %v949 = vrot.slane %v948, 1
      %v950 = vadd.f32 %v948, %v949
      %v951 = vadd.f32 %v825, %v856
      %v952 = vrot.slane %v951, 4
      %v953 = vadd.f32 %v951, %v952
      %v954 = vrot.slane %v953, 2
      %v955 = vadd.f32 %v953, %v954
      %v956 = vrot.slane %v955, 1
      %v957 = vadd.f32 %v955, %v956
      %v958 = vadd.f32 %v827, %v858
      %v959 = vrot.slane %v958, 4
      %v960 = vadd.f32 %v958, %v959
      %v961 = vrot.slane %v960, 2
      %v962 = vadd.f32 %v960, %v961
      %v963 = vrot.slane %v962, 1
      %v964 = vadd.f32 %v962, %v963
      %v965 = vadd.f32 %v829, %v860
      %v966 = vrot.slane %v965, 4
      %v967 = vadd.f32 %v965, %v966
      %v968 = vrot.slane %v967, 2
      %v969 = vadd.f32 %v967, %v968
      %v970 = vrot.slane %v969, 1
      %v971 = vadd.f32 %v969, %v970
      %v972 = vadd.f32 %v831, %v862
      %v973 = vrot.slane %v972, 4
      %v974 = vadd.f32 %v972, %v973
      %v975 = vrot.slane %v974, 2
      %v976 = vadd.f32 %v974, %v975
      %v977 = vrot.slane %v976, 1
      %v978 = vadd.f32 %v976, %v977
      %v979 = vmul.f32 %v873, %v864
      %v980 = vmul.f32 %v880, %v864
      %v981 = vmul.f32 %v887, %v864
      %v982 = vmul.f32 %v894, %v864
      %v983 = vmul.f32 %v901, %v864
      %v984 = vmul.f32 %v908, %v864
      %v985 = vmul.f32 %v915, %v864
      %v986 = vmul.f32 %v922, %v864
      %v987 = vmul.f32 %v929, %v864
      %v988 = vmul.f32 %v936, %v864
      %v989 = vmul.f32 %v943, %v864
      %v990 = vmul.f32 %v950, %v864
      %v991 = vmul.f32 %v957, %v864
      %v992 = vmul.f32 %v964, %v864
      %v993 = vmul.f32 %v971, %v864
      %v994 = vmul.f32 %v978, %v864
      %v995 = vld [vmem:[%s11] sm:$0xff]
      %v996 = vld [vmem:[%s11 + $0x8] sm:$0xff]
      %vm997 = vcmp.ge.s32.totalorder %v995, 1
      %vm998 = vcmp.ge.s32.totalorder %v996, 1
      %v999 = vrot.slane %v865, 7
      %v1000 = vrot.slane %v866, 7
      %v1001 = vlaneseq
      %v1002 = vshrl.u32 %v1001, 7
      %vm1003 = vcmp.lt.s32.totalorder %v1002, 1
      %v1004 = vsel %vm1003, %v999, %v1000
      %v1005 = vsel %vm1003, %v1000, %v999
      %v1006 = vsel %vm997, 1, 0
      %v1007 = vsel %vm998, 1, 0
      %1008 = vset.pattern.permute.xlu0 0
      %1009 = vperm.xlu0 %1008, %v1006
      %v1010 = vpop.permute.xlu0 %1009
      %1011 = vset.pattern.permute.xlu0 0
      %1012 = vperm.xlu0 %1011, %v1007
      %v1013 = vpop.permute.xlu0 %1012
      %vm1014 = vcmp.eq.s32.totalorder %v1010, 1
      %vm1015 = vcmp.eq.s32.totalorder %v1013, 1
      %v1016 = vsel %vm1014, %v1005, 0.0
      %v1017 = vsel %vm1015, %v1004, 0.0
      %v1018 = vpack.c.bf16 %v1017, %v1016
      %v1019 = vld [vmem:[%s3] sm:$0x3]
      %v1020 = vpack.c.bf16 %v866, %v865
      %s1021 = scalar_lea.vmem %s3, 2
      %v1022 = vld [vmem:[%s1021] sm:$0x3]
      %v1024 = vsel %vm801, %v1020, 0
      %vm1026 = vcmask 1041408
      %v1028 = vsel %vm1026, %v1022, 0
      %1030 = vmatprep.subr.bf16.mxu0 0
      %1031 = vmatpush1.bf16.msra.mxu0 0
      %1032 = vmatprep.subr.bf16.mxu0 0
      %1033 = vmatpush1.bf16.msra.mxu0 0
      %1034 = vmatprep.subr.bf16.mxu0 0
      %1035 = vmatpush1.bf16.msra.mxu0 0
      %1036 = vmatprep.subr.bf16.mxu0 0
      %1037 = vmatpush1.bf16.msra.mxu0 0
      %1038 = vmatprep.subr.bf16.mxu0 0
      %1039 = vmatpush1.bf16.msra.mxu0 0
      %1040 = vmatprep.subr.bf16.mxu0 0
      %1041 = vmatpush1.bf16.msra.mxu0 0
      %1042 = vmatprep.subr.bf16.mxu0 0
      %1043 = vmatpush1.bf16.msra.mxu0 0
      %1044 = vmatprep.subr.bf16.mxu0 0
      %1045 = vmatpush1.bf16.msra.mxu0 %v1028
      %1046 = vmatprep.subr.bf16.mxu0 0
      %1047 = vmatpush2.bf16.msra.mxu0 0
      %1048 = vmatprep.subr.bf16.mxu0 0
      %1049 = vmatpush2.bf16.msra.mxu0 0
      %1050 = vmatprep.subr.bf16.mxu0 0
      %1051 = vmatpush2.bf16.msra.mxu0 0
      %1052 = vmatprep.subr.bf16.mxu0 0
      %1053 = vmatpush2.bf16.msra.mxu0 0
      %1054 = vmatprep.subr.bf16.mxu0 0
      %1055 = vmatpush2.bf16.msra.mxu0 0
      %1056 = vmatprep.subr.bf16.mxu0 0
      %1057 = vmatpush2.bf16.msra.mxu0 0
      %1058 = vmatprep.subr.bf16.mxu0 0
      %1059 = vmatpush2.bf16.msra.mxu0 0
      %1060 = vmatprep.subr.bf16.mxu0 0
      %1061 = vmatpush2.bf16.msra.mxu0 0
      %1062 = vmatprep.mubr.bf16.mxu0 0
      %1063 = vmatmul.mubr.bf16.gmra.mxu0 %v1024
      %v1064 = vpop.f32.mrf.mxu0
      %v1065 = vadd.f32 0.0, %v1064
      %v1066 = vpop.f32.mrf.mxu0
      %v1067 = vpop.f32.mrf.mxu0
      %v1068 = vadd.f32 0.0, %v1067
      %v1069 = vpop.f32.mrf.mxu0
      %1070 = vdwg.mxu0
      %v1072 = vsel %vm801, %v1018, 0
      %v1075 = vsel %vm1026, %v1019, 0
      %1077 = vmatprep.subr.bf16.mxu0 0
      %1078 = vmatpush1.bf16.msra.mxu0 0
      %1079 = vmatprep.subr.bf16.mxu0 0
      %1080 = vmatpush1.bf16.msra.mxu0 0
      %1081 = vmatprep.subr.bf16.mxu0 0
      %1082 = vmatpush1.bf16.msra.mxu0 0
      %1083 = vmatprep.subr.bf16.mxu0 0
      %1084 = vmatpush1.bf16.msra.mxu0 0
      %1085 = vmatprep.subr.bf16.mxu0 0
      %1086 = vmatpush1.bf16.msra.mxu0 0
      %1087 = vmatprep.subr.bf16.mxu0 0
      %1088 = vmatpush1.bf16.msra.mxu0 0
      %1089 = vmatprep.subr.bf16.mxu0 0
      %1090 = vmatpush1.bf16.msra.mxu0 0
      %1091 = vmatprep.subr.bf16.mxu0 0
      %1092 = vmatpush1.bf16.msra.mxu0 %v1075
      %1093 = vmatprep.subr.bf16.mxu0 0
      %1094 = vmatpush2.bf16.msra.mxu0 0
      %1095 = vmatprep.subr.bf16.mxu0 0
      %1096 = vmatpush2.bf16.msra.mxu0 0
      %1097 = vmatprep.subr.bf16.mxu0 0
      %1098 = vmatpush2.bf16.msra.mxu0 0
      %1099 = vmatprep.subr.bf16.mxu0 0
      %1100 = vmatpush2.bf16.msra.mxu0 0
      %1101 = vmatprep.subr.bf16.mxu0 0
      %1102 = vmatpush2.bf16.msra.mxu0 0
      %1103 = vmatprep.subr.bf16.mxu0 0
      %1104 = vmatpush2.bf16.msra.mxu0 0
      %1105 = vmatprep.subr.bf16.mxu0 0
      %1106 = vmatpush2.bf16.msra.mxu0 0
      %1107 = vmatprep.subr.bf16.mxu0 0
      %1108 = vmatpush2.bf16.msra.mxu0 0
      %1109 = vmatprep.mubr.bf16.mxu0 0
      %1110 = vmatmul.mubr.bf16.gmra.mxu0 %v1072
      %v1111 = vpop.f32.mrf.mxu0
      %v1112 = vadd.f32 %v1065, %v1111
      %v1113 = vpop.f32.mrf.mxu0
      %v1114 = vpop.f32.mrf.mxu0
      %v1115 = vadd.f32 %v1068, %v1114
      %v1116 = vpop.f32.mrf.mxu0
      %1117 = vdwg.mxu0
      %vm1118 = vcmp.le.s32.totalorder %v995, 14
      %vm1119 = vcmp.le.s32.totalorder %v996, 14
      %v1120 = vrot.slane %v865, 1
      %v1121 = vrot.slane %v866, 1
      %vm1122 = vcmp.lt.s32.totalorder %v1002, 7
      %v1123 = vsel %vm1122, %v1120, %v1121
      %v1124 = vsel %vm1122, %v1121, %v1120
      %v1125 = vsel %vm1118, 1, 0
      %v1126 = vsel %vm1119, 1, 0
      %1127 = vset.pattern.permute.xlu0 0
      %1128 = vperm.xlu0 %1127, %v1125
      %v1129 = vpop.permute.xlu0 %1128
      %1130 = vset.pattern.permute.xlu0 0
      %1131 = vperm.xlu0 %1130, %v1126
      %v1132 = vpop.permute.xlu0 %1131
      %vm1133 = vcmp.eq.s32.totalorder %v1129, 1
      %vm1134 = vcmp.eq.s32.totalorder %v1132, 1
      %v1135 = vsel %vm1133, %v1123, 0.0
      %v1136 = vsel %vm1134, %v1124, 0.0
      %v1137 = vpack.c.bf16 %v1136, %v1135
      %s1138 = scalar_lea.vmem %s3, 4
      %v1139 = vld [vmem:[%s1138] sm:$0x3]
      %v1141 = vsel %vm801, %v1137, 0
      %v1144 = vsel %vm1026, %v1139, 0
      %1146 = vmatprep.subr.bf16.mxu0 0
      %1147 = vmatpush1.bf16.msra.mxu0 0
      %1148 = vmatprep.subr.bf16.mxu0 0
      %1149 = vmatpush1.bf16.msra.mxu0 0
      %1150 = vmatprep.subr.bf16.mxu0 0
      %1151 = vmatpush1.bf16.msra.mxu0 0
      %1152 = vmatprep.subr.bf16.mxu0 0
      %1153 = vmatpush1.bf16.msra.mxu0 0
      %1154 = vmatprep.subr.bf16.mxu0 0
      %1155 = vmatpush1.bf16.msra.mxu0 0
      %1156 = vmatprep.subr.bf16.mxu0 0
      %1157 = vmatpush1.bf16.msra.mxu0 0
      %1158 = vmatprep.subr.bf16.mxu0 0
      %1159 = vmatpush1.bf16.msra.mxu0 0
      %1160 = vmatprep.subr.bf16.mxu0 0
      %1161 = vmatpush1.bf16.msra.mxu0 %v1144
      %1162 = vmatprep.subr.bf16.mxu0 0
      %1163 = vmatpush2.bf16.msra.mxu0 0
      %1164 = vmatprep.subr.bf16.mxu0 0
      %1165 = vmatpush2.bf16.msra.mxu0 0
      %1166 = vmatprep.subr.bf16.mxu0 0
      %1167 = vmatpush2.bf16.msra.mxu0 0
      %1168 = vmatprep.subr.bf16.mxu0 0
      %1169 = vmatpush2.bf16.msra.mxu0 0
      %1170 = vmatprep.subr.bf16.mxu0 0
      %1171 = vmatpush2.bf16.msra.mxu0 0
      %1172 = vmatprep.subr.bf16.mxu0 0
      %1173 = vmatpush2.bf16.msra.mxu0 0
      %1174 = vmatprep.subr.bf16.mxu0 0
      %1175 = vmatpush2.bf16.msra.mxu0 0
      %1176 = vmatprep.subr.bf16.mxu0 0
      %1177 = vmatpush2.bf16.msra.mxu0 0
      %1178 = vmatprep.mubr.bf16.mxu0 0
      %1179 = vmatmul.mubr.bf16.gmra.mxu0 %v1141
      %v1180 = vpop.f32.mrf.mxu0
      %v1181 = vadd.f32 0.0, %v1180
      %v1182 = vpop.f32.mrf.mxu0
      %v1183 = vpop.f32.mrf.mxu0
      %v1184 = vadd.f32 0.0, %v1183
      %v1185 = vpop.f32.mrf.mxu0
      %1186 = vdwg.mxu0
      %v1187 = vadd.f32 %v1112, %v1181
      %v1188 = vadd.f32 %v1115, %v1184
      %v1189 = vld [vmem:[%s4] sm:$0x1]
      %v1191 = vlaneseq
      %v1192 = vshrl.u32 %v1191, 7
      %v1193 = vsub.s32 0, %v1192
      %v1194 = vrot.slane %v1189, %v1193
      %v1196 = vadd.f32 %v1187, %v1194
      %v1197 = vadd.f32 %v1188, %v1194
      %v1198 = vld [vmem:[%s12] sm:$0xff]
      %v1199 = vld [vmem:[%s12 + $0x8] sm:$0xff]
      %vm1200 = vcmp.ge.s32.totalorder %v1198, 1
      %vm1201 = vcmp.ge.s32.totalorder %v1199, 1
      %vm1218 = vcmask 1041409
      %v1219 = vsel %vm1218, %v980, %v979
      %vm1220 = vcmask 1042434
      %v1221 = vsel %vm1220, %v981, %v1219
      %vm1222 = vcmask 1043459
      %v1223 = vsel %vm1222, %v982, %v1221
      %vm1224 = vcmask 1044484
      %v1225 = vsel %vm1224, %v983, %v1223
      %vm1226 = vcmask 1045509
      %v1227 = vsel %vm1226, %v984, %v1225
      %vm1228 = vcmask 1046534
      %v1229 = vsel %vm1228, %v985, %v1227
      %vm1230 = vcmask 1047559
      %v1231 = vsel %vm1230, %v986, %v1229
      %v1232 = vsel %vm1218, %v988, %v987
      %v1233 = vsel %vm1220, %v989, %v1232
      %v1234 = vsel %vm1222, %v990, %v1233
      %v1235 = vsel %vm1224, %v991, %v1234
      %v1236 = vsel %vm1226, %v992, %v1235
      %v1237 = vsel %vm1228, %v993, %v1236
      %v1238 = vsel %vm1230, %v994, %v1237
      %v1241 = vrot.slane %v1231, 7
      %v1242 = vrot.slane %v1238, 7
      %v1243 = vsel %vm1003, %v1241, %v1242
      %v1244 = vsel %vm1003, %v1242, %v1241
      %v1245 = vsel %vm1200, 1, 0
      %v1246 = vsel %vm1201, 1, 0
      %1247 = vset.pattern.permute.xlu0 0
      %1248 = vperm.xlu0 %1247, %v1245
      %v1249 = vpop.permute.xlu0 %1248
      %1250 = vset.pattern.permute.xlu0 0
      %1251 = vperm.xlu0 %1250, %v1246
      %v1252 = vpop.permute.xlu0 %1251
      %vm1253 = vcmp.eq.s32.totalorder %v1249, 1
      %vm1254 = vcmp.eq.s32.totalorder %v1252, 1
      %v1255 = vsel %vm1253, %v1244, 0.0
      %v1256 = vsel %vm1254, %v1243, 0.0
      %v1257 = vpack.c.bf16 %v1256, %v1255
      %v1258 = vld [vmem:[%s5] sm:$0x3]
      %v1259 = vpack.c.bf16 %v979, %v979
      %v1260 = vpack.c.bf16 %v980, %v980
      %v1261 = vpack.c.bf16 %v981, %v981
      %v1262 = vpack.c.bf16 %v982, %v982
      %v1263 = vpack.c.bf16 %v983, %v983
      %v1264 = vpack.c.bf16 %v984, %v984
      %v1265 = vpack.c.bf16 %v985, %v985
      %v1266 = vpack.c.bf16 %v986, %v986
      %v1267 = vpack.c.bf16 %v987, %v987
      %v1268 = vpack.c.bf16 %v988, %v988
      %v1269 = vpack.c.bf16 %v989, %v989
      %v1270 = vpack.c.bf16 %v990, %v990
      %v1271 = vpack.c.bf16 %v991, %v991
      %v1272 = vpack.c.bf16 %v992, %v992
      %v1273 = vpack.c.bf16 %v993, %v993
      %v1274 = vpack.c.bf16 %v994, %v994
      %s1275 = scalar_lea.vmem %s5, 2
      %v1276 = vld [vmem:[%s1275] sm:$0x3]
      %v1293 = vunpack.c.l.b16 %v1259
      %v1294 = vunpack.c.l.b16 %v1260
      %v1295 = vunpack.c.l.b16 %v1261
      %v1296 = vunpack.c.l.b16 %v1262
      %v1297 = vunpack.c.l.b16 %v1263
      %v1298 = vunpack.c.l.b16 %v1264
      %v1299 = vunpack.c.l.b16 %v1265
      %v1300 = vunpack.c.l.b16 %v1266
      %v1301 = vunpack.c.l.b16 %v1267
      %v1302 = vunpack.c.l.b16 %v1268
      %v1303 = vunpack.c.l.b16 %v1269
      %v1304 = vunpack.c.l.b16 %v1270
      %v1305 = vunpack.c.l.b16 %v1271
      %v1306 = vunpack.c.l.b16 %v1272
      %v1307 = vunpack.c.l.b16 %v1273
      %v1308 = vunpack.c.l.b16 %v1274
      %v1309 = vsel %vm1218, %v1294, %v1293
      %v1310 = vsel %vm1220, %v1295, %v1309
      %v1311 = vsel %vm1222, %v1296, %v1310
      %v1312 = vsel %vm1224, %v1297, %v1311
      %v1313 = vsel %vm1226, %v1298, %v1312
      %v1314 = vsel %vm1228, %v1299, %v1313
      %v1315 = vsel %vm1230, %v1300, %v1314
      %v1316 = vsel %vm1218, %v1302, %v1301
      %v1317 = vsel %vm1220, %v1303, %v1316
      %v1318 = vsel %vm1222, %v1304, %v1317
      %v1319 = vsel %vm1224, %v1305, %v1318
      %v1320 = vsel %vm1226, %v1306, %v1319
      %v1321 = vsel %vm1228, %v1307, %v1320
      %v1322 = vsel %vm1230, %v1308, %v1321
      %v1323 = vpack.c.b16 %v1322, %v1315
      %v1325 = vsel %vm801, %v1323, 0
      %v1328 = vsel %vm1026, %v1276, 0
      %1330 = vmatprep.subr.bf16.mxu0 0
      %1331 = vmatpush1.bf16.msra.mxu0 0
      %1332 = vmatprep.subr.bf16.mxu0 0
      %1333 = vmatpush1.bf16.msra.mxu0 0
      %1334 = vmatprep.subr.bf16.mxu0 0
      %1335 = vmatpush1.bf16.msra.mxu0 0
      %1336 = vmatprep.subr.bf16.mxu0 0
      %1337 = vmatpush1.bf16.msra.mxu0 0
      %1338 = vmatprep.subr.bf16.mxu0 0
      %1339 = vmatpush1.bf16.msra.mxu0 0
      %1340 = vmatprep.subr.bf16.mxu0 0
      %1341 = vmatpush1.bf16.msra.mxu0 0
      %1342 = vmatprep.subr.bf16.mxu0 0
      %1343 = vmatpush1.bf16.msra.mxu0 0
      %1344 = vmatprep.subr.bf16.mxu0 0
      %1345 = vmatpush1.bf16.msra.mxu0 %v1328
      %1346 = vmatprep.subr.bf16.mxu0 0
      %1347 = vmatpush2.bf16.msra.mxu0 0
      %1348 = vmatprep.subr.bf16.mxu0 0
      %1349 = vmatpush2.bf16.msra.mxu0 0
      %1350 = vmatprep.subr.bf16.mxu0 0
      %1351 = vmatpush2.bf16.msra.mxu0 0
      %1352 = vmatprep.subr.bf16.mxu0 0
      %1353 = vmatpush2.bf16.msra.mxu0 0
      %1354 = vmatprep.subr.bf16.mxu0 0
      %1355 = vmatpush2.bf16.msra.mxu0 0
      %1356 = vmatprep.subr.bf16.mxu0 0
      %1357 = vmatpush2.bf16.msra.mxu0 0
      %1358 = vmatprep.subr.bf16.mxu0 0
      %1359 = vmatpush2.bf16.msra.mxu0 0
      %1360 = vmatprep.subr.bf16.mxu0 0
      %1361 = vmatpush2.bf16.msra.mxu0 0
      %1362 = vmatprep.mubr.bf16.mxu0 0
      %1363 = vmatmul.mubr.bf16.gmra.mxu0 %v1325
      %v1364 = vpop.f32.mrf.mxu0
      %v1365 = vadd.f32 0.0, %v1364
      %v1366 = vpop.f32.mrf.mxu0
      %v1367 = vpop.f32.mrf.mxu0
      %v1368 = vadd.f32 0.0, %v1367
      %v1369 = vpop.f32.mrf.mxu0
      %1370 = vdwg.mxu0
      %v1372 = vsel %vm801, %v1257, 0
      %v1375 = vsel %vm1026, %v1258, 0
      %1377 = vmatprep.subr.bf16.mxu0 0
      %1378 = vmatpush1.bf16.msra.mxu0 0
      %1379 = vmatprep.subr.bf16.mxu0 0
      %1380 = vmatpush1.bf16.msra.mxu0 0
      %1381 = vmatprep.subr.bf16.mxu0 0
      %1382 = vmatpush1.bf16.msra.mxu0 0
      %1383 = vmatprep.subr.bf16.mxu0 0
      %1384 = vmatpush1.bf16.msra.mxu0 0
      %1385 = vmatprep.subr.bf16.mxu0 0
      %1386 = vmatpush1.bf16.msra.mxu0 0
      %1387 = vmatprep.subr.bf16.mxu0 0
      %1388 = vmatpush1.bf16.msra.mxu0 0
      %1389 = vmatprep.subr.bf16.mxu0 0
      %1390 = vmatpush1.bf16.msra.mxu0 0
      %1391 = vmatprep.subr.bf16.mxu0 0
      %1392 = vmatpush1.bf16.msra.mxu0 %v1375
      %1393 = vmatprep.subr.bf16.mxu0 0
      %1394 = vmatpush2.bf16.msra.mxu0 0
      %1395 = vmatprep.subr.bf16.mxu0 0
      %1396 = vmatpush2.bf16.msra.mxu0 0
      %1397 = vmatprep.subr.bf16.mxu0 0
      %1398 = vmatpush2.bf16.msra.mxu0 0
      %1399 = vmatprep.subr.bf16.mxu0 0
      %1400 = vmatpush2.bf16.msra.mxu0 0
      %1401 = vmatprep.subr.bf16.mxu0 0
      %1402 = vmatpush2.bf16.msra.mxu0 0
      %1403 = vmatprep.subr.bf16.mxu0 0
      %1404 = vmatpush2.bf16.msra.mxu0 0
      %1405 = vmatprep.subr.bf16.mxu0 0
      %1406 = vmatpush2.bf16.msra.mxu0 0
      %1407 = vmatprep.subr.bf16.mxu0 0
      %1408 = vmatpush2.bf16.msra.mxu0 0
      %1409 = vmatprep.mubr.bf16.mxu0 0
      %1410 = vmatmul.mubr.bf16.gmra.mxu0 %v1372
      %v1411 = vpop.f32.mrf.mxu0
      %v1412 = vadd.f32 %v1365, %v1411
      %v1413 = vpop.f32.mrf.mxu0
      %v1414 = vpop.f32.mrf.mxu0
      %v1415 = vadd.f32 %v1368, %v1414
      %v1416 = vpop.f32.mrf.mxu0
      %1417 = vdwg.mxu0
      %vm1418 = vcmp.le.s32.totalorder %v1198, 14
      %vm1419 = vcmp.le.s32.totalorder %v1199, 14
      %v1420 = vrot.slane %v1231, 1
      %v1421 = vrot.slane %v1238, 1
      %v1422 = vsel %vm1122, %v1420, %v1421
      %v1423 = vsel %vm1122, %v1421, %v1420
      %v1424 = vsel %vm1418, 1, 0
      %v1425 = vsel %vm1419, 1, 0
      %1426 = vset.pattern.permute.xlu0 0
      %1427 = vperm.xlu0 %1426, %v1424
      %v1428 = vpop.permute.xlu0 %1427
      %1429 = vset.pattern.permute.xlu0 0
      %1430 = vperm.xlu0 %1429, %v1425
      %v1431 = vpop.permute.xlu0 %1430
      %vm1432 = vcmp.eq.s32.totalorder %v1428, 1
      %vm1433 = vcmp.eq.s32.totalorder %v1431, 1
      %v1434 = vsel %vm1432, %v1422, 0.0
      %v1435 = vsel %vm1433, %v1423, 0.0
      %v1436 = vpack.c.bf16 %v1435, %v1434
      %s1437 = scalar_lea.vmem %s5, 4
      %v1438 = vld [vmem:[%s1437] sm:$0x3]
      %v1440 = vsel %vm801, %v1436, 0
      %v1443 = vsel %vm1026, %v1438, 0
      %1445 = vmatprep.subr.bf16.mxu0 0
      %1446 = vmatpush1.bf16.msra.mxu0 0
      %1447 = vmatprep.subr.bf16.mxu0 0
      %1448 = vmatpush1.bf16.msra.mxu0 0
      %1449 = vmatprep.subr.bf16.mxu0 0
      %1450 = vmatpush1.bf16.msra.mxu0 0
      %1451 = vmatprep.subr.bf16.mxu0 0
      %1452 = vmatpush1.bf16.msra.mxu0 0
      %1453 = vmatprep.subr.bf16.mxu0 0
      %1454 = vmatpush1.bf16.msra.mxu0 0
      %1455 = vmatprep.subr.bf16.mxu0 0
      %1456 = vmatpush1.bf16.msra.mxu0 0
      %1457 = vmatprep.subr.bf16.mxu0 0
      %1458 = vmatpush1.bf16.msra.mxu0 0
      %1459 = vmatprep.subr.bf16.mxu0 0
      %1460 = vmatpush1.bf16.msra.mxu0 %v1443
      %1461 = vmatprep.subr.bf16.mxu0 0
      %1462 = vmatpush2.bf16.msra.mxu0 0
      %1463 = vmatprep.subr.bf16.mxu0 0
      %1464 = vmatpush2.bf16.msra.mxu0 0
      %1465 = vmatprep.subr.bf16.mxu0 0
      %1466 = vmatpush2.bf16.msra.mxu0 0
      %1467 = vmatprep.subr.bf16.mxu0 0
      %1468 = vmatpush2.bf16.msra.mxu0 0
      %1469 = vmatprep.subr.bf16.mxu0 0
      %1470 = vmatpush2.bf16.msra.mxu0 0
      %1471 = vmatprep.subr.bf16.mxu0 0
      %1472 = vmatpush2.bf16.msra.mxu0 0
      %1473 = vmatprep.subr.bf16.mxu0 0
      %1474 = vmatpush2.bf16.msra.mxu0 0
      %1475 = vmatprep.subr.bf16.mxu0 0
      %1476 = vmatpush2.bf16.msra.mxu0 0
      %1477 = vmatprep.mubr.bf16.mxu0 0
      %1478 = vmatmul.mubr.bf16.gmra.mxu0 %v1440
      %v1479 = vpop.f32.mrf.mxu0
      %v1480 = vadd.f32 0.0, %v1479
      %v1481 = vpop.f32.mrf.mxu0
      %v1482 = vpop.f32.mrf.mxu0
      %v1483 = vadd.f32 0.0, %v1482
      %v1484 = vpop.f32.mrf.mxu0
      %1485 = vdwg.mxu0
      %v1486 = vadd.f32 %v1412, %v1480
      %v1487 = vadd.f32 %v1415, %v1483
      %v1488 = vld [vmem:[%s6] sm:$0x1]
      %v1490 = vlaneseq
      %v1491 = vshrl.u32 %v1490, 7
      %v1492 = vsub.s32 0, %v1491
      %v1493 = vrot.slane %v1488, %v1492
      %v1495 = vadd.f32 %v1486, %v1493
      %v1496 = vadd.f32 %v1487, %v1493
      %v1499 = vcombine.high %v1495, %v1495
      %v1501 = vunpack.c.l.s4 1966171168
      %v1502 = vunpack.c.0.s8 %v1501
      %v1503 = vlaneseq
      %v1504 = vshrl.u32 %v1503, 7
      %v1505 = vsub.s32 %v1502, %v1504
      %v1506 = vrot.slane %v1495, %v1505
      %v1508 = vunpack.c.l.s4 1966171168
      %v1509 = vunpack.c.0.s8 %v1508
      %v1510 = vlaneseq
      %v1511 = vshrl.u32 %v1510, 7
      %v1512 = vsub.s32 %v1509, %v1511
      %v1513 = vrot.slane %v1499, %v1512
      %v1514 = vcombine.high %v1506, %v1506
      %v1515 = vcombine.high %v1513, %v1513
      %v1517 = vunpack.c.l.s4 1966171168
      %v1518 = vunpack.c.0.s8 %v1517
      %v1519 = vlaneseq
      %v1520 = vshrl.u32 %v1519, 7
      %v1521 = vsub.s32 %v1518, %v1520
      %v1522 = vrot.slane %v1506, %v1521
      %v1524 = vunpack.c.l.s4 1966171168
      %v1525 = vunpack.c.0.s8 %v1524
      %v1526 = vlaneseq
      %v1527 = vshrl.u32 %v1526, 7
      %v1528 = vsub.s32 %v1525, %v1527
      %v1529 = vrot.slane %v1513, %v1528
      %v1531 = vunpack.c.l.s4 1966171168
      %v1532 = vunpack.c.0.s8 %v1531
      %v1533 = vlaneseq
      %v1534 = vshrl.u32 %v1533, 7
      %v1535 = vsub.s32 %v1532, %v1534
      %v1536 = vrot.slane %v1514, %v1535
      %v1538 = vunpack.c.l.s4 1966171168
      %v1539 = vunpack.c.0.s8 %v1538
      %v1540 = vlaneseq
      %v1541 = vshrl.u32 %v1540, 7
      %v1542 = vsub.s32 %v1539, %v1541
      %v1543 = vrot.slane %v1515, %v1542
      %v1544 = vcombine.high %v1522, %v1522
      %v1545 = vcombine.high %v1529, %v1529
      %v1546 = vcombine.high %v1536, %v1536
      %v1547 = vcombine.high %v1543, %v1543
      %v1548 = vcombine.high %v1496, %v1496
      %v1550 = vunpack.c.l.s4 1966171168
      %v1551 = vunpack.c.0.s8 %v1550
      %v1552 = vlaneseq
      %v1553 = vshrl.u32 %v1552, 7
      %v1554 = vsub.s32 %v1551, %v1553
      %v1555 = vrot.slane %v1496, %v1554
      %v1557 = vunpack.c.l.s4 1966171168
      %v1558 = vunpack.c.0.s8 %v1557
      %v1559 = vlaneseq
      %v1560 = vshrl.u32 %v1559, 7
      %v1561 = vsub.s32 %v1558, %v1560
      %v1562 = vrot.slane %v1548, %v1561
      %v1563 = vcombine.high %v1555, %v1555
      %v1564 = vcombine.high %v1562, %v1562
      %v1566 = vunpack.c.l.s4 1966171168
      %v1567 = vunpack.c.0.s8 %v1566
      %v1568 = vlaneseq
      %v1569 = vshrl.u32 %v1568, 7
      %v1570 = vsub.s32 %v1567, %v1569
      %v1571 = vrot.slane %v1555, %v1570
      %v1573 = vunpack.c.l.s4 1966171168
      %v1574 = vunpack.c.0.s8 %v1573
      %v1575 = vlaneseq
      %v1576 = vshrl.u32 %v1575, 7
      %v1577 = vsub.s32 %v1574, %v1576
      %v1578 = vrot.slane %v1562, %v1577
      %v1580 = vunpack.c.l.s4 1966171168
      %v1581 = vunpack.c.0.s8 %v1580
      %v1582 = vlaneseq
      %v1583 = vshrl.u32 %v1582, 7
      %v1584 = vsub.s32 %v1581, %v1583
      %v1585 = vrot.slane %v1563, %v1584
      %v1587 = vunpack.c.l.s4 1966171168
      %v1588 = vunpack.c.0.s8 %v1587
      %v1589 = vlaneseq
      %v1590 = vshrl.u32 %v1589, 7
      %v1591 = vsub.s32 %v1588, %v1590
      %v1592 = vrot.slane %v1564, %v1591
      %v1593 = vcombine.high %v1571, %v1571
      %v1594 = vcombine.high %v1578, %v1578
      %v1595 = vcombine.high %v1585, %v1585
      %v1596 = vcombine.high %v1592, %v1592
      %v1597 = vlaneseq
      %v1598 = vshrl.u32 %v1597, 7
      %v1599 = vsub.s32 0, %v1598
      %v1600 = vrot.slane %v1522, %v1599
      %v1601 = vlaneseq
      %v1602 = vshrl.u32 %v1601, 7
      %v1603 = vsub.s32 0, %v1602
      %v1604 = vrot.slane %v1536, %v1603
      %v1605 = vlaneseq
      %v1606 = vshrl.u32 %v1605, 7
      %v1607 = vsub.s32 0, %v1606
      %v1608 = vrot.slane %v1544, %v1607
      %v1609 = vlaneseq
      %v1610 = vshrl.u32 %v1609, 7
      %v1611 = vsub.s32 0, %v1610
      %v1612 = vrot.slane %v1546, %v1611
      %v1613 = vlaneseq
      %v1614 = vshrl.u32 %v1613, 7
      %v1615 = vsub.s32 0, %v1614
      %v1616 = vrot.slane %v1529, %v1615
      %v1617 = vlaneseq
      %v1618 = vshrl.u32 %v1617, 7
      %v1619 = vsub.s32 0, %v1618
      %v1620 = vrot.slane %v1543, %v1619
      %v1621 = vlaneseq
      %v1622 = vshrl.u32 %v1621, 7
      %v1623 = vsub.s32 0, %v1622
      %v1624 = vrot.slane %v1545, %v1623
      %v1625 = vlaneseq
      %v1626 = vshrl.u32 %v1625, 7
      %v1627 = vsub.s32 0, %v1626
      %v1628 = vrot.slane %v1547, %v1627
      %v1629 = vlaneseq
      %v1630 = vshrl.u32 %v1629, 7
      %v1631 = vsub.s32 0, %v1630
      %v1632 = vrot.slane %v1571, %v1631
      %v1633 = vlaneseq
      %v1634 = vshrl.u32 %v1633, 7
      %v1635 = vsub.s32 0, %v1634
      %v1636 = vrot.slane %v1585, %v1635
      %v1637 = vlaneseq
      %v1638 = vshrl.u32 %v1637, 7
      %v1639 = vsub.s32 0, %v1638
      %v1640 = vrot.slane %v1593, %v1639
      %v1641 = vlaneseq
      %v1642 = vshrl.u32 %v1641, 7
      %v1643 = vsub.s32 0, %v1642
      %v1644 = vrot.slane %v1595, %v1643
      %v1645 = vlaneseq
      %v1646 = vshrl.u32 %v1645, 7
      %v1647 = vsub.s32 0, %v1646
      %v1648 = vrot.slane %v1578, %v1647
      %v1649 = vlaneseq
      %v1650 = vshrl.u32 %v1649, 7
      %v1651 = vsub.s32 0, %v1650
      %v1652 = vrot.slane %v1592, %v1651
      %v1653 = vlaneseq
      %v1654 = vshrl.u32 %v1653, 7
      %v1655 = vsub.s32 0, %v1654
      %v1656 = vrot.slane %v1594, %v1655
      %v1657 = vlaneseq
      %v1658 = vshrl.u32 %v1657, 7
      %v1659 = vsub.s32 0, %v1658
      %v1660 = vrot.slane %v1596, %v1659
      %v1677 = vadd.f32 %v1196, %v1600
      %v1678 = vadd.f32 %v1197, %v1600
      %v1679 = vadd.f32 %v1196, %v1604
      %v1680 = vadd.f32 %v1197, %v1604
      %v1681 = vadd.f32 %v1196, %v1608
      %v1682 = vadd.f32 %v1197, %v1608
      %v1683 = vadd.f32 %v1196, %v1612
      %v1684 = vadd.f32 %v1197, %v1612
      %v1685 = vadd.f32 %v1196, %v1616
      %v1686 = vadd.f32 %v1197, %v1616
      %v1687 = vadd.f32 %v1196, %v1620
      %v1688 = vadd.f32 %v1197, %v1620
      %v1689 = vadd.f32 %v1196, %v1624
      %v1690 = vadd.f32 %v1197, %v1624
      %v1691 = vadd.f32 %v1196, %v1628
      %v1692 = vadd.f32 %v1197, %v1628
      %v1693 = vadd.f32 %v1196, %v1632
      %v1694 = vadd.f32 %v1197, %v1632
      %v1695 = vadd.f32 %v1196, %v1636
      %v1696 = vadd.f32 %v1197, %v1636
      %v1697 = vadd.f32 %v1196, %v1640
      %v1698 = vadd.f32 %v1197, %v1640
      %v1699 = vadd.f32 %v1196, %v1644
      %v1700 = vadd.f32 %v1197, %v1644
      %v1701 = vadd.f32 %v1196, %v1648
      %v1702 = vadd.f32 %v1197, %v1648
      %v1703 = vadd.f32 %v1196, %v1652
      %v1704 = vadd.f32 %v1197, %v1652
      %v1705 = vadd.f32 %v1196, %v1656
      %v1706 = vadd.f32 %v1197, %v1656
      %v1707 = vadd.f32 %v1196, %v1660
      %v1708 = vadd.f32 %v1197, %v1660
      %v1709 = vmax.f32 %v1677, 0.0
      %v1710 = vmax.f32 %v1678, 0.0
      %v1711 = vmax.f32 %v1679, 0.0
      %v1712 = vmax.f32 %v1680, 0.0
      %v1713 = vmax.f32 %v1681, 0.0
      %v1714 = vmax.f32 %v1682, 0.0
      %v1715 = vmax.f32 %v1683, 0.0
      %v1716 = vmax.f32 %v1684, 0.0
      %v1717 = vmax.f32 %v1685, 0.0
      %v1718 = vmax.f32 %v1686, 0.0
      %v1719 = vmax.f32 %v1687, 0.0
      %v1720 = vmax.f32 %v1688, 0.0
      %v1721 = vmax.f32 %v1689, 0.0
      %v1722 = vmax.f32 %v1690, 0.0
      %v1723 = vmax.f32 %v1691, 0.0
      %v1724 = vmax.f32 %v1692, 0.0
      %v1725 = vmax.f32 %v1693, 0.0
      %v1726 = vmax.f32 %v1694, 0.0
      %v1727 = vmax.f32 %v1695, 0.0
      %v1728 = vmax.f32 %v1696, 0.0
      %v1729 = vmax.f32 %v1697, 0.0
      %v1730 = vmax.f32 %v1698, 0.0
      %v1731 = vmax.f32 %v1699, 0.0
      %v1732 = vmax.f32 %v1700, 0.0
      %v1733 = vmax.f32 %v1701, 0.0
      %v1734 = vmax.f32 %v1702, 0.0
      %v1735 = vmax.f32 %v1703, 0.0
      %v1736 = vmax.f32 %v1704, 0.0
      %v1737 = vmax.f32 %v1705, 0.0
      %v1738 = vmax.f32 %v1706, 0.0
      %v1739 = vmax.f32 %v1707, 0.0
      %v1740 = vmax.f32 %v1708, 0.0
      %v1741 = vld [vmem:[%s13] sm:$0xff]
      %v1742 = vld [vmem:[%s13 + $0x8] sm:$0xff]
      %v1743 = vld [vmem:[%s13 + $0x10] sm:$0xff]
      %v1744 = vld [vmem:[%s13 + $0x18] sm:$0xff]
      %v1745 = vld [vmem:[%s13 + $0x20] sm:$0xff]
      %v1746 = vld [vmem:[%s13 + $0x28] sm:$0xff]
      %v1747 = vld [vmem:[%s13 + $0x30] sm:$0xff]
      %v1748 = vld [vmem:[%s13 + $0x38] sm:$0xff]
      %v1749 = vld [vmem:[%s13 + $0x40] sm:$0xff]
      %v1750 = vld [vmem:[%s13 + $0x48] sm:$0xff]
      %v1751 = vld [vmem:[%s13 + $0x50] sm:$0xff]
      %v1752 = vld [vmem:[%s13 + $0x58] sm:$0xff]
      %v1753 = vld [vmem:[%s13 + $0x60] sm:$0xff]
      %v1754 = vld [vmem:[%s13 + $0x68] sm:$0xff]
      %v1755 = vld [vmem:[%s13 + $0x70] sm:$0xff]
      %v1756 = vld [vmem:[%s13 + $0x78] sm:$0xff]
      %v1757 = vld [vmem:[%s13 + $0x80] sm:$0xff]
      %v1758 = vld [vmem:[%s13 + $0x88] sm:$0xff]
      %v1759 = vld [vmem:[%s13 + $0x90] sm:$0xff]
      %v1760 = vld [vmem:[%s13 + $0x98] sm:$0xff]
      %v1761 = vld [vmem:[%s13 + $0xa0] sm:$0xff]
      %v1762 = vld [vmem:[%s13 + $0xa8] sm:$0xff]
      %v1763 = vld [vmem:[%s13 + $0xb0] sm:$0xff]
      %v1764 = vld [vmem:[%s13 + $0xb8] sm:$0xff]
      %v1765 = vld [vmem:[%s13 + $0xc0] sm:$0xff]
      %v1766 = vld [vmem:[%s13 + $0xc8] sm:$0xff]
      %v1767 = vld [vmem:[%s13 + $0xd0] sm:$0xff]
      %v1768 = vld [vmem:[%s13 + $0xd8] sm:$0xff]
      %v1769 = vld [vmem:[%s13 + $0xe0] sm:$0xff]
      %v1770 = vld [vmem:[%s13 + $0xe8] sm:$0xff]
      %v1771 = vld [vmem:[%s13 + $0xf0] sm:$0xff]
      %v1772 = vld [vmem:[%s13 + $0xf8] sm:$0xff]
      %v1773 = vld [vmem:[%s14] sm:$0xff]
      %v1774 = vld [vmem:[%s14 + $0x8] sm:$0xff]
      %v1775 = vld [vmem:[%s14 + $0x10] sm:$0xff]
      %v1776 = vld [vmem:[%s14 + $0x18] sm:$0xff]
      %v1777 = vld [vmem:[%s14 + $0x20] sm:$0xff]
      %v1778 = vld [vmem:[%s14 + $0x28] sm:$0xff]
      %v1779 = vld [vmem:[%s14 + $0x30] sm:$0xff]
      %v1780 = vld [vmem:[%s14 + $0x38] sm:$0xff]
      %v1781 = vld [vmem:[%s14 + $0x40] sm:$0xff]
      %v1782 = vld [vmem:[%s14 + $0x48] sm:$0xff]
      %v1783 = vld [vmem:[%s14 + $0x50] sm:$0xff]
      %v1784 = vld [vmem:[%s14 + $0x58] sm:$0xff]
      %v1785 = vld [vmem:[%s14 + $0x60] sm:$0xff]
      %v1786 = vld [vmem:[%s14 + $0x68] sm:$0xff]
      %v1787 = vld [vmem:[%s14 + $0x70] sm:$0xff]
      %v1788 = vld [vmem:[%s14 + $0x78] sm:$0xff]
      %v1789 = vld [vmem:[%s14 + $0x80] sm:$0xff]
      %v1790 = vld [vmem:[%s14 + $0x88] sm:$0xff]
      %v1791 = vld [vmem:[%s14 + $0x90] sm:$0xff]
      %v1792 = vld [vmem:[%s14 + $0x98] sm:$0xff]
      %v1793 = vld [vmem:[%s14 + $0xa0] sm:$0xff]
      %v1794 = vld [vmem:[%s14 + $0xa8] sm:$0xff]
      %v1795 = vld [vmem:[%s14 + $0xb0] sm:$0xff]
      %v1796 = vld [vmem:[%s14 + $0xb8] sm:$0xff]
      %v1797 = vld [vmem:[%s14 + $0xc0] sm:$0xff]
      %v1798 = vld [vmem:[%s14 + $0xc8] sm:$0xff]
      %v1799 = vld [vmem:[%s14 + $0xd0] sm:$0xff]
      %v1800 = vld [vmem:[%s14 + $0xd8] sm:$0xff]
      %v1801 = vld [vmem:[%s14 + $0xe0] sm:$0xff]
      %v1802 = vld [vmem:[%s14 + $0xe8] sm:$0xff]
      %v1803 = vld [vmem:[%s14 + $0xf0] sm:$0xff]
      %v1804 = vld [vmem:[%s14 + $0xf8] sm:$0xff]
      %vm1805 = vcmp.ge.s32.totalorder %v1741, 1
      %vm1806 = vcmp.ge.s32.totalorder %v1742, 1
      %vm1807 = vcmp.ge.s32.totalorder %v1743, 1
      %vm1808 = vcmp.ge.s32.totalorder %v1744, 1
      %vm1809 = vcmp.ge.s32.totalorder %v1745, 1
      %vm1810 = vcmp.ge.s32.totalorder %v1746, 1
      %vm1811 = vcmp.ge.s32.totalorder %v1747, 1
      %vm1812 = vcmp.ge.s32.totalorder %v1748, 1
      %vm1813 = vcmp.ge.s32.totalorder %v1749, 1
      %vm1814 = vcmp.ge.s32.totalorder %v1750, 1
      %vm1815 = vcmp.ge.s32.totalorder %v1751, 1
      %vm1816 = vcmp.ge.s32.totalorder %v1752, 1
      %vm1817 = vcmp.ge.s32.totalorder %v1753, 1
      %vm1818 = vcmp.ge.s32.totalorder %v1754, 1
      %vm1819 = vcmp.ge.s32.totalorder %v1755, 1
      %vm1820 = vcmp.ge.s32.totalorder %v1756, 1
      %vm1821 = vcmp.ge.s32.totalorder %v1757, 1
      %vm1822 = vcmp.ge.s32.totalorder %v1758, 1
      %vm1823 = vcmp.ge.s32.totalorder %v1759, 1
      %vm1824 = vcmp.ge.s32.totalorder %v1760, 1
      %vm1825 = vcmp.ge.s32.totalorder %v1761, 1
      %vm1826 = vcmp.ge.s32.totalorder %v1762, 1
      %vm1827 = vcmp.ge.s32.totalorder %v1763, 1
      %vm1828 = vcmp.ge.s32.totalorder %v1764, 1
      %vm1829 = vcmp.ge.s32.totalorder %v1765, 1
      %vm1830 = vcmp.ge.s32.totalorder %v1766, 1
      %vm1831 = vcmp.ge.s32.totalorder %v1767, 1
      %vm1832 = vcmp.ge.s32.totalorder %v1768, 1
      %vm1833 = vcmp.ge.s32.totalorder %v1769, 1
      %vm1834 = vcmp.ge.s32.totalorder %v1770, 1
      %vm1835 = vcmp.ge.s32.totalorder %v1771, 1
      %vm1836 = vcmp.ge.s32.totalorder %v1772, 1
      %vm1837 = vcmp.ge.s32.totalorder %v1773, 1
      %vm1838 = vcmp.ge.s32.totalorder %v1774, 1
      %vm1839 = vcmp.ge.s32.totalorder %v1775, 1
      %vm1840 = vcmp.ge.s32.totalorder %v1776, 1
      %vm1841 = vcmp.ge.s32.totalorder %v1777, 1
      %vm1842 = vcmp.ge.s32.totalorder %v1778, 1
      %vm1843 = vcmp.ge.s32.totalorder %v1779, 1
      %vm1844 = vcmp.ge.s32.totalorder %v1780, 1
      %vm1845 = vcmp.ge.s32.totalorder %v1781, 1
      %vm1846 = vcmp.ge.s32.totalorder %v1782, 1
      %vm1847 = vcmp.ge.s32.totalorder %v1783, 1
      %vm1848 = vcmp.ge.s32.totalorder %v1784, 1
      %vm1849 = vcmp.ge.s32.totalorder %v1785, 1
      %vm1850 = vcmp.ge.s32.totalorder %v1786, 1
      %vm1851 = vcmp.ge.s32.totalorder %v1787, 1
      %vm1852 = vcmp.ge.s32.totalorder %v1788, 1
      %vm1853 = vcmp.ge.s32.totalorder %v1789, 1
      %vm1854 = vcmp.ge.s32.totalorder %v1790, 1
      %vm1855 = vcmp.ge.s32.totalorder %v1791, 1
      %vm1856 = vcmp.ge.s32.totalorder %v1792, 1
      %vm1857 = vcmp.ge.s32.totalorder %v1793, 1
      %vm1858 = vcmp.ge.s32.totalorder %v1794, 1
      %vm1859 = vcmp.ge.s32.totalorder %v1795, 1
      %vm1860 = vcmp.ge.s32.totalorder %v1796, 1
      %vm1861 = vcmp.ge.s32.totalorder %v1797, 1
      %vm1862 = vcmp.ge.s32.totalorder %v1798, 1
      %vm1863 = vcmp.ge.s32.totalorder %v1799, 1
      %vm1864 = vcmp.ge.s32.totalorder %v1800, 1
      %vm1865 = vcmp.ge.s32.totalorder %v1801, 1
      %vm1866 = vcmp.ge.s32.totalorder %v1802, 1
      %vm1867 = vcmp.ge.s32.totalorder %v1803, 1
      %vm1868 = vcmp.ge.s32.totalorder %v1804, 1
      %vm1869 = vmand %vm1805, %vm1837
      %vm1870 = vmand %vm1806, %vm1838
      %vm1871 = vmand %vm1807, %vm1839
      %vm1872 = vmand %vm1808, %vm1840
      %vm1873 = vmand %vm1809, %vm1841
      %vm1874 = vmand %vm1810, %vm1842
      %vm1875 = vmand %vm1811, %vm1843
      %vm1876 = vmand %vm1812, %vm1844
      %vm1877 = vmand %vm1813, %vm1845
      %vm1878 = vmand %vm1814, %vm1846
      %vm1879 = vmand %vm1815, %vm1847
      %vm1880 = vmand %vm1816, %vm1848
      %vm1881 = vmand %vm1817, %vm1849
      %vm1882 = vmand %vm1818, %vm1850
      %vm1883 = vmand %vm1819, %vm1851
      %vm1884 = vmand %vm1820, %vm1852
      %vm1885 = vmand %vm1821, %vm1853
      %vm1886 = vmand %vm1822, %vm1854
      %vm1887 = vmand %vm1823, %vm1855
      %vm1888 = vmand %vm1824, %vm1856
      %vm1889 = vmand %vm1825, %vm1857
      %vm1890 = vmand %vm1826, %vm1858
      %vm1891 = vmand %vm1827, %vm1859
      %vm1892 = vmand %vm1828, %vm1860
      %vm1893 = vmand %vm1829, %vm1861
      %vm1894 = vmand %vm1830, %vm1862
      %vm1895 = vmand %vm1831, %vm1863
      %vm1896 = vmand %vm1832, %vm1864
      %vm1897 = vmand %vm1833, %vm1865
      %vm1898 = vmand %vm1834, %vm1866
      %vm1899 = vmand %vm1835, %vm1867
      %vm1900 = vmand %vm1836, %vm1868
      %v1901 = vrot.slane %v1709, 7
      %v1902 = vrot.slane %v1710, 7
      %v1903 = vrot.slane %v1711, 7
      %v1904 = vrot.slane %v1712, 7
      %v1905 = vrot.slane %v1713, 7
      %v1906 = vrot.slane %v1714, 7
      %v1907 = vrot.slane %v1715, 7
      %v1908 = vrot.slane %v1716, 7
      %v1909 = vrot.slane %v1717, 7
      %v1910 = vrot.slane %v1718, 7
      %v1911 = vrot.slane %v1719, 7
      %v1912 = vrot.slane %v1720, 7
      %v1913 = vrot.slane %v1721, 7
      %v1914 = vrot.slane %v1722, 7
      %v1915 = vrot.slane %v1723, 7
      %v1916 = vrot.slane %v1724, 7
      %v1917 = vrot.slane %v1725, 7
      %v1918 = vrot.slane %v1726, 7
      %v1919 = vrot.slane %v1727, 7
      %v1920 = vrot.slane %v1728, 7
      %v1921 = vrot.slane %v1729, 7
      %v1922 = vrot.slane %v1730, 7
      %v1923 = vrot.slane %v1731, 7
      %v1924 = vrot.slane %v1732, 7
      %v1925 = vrot.slane %v1733, 7
      %v1926 = vrot.slane %v1734, 7
      %v1927 = vrot.slane %v1735, 7
      %v1928 = vrot.slane %v1736, 7
      %v1929 = vrot.slane %v1737, 7
      %v1930 = vrot.slane %v1738, 7
      %v1931 = vrot.slane %v1739, 7
      %v1932 = vrot.slane %v1740, 7
      %v1933 = vsel %vm1003, %v1931, %v1932
      %v1934 = vsel %vm1003, %v1930, %v1931
      %v1935 = vsel %vm1003, %v1929, %v1930
      %v1936 = vsel %vm1003, %v1928, %v1929
      %v1937 = vsel %vm1003, %v1927, %v1928
      %v1938 = vsel %vm1003, %v1926, %v1927
      %v1939 = vsel %vm1003, %v1925, %v1926
      %v1940 = vsel %vm1003, %v1924, %v1925
      %v1941 = vsel %vm1003, %v1923, %v1924
      %v1942 = vsel %vm1003, %v1922, %v1923
      %v1943 = vsel %vm1003, %v1921, %v1922
      %v1944 = vsel %vm1003, %v1920, %v1921
      %v1945 = vsel %vm1003, %v1919, %v1920
      %v1946 = vsel %vm1003, %v1918, %v1919
      %v1947 = vsel %vm1003, %v1917, %v1918
      %v1948 = vsel %vm1003, %v1916, %v1917
      %v1949 = vsel %vm1003, %v1915, %v1916
      %v1950 = vsel %vm1003, %v1914, %v1915
      %v1951 = vsel %vm1003, %v1913, %v1914
      %v1952 = vsel %vm1003, %v1912, %v1913
      %v1953 = vsel %vm1003, %v1911, %v1912
      %v1954 = vsel %vm1003, %v1910, %v1911
      %v1955 = vsel %vm1003, %v1909, %v1910
      %v1956 = vsel %vm1003, %v1908, %v1909
      %v1957 = vsel %vm1003, %v1907, %v1908
      %v1958 = vsel %vm1003, %v1906, %v1907
      %v1959 = vsel %vm1003, %v1905, %v1906
      %v1960 = vsel %vm1003, %v1904, %v1905
      %v1961 = vsel %vm1003, %v1903, %v1904
      %v1962 = vsel %vm1003, %v1902, %v1903
      %v1963 = vsel %vm1003, %v1901, %v1902
      %v1964 = vsel %vm1003, %v1932, %v1901
      %v1965 = vsel %vm1869, 1, 0
      %v1966 = vsel %vm1870, 1, 0
      %v1967 = vsel %vm1871, 1, 0
      %v1968 = vsel %vm1872, 1, 0
      %v1969 = vsel %vm1873, 1, 0
      %v1970 = vsel %vm1874, 1, 0
      %v1971 = vsel %vm1875, 1, 0
      %v1972 = vsel %vm1876, 1, 0
      %v1973 = vsel %vm1877, 1, 0
      %v1974 = vsel %vm1878, 1, 0
      %v1975 = vsel %vm1879, 1, 0
      %v1976 = vsel %vm1880, 1, 0
      %v1977 = vsel %vm1881, 1, 0
      %v1978 = vsel %vm1882, 1, 0
      %v1979 = vsel %vm1883, 1, 0
      %v1980 = vsel %vm1884, 1, 0
      %v1981 = vsel %vm1885, 1, 0
      %v1982 = vsel %vm1886, 1, 0
      %v1983 = vsel %vm1887, 1, 0
      %v1984 = vsel %vm1888, 1, 0
      %v1985 = vsel %vm1889, 1, 0
      %v1986 = vsel %vm1890, 1, 0
      %v1987 = vsel %vm1891, 1, 0
      %v1988 = vsel %vm1892, 1, 0
      %v1989 = vsel %vm1893, 1, 0
      %v1990 = vsel %vm1894, 1, 0
      %v1991 = vsel %vm1895, 1, 0
      %v1992 = vsel %vm1896, 1, 0
      %v1993 = vsel %vm1897, 1, 0
      %v1994 = vsel %vm1898, 1, 0
      %v1995 = vsel %vm1899, 1, 0
      %v1996 = vsel %vm1900, 1, 0
      %1997 = vset.pattern.permute.xlu0 0
      %1998 = vperm.xlu0 %1997, %v1965
      %v1999 = vpop.permute.xlu0 %1998
      %2000 = vset.pattern.permute.xlu0 0
      %2001 = vperm.xlu0 %2000, %v1966
      %v2002 = vpop.permute.xlu0 %2001
      %2003 = vset.pattern.permute.xlu0 0
      %2004 = vperm.xlu0 %2003, %v1967
      %v2005 = vpop.permute.xlu0 %2004
      %2006 = vset.pattern.permute.xlu0 0
      %2007 = vperm.xlu0 %2006, %v1968
      %v2008 = vpop.permute.xlu0 %2007
      %2009 = vset.pattern.permute.xlu0 0
      %2010 = vperm.xlu0 %2009, %v1969
      %v2011 = vpop.permute.xlu0 %2010
      %2012 = vset.pattern.permute.xlu0 0
      %2013 = vperm.xlu0 %2012, %v1970
      %v2014 = vpop.permute.xlu0 %2013
      %2015 = vset.pattern.permute.xlu0 0
      %2016 = vperm.xlu0 %2015, %v1971
      %v2017 = vpop.permute.xlu0 %2016
      %2018 = vset.pattern.permute.xlu0 0
      %2019 = vperm.xlu0 %2018, %v1972
      %v2020 = vpop.permute.xlu0 %2019
      %2021 = vset.pattern.permute.xlu0 0
      %2022 = vperm.xlu0 %2021, %v1973
      %v2023 = vpop.permute.xlu0 %2022
      %2024 = vset.pattern.permute.xlu0 0
      %2025 = vperm.xlu0 %2024, %v1974
      %v2026 = vpop.permute.xlu0 %2025
      %2027 = vset.pattern.permute.xlu0 0
      %2028 = vperm.xlu0 %2027, %v1975
      %v2029 = vpop.permute.xlu0 %2028
      %2030 = vset.pattern.permute.xlu0 0
      %2031 = vperm.xlu0 %2030, %v1976
      %v2032 = vpop.permute.xlu0 %2031
      %2033 = vset.pattern.permute.xlu0 0
      %2034 = vperm.xlu0 %2033, %v1977
      %v2035 = vpop.permute.xlu0 %2034
      %2036 = vset.pattern.permute.xlu0 0
      %2037 = vperm.xlu0 %2036, %v1978
      %v2038 = vpop.permute.xlu0 %2037
      %2039 = vset.pattern.permute.xlu0 0
      %2040 = vperm.xlu0 %2039, %v1979
      %v2041 = vpop.permute.xlu0 %2040
      %2042 = vset.pattern.permute.xlu0 0
      %2043 = vperm.xlu0 %2042, %v1980
      %v2044 = vpop.permute.xlu0 %2043
      %2045 = vset.pattern.permute.xlu0 0
      %2046 = vperm.xlu0 %2045, %v1981
      %v2047 = vpop.permute.xlu0 %2046
      %2048 = vset.pattern.permute.xlu0 0
      %2049 = vperm.xlu0 %2048, %v1982
      %v2050 = vpop.permute.xlu0 %2049
      %2051 = vset.pattern.permute.xlu0 0
      %2052 = vperm.xlu0 %2051, %v1983
      %v2053 = vpop.permute.xlu0 %2052
      %2054 = vset.pattern.permute.xlu0 0
      %2055 = vperm.xlu0 %2054, %v1984
      %v2056 = vpop.permute.xlu0 %2055
      %2057 = vset.pattern.permute.xlu0 0
      %2058 = vperm.xlu0 %2057, %v1985
      %v2059 = vpop.permute.xlu0 %2058
      %2060 = vset.pattern.permute.xlu0 0
      %2061 = vperm.xlu0 %2060, %v1986
      %v2062 = vpop.permute.xlu0 %2061
      %2063 = vset.pattern.permute.xlu0 0
      %2064 = vperm.xlu0 %2063, %v1987
      %v2065 = vpop.permute.xlu0 %2064
      %2066 = vset.pattern.permute.xlu0 0
      %2067 = vperm.xlu0 %2066, %v1988
      %v2068 = vpop.permute.xlu0 %2067
      %2069 = vset.pattern.permute.xlu0 0
      %2070 = vperm.xlu0 %2069, %v1989
      %v2071 = vpop.permute.xlu0 %2070
      %2072 = vset.pattern.permute.xlu0 0
      %2073 = vperm.xlu0 %2072, %v1990
      %v2074 = vpop.permute.xlu0 %2073
      %2075 = vset.pattern.permute.xlu0 0
      %2076 = vperm.xlu0 %2075, %v1991
      %v2077 = vpop.permute.xlu0 %2076
      %2078 = vset.pattern.permute.xlu0 0
      %2079 = vperm.xlu0 %2078, %v1992
      %v2080 = vpop.permute.xlu0 %2079
      %2081 = vset.pattern.permute.xlu0 0
      %2082 = vperm.xlu0 %2081, %v1993
      %v2083 = vpop.permute.xlu0 %2082
      %2084 = vset.pattern.permute.xlu0 0
      %2085 = vperm.xlu0 %2084, %v1994
      %v2086 = vpop.permute.xlu0 %2085
      %2087 = vset.pattern.permute.xlu0 0
      %2088 = vperm.xlu0 %2087, %v1995
      %v2089 = vpop.permute.xlu0 %2088
      %2090 = vset.pattern.permute.xlu0 0
      %2091 = vperm.xlu0 %2090, %v1996
      %v2092 = vpop.permute.xlu0 %2091
      %vm2093 = vcmp.eq.s32.totalorder %v1999, 1
      %vm2094 = vcmp.eq.s32.totalorder %v2002, 1
      %vm2095 = vcmp.eq.s32.totalorder %v2005, 1
      %vm2096 = vcmp.eq.s32.totalorder %v2008, 1
      %vm2097 = vcmp.eq.s32.totalorder %v2011, 1
      %vm2098 = vcmp.eq.s32.totalorder %v2014, 1
      %vm2099 = vcmp.eq.s32.totalorder %v2017, 1
      %vm2100 = vcmp.eq.s32.totalorder %v2020, 1
      %vm2101 = vcmp.eq.s32.totalorder %v2023, 1
      %vm2102 = vcmp.eq.s32.totalorder %v2026, 1
      %vm2103 = vcmp.eq.s32.totalorder %v2029, 1
      %vm2104 = vcmp.eq.s32.totalorder %v2032, 1
      %vm2105 = vcmp.eq.s32.totalorder %v2035, 1
      %vm2106 = vcmp.eq.s32.totalorder %v2038, 1
      %vm2107 = vcmp.eq.s32.totalorder %v2041, 1
      %vm2108 = vcmp.eq.s32.totalorder %v2044, 1
      %vm2109 = vcmp.eq.s32.totalorder %v2047, 1
      %vm2110 = vcmp.eq.s32.totalorder %v2050, 1
      %vm2111 = vcmp.eq.s32.totalorder %v2053, 1
      %vm2112 = vcmp.eq.s32.totalorder %v2056, 1
      %vm2113 = vcmp.eq.s32.totalorder %v2059, 1
      %vm2114 = vcmp.eq.s32.totalorder %v2062, 1
      %vm2115 = vcmp.eq.s32.totalorder %v2065, 1
      %vm2116 = vcmp.eq.s32.totalorder %v2068, 1
      %vm2117 = vcmp.eq.s32.totalorder %v2071, 1
      %vm2118 = vcmp.eq.s32.totalorder %v2074, 1
      %vm2119 = vcmp.eq.s32.totalorder %v2077, 1
      %vm2120 = vcmp.eq.s32.totalorder %v2080, 1
      %vm2121 = vcmp.eq.s32.totalorder %v2083, 1
      %vm2122 = vcmp.eq.s32.totalorder %v2086, 1
      %vm2123 = vcmp.eq.s32.totalorder %v2089, 1
      %vm2124 = vcmp.eq.s32.totalorder %v2092, 1
      %v2125 = vsel %vm2093, %v1934, 0.0
      %v2126 = vsel %vm2094, %v1933, 0.0
      %v2127 = vsel %vm2095, %v1964, 0.0
      %v2128 = vsel %vm2096, %v1963, 0.0
      %v2129 = vsel %vm2097, %v1962, 0.0
      %v2130 = vsel %vm2098, %v1961, 0.0
      %v2131 = vsel %vm2099, %v1960, 0.0
      %v2132 = vsel %vm2100, %v1959, 0.0
      %v2133 = vsel %vm2101, %v1958, 0.0
      %v2134 = vsel %vm2102, %v1957, 0.0
      %v2135 = vsel %vm2103, %v1956, 0.0
      %v2136 = vsel %vm2104, %v1955, 0.0
      %v2137 = vsel %vm2105, %v1954, 0.0
      %v2138 = vsel %vm2106, %v1953, 0.0
      %v2139 = vsel %vm2107, %v1952, 0.0
      %v2140 = vsel %vm2108, %v1951, 0.0
      %v2141 = vsel %vm2109, %v1950, 0.0
      %v2142 = vsel %vm2110, %v1949, 0.0
      %v2143 = vsel %vm2111, %v1948, 0.0
      %v2144 = vsel %vm2112, %v1947, 0.0
      %v2145 = vsel %vm2113, %v1946, 0.0
      %v2146 = vsel %vm2114, %v1945, 0.0
      %v2147 = vsel %vm2115, %v1944, 0.0
      %v2148 = vsel %vm2116, %v1943, 0.0
      %v2149 = vsel %vm2117, %v1942, 0.0
      %v2150 = vsel %vm2118, %v1941, 0.0
      %v2151 = vsel %vm2119, %v1940, 0.0
      %v2152 = vsel %vm2120, %v1939, 0.0
      %v2153 = vsel %vm2121, %v1938, 0.0
      %v2154 = vsel %vm2122, %v1937, 0.0
      %v2155 = vsel %vm2123, %v1936, 0.0
      %v2156 = vsel %vm2124, %v1935, 0.0
      %v2157 = vpack.c.bf16 %v2126, %v2125
      %v2158 = vpack.c.bf16 %v2128, %v2127
      %v2159 = vpack.c.bf16 %v2130, %v2129
      %v2160 = vpack.c.bf16 %v2132, %v2131
      %v2161 = vpack.c.bf16 %v2134, %v2133
      %v2162 = vpack.c.bf16 %v2136, %v2135
      %v2163 = vpack.c.bf16 %v2138, %v2137
      %v2164 = vpack.c.bf16 %v2140, %v2139
      %v2165 = vpack.c.bf16 %v2142, %v2141
      %v2166 = vpack.c.bf16 %v2144, %v2143
      %v2167 = vpack.c.bf16 %v2146, %v2145
      %v2168 = vpack.c.bf16 %v2148, %v2147
      %v2169 = vpack.c.bf16 %v2150, %v2149
      %v2170 = vpack.c.bf16 %v2152, %v2151
      %v2171 = vpack.c.bf16 %v2154, %v2153
      %v2172 = vpack.c.bf16 %v2156, %v2155
      %v2173 = vld [vmem:[%s7] sm:$0x3]
      %v2174 = vsel %vm1805, 1, 0
      %v2175 = vsel %vm1806, 1, 0
      %v2176 = vsel %vm1807, 1, 0
      %v2177 = vsel %vm1808, 1, 0
      %v2178 = vsel %vm1809, 1, 0
      %v2179 = vsel %vm1810, 1, 0
      %v2180 = vsel %vm1811, 1, 0
      %v2181 = vsel %vm1812, 1, 0
      %v2182 = vsel %vm1813, 1, 0
      %v2183 = vsel %vm1814, 1, 0
      %v2184 = vsel %vm1815, 1, 0
      %v2185 = vsel %vm1816, 1, 0
      %v2186 = vsel %vm1817, 1, 0
      %v2187 = vsel %vm1818, 1, 0
      %v2188 = vsel %vm1819, 1, 0
      %v2189 = vsel %vm1820, 1, 0
      %v2190 = vsel %vm1821, 1, 0
      %v2191 = vsel %vm1822, 1, 0
      %v2192 = vsel %vm1823, 1, 0
      %v2193 = vsel %vm1824, 1, 0
      %v2194 = vsel %vm1825, 1, 0
      %v2195 = vsel %vm1826, 1, 0
      %v2196 = vsel %vm1827, 1, 0
      %v2197 = vsel %vm1828, 1, 0
      %v2198 = vsel %vm1829, 1, 0
      %v2199 = vsel %vm1830, 1, 0
      %v2200 = vsel %vm1831, 1, 0
      %v2201 = vsel %vm1832, 1, 0
      %v2202 = vsel %vm1833, 1, 0
      %v2203 = vsel %vm1834, 1, 0
      %v2204 = vsel %vm1835, 1, 0
      %v2205 = vsel %vm1836, 1, 0
      %2206 = vset.pattern.permute.xlu0 0
      %2207 = vperm.xlu0 %2206, %v2174
      %v2208 = vpop.permute.xlu0 %2207
      %2209 = vset.pattern.permute.xlu0 0
      %2210 = vperm.xlu0 %2209, %v2175
      %v2211 = vpop.permute.xlu0 %2210
      %2212 = vset.pattern.permute.xlu0 0
      %2213 = vperm.xlu0 %2212, %v2176
      %v2214 = vpop.permute.xlu0 %2213
      %2215 = vset.pattern.permute.xlu0 0
      %2216 = vperm.xlu0 %2215, %v2177
      %v2217 = vpop.permute.xlu0 %2216
      %2218 = vset.pattern.permute.xlu0 0
      %2219 = vperm.xlu0 %2218, %v2178
      %v2220 = vpop.permute.xlu0 %2219
      %2221 = vset.pattern.permute.xlu0 0
      %2222 = vperm.xlu0 %2221, %v2179
      %v2223 = vpop.permute.xlu0 %2222
      %2224 = vset.pattern.permute.xlu0 0
      %2225 = vperm.xlu0 %2224, %v2180
      %v2226 = vpop.permute.xlu0 %2225
      %2227 = vset.pattern.permute.xlu0 0
      %2228 = vperm.xlu0 %2227, %v2181
      %v2229 = vpop.permute.xlu0 %2228
      %2230 = vset.pattern.permute.xlu0 0
      %2231 = vperm.xlu0 %2230, %v2182
      %v2232 = vpop.permute.xlu0 %2231
      %2233 = vset.pattern.permute.xlu0 0
      %2234 = vperm.xlu0 %2233, %v2183
      %v2235 = vpop.permute.xlu0 %2234
      %2236 = vset.pattern.permute.xlu0 0
      %2237 = vperm.xlu0 %2236, %v2184
      %v2238 = vpop.permute.xlu0 %2237
      %2239 = vset.pattern.permute.xlu0 0
      %2240 = vperm.xlu0 %2239, %v2185
      %v2241 = vpop.permute.xlu0 %2240
      %2242 = vset.pattern.permute.xlu0 0
      %2243 = vperm.xlu0 %2242, %v2186
      %v2244 = vpop.permute.xlu0 %2243
      %2245 = vset.pattern.permute.xlu0 0
      %2246 = vperm.xlu0 %2245, %v2187
      %v2247 = vpop.permute.xlu0 %2246
      %2248 = vset.pattern.permute.xlu0 0
      %2249 = vperm.xlu0 %2248, %v2188
      %v2250 = vpop.permute.xlu0 %2249
      %2251 = vset.pattern.permute.xlu0 0
      %2252 = vperm.xlu0 %2251, %v2189
      %v2253 = vpop.permute.xlu0 %2252
      %2254 = vset.pattern.permute.xlu0 0
      %2255 = vperm.xlu0 %2254, %v2190
      %v2256 = vpop.permute.xlu0 %2255
      %2257 = vset.pattern.permute.xlu0 0
      %2258 = vperm.xlu0 %2257, %v2191
      %v2259 = vpop.permute.xlu0 %2258
      %2260 = vset.pattern.permute.xlu0 0
      %2261 = vperm.xlu0 %2260, %v2192
      %v2262 = vpop.permute.xlu0 %2261
      %2263 = vset.pattern.permute.xlu0 0
      %2264 = vperm.xlu0 %2263, %v2193
      %v2265 = vpop.permute.xlu0 %2264
      %2266 = vset.pattern.permute.xlu0 0
      %2267 = vperm.xlu0 %2266, %v2194
      %v2268 = vpop.permute.xlu0 %2267
      %2269 = vset.pattern.permute.xlu0 0
      %2270 = vperm.xlu0 %2269, %v2195
      %v2271 = vpop.permute.xlu0 %2270
      %2272 = vset.pattern.permute.xlu0 0
      %2273 = vperm.xlu0 %2272, %v2196
      %v2274 = vpop.permute.xlu0 %2273
      %2275 = vset.pattern.permute.xlu0 0
      %2276 = vperm.xlu0 %2275, %v2197
      %v2277 = vpop.permute.xlu0 %2276
      %2278 = vset.pattern.permute.xlu0 0
      %2279 = vperm.xlu0 %2278, %v2198
      %v2280 = vpop.permute.xlu0 %2279
      %2281 = vset.pattern.permute.xlu0 0
      %2282 = vperm.xlu0 %2281, %v2199
      %v2283 = vpop.permute.xlu0 %2282
      %2284 = vset.pattern.permute.xlu0 0
      %2285 = vperm.xlu0 %2284, %v2200
      %v2286 = vpop.permute.xlu0 %2285
      %2287 = vset.pattern.permute.xlu0 0
      %2288 = vperm.xlu0 %2287, %v2201
      %v2289 = vpop.permute.xlu0 %2288
      %2290 = vset.pattern.permute.xlu0 0
      %2291 = vperm.xlu0 %2290, %v2202
      %v2292 = vpop.permute.xlu0 %2291
      %2293 = vset.pattern.permute.xlu0 0
      %2294 = vperm.xlu0 %2293, %v2203
      %v2295 = vpop.permute.xlu0 %2294
      %2296 = vset.pattern.permute.xlu0 0
      %2297 = vperm.xlu0 %2296, %v2204
      %v2298 = vpop.permute.xlu0 %2297
      %2299 = vset.pattern.permute.xlu0 0
      %2300 = vperm.xlu0 %2299, %v2205
      %v2301 = vpop.permute.xlu0 %2300
      %vm2302 = vcmp.eq.s32.totalorder %v2208, 1
      %vm2303 = vcmp.eq.s32.totalorder %v2211, 1
      %vm2304 = vcmp.eq.s32.totalorder %v2214, 1
      %vm2305 = vcmp.eq.s32.totalorder %v2217, 1
      %vm2306 = vcmp.eq.s32.totalorder %v2220, 1
      %vm2307 = vcmp.eq.s32.totalorder %v2223, 1
      %vm2308 = vcmp.eq.s32.totalorder %v2226, 1
      %vm2309 = vcmp.eq.s32.totalorder %v2229, 1
      %vm2310 = vcmp.eq.s32.totalorder %v2232, 1
      %vm2311 = vcmp.eq.s32.totalorder %v2235, 1
      %vm2312 = vcmp.eq.s32.totalorder %v2238, 1
      %vm2313 = vcmp.eq.s32.totalorder %v2241, 1
      %vm2314 = vcmp.eq.s32.totalorder %v2244, 1
      %vm2315 = vcmp.eq.s32.totalorder %v2247, 1
      %vm2316 = vcmp.eq.s32.totalorder %v2250, 1
      %vm2317 = vcmp.eq.s32.totalorder %v2253, 1
      %vm2318 = vcmp.eq.s32.totalorder %v2256, 1
      %vm2319 = vcmp.eq.s32.totalorder %v2259, 1
      %vm2320 = vcmp.eq.s32.totalorder %v2262, 1
      %vm2321 = vcmp.eq.s32.totalorder %v2265, 1
      %vm2322 = vcmp.eq.s32.totalorder %v2268, 1
      %vm2323 = vcmp.eq.s32.totalorder %v2271, 1
      %vm2324 = vcmp.eq.s32.totalorder %v2274, 1
      %vm2325 = vcmp.eq.s32.totalorder %v2277, 1
      %vm2326 = vcmp.eq.s32.totalorder %v2280, 1
      %vm2327 = vcmp.eq.s32.totalorder %v2283, 1
      %vm2328 = vcmp.eq.s32.totalorder %v2286, 1
      %vm2329 = vcmp.eq.s32.totalorder %v2289, 1
      %vm2330 = vcmp.eq.s32.totalorder %v2292, 1
      %vm2331 = vcmp.eq.s32.totalorder %v2295, 1
      %vm2332 = vcmp.eq.s32.totalorder %v2298, 1
      %vm2333 = vcmp.eq.s32.totalorder %v2301, 1
      %v2334 = vsel %vm2302, %v1739, 0.0
      %v2335 = vsel %vm2303, %v1740, 0.0
      %v2336 = vsel %vm2304, %v1709, 0.0
      %v2337 = vsel %vm2305, %v1710, 0.0
      %v2338 = vsel %vm2306, %v1711, 0.0
      %v2339 = vsel %vm2307, %v1712, 0.0
      %v2340 = vsel %vm2308, %v1713, 0.0
      %v2341 = vsel %vm2309, %v1714, 0.0
      %v2342 = vsel %vm2310, %v1715, 0.0
      %v2343 = vsel %vm2311, %v1716, 0.0
      %v2344 = vsel %vm2312, %v1717, 0.0
      %v2345 = vsel %vm2313, %v1718, 0.0
      %v2346 = vsel %vm2314, %v1719, 0.0
      %v2347 = vsel %vm2315, %v1720, 0.0
      %v2348 = vsel %vm2316, %v1721, 0.0
      %v2349 = vsel %vm2317, %v1722, 0.0
      %v2350 = vsel %vm2318, %v1723, 0.0
      %v2351 = vsel %vm2319, %v1724, 0.0
      %v2352 = vsel %vm2320, %v1725, 0.0
      %v2353 = vsel %vm2321, %v1726, 0.0
      %v2354 = vsel %vm2322, %v1727, 0.0
      %v2355 = vsel %vm2323, %v1728, 0.0
      %v2356 = vsel %vm2324, %v1729, 0.0
      %v2357 = vsel %vm2325, %v1730, 0.0
      %v2358 = vsel %vm2326, %v1731, 0.0
      %v2359 = vsel %vm2327, %v1732, 0.0
      %v2360 = vsel %vm2328, %v1733, 0.0
      %v2361 = vsel %vm2329, %v1734, 0.0
      %v2362 = vsel %vm2330, %v1735, 0.0
      %v2363 = vsel %vm2331, %v1736, 0.0
      %v2364 = vsel %vm2332, %v1737, 0.0
      %v2365 = vsel %vm2333, %v1738, 0.0
      %v2366 = vpack.c.bf16 %v2335, %v2334
      %v2367 = vpack.c.bf16 %v2337, %v2336
      %v2368 = vpack.c.bf16 %v2339, %v2338
      %v2369 = vpack.c.bf16 %v2341, %v2340
      %v2370 = vpack.c.bf16 %v2343, %v2342
      %v2371 = vpack.c.bf16 %v2345, %v2344
      %v2372 = vpack.c.bf16 %v2347, %v2346
      %v2373 = vpack.c.bf16 %v2349, %v2348
      %v2374 = vpack.c.bf16 %v2351, %v2350
      %v2375 = vpack.c.bf16 %v2353, %v2352
      %v2376 = vpack.c.bf16 %v2355, %v2354
      %v2377 = vpack.c.bf16 %v2357, %v2356
      %v2378 = vpack.c.bf16 %v2359, %v2358
      %v2379 = vpack.c.bf16 %v2361, %v2360
      %v2380 = vpack.c.bf16 %v2363, %v2362
      %v2381 = vpack.c.bf16 %v2365, %v2364
      %s2382 = scalar_lea.vmem %s7, 2
      %v2383 = vld [vmem:[%s2382] sm:$0x3]
      %v2385 = vsel %vm801, %v2366, 0
      %v2388 = vsel %vm801, %v2367, 0
      %v2391 = vsel %vm801, %v2368, 0
      %v2394 = vsel %vm801, %v2369, 0
      %v2397 = vsel %vm801, %v2370, 0
      %v2400 = vsel %vm801, %v2371, 0
      %v2403 = vsel %vm801, %v2372, 0
      %v2406 = vsel %vm801, %v2373, 0
      %v2409 = vsel %vm801, %v2374, 0
      %v2412 = vsel %vm801, %v2375, 0
      %v2415 = vsel %vm801, %v2376, 0
      %v2418 = vsel %vm801, %v2377, 0
      %v2421 = vsel %vm801, %v2378, 0
      %v2424 = vsel %vm801, %v2379, 0
      %v2427 = vsel %vm801, %v2380, 0
      %v2430 = vsel %vm801, %v2381, 0
      %v2433 = vsel %vm1026, %v2383, 0
      %2435 = vmatprep.subr.bf16.mxu0 0
      %2436 = vmatpush1.bf16.msra.mxu0 0
      %2437 = vmatprep.subr.bf16.mxu0 0
      %2438 = vmatpush1.bf16.msra.mxu0 0
      %2439 = vmatprep.subr.bf16.mxu0 0
      %2440 = vmatpush1.bf16.msra.mxu0 0
      %2441 = vmatprep.subr.bf16.mxu0 0
      %2442 = vmatpush1.bf16.msra.mxu0 0
      %2443 = vmatprep.subr.bf16.mxu0 0
      %2444 = vmatpush1.bf16.msra.mxu0 0
      %2445 = vmatprep.subr.bf16.mxu0 0
      %2446 = vmatpush1.bf16.msra.mxu0 0
      %2447 = vmatprep.subr.bf16.mxu0 0
      %2448 = vmatpush1.bf16.msra.mxu0 0
      %2449 = vmatprep.subr.bf16.mxu0 0
      %2450 = vmatpush1.bf16.msra.mxu0 %v2433
      %2451 = vmatprep.subr.bf16.mxu0 0
      %2452 = vmatpush2.bf16.msra.mxu0 0
      %2453 = vmatprep.subr.bf16.mxu0 0
      %2454 = vmatpush2.bf16.msra.mxu0 0
      %2455 = vmatprep.subr.bf16.mxu0 0
      %2456 = vmatpush2.bf16.msra.mxu0 0
      %2457 = vmatprep.subr.bf16.mxu0 0
      %2458 = vmatpush2.bf16.msra.mxu0 0
      %2459 = vmatprep.subr.bf16.mxu0 0
      %2460 = vmatpush2.bf16.msra.mxu0 0
      %2461 = vmatprep.subr.bf16.mxu0 0
      %2462 = vmatpush2.bf16.msra.mxu0 0
      %2463 = vmatprep.subr.bf16.mxu0 0
      %2464 = vmatpush2.bf16.msra.mxu0 0
      %2465 = vmatprep.subr.bf16.mxu0 0
      %2466 = vmatpush2.bf16.msra.mxu0 0
      %2467 = vmatprep.mubr.bf16.mxu0 0
      %2468 = vmatmul.mubr.bf16.gmra.mxu0 %v2385
      %v2469 = vpop.f32.mrf.mxu0
      %v2470 = vadd.f32 0.0, %v2469
      %v2471 = vpop.f32.mrf.mxu0
      %v2472 = vpop.f32.mrf.mxu0
      %v2473 = vadd.f32 0.0, %v2472
      %v2474 = vpop.f32.mrf.mxu0
      %2475 = vmatprep.mubr.bf16.mxu0 0
      %2476 = vmatmul.mubr.bf16.gmra.mxu0 %v2388
      %v2477 = vpop.f32.mrf.mxu0
      %v2478 = vadd.f32 0.0, %v2477
      %v2479 = vpop.f32.mrf.mxu0
      %v2480 = vpop.f32.mrf.mxu0
      %v2481 = vadd.f32 0.0, %v2480
      %v2482 = vpop.f32.mrf.mxu0
      %2483 = vmatprep.mubr.bf16.mxu0 0
      %2484 = vmatmul.mubr.bf16.gmra.mxu0 %v2391
      %v2485 = vpop.f32.mrf.mxu0
      %v2486 = vadd.f32 0.0, %v2485
      %v2487 = vpop.f32.mrf.mxu0
      %v2488 = vpop.f32.mrf.mxu0
      %v2489 = vadd.f32 0.0, %v2488
      %v2490 = vpop.f32.mrf.mxu0
      %2491 = vmatprep.mubr.bf16.mxu0 0
      %2492 = vmatmul.mubr.bf16.gmra.mxu0 %v2394
      %v2493 = vpop.f32.mrf.mxu0
      %v2494 = vadd.f32 0.0, %v2493
      %v2495 = vpop.f32.mrf.mxu0
      %v2496 = vpop.f32.mrf.mxu0
      %v2497 = vadd.f32 0.0, %v2496
      %v2498 = vpop.f32.mrf.mxu0
      %2499 = vmatprep.mubr.bf16.mxu0 0
      %2500 = vmatmul.mubr.bf16.gmra.mxu0 %v2397
      %v2501 = vpop.f32.mrf.mxu0
      %v2502 = vadd.f32 0.0, %v2501
      %v2503 = vpop.f32.mrf.mxu0
      %v2504 = vpop.f32.mrf.mxu0
      %v2505 = vadd.f32 0.0, %v2504
      %v2506 = vpop.f32.mrf.mxu0
      %2507 = vmatprep.mubr.bf16.mxu0 0
      %2508 = vmatmul.mubr.bf16.gmra.mxu0 %v2400
      %v2509 = vpop.f32.mrf.mxu0
      %v2510 = vadd.f32 0.0, %v2509
      %v2511 = vpop.f32.mrf.mxu0
      %v2512 = vpop.f32.mrf.mxu0
      %v2513 = vadd.f32 0.0, %v2512
      %v2514 = vpop.f32.mrf.mxu0
      %2515 = vmatprep.mubr.bf16.mxu0 0
      %2516 = vmatmul.mubr.bf16.gmra.mxu0 %v2403
      %v2517 = vpop.f32.mrf.mxu0
      %v2518 = vadd.f32 0.0, %v2517
      %v2519 = vpop.f32.mrf.mxu0
      %v2520 = vpop.f32.mrf.mxu0
      %v2521 = vadd.f32 0.0, %v2520
      %v2522 = vpop.f32.mrf.mxu0
      %2523 = vmatprep.mubr.bf16.mxu0 0
      %2524 = vmatmul.mubr.bf16.gmra.mxu0 %v2406
      %v2525 = vpop.f32.mrf.mxu0
      %v2526 = vadd.f32 0.0, %v2525
      %v2527 = vpop.f32.mrf.mxu0
      %v2528 = vpop.f32.mrf.mxu0
      %v2529 = vadd.f32 0.0, %v2528
      %v2530 = vpop.f32.mrf.mxu0
      %2531 = vmatprep.mubr.bf16.mxu0 0
      %2532 = vmatmul.mubr.bf16.gmra.mxu0 %v2409
      %v2533 = vpop.f32.mrf.mxu0
      %v2534 = vadd.f32 0.0, %v2533
      %v2535 = vpop.f32.mrf.mxu0
      %v2536 = vpop.f32.mrf.mxu0
      %v2537 = vadd.f32 0.0, %v2536
      %v2538 = vpop.f32.mrf.mxu0
      %2539 = vmatprep.mubr.bf16.mxu0 0
      %2540 = vmatmul.mubr.bf16.gmra.mxu0 %v2412
      %v2541 = vpop.f32.mrf.mxu0
      %v2542 = vadd.f32 0.0, %v2541
      %v2543 = vpop.f32.mrf.mxu0
      %v2544 = vpop.f32.mrf.mxu0
      %v2545 = vadd.f32 0.0, %v2544
      %v2546 = vpop.f32.mrf.mxu0
      %2547 = vmatprep.mubr.bf16.mxu0 0
      %2548 = vmatmul.mubr.bf16.gmra.mxu0 %v2415
      %v2549 = vpop.f32.mrf.mxu0
      %v2550 = vadd.f32 0.0, %v2549
      %v2551 = vpop.f32.mrf.mxu0
      %v2552 = vpop.f32.mrf.mxu0
      %v2553 = vadd.f32 0.0, %v2552
      %v2554 = vpop.f32.mrf.mxu0
      %2555 = vmatprep.mubr.bf16.mxu0 0
      %2556 = vmatmul.mubr.bf16.gmra.mxu0 %v2418
      %v2557 = vpop.f32.mrf.mxu0
      %v2558 = vadd.f32 0.0, %v2557
      %v2559 = vpop.f32.mrf.mxu0
      %v2560 = vpop.f32.mrf.mxu0
      %v2561 = vadd.f32 0.0, %v2560
      %v2562 = vpop.f32.mrf.mxu0
      %2563 = vmatprep.mubr.bf16.mxu0 0
      %2564 = vmatmul.mubr.bf16.gmra.mxu0 %v2421
      %v2565 = vpop.f32.mrf.mxu0
      %v2566 = vadd.f32 0.0, %v2565
      %v2567 = vpop.f32.mrf.mxu0
      %v2568 = vpop.f32.mrf.mxu0
      %v2569 = vadd.f32 0.0, %v2568
      %v2570 = vpop.f32.mrf.mxu0
      %2571 = vmatprep.mubr.bf16.mxu0 0
      %2572 = vmatmul.mubr.bf16.gmra.mxu0 %v2424
      %v2573 = vpop.f32.mrf.mxu0
      %v2574 = vadd.f32 0.0, %v2573
      %v2575 = vpop.f32.mrf.mxu0
      %v2576 = vpop.f32.mrf.mxu0
      %v2577 = vadd.f32 0.0, %v2576
      %v2578 = vpop.f32.mrf.mxu0
      %2579 = vmatprep.mubr.bf16.mxu0 0
      %2580 = vmatmul.mubr.bf16.gmra.mxu0 %v2427
      %v2581 = vpop.f32.mrf.mxu0
      %v2582 = vadd.f32 0.0, %v2581
      %v2583 = vpop.f32.mrf.mxu0
      %v2584 = vpop.f32.mrf.mxu0
      %v2585 = vadd.f32 0.0, %v2584
      %v2586 = vpop.f32.mrf.mxu0
      %2587 = vmatprep.mubr.bf16.mxu0 0
      %2588 = vmatmul.mubr.bf16.gmra.mxu0 %v2430
      %v2589 = vpop.f32.mrf.mxu0
      %v2590 = vadd.f32 0.0, %v2589
      %v2591 = vpop.f32.mrf.mxu0
      %v2592 = vpop.f32.mrf.mxu0
      %v2593 = vadd.f32 0.0, %v2592
      %v2594 = vpop.f32.mrf.mxu0
      %2595 = vdwg.mxu0
      %v2597 = vsel %vm801, %v2157, 0
      %v2600 = vsel %vm801, %v2158, 0
      %v2603 = vsel %vm801, %v2159, 0
      %v2606 = vsel %vm801, %v2160, 0
      %v2609 = vsel %vm801, %v2161, 0
      %v2612 = vsel %vm801, %v2162, 0
      %v2615 = vsel %vm801, %v2163, 0
      %v2618 = vsel %vm801, %v2164, 0
      %v2621 = vsel %vm801, %v2165, 0
      %v2624 = vsel %vm801, %v2166, 0
      %v2627 = vsel %vm801, %v2167, 0
      %v2630 = vsel %vm801, %v2168, 0
      %v2633 = vsel %vm801, %v2169, 0
      %v2636 = vsel %vm801, %v2170, 0
      %v2639 = vsel %vm801, %v2171, 0
      %v2642 = vsel %vm801, %v2172, 0
      %v2645 = vsel %vm1026, %v2173, 0
      %2647 = vmatprep.subr.bf16.mxu0 0
      %2648 = vmatpush1.bf16.msra.mxu0 0
      %2649 = vmatprep.subr.bf16.mxu0 0
      %2650 = vmatpush1.bf16.msra.mxu0 0
      %2651 = vmatprep.subr.bf16.mxu0 0
      %2652 = vmatpush1.bf16.msra.mxu0 0
      %2653 = vmatprep.subr.bf16.mxu0 0
      %2654 = vmatpush1.bf16.msra.mxu0 0
      %2655 = vmatprep.subr.bf16.mxu0 0
      %2656 = vmatpush1.bf16.msra.mxu0 0
      %2657 = vmatprep.subr.bf16.mxu0 0
      %2658 = vmatpush1.bf16.msra.mxu0 0
      %2659 = vmatprep.subr.bf16.mxu0 0
      %2660 = vmatpush1.bf16.msra.mxu0 0
      %2661 = vmatprep.subr.bf16.mxu0 0
      %2662 = vmatpush1.bf16.msra.mxu0 %v2645
      %2663 = vmatprep.subr.bf16.mxu0 0
      %2664 = vmatpush2.bf16.msra.mxu0 0
      %2665 = vmatprep.subr.bf16.mxu0 0
      %2666 = vmatpush2.bf16.msra.mxu0 0
      %2667 = vmatprep.subr.bf16.mxu0 0
      %2668 = vmatpush2.bf16.msra.mxu0 0
      %2669 = vmatprep.subr.bf16.mxu0 0
      %2670 = vmatpush2.bf16.msra.mxu0 0
      %2671 = vmatprep.subr.bf16.mxu0 0
      %2672 = vmatpush2.bf16.msra.mxu0 0
      %2673 = vmatprep.subr.bf16.mxu0 0
      %2674 = vmatpush2.bf16.msra.mxu0 0
      %2675 = vmatprep.subr.bf16.mxu0 0
      %2676 = vmatpush2.bf16.msra.mxu0 0
      %2677 = vmatprep.subr.bf16.mxu0 0
      %2678 = vmatpush2.bf16.msra.mxu0 0
      %2679 = vmatprep.mubr.bf16.mxu0 0
      %2680 = vmatmul.mubr.bf16.gmra.mxu0 %v2597
      %v2681 = vpop.f32.mrf.mxu0
      %v2682 = vadd.f32 %v2470, %v2681
      %v2683 = vpop.f32.mrf.mxu0
      %v2684 = vpop.f32.mrf.mxu0
      %v2685 = vadd.f32 %v2473, %v2684
      %v2686 = vpop.f32.mrf.mxu0
      %2687 = vmatprep.mubr.bf16.mxu0 0
      %2688 = vmatmul.mubr.bf16.gmra.mxu0 %v2600
      %v2689 = vpop.f32.mrf.mxu0
      %v2690 = vadd.f32 %v2478, %v2689
      %v2691 = vpop.f32.mrf.mxu0
      %v2692 = vpop.f32.mrf.mxu0
      %v2693 = vadd.f32 %v2481, %v2692
      %v2694 = vpop.f32.mrf.mxu0
      %2695 = vmatprep.mubr.bf16.mxu0 0
      %2696 = vmatmul.mubr.bf16.gmra.mxu0 %v2603
      %v2697 = vpop.f32.mrf.mxu0
      %v2698 = vadd.f32 %v2486, %v2697
      %v2699 = vpop.f32.mrf.mxu0
      %v2700 = vpop.f32.mrf.mxu0
      %v2701 = vadd.f32 %v2489, %v2700
      %v2702 = vpop.f32.mrf.mxu0
      %2703 = vmatprep.mubr.bf16.mxu0 0
      %2704 = vmatmul.mubr.bf16.gmra.mxu0 %v2606
      %v2705 = vpop.f32.mrf.mxu0
      %v2706 = vadd.f32 %v2494, %v2705
      %v2707 = vpop.f32.mrf.mxu0
      %v2708 = vpop.f32.mrf.mxu0
      %v2709 = vadd.f32 %v2497, %v2708
      %v2710 = vpop.f32.mrf.mxu0
      %2711 = vmatprep.mubr.bf16.mxu0 0
      %2712 = vmatmul.mubr.bf16.gmra.mxu0 %v2609
      %v2713 = vpop.f32.mrf.mxu0
      %v2714 = vadd.f32 %v2502, %v2713
      %v2715 = vpop.f32.mrf.mxu0
      %v2716 = vpop.f32.mrf.mxu0
      %v2717 = vadd.f32 %v2505, %v2716
      %v2718 = vpop.f32.mrf.mxu0
      %2719 = vmatprep.mubr.bf16.mxu0 0
      %2720 = vmatmul.mubr.bf16.gmra.mxu0 %v2612
      %v2721 = vpop.f32.mrf.mxu0
      %v2722 = vadd.f32 %v2510, %v2721
      %v2723 = vpop.f32.mrf.mxu0
      %v2724 = vpop.f32.mrf.mxu0
      %v2725 = vadd.f32 %v2513, %v2724
      %v2726 = vpop.f32.mrf.mxu0
      %2727 = vmatprep.mubr.bf16.mxu0 0
      %2728 = vmatmul.mubr.bf16.gmra.mxu0 %v2615
      %v2729 = vpop.f32.mrf.mxu0
      %v2730 = vadd.f32 %v2518, %v2729
      %v2731 = vpop.f32.mrf.mxu0
      %v2732 = vpop.f32.mrf.mxu0
      %v2733 = vadd.f32 %v2521, %v2732
      %v2734 = vpop.f32.mrf.mxu0
      %2735 = vmatprep.mubr.bf16.mxu0 0
      %2736 = vmatmul.mubr.bf16.gmra.mxu0 %v2618
      %v2737 = vpop.f32.mrf.mxu0
      %v2738 = vadd.f32 %v2526, %v2737
      %v2739 = vpop.f32.mrf.mxu0
      %v2740 = vpop.f32.mrf.mxu0
      %v2741 = vadd.f32 %v2529, %v2740
      %v2742 = vpop.f32.mrf.mxu0
      %2743 = vmatprep.mubr.bf16.mxu0 0
      %2744 = vmatmul.mubr.bf16.gmra.mxu0 %v2621
      %v2745 = vpop.f32.mrf.mxu0
      %v2746 = vadd.f32 %v2534, %v2745
      %v2747 = vpop.f32.mrf.mxu0
      %v2748 = vpop.f32.mrf.mxu0
      %v2749 = vadd.f32 %v2537, %v2748
      %v2750 = vpop.f32.mrf.mxu0
      %2751 = vmatprep.mubr.bf16.mxu0 0
      %2752 = vmatmul.mubr.bf16.gmra.mxu0 %v2624
      %v2753 = vpop.f32.mrf.mxu0
      %v2754 = vadd.f32 %v2542, %v2753
      %v2755 = vpop.f32.mrf.mxu0
      %v2756 = vpop.f32.mrf.mxu0
      %v2757 = vadd.f32 %v2545, %v2756
      %v2758 = vpop.f32.mrf.mxu0
      %2759 = vmatprep.mubr.bf16.mxu0 0
      %2760 = vmatmul.mubr.bf16.gmra.mxu0 %v2627
      %v2761 = vpop.f32.mrf.mxu0
      %v2762 = vadd.f32 %v2550, %v2761
      %v2763 = vpop.f32.mrf.mxu0
      %v2764 = vpop.f32.mrf.mxu0
      %v2765 = vadd.f32 %v2553, %v2764
      %v2766 = vpop.f32.mrf.mxu0
      %2767 = vmatprep.mubr.bf16.mxu0 0
      %2768 = vmatmul.mubr.bf16.gmra.mxu0 %v2630
      %v2769 = vpop.f32.mrf.mxu0
      %v2770 = vadd.f32 %v2558, %v2769
      %v2771 = vpop.f32.mrf.mxu0
      %v2772 = vpop.f32.mrf.mxu0
      %v2773 = vadd.f32 %v2561, %v2772
      %v2774 = vpop.f32.mrf.mxu0
      %2775 = vmatprep.mubr.bf16.mxu0 0
      %2776 = vmatmul.mubr.bf16.gmra.mxu0 %v2633
      %v2777 = vpop.f32.mrf.mxu0
      %v2778 = vadd.f32 %v2566, %v2777
      %v2779 = vpop.f32.mrf.mxu0
      %v2780 = vpop.f32.mrf.mxu0
      %v2781 = vadd.f32 %v2569, %v2780
      %v2782 = vpop.f32.mrf.mxu0
      %2783 = vmatprep.mubr.bf16.mxu0 0
      %2784 = vmatmul.mubr.bf16.gmra.mxu0 %v2636
      %v2785 = vpop.f32.mrf.mxu0
      %v2786 = vadd.f32 %v2574, %v2785
      %v2787 = vpop.f32.mrf.mxu0
      %v2788 = vpop.f32.mrf.mxu0
      %v2789 = vadd.f32 %v2577, %v2788
      %v2790 = vpop.f32.mrf.mxu0
      %2791 = vmatprep.mubr.bf16.mxu0 0
      %2792 = vmatmul.mubr.bf16.gmra.mxu0 %v2639
      %v2793 = vpop.f32.mrf.mxu0
      %v2794 = vadd.f32 %v2582, %v2793
      %v2795 = vpop.f32.mrf.mxu0
      %v2796 = vpop.f32.mrf.mxu0
      %v2797 = vadd.f32 %v2585, %v2796
      %v2798 = vpop.f32.mrf.mxu0
      %2799 = vmatprep.mubr.bf16.mxu0 0
      %2800 = vmatmul.mubr.bf16.gmra.mxu0 %v2642
      %v2801 = vpop.f32.mrf.mxu0
      %v2802 = vadd.f32 %v2590, %v2801
      %v2803 = vpop.f32.mrf.mxu0
      %v2804 = vpop.f32.mrf.mxu0
      %v2805 = vadd.f32 %v2593, %v2804
      %v2806 = vpop.f32.mrf.mxu0
      %2807 = vdwg.mxu0
      %vm2808 = vcmp.le.s32.totalorder %v1773, 14
      %vm2809 = vcmp.le.s32.totalorder %v1774, 14
      %vm2810 = vcmp.le.s32.totalorder %v1775, 14
      %vm2811 = vcmp.le.s32.totalorder %v1776, 14
      %vm2812 = vcmp.le.s32.totalorder %v1777, 14
      %vm2813 = vcmp.le.s32.totalorder %v1778, 14
      %vm2814 = vcmp.le.s32.totalorder %v1779, 14
      %vm2815 = vcmp.le.s32.totalorder %v1780, 14
      %vm2816 = vcmp.le.s32.totalorder %v1781, 14
      %vm2817 = vcmp.le.s32.totalorder %v1782, 14
      %vm2818 = vcmp.le.s32.totalorder %v1783, 14
      %vm2819 = vcmp.le.s32.totalorder %v1784, 14
      %vm2820 = vcmp.le.s32.totalorder %v1785, 14
      %vm2821 = vcmp.le.s32.totalorder %v1786, 14
      %vm2822 = vcmp.le.s32.totalorder %v1787, 14
      %vm2823 = vcmp.le.s32.totalorder %v1788, 14
      %vm2824 = vcmp.le.s32.totalorder %v1789, 14
      %vm2825 = vcmp.le.s32.totalorder %v1790, 14
      %vm2826 = vcmp.le.s32.totalorder %v1791, 14
      %vm2827 = vcmp.le.s32.totalorder %v1792, 14
      %vm2828 = vcmp.le.s32.totalorder %v1793, 14
      %vm2829 = vcmp.le.s32.totalorder %v1794, 14
      %vm2830 = vcmp.le.s32.totalorder %v1795, 14
      %vm2831 = vcmp.le.s32.totalorder %v1796, 14
      %vm2832 = vcmp.le.s32.totalorder %v1797, 14
      %vm2833 = vcmp.le.s32.totalorder %v1798, 14
      %vm2834 = vcmp.le.s32.totalorder %v1799, 14
      %vm2835 = vcmp.le.s32.totalorder %v1800, 14
      %vm2836 = vcmp.le.s32.totalorder %v1801, 14
      %vm2837 = vcmp.le.s32.totalorder %v1802, 14
      %vm2838 = vcmp.le.s32.totalorder %v1803, 14
      %vm2839 = vcmp.le.s32.totalorder %v1804, 14
      %vm2840 = vmand %vm1805, %vm2808
      %vm2841 = vmand %vm1806, %vm2809
      %vm2842 = vmand %vm1807, %vm2810
      %vm2843 = vmand %vm1808, %vm2811
      %vm2844 = vmand %vm1809, %vm2812
      %vm2845 = vmand %vm1810, %vm2813
      %vm2846 = vmand %vm1811, %vm2814
      %vm2847 = vmand %vm1812, %vm2815
      %vm2848 = vmand %vm1813, %vm2816
      %vm2849 = vmand %vm1814, %vm2817
      %vm2850 = vmand %vm1815, %vm2818
      %vm2851 = vmand %vm1816, %vm2819
      %vm2852 = vmand %vm1817, %vm2820
      %vm2853 = vmand %vm1818, %vm2821
      %vm2854 = vmand %vm1819, %vm2822
      %vm2855 = vmand %vm1820, %vm2823
      %vm2856 = vmand %vm1821, %vm2824
      %vm2857 = vmand %vm1822, %vm2825
      %vm2858 = vmand %vm1823, %vm2826
      %vm2859 = vmand %vm1824, %vm2827
      %vm2860 = vmand %vm1825, %vm2828
      %vm2861 = vmand %vm1826, %vm2829
      %vm2862 = vmand %vm1827, %vm2830
      %vm2863 = vmand %vm1828, %vm2831
      %vm2864 = vmand %vm1829, %vm2832
      %vm2865 = vmand %vm1830, %vm2833
      %vm2866 = vmand %vm1831, %vm2834
      %vm2867 = vmand %vm1832, %vm2835
      %vm2868 = vmand %vm1833, %vm2836
      %vm2869 = vmand %vm1834, %vm2837
      %vm2870 = vmand %vm1835, %vm2838
      %vm2871 = vmand %vm1836, %vm2839
      %v2872 = vrot.slane %v1709, 1
      %v2873 = vrot.slane %v1710, 1
      %v2874 = vrot.slane %v1711, 1
      %v2875 = vrot.slane %v1712, 1
      %v2876 = vrot.slane %v1713, 1
      %v2877 = vrot.slane %v1714, 1
      %v2878 = vrot.slane %v1715, 1
      %v2879 = vrot.slane %v1716, 1
      %v2880 = vrot.slane %v1717, 1
      %v2881 = vrot.slane %v1718, 1
      %v2882 = vrot.slane %v1719, 1
      %v2883 = vrot.slane %v1720, 1
      %v2884 = vrot.slane %v1721, 1
      %v2885 = vrot.slane %v1722, 1
      %v2886 = vrot.slane %v1723, 1
      %v2887 = vrot.slane %v1724, 1
      %v2888 = vrot.slane %v1725, 1
      %v2889 = vrot.slane %v1726, 1
      %v2890 = vrot.slane %v1727, 1
      %v2891 = vrot.slane %v1728, 1
      %v2892 = vrot.slane %v1729, 1
      %v2893 = vrot.slane %v1730, 1
      %v2894 = vrot.slane %v1731, 1
      %v2895 = vrot.slane %v1732, 1
      %v2896 = vrot.slane %v1733, 1
      %v2897 = vrot.slane %v1734, 1
      %v2898 = vrot.slane %v1735, 1
      %v2899 = vrot.slane %v1736, 1
      %v2900 = vrot.slane %v1737, 1
      %v2901 = vrot.slane %v1738, 1
      %v2902 = vrot.slane %v1739, 1
      %v2903 = vrot.slane %v1740, 1
      %v2904 = vsel %vm1122, %v2902, %v2903
      %v2905 = vsel %vm1122, %v2901, %v2902
      %v2906 = vsel %vm1122, %v2900, %v2901
      %v2907 = vsel %vm1122, %v2899, %v2900
      %v2908 = vsel %vm1122, %v2898, %v2899
      %v2909 = vsel %vm1122, %v2897, %v2898
      %v2910 = vsel %vm1122, %v2896, %v2897
      %v2911 = vsel %vm1122, %v2895, %v2896
      %v2912 = vsel %vm1122, %v2894, %v2895
      %v2913 = vsel %vm1122, %v2893, %v2894
      %v2914 = vsel %vm1122, %v2892, %v2893
      %v2915 = vsel %vm1122, %v2891, %v2892
      %v2916 = vsel %vm1122, %v2890, %v2891
      %v2917 = vsel %vm1122, %v2889, %v2890
      %v2918 = vsel %vm1122, %v2888, %v2889
      %v2919 = vsel %vm1122, %v2887, %v2888
      %v2920 = vsel %vm1122, %v2886, %v2887
      %v2921 = vsel %vm1122, %v2885, %v2886
      %v2922 = vsel %vm1122, %v2884, %v2885
      %v2923 = vsel %vm1122, %v2883, %v2884
      %v2924 = vsel %vm1122, %v2882, %v2883
      %v2925 = vsel %vm1122, %v2881, %v2882
      %v2926 = vsel %vm1122, %v2880, %v2881
      %v2927 = vsel %vm1122, %v2879, %v2880
      %v2928 = vsel %vm1122, %v2878, %v2879
      %v2929 = vsel %vm1122, %v2877, %v2878
      %v2930 = vsel %vm1122, %v2876, %v2877
      %v2931 = vsel %vm1122, %v2875, %v2876
      %v2932 = vsel %vm1122, %v2874, %v2875
      %v2933 = vsel %vm1122, %v2873, %v2874
      %v2934 = vsel %vm1122, %v2872, %v2873
      %v2935 = vsel %vm1122, %v2903, %v2872
      %v2936 = vsel %vm2840, 1, 0
      %v2937 = vsel %vm2841, 1, 0
      %v2938 = vsel %vm2842, 1, 0
      %v2939 = vsel %vm2843, 1, 0
      %v2940 = vsel %vm2844, 1, 0
      %v2941 = vsel %vm2845, 1, 0
      %v2942 = vsel %vm2846, 1, 0
      %v2943 = vsel %vm2847, 1, 0
      %v2944 = vsel %vm2848, 1, 0
      %v2945 = vsel %vm2849, 1, 0
      %v2946 = vsel %vm2850, 1, 0
      %v2947 = vsel %vm2851, 1, 0
      %v2948 = vsel %vm2852, 1, 0
      %v2949 = vsel %vm2853, 1, 0
      %v2950 = vsel %vm2854, 1, 0
      %v2951 = vsel %vm2855, 1, 0
      %v2952 = vsel %vm2856, 1, 0
      %v2953 = vsel %vm2857, 1, 0
      %v2954 = vsel %vm2858, 1, 0
      %v2955 = vsel %vm2859, 1, 0
      %v2956 = vsel %vm2860, 1, 0
      %v2957 = vsel %vm2861, 1, 0
      %v2958 = vsel %vm2862, 1, 0
      %v2959 = vsel %vm2863, 1, 0
      %v2960 = vsel %vm2864, 1, 0
      %v2961 = vsel %vm2865, 1, 0
      %v2962 = vsel %vm2866, 1, 0
      %v2963 = vsel %vm2867, 1, 0
      %v2964 = vsel %vm2868, 1, 0
      %v2965 = vsel %vm2869, 1, 0
      %v2966 = vsel %vm2870, 1, 0
      %v2967 = vsel %vm2871, 1, 0
      %2968 = vset.pattern.permute.xlu0 0
      %2969 = vperm.xlu0 %2968, %v2936
      %v2970 = vpop.permute.xlu0 %2969
      %2971 = vset.pattern.permute.xlu0 0
      %2972 = vperm.xlu0 %2971, %v2937
      %v2973 = vpop.permute.xlu0 %2972
      %2974 = vset.pattern.permute.xlu0 0
      %2975 = vperm.xlu0 %2974, %v2938
      %v2976 = vpop.permute.xlu0 %2975
      %2977 = vset.pattern.permute.xlu0 0
      %2978 = vperm.xlu0 %2977, %v2939
      %v2979 = vpop.permute.xlu0 %2978
      %2980 = vset.pattern.permute.xlu0 0
      %2981 = vperm.xlu0 %2980, %v2940
      %v2982 = vpop.permute.xlu0 %2981
      %2983 = vset.pattern.permute.xlu0 0
      %2984 = vperm.xlu0 %2983, %v2941
      %v2985 = vpop.permute.xlu0 %2984
      %2986 = vset.pattern.permute.xlu0 0
      %2987 = vperm.xlu0 %2986, %v2942
      %v2988 = vpop.permute.xlu0 %2987
      %2989 = vset.pattern.permute.xlu0 0
      %2990 = vperm.xlu0 %2989, %v2943
      %v2991 = vpop.permute.xlu0 %2990
      %2992 = vset.pattern.permute.xlu0 0
      %2993 = vperm.xlu0 %2992, %v2944
      %v2994 = vpop.permute.xlu0 %2993
      %2995 = vset.pattern.permute.xlu0 0
      %2996 = vperm.xlu0 %2995, %v2945
      %v2997 = vpop.permute.xlu0 %2996
      %2998 = vset.pattern.permute.xlu0 0
      %2999 = vperm.xlu0 %2998, %v2946
      %v3000 = vpop.permute.xlu0 %2999
      %3001 = vset.pattern.permute.xlu0 0
      %3002 = vperm.xlu0 %3001, %v2947
      %v3003 = vpop.permute.xlu0 %3002
      %3004 = vset.pattern.permute.xlu0 0
      %3005 = vperm.xlu0 %3004, %v2948
      %v3006 = vpop.permute.xlu0 %3005
      %3007 = vset.pattern.permute.xlu0 0
      %3008 = vperm.xlu0 %3007, %v2949
      %v3009 = vpop.permute.xlu0 %3008
      %3010 = vset.pattern.permute.xlu0 0
      %3011 = vperm.xlu0 %3010, %v2950
      %v3012 = vpop.permute.xlu0 %3011
      %3013 = vset.pattern.permute.xlu0 0
      %3014 = vperm.xlu0 %3013, %v2951
      %v3015 = vpop.permute.xlu0 %3014
      %3016 = vset.pattern.permute.xlu0 0
      %3017 = vperm.xlu0 %3016, %v2952
      %v3018 = vpop.permute.xlu0 %3017
      %3019 = vset.pattern.permute.xlu0 0
      %3020 = vperm.xlu0 %3019, %v2953
      %v3021 = vpop.permute.xlu0 %3020
      %3022 = vset.pattern.permute.xlu0 0
      %3023 = vperm.xlu0 %3022, %v2954
      %v3024 = vpop.permute.xlu0 %3023
      %3025 = vset.pattern.permute.xlu0 0
      %3026 = vperm.xlu0 %3025, %v2955
      %v3027 = vpop.permute.xlu0 %3026
      %3028 = vset.pattern.permute.xlu0 0
      %3029 = vperm.xlu0 %3028, %v2956
      %v3030 = vpop.permute.xlu0 %3029
      %3031 = vset.pattern.permute.xlu0 0
      %3032 = vperm.xlu0 %3031, %v2957
      %v3033 = vpop.permute.xlu0 %3032
      %3034 = vset.pattern.permute.xlu0 0
      %3035 = vperm.xlu0 %3034, %v2958
      %v3036 = vpop.permute.xlu0 %3035
      %3037 = vset.pattern.permute.xlu0 0
      %3038 = vperm.xlu0 %3037, %v2959
      %v3039 = vpop.permute.xlu0 %3038
      %3040 = vset.pattern.permute.xlu0 0
      %3041 = vperm.xlu0 %3040, %v2960
      %v3042 = vpop.permute.xlu0 %3041
      %3043 = vset.pattern.permute.xlu0 0
      %3044 = vperm.xlu0 %3043, %v2961
      %v3045 = vpop.permute.xlu0 %3044
      %3046 = vset.pattern.permute.xlu0 0
      %3047 = vperm.xlu0 %3046, %v2962
      %v3048 = vpop.permute.xlu0 %3047
      %3049 = vset.pattern.permute.xlu0 0
      %3050 = vperm.xlu0 %3049, %v2963
      %v3051 = vpop.permute.xlu0 %3050
      %3052 = vset.pattern.permute.xlu0 0
      %3053 = vperm.xlu0 %3052, %v2964
      %v3054 = vpop.permute.xlu0 %3053
      %3055 = vset.pattern.permute.xlu0 0
      %3056 = vperm.xlu0 %3055, %v2965
      %v3057 = vpop.permute.xlu0 %3056
      %3058 = vset.pattern.permute.xlu0 0
      %3059 = vperm.xlu0 %3058, %v2966
      %v3060 = vpop.permute.xlu0 %3059
      %3061 = vset.pattern.permute.xlu0 0
      %3062 = vperm.xlu0 %3061, %v2967
      %v3063 = vpop.permute.xlu0 %3062
      %vm3064 = vcmp.eq.s32.totalorder %v2970, 1
      %vm3065 = vcmp.eq.s32.totalorder %v2973, 1
      %vm3066 = vcmp.eq.s32.totalorder %v2976, 1
      %vm3067 = vcmp.eq.s32.totalorder %v2979, 1
      %vm3068 = vcmp.eq.s32.totalorder %v2982, 1
      %vm3069 = vcmp.eq.s32.totalorder %v2985, 1
      %vm3070 = vcmp.eq.s32.totalorder %v2988, 1
      %vm3071 = vcmp.eq.s32.totalorder %v2991, 1
      %vm3072 = vcmp.eq.s32.totalorder %v2994, 1
      %vm3073 = vcmp.eq.s32.totalorder %v2997, 1
      %vm3074 = vcmp.eq.s32.totalorder %v3000, 1
      %vm3075 = vcmp.eq.s32.totalorder %v3003, 1
      %vm3076 = vcmp.eq.s32.totalorder %v3006, 1
      %vm3077 = vcmp.eq.s32.totalorder %v3009, 1
      %vm3078 = vcmp.eq.s32.totalorder %v3012, 1
      %vm3079 = vcmp.eq.s32.totalorder %v3015, 1
      %vm3080 = vcmp.eq.s32.totalorder %v3018, 1
      %vm3081 = vcmp.eq.s32.totalorder %v3021, 1
      %vm3082 = vcmp.eq.s32.totalorder %v3024, 1
      %vm3083 = vcmp.eq.s32.totalorder %v3027, 1
      %vm3084 = vcmp.eq.s32.totalorder %v3030, 1
      %vm3085 = vcmp.eq.s32.totalorder %v3033, 1
      %vm3086 = vcmp.eq.s32.totalorder %v3036, 1
      %vm3087 = vcmp.eq.s32.totalorder %v3039, 1
      %vm3088 = vcmp.eq.s32.totalorder %v3042, 1
      %vm3089 = vcmp.eq.s32.totalorder %v3045, 1
      %vm3090 = vcmp.eq.s32.totalorder %v3048, 1
      %vm3091 = vcmp.eq.s32.totalorder %v3051, 1
      %vm3092 = vcmp.eq.s32.totalorder %v3054, 1
      %vm3093 = vcmp.eq.s32.totalorder %v3057, 1
      %vm3094 = vcmp.eq.s32.totalorder %v3060, 1
      %vm3095 = vcmp.eq.s32.totalorder %v3063, 1
      %v3096 = vsel %vm3064, %v2904, 0.0
      %v3097 = vsel %vm3065, %v2935, 0.0
      %v3098 = vsel %vm3066, %v2934, 0.0
      %v3099 = vsel %vm3067, %v2933, 0.0
      %v3100 = vsel %vm3068, %v2932, 0.0
      %v3101 = vsel %vm3069, %v2931, 0.0
      %v3102 = vsel %vm3070, %v2930, 0.0
      %v3103 = vsel %vm3071, %v2929, 0.0
      %v3104 = vsel %vm3072, %v2928, 0.0
      %v3105 = vsel %vm3073, %v2927, 0.0
      %v3106 = vsel %vm3074, %v2926, 0.0
      %v3107 = vsel %vm3075, %v2925, 0.0
      %v3108 = vsel %vm3076, %v2924, 0.0
      %v3109 = vsel %vm3077, %v2923, 0.0
      %v3110 = vsel %vm3078, %v2922, 0.0
      %v3111 = vsel %vm3079, %v2921, 0.0
      %v3112 = vsel %vm3080, %v2920, 0.0
      %v3113 = vsel %vm3081, %v2919, 0.0
      %v3114 = vsel %vm3082, %v2918, 0.0
      %v3115 = vsel %vm3083, %v2917, 0.0
      %v3116 = vsel %vm3084, %v2916, 0.0
      %v3117 = vsel %vm3085, %v2915, 0.0
      %v3118 = vsel %vm3086, %v2914, 0.0
      %v3119 = vsel %vm3087, %v2913, 0.0
      %v3120 = vsel %vm3088, %v2912, 0.0
      %v3121 = vsel %vm3089, %v2911, 0.0
      %v3122 = vsel %vm3090, %v2910, 0.0
      %v3123 = vsel %vm3091, %v2909, 0.0
      %v3124 = vsel %vm3092, %v2908, 0.0
      %v3125 = vsel %vm3093, %v2907, 0.0
      %v3126 = vsel %vm3094, %v2906, 0.0
      %v3127 = vsel %vm3095, %v2905, 0.0
      %v3128 = vpack.c.bf16 %v3097, %v3096
      %v3129 = vpack.c.bf16 %v3099, %v3098
      %v3130 = vpack.c.bf16 %v3101, %v3100
      %v3131 = vpack.c.bf16 %v3103, %v3102
      %v3132 = vpack.c.bf16 %v3105, %v3104
      %v3133 = vpack.c.bf16 %v3107, %v3106
      %v3134 = vpack.c.bf16 %v3109, %v3108
      %v3135 = vpack.c.bf16 %v3111, %v3110
      %v3136 = vpack.c.bf16 %v3113, %v3112
      %v3137 = vpack.c.bf16 %v3115, %v3114
      %v3138 = vpack.c.bf16 %v3117, %v3116
      %v3139 = vpack.c.bf16 %v3119, %v3118
      %v3140 = vpack.c.bf16 %v3121, %v3120
      %v3141 = vpack.c.bf16 %v3123, %v3122
      %v3142 = vpack.c.bf16 %v3125, %v3124
      %v3143 = vpack.c.bf16 %v3127, %v3126
      %s3144 = scalar_lea.vmem %s7, 4
      %v3145 = vld [vmem:[%s3144] sm:$0x3]
      %v3147 = vsel %vm801, %v3128, 0
      %v3150 = vsel %vm801, %v3129, 0
      %v3153 = vsel %vm801, %v3130, 0
      %v3156 = vsel %vm801, %v3131, 0
      %v3159 = vsel %vm801, %v3132, 0
      %v3162 = vsel %vm801, %v3133, 0
      %v3165 = vsel %vm801, %v3134, 0
      %v3168 = vsel %vm801, %v3135, 0
      %v3171 = vsel %vm801, %v3136, 0
      %v3174 = vsel %vm801, %v3137, 0
      %v3177 = vsel %vm801, %v3138, 0
      %v3180 = vsel %vm801, %v3139, 0
      %v3183 = vsel %vm801, %v3140, 0
      %v3186 = vsel %vm801, %v3141, 0
      %v3189 = vsel %vm801, %v3142, 0
      %v3192 = vsel %vm801, %v3143, 0
      %v3195 = vsel %vm1026, %v3145, 0
      %3197 = vmatprep.subr.bf16.mxu0 0
      %3198 = vmatpush1.bf16.msra.mxu0 0
      %3199 = vmatprep.subr.bf16.mxu0 0
      %3200 = vmatpush1.bf16.msra.mxu0 0
      %3201 = vmatprep.subr.bf16.mxu0 0
      %3202 = vmatpush1.bf16.msra.mxu0 0
      %3203 = vmatprep.subr.bf16.mxu0 0
      %3204 = vmatpush1.bf16.msra.mxu0 0
      %3205 = vmatprep.subr.bf16.mxu0 0
      %3206 = vmatpush1.bf16.msra.mxu0 0
      %3207 = vmatprep.subr.bf16.mxu0 0
      %3208 = vmatpush1.bf16.msra.mxu0 0
      %3209 = vmatprep.subr.bf16.mxu0 0
      %3210 = vmatpush1.bf16.msra.mxu0 0
      %3211 = vmatprep.subr.bf16.mxu0 0
      %3212 = vmatpush1.bf16.msra.mxu0 %v3195
      %3213 = vmatprep.subr.bf16.mxu0 0
      %3214 = vmatpush2.bf16.msra.mxu0 0
      %3215 = vmatprep.subr.bf16.mxu0 0
      %3216 = vmatpush2.bf16.msra.mxu0 0
      %3217 = vmatprep.subr.bf16.mxu0 0
      %3218 = vmatpush2.bf16.msra.mxu0 0
      %3219 = vmatprep.subr.bf16.mxu0 0
      %3220 = vmatpush2.bf16.msra.mxu0 0
      %3221 = vmatprep.subr.bf16.mxu0 0
      %3222 = vmatpush2.bf16.msra.mxu0 0
      %3223 = vmatprep.subr.bf16.mxu0 0
      %3224 = vmatpush2.bf16.msra.mxu0 0
      %3225 = vmatprep.subr.bf16.mxu0 0
      %3226 = vmatpush2.bf16.msra.mxu0 0
      %3227 = vmatprep.subr.bf16.mxu0 0
      %3228 = vmatpush2.bf16.msra.mxu0 0
      %3229 = vmatprep.mubr.bf16.mxu0 0
      %3230 = vmatmul.mubr.bf16.gmra.mxu0 %v3147
      %v3231 = vpop.f32.mrf.mxu0
      %v3232 = vadd.f32 0.0, %v3231
      %v3233 = vpop.f32.mrf.mxu0
      %v3234 = vpop.f32.mrf.mxu0
      %v3235 = vadd.f32 0.0, %v3234
      %v3236 = vpop.f32.mrf.mxu0
      %3237 = vmatprep.mubr.bf16.mxu0 0
      %3238 = vmatmul.mubr.bf16.gmra.mxu0 %v3150
      %v3239 = vpop.f32.mrf.mxu0
      %v3240 = vadd.f32 0.0, %v3239
      %v3241 = vpop.f32.mrf.mxu0
      %v3242 = vpop.f32.mrf.mxu0
      %v3243 = vadd.f32 0.0, %v3242
      %v3244 = vpop.f32.mrf.mxu0
      %3245 = vmatprep.mubr.bf16.mxu0 0
      %3246 = vmatmul.mubr.bf16.gmra.mxu0 %v3153
      %v3247 = vpop.f32.mrf.mxu0
      %v3248 = vadd.f32 0.0, %v3247
      %v3249 = vpop.f32.mrf.mxu0
      %v3250 = vpop.f32.mrf.mxu0
      %v3251 = vadd.f32 0.0, %v3250
      %v3252 = vpop.f32.mrf.mxu0
      %3253 = vmatprep.mubr.bf16.mxu0 0
      %3254 = vmatmul.mubr.bf16.gmra.mxu0 %v3156
      %v3255 = vpop.f32.mrf.mxu0
      %v3256 = vadd.f32 0.0, %v3255
      %v3257 = vpop.f32.mrf.mxu0
      %v3258 = vpop.f32.mrf.mxu0
      %v3259 = vadd.f32 0.0, %v3258
      %v3260 = vpop.f32.mrf.mxu0
      %3261 = vmatprep.mubr.bf16.mxu0 0
      %3262 = vmatmul.mubr.bf16.gmra.mxu0 %v3159
      %v3263 = vpop.f32.mrf.mxu0
      %v3264 = vadd.f32 0.0, %v3263
      %v3265 = vpop.f32.mrf.mxu0
      %v3266 = vpop.f32.mrf.mxu0
      %v3267 = vadd.f32 0.0, %v3266
      %v3268 = vpop.f32.mrf.mxu0
      %3269 = vmatprep.mubr.bf16.mxu0 0
      %3270 = vmatmul.mubr.bf16.gmra.mxu0 %v3162
      %v3271 = vpop.f32.mrf.mxu0
      %v3272 = vadd.f32 0.0, %v3271
      %v3273 = vpop.f32.mrf.mxu0
      %v3274 = vpop.f32.mrf.mxu0
      %v3275 = vadd.f32 0.0, %v3274
      %v3276 = vpop.f32.mrf.mxu0
      %3277 = vmatprep.mubr.bf16.mxu0 0
      %3278 = vmatmul.mubr.bf16.gmra.mxu0 %v3165
      %v3279 = vpop.f32.mrf.mxu0
      %v3280 = vadd.f32 0.0, %v3279
      %v3281 = vpop.f32.mrf.mxu0
      %v3282 = vpop.f32.mrf.mxu0
      %v3283 = vadd.f32 0.0, %v3282
      %v3284 = vpop.f32.mrf.mxu0
      %3285 = vmatprep.mubr.bf16.mxu0 0
      %3286 = vmatmul.mubr.bf16.gmra.mxu0 %v3168
      %v3287 = vpop.f32.mrf.mxu0
      %v3288 = vadd.f32 0.0, %v3287
      %v3289 = vpop.f32.mrf.mxu0
      %v3290 = vpop.f32.mrf.mxu0
      %v3291 = vadd.f32 0.0, %v3290
      %v3292 = vpop.f32.mrf.mxu0
      %3293 = vmatprep.mubr.bf16.mxu0 0
      %3294 = vmatmul.mubr.bf16.gmra.mxu0 %v3171
      %v3295 = vpop.f32.mrf.mxu0
      %v3296 = vadd.f32 0.0, %v3295
      %v3297 = vpop.f32.mrf.mxu0
      %v3298 = vpop.f32.mrf.mxu0
      %v3299 = vadd.f32 0.0, %v3298
      %v3300 = vpop.f32.mrf.mxu0
      %3301 = vmatprep.mubr.bf16.mxu0 0
      %3302 = vmatmul.mubr.bf16.gmra.mxu0 %v3174
      %v3303 = vpop.f32.mrf.mxu0
      %v3304 = vadd.f32 0.0, %v3303
      %v3305 = vpop.f32.mrf.mxu0
      %v3306 = vpop.f32.mrf.mxu0
      %v3307 = vadd.f32 0.0, %v3306
      %v3308 = vpop.f32.mrf.mxu0
      %3309 = vmatprep.mubr.bf16.mxu0 0
      %3310 = vmatmul.mubr.bf16.gmra.mxu0 %v3177
      %v3311 = vpop.f32.mrf.mxu0
      %v3312 = vadd.f32 0.0, %v3311
      %v3313 = vpop.f32.mrf.mxu0
      %v3314 = vpop.f32.mrf.mxu0
      %v3315 = vadd.f32 0.0, %v3314
      %v3316 = vpop.f32.mrf.mxu0
      %3317 = vmatprep.mubr.bf16.mxu0 0
      %3318 = vmatmul.mubr.bf16.gmra.mxu0 %v3180
      %v3319 = vpop.f32.mrf.mxu0
      %v3320 = vadd.f32 0.0, %v3319
      %v3321 = vpop.f32.mrf.mxu0
      %v3322 = vpop.f32.mrf.mxu0
      %v3323 = vadd.f32 0.0, %v3322
      %v3324 = vpop.f32.mrf.mxu0
      %3325 = vmatprep.mubr.bf16.mxu0 0
      %3326 = vmatmul.mubr.bf16.gmra.mxu0 %v3183
      %v3327 = vpop.f32.mrf.mxu0
      %v3328 = vadd.f32 0.0, %v3327
      %v3329 = vpop.f32.mrf.mxu0
      %v3330 = vpop.f32.mrf.mxu0
      %v3331 = vadd.f32 0.0, %v3330
      %v3332 = vpop.f32.mrf.mxu0
      %3333 = vmatprep.mubr.bf16.mxu0 0
      %3334 = vmatmul.mubr.bf16.gmra.mxu0 %v3186
      %v3335 = vpop.f32.mrf.mxu0
      %v3336 = vadd.f32 0.0, %v3335
      %v3337 = vpop.f32.mrf.mxu0
      %v3338 = vpop.f32.mrf.mxu0
      %v3339 = vadd.f32 0.0, %v3338
      %v3340 = vpop.f32.mrf.mxu0
      %3341 = vmatprep.mubr.bf16.mxu0 0
      %3342 = vmatmul.mubr.bf16.gmra.mxu0 %v3189
      %v3343 = vpop.f32.mrf.mxu0
      %v3344 = vadd.f32 0.0, %v3343
      %v3345 = vpop.f32.mrf.mxu0
      %v3346 = vpop.f32.mrf.mxu0
      %v3347 = vadd.f32 0.0, %v3346
      %v3348 = vpop.f32.mrf.mxu0
      %3349 = vmatprep.mubr.bf16.mxu0 0
      %3350 = vmatmul.mubr.bf16.gmra.mxu0 %v3192
      %v3351 = vpop.f32.mrf.mxu0
      %v3352 = vadd.f32 0.0, %v3351
      %v3353 = vpop.f32.mrf.mxu0
      %v3354 = vpop.f32.mrf.mxu0
      %v3355 = vadd.f32 0.0, %v3354
      %v3356 = vpop.f32.mrf.mxu0
      %3357 = vdwg.mxu0
      %v3358 = vadd.f32 %v2682, %v3232
      %v3359 = vadd.f32 %v2685, %v3235
      %v3360 = vadd.f32 %v2690, %v3240
      %v3361 = vadd.f32 %v2693, %v3243
      %v3362 = vadd.f32 %v2698, %v3248
      %v3363 = vadd.f32 %v2701, %v3251
      %v3364 = vadd.f32 %v2706, %v3256
      %v3365 = vadd.f32 %v2709, %v3259
      %v3366 = vadd.f32 %v2714, %v3264
      %v3367 = vadd.f32 %v2717, %v3267
      %v3368 = vadd.f32 %v2722, %v3272
      %v3369 = vadd.f32 %v2725, %v3275
      %v3370 = vadd.f32 %v2730, %v3280
      %v3371 = vadd.f32 %v2733, %v3283
      %v3372 = vadd.f32 %v2738, %v3288
      %v3373 = vadd.f32 %v2741, %v3291
      %v3374 = vadd.f32 %v2746, %v3296
      %v3375 = vadd.f32 %v2749, %v3299
      %v3376 = vadd.f32 %v2754, %v3304
      %v3377 = vadd.f32 %v2757, %v3307
      %v3378 = vadd.f32 %v2762, %v3312
      %v3379 = vadd.f32 %v2765, %v3315
      %v3380 = vadd.f32 %v2770, %v3320
      %v3381 = vadd.f32 %v2773, %v3323
      %v3382 = vadd.f32 %v2778, %v3328
      %v3383 = vadd.f32 %v2781, %v3331
      %v3384 = vadd.f32 %v2786, %v3336
      %v3385 = vadd.f32 %v2789, %v3339
      %v3386 = vadd.f32 %v2794, %v3344
      %v3387 = vadd.f32 %v2797, %v3347
      %v3388 = vadd.f32 %v2802, %v3352
      %v3389 = vadd.f32 %v2805, %v3355
      %v3390 = vsel %vm1837, 1, 0
      %v3391 = vsel %vm1838, 1, 0
      %v3392 = vsel %vm1839, 1, 0
      %v3393 = vsel %vm1840, 1, 0
      %v3394 = vsel %vm1841, 1, 0
      %v3395 = vsel %vm1842, 1, 0
      %v3396 = vsel %vm1843, 1, 0
      %v3397 = vsel %vm1844, 1, 0
      %v3398 = vsel %vm1845, 1, 0
      %v3399 = vsel %vm1846, 1, 0
      %v3400 = vsel %vm1847, 1, 0
      %v3401 = vsel %vm1848, 1, 0
      %v3402 = vsel %vm1849, 1, 0
      %v3403 = vsel %vm1850, 1, 0
      %v3404 = vsel %vm1851, 1, 0
      %v3405 = vsel %vm1852, 1, 0
      %v3406 = vsel %vm1853, 1, 0
      %v3407 = vsel %vm1854, 1, 0
      %v3408 = vsel %vm1855, 1, 0
      %v3409 = vsel %vm1856, 1, 0
      %v3410 = vsel %vm1857, 1, 0
      %v3411 = vsel %vm1858, 1, 0
      %v3412 = vsel %vm1859, 1, 0
      %v3413 = vsel %vm1860, 1, 0
      %v3414 = vsel %vm1861, 1, 0
      %v3415 = vsel %vm1862, 1, 0
      %v3416 = vsel %vm1863, 1, 0
      %v3417 = vsel %vm1864, 1, 0
      %v3418 = vsel %vm1865, 1, 0
      %v3419 = vsel %vm1866, 1, 0
      %v3420 = vsel %vm1867, 1, 0
      %v3421 = vsel %vm1868, 1, 0
      %3422 = vset.pattern.permute.xlu0 0
      %3423 = vperm.xlu0 %3422, %v3390
      %v3424 = vpop.permute.xlu0 %3423
      %3425 = vset.pattern.permute.xlu0 0
      %3426 = vperm.xlu0 %3425, %v3391
      %v3427 = vpop.permute.xlu0 %3426
      %3428 = vset.pattern.permute.xlu0 0
      %3429 = vperm.xlu0 %3428, %v3392
      %v3430 = vpop.permute.xlu0 %3429
      %3431 = vset.pattern.permute.xlu0 0
      %3432 = vperm.xlu0 %3431, %v3393
      %v3433 = vpop.permute.xlu0 %3432
      %3434 = vset.pattern.permute.xlu0 0
      %3435 = vperm.xlu0 %3434, %v3394
      %v3436 = vpop.permute.xlu0 %3435
      %3437 = vset.pattern.permute.xlu0 0
      %3438 = vperm.xlu0 %3437, %v3395
      %v3439 = vpop.permute.xlu0 %3438
      %3440 = vset.pattern.permute.xlu0 0
      %3441 = vperm.xlu0 %3440, %v3396
      %v3442 = vpop.permute.xlu0 %3441
      %3443 = vset.pattern.permute.xlu0 0
      %3444 = vperm.xlu0 %3443, %v3397
      %v3445 = vpop.permute.xlu0 %3444
      %3446 = vset.pattern.permute.xlu0 0
      %3447 = vperm.xlu0 %3446, %v3398
      %v3448 = vpop.permute.xlu0 %3447
      %3449 = vset.pattern.permute.xlu0 0
      %3450 = vperm.xlu0 %3449, %v3399
      %v3451 = vpop.permute.xlu0 %3450
      %3452 = vset.pattern.permute.xlu0 0
      %3453 = vperm.xlu0 %3452, %v3400
      %v3454 = vpop.permute.xlu0 %3453
      %3455 = vset.pattern.permute.xlu0 0
      %3456 = vperm.xlu0 %3455, %v3401
      %v3457 = vpop.permute.xlu0 %3456
      %3458 = vset.pattern.permute.xlu0 0
      %3459 = vperm.xlu0 %3458, %v3402
      %v3460 = vpop.permute.xlu0 %3459
      %3461 = vset.pattern.permute.xlu0 0
      %3462 = vperm.xlu0 %3461, %v3403
      %v3463 = vpop.permute.xlu0 %3462
      %3464 = vset.pattern.permute.xlu0 0
      %3465 = vperm.xlu0 %3464, %v3404
      %v3466 = vpop.permute.xlu0 %3465
      %3467 = vset.pattern.permute.xlu0 0
      %3468 = vperm.xlu0 %3467, %v3405
      %v3469 = vpop.permute.xlu0 %3468
      %3470 = vset.pattern.permute.xlu0 0
      %3471 = vperm.xlu0 %3470, %v3406
      %v3472 = vpop.permute.xlu0 %3471
      %3473 = vset.pattern.permute.xlu0 0
      %3474 = vperm.xlu0 %3473, %v3407
      %v3475 = vpop.permute.xlu0 %3474
      %3476 = vset.pattern.permute.xlu0 0
      %3477 = vperm.xlu0 %3476, %v3408
      %v3478 = vpop.permute.xlu0 %3477
      %3479 = vset.pattern.permute.xlu0 0
      %3480 = vperm.xlu0 %3479, %v3409
      %v3481 = vpop.permute.xlu0 %3480
      %3482 = vset.pattern.permute.xlu0 0
      %3483 = vperm.xlu0 %3482, %v3410
      %v3484 = vpop.permute.xlu0 %3483
      %3485 = vset.pattern.permute.xlu0 0
      %3486 = vperm.xlu0 %3485, %v3411
      %v3487 = vpop.permute.xlu0 %3486
      %3488 = vset.pattern.permute.xlu0 0
      %3489 = vperm.xlu0 %3488, %v3412
      %v3490 = vpop.permute.xlu0 %3489
      %3491 = vset.pattern.permute.xlu0 0
      %3492 = vperm.xlu0 %3491, %v3413
      %v3493 = vpop.permute.xlu0 %3492
      %3494 = vset.pattern.permute.xlu0 0
      %3495 = vperm.xlu0 %3494, %v3414
      %v3496 = vpop.permute.xlu0 %3495
      %3497 = vset.pattern.permute.xlu0 0
      %3498 = vperm.xlu0 %3497, %v3415
      %v3499 = vpop.permute.xlu0 %3498
      %3500 = vset.pattern.permute.xlu0 0
      %3501 = vperm.xlu0 %3500, %v3416
      %v3502 = vpop.permute.xlu0 %3501
      %3503 = vset.pattern.permute.xlu0 0
      %3504 = vperm.xlu0 %3503, %v3417
      %v3505 = vpop.permute.xlu0 %3504
      %3506 = vset.pattern.permute.xlu0 0
      %3507 = vperm.xlu0 %3506, %v3418
      %v3508 = vpop.permute.xlu0 %3507
      %3509 = vset.pattern.permute.xlu0 0
      %3510 = vperm.xlu0 %3509, %v3419
      %v3511 = vpop.permute.xlu0 %3510
      %3512 = vset.pattern.permute.xlu0 0
      %3513 = vperm.xlu0 %3512, %v3420
      %v3514 = vpop.permute.xlu0 %3513
      %3515 = vset.pattern.permute.xlu0 0
      %3516 = vperm.xlu0 %3515, %v3421
      %v3517 = vpop.permute.xlu0 %3516
      %vm3518 = vcmp.eq.s32.totalorder %v3424, 1
      %vm3519 = vcmp.eq.s32.totalorder %v3427, 1
      %vm3520 = vcmp.eq.s32.totalorder %v3430, 1
      %vm3521 = vcmp.eq.s32.totalorder %v3433, 1
      %vm3522 = vcmp.eq.s32.totalorder %v3436, 1
      %vm3523 = vcmp.eq.s32.totalorder %v3439, 1
      %vm3524 = vcmp.eq.s32.totalorder %v3442, 1
      %vm3525 = vcmp.eq.s32.totalorder %v3445, 1
      %vm3526 = vcmp.eq.s32.totalorder %v3448, 1
      %vm3527 = vcmp.eq.s32.totalorder %v3451, 1
      %vm3528 = vcmp.eq.s32.totalorder %v3454, 1
      %vm3529 = vcmp.eq.s32.totalorder %v3457, 1
      %vm3530 = vcmp.eq.s32.totalorder %v3460, 1
      %vm3531 = vcmp.eq.s32.totalorder %v3463, 1
      %vm3532 = vcmp.eq.s32.totalorder %v3466, 1
      %vm3533 = vcmp.eq.s32.totalorder %v3469, 1
      %vm3534 = vcmp.eq.s32.totalorder %v3472, 1
      %vm3535 = vcmp.eq.s32.totalorder %v3475, 1
      %vm3536 = vcmp.eq.s32.totalorder %v3478, 1
      %vm3537 = vcmp.eq.s32.totalorder %v3481, 1
      %vm3538 = vcmp.eq.s32.totalorder %v3484, 1
      %vm3539 = vcmp.eq.s32.totalorder %v3487, 1
      %vm3540 = vcmp.eq.s32.totalorder %v3490, 1
      %vm3541 = vcmp.eq.s32.totalorder %v3493, 1
      %vm3542 = vcmp.eq.s32.totalorder %v3496, 1
      %vm3543 = vcmp.eq.s32.totalorder %v3499, 1
      %vm3544 = vcmp.eq.s32.totalorder %v3502, 1
      %vm3545 = vcmp.eq.s32.totalorder %v3505, 1
      %vm3546 = vcmp.eq.s32.totalorder %v3508, 1
      %vm3547 = vcmp.eq.s32.totalorder %v3511, 1
      %vm3548 = vcmp.eq.s32.totalorder %v3514, 1
      %vm3549 = vcmp.eq.s32.totalorder %v3517, 1
      %v3550 = vsel %vm3518, %v1964, 0.0
      %v3551 = vsel %vm3519, %v1963, 0.0
      %v3552 = vsel %vm3520, %v1962, 0.0
      %v3553 = vsel %vm3521, %v1961, 0.0
      %v3554 = vsel %vm3522, %v1960, 0.0
      %v3555 = vsel %vm3523, %v1959, 0.0
      %v3556 = vsel %vm3524, %v1958, 0.0
      %v3557 = vsel %vm3525, %v1957, 0.0
      %v3558 = vsel %vm3526, %v1956, 0.0
      %v3559 = vsel %vm3527, %v1955, 0.0
      %v3560 = vsel %vm3528, %v1954, 0.0
      %v3561 = vsel %vm3529, %v1953, 0.0
      %v3562 = vsel %vm3530, %v1952, 0.0
      %v3563 = vsel %vm3531, %v1951, 0.0
      %v3564 = vsel %vm3532, %v1950, 0.0
      %v3565 = vsel %vm3533, %v1949, 0.0
      %v3566 = vsel %vm3534, %v1948, 0.0
      %v3567 = vsel %vm3535, %v1947, 0.0
      %v3568 = vsel %vm3536, %v1946, 0.0
      %v3569 = vsel %vm3537, %v1945, 0.0
      %v3570 = vsel %vm3538, %v1944, 0.0
      %v3571 = vsel %vm3539, %v1943, 0.0
      %v3572 = vsel %vm3540, %v1942, 0.0
      %v3573 = vsel %vm3541, %v1941, 0.0
      %v3574 = vsel %vm3542, %v1940, 0.0
      %v3575 = vsel %vm3543, %v1939, 0.0
      %v3576 = vsel %vm3544, %v1938, 0.0
      %v3577 = vsel %vm3545, %v1937, 0.0
      %v3578 = vsel %vm3546, %v1936, 0.0
      %v3579 = vsel %vm3547, %v1935, 0.0
      %v3580 = vsel %vm3548, %v1934, 0.0
      %v3581 = vsel %vm3549, %v1933, 0.0
      %v3582 = vpack.c.bf16 %v3551, %v3550
      %v3583 = vpack.c.bf16 %v3553, %v3552
      %v3584 = vpack.c.bf16 %v3555, %v3554
      %v3585 = vpack.c.bf16 %v3557, %v3556
      %v3586 = vpack.c.bf16 %v3559, %v3558
      %v3587 = vpack.c.bf16 %v3561, %v3560
      %v3588 = vpack.c.bf16 %v3563, %v3562
      %v3589 = vpack.c.bf16 %v3565, %v3564
      %v3590 = vpack.c.bf16 %v3567, %v3566
      %v3591 = vpack.c.bf16 %v3569, %v3568
      %v3592 = vpack.c.bf16 %v3571, %v3570
      %v3593 = vpack.c.bf16 %v3573, %v3572
      %v3594 = vpack.c.bf16 %v3575, %v3574
      %v3595 = vpack.c.bf16 %v3577, %v3576
      %v3596 = vpack.c.bf16 %v3579, %v3578
      %v3597 = vpack.c.bf16 %v3581, %v3580
      %s3598 = scalar_lea.vmem %s7, 6
      %v3599 = vld [vmem:[%s3598] sm:$0x3]
      %v3601 = vsel %vm801, %v3582, 0
      %v3604 = vsel %vm801, %v3583, 0
      %v3607 = vsel %vm801, %v3584, 0
      %v3610 = vsel %vm801, %v3585, 0
      %v3613 = vsel %vm801, %v3586, 0
      %v3616 = vsel %vm801, %v3587, 0
      %v3619 = vsel %vm801, %v3588, 0
      %v3622 = vsel %vm801, %v3589, 0
      %v3625 = vsel %vm801, %v3590, 0
      %v3628 = vsel %vm801, %v3591, 0
      %v3631 = vsel %vm801, %v3592, 0
      %v3634 = vsel %vm801, %v3593, 0
      %v3637 = vsel %vm801, %v3594, 0
      %v3640 = vsel %vm801, %v3595, 0
      %v3643 = vsel %vm801, %v3596, 0
      %v3646 = vsel %vm801, %v3597, 0
      %v3649 = vsel %vm1026, %v3599, 0
      %3651 = vmatprep.subr.bf16.mxu0 0
      %3652 = vmatpush1.bf16.msra.mxu0 0
      %3653 = vmatprep.subr.bf16.mxu0 0
      %3654 = vmatpush1.bf16.msra.mxu0 0
      %3655 = vmatprep.subr.bf16.mxu0 0
      %3656 = vmatpush1.bf16.msra.mxu0 0
      %3657 = vmatprep.subr.bf16.mxu0 0
      %3658 = vmatpush1.bf16.msra.mxu0 0
      %3659 = vmatprep.subr.bf16.mxu0 0
      %3660 = vmatpush1.bf16.msra.mxu0 0
      %3661 = vmatprep.subr.bf16.mxu0 0
      %3662 = vmatpush1.bf16.msra.mxu0 0
      %3663 = vmatprep.subr.bf16.mxu0 0
      %3664 = vmatpush1.bf16.msra.mxu0 0
      %3665 = vmatprep.subr.bf16.mxu0 0
      %3666 = vmatpush1.bf16.msra.mxu0 %v3649
      %3667 = vmatprep.subr.bf16.mxu0 0
      %3668 = vmatpush2.bf16.msra.mxu0 0
      %3669 = vmatprep.subr.bf16.mxu0 0
      %3670 = vmatpush2.bf16.msra.mxu0 0
      %3671 = vmatprep.subr.bf16.mxu0 0
      %3672 = vmatpush2.bf16.msra.mxu0 0
      %3673 = vmatprep.subr.bf16.mxu0 0
      %3674 = vmatpush2.bf16.msra.mxu0 0
      %3675 = vmatprep.subr.bf16.mxu0 0
      %3676 = vmatpush2.bf16.msra.mxu0 0
      %3677 = vmatprep.subr.bf16.mxu0 0
      %3678 = vmatpush2.bf16.msra.mxu0 0
      %3679 = vmatprep.subr.bf16.mxu0 0
      %3680 = vmatpush2.bf16.msra.mxu0 0
      %3681 = vmatprep.subr.bf16.mxu0 0
      %3682 = vmatpush2.bf16.msra.mxu0 0
      %3683 = vmatprep.mubr.bf16.mxu0 0
      %3684 = vmatmul.mubr.bf16.gmra.mxu0 %v3601
      %v3685 = vpop.f32.mrf.mxu0
      %v3686 = vadd.f32 0.0, %v3685
      %v3687 = vpop.f32.mrf.mxu0
      %v3688 = vpop.f32.mrf.mxu0
      %v3689 = vadd.f32 0.0, %v3688
      %v3690 = vpop.f32.mrf.mxu0
      %3691 = vmatprep.mubr.bf16.mxu0 0
      %3692 = vmatmul.mubr.bf16.gmra.mxu0 %v3604
      %v3693 = vpop.f32.mrf.mxu0
      %v3694 = vadd.f32 0.0, %v3693
      %v3695 = vpop.f32.mrf.mxu0
      %v3696 = vpop.f32.mrf.mxu0
      %v3697 = vadd.f32 0.0, %v3696
      %v3698 = vpop.f32.mrf.mxu0
      %3699 = vmatprep.mubr.bf16.mxu0 0
      %3700 = vmatmul.mubr.bf16.gmra.mxu0 %v3607
      %v3701 = vpop.f32.mrf.mxu0
      %v3702 = vadd.f32 0.0, %v3701
      %v3703 = vpop.f32.mrf.mxu0
      %v3704 = vpop.f32.mrf.mxu0
      %v3705 = vadd.f32 0.0, %v3704
      %v3706 = vpop.f32.mrf.mxu0
      %3707 = vmatprep.mubr.bf16.mxu0 0
      %3708 = vmatmul.mubr.bf16.gmra.mxu0 %v3610
      %v3709 = vpop.f32.mrf.mxu0
      %v3710 = vadd.f32 0.0, %v3709
      %v3711 = vpop.f32.mrf.mxu0
      %v3712 = vpop.f32.mrf.mxu0
      %v3713 = vadd.f32 0.0, %v3712
      %v3714 = vpop.f32.mrf.mxu0
      %3715 = vmatprep.mubr.bf16.mxu0 0
      %3716 = vmatmul.mubr.bf16.gmra.mxu0 %v3613
      %v3717 = vpop.f32.mrf.mxu0
      %v3718 = vadd.f32 0.0, %v3717
      %v3719 = vpop.f32.mrf.mxu0
      %v3720 = vpop.f32.mrf.mxu0
      %v3721 = vadd.f32 0.0, %v3720
      %v3722 = vpop.f32.mrf.mxu0
      %3723 = vmatprep.mubr.bf16.mxu0 0
      %3724 = vmatmul.mubr.bf16.gmra.mxu0 %v3616
      %v3725 = vpop.f32.mrf.mxu0
      %v3726 = vadd.f32 0.0, %v3725
      %v3727 = vpop.f32.mrf.mxu0
      %v3728 = vpop.f32.mrf.mxu0
      %v3729 = vadd.f32 0.0, %v3728
      %v3730 = vpop.f32.mrf.mxu0
      %3731 = vmatprep.mubr.bf16.mxu0 0
      %3732 = vmatmul.mubr.bf16.gmra.mxu0 %v3619
      %v3733 = vpop.f32.mrf.mxu0
      %v3734 = vadd.f32 0.0, %v3733
      %v3735 = vpop.f32.mrf.mxu0
      %v3736 = vpop.f32.mrf.mxu0
      %v3737 = vadd.f32 0.0, %v3736
      %v3738 = vpop.f32.mrf.mxu0
      %3739 = vmatprep.mubr.bf16.mxu0 0
      %3740 = vmatmul.mubr.bf16.gmra.mxu0 %v3622
      %v3741 = vpop.f32.mrf.mxu0
      %v3742 = vadd.f32 0.0, %v3741
      %v3743 = vpop.f32.mrf.mxu0
      %v3744 = vpop.f32.mrf.mxu0
      %v3745 = vadd.f32 0.0, %v3744
      %v3746 = vpop.f32.mrf.mxu0
      %3747 = vmatprep.mubr.bf16.mxu0 0
      %3748 = vmatmul.mubr.bf16.gmra.mxu0 %v3625
      %v3749 = vpop.f32.mrf.mxu0
      %v3750 = vadd.f32 0.0, %v3749
      %v3751 = vpop.f32.mrf.mxu0
      %v3752 = vpop.f32.mrf.mxu0
      %v3753 = vadd.f32 0.0, %v3752
      %v3754 = vpop.f32.mrf.mxu0
      %3755 = vmatprep.mubr.bf16.mxu0 0
      %3756 = vmatmul.mubr.bf16.gmra.mxu0 %v3628
      %v3757 = vpop.f32.mrf.mxu0
      %v3758 = vadd.f32 0.0, %v3757
      %v3759 = vpop.f32.mrf.mxu0
      %v3760 = vpop.f32.mrf.mxu0
      %v3761 = vadd.f32 0.0, %v3760
      %v3762 = vpop.f32.mrf.mxu0
      %3763 = vmatprep.mubr.bf16.mxu0 0
      %3764 = vmatmul.mubr.bf16.gmra.mxu0 %v3631
      %v3765 = vpop.f32.mrf.mxu0
      %v3766 = vadd.f32 0.0, %v3765
      %v3767 = vpop.f32.mrf.mxu0
      %v3768 = vpop.f32.mrf.mxu0
      %v3769 = vadd.f32 0.0, %v3768
      %v3770 = vpop.f32.mrf.mxu0
      %3771 = vmatprep.mubr.bf16.mxu0 0
      %3772 = vmatmul.mubr.bf16.gmra.mxu0 %v3634
      %v3773 = vpop.f32.mrf.mxu0
      %v3774 = vadd.f32 0.0, %v3773
      %v3775 = vpop.f32.mrf.mxu0
      %v3776 = vpop.f32.mrf.mxu0
      %v3777 = vadd.f32 0.0, %v3776
      %v3778 = vpop.f32.mrf.mxu0
      %3779 = vmatprep.mubr.bf16.mxu0 0
      %3780 = vmatmul.mubr.bf16.gmra.mxu0 %v3637
      %v3781 = vpop.f32.mrf.mxu0
      %v3782 = vadd.f32 0.0, %v3781
      %v3783 = vpop.f32.mrf.mxu0
      %v3784 = vpop.f32.mrf.mxu0
      %v3785 = vadd.f32 0.0, %v3784
      %v3786 = vpop.f32.mrf.mxu0
      %3787 = vmatprep.mubr.bf16.mxu0 0
      %3788 = vmatmul.mubr.bf16.gmra.mxu0 %v3640
      %v3789 = vpop.f32.mrf.mxu0
      %v3790 = vadd.f32 0.0, %v3789
      %v3791 = vpop.f32.mrf.mxu0
      %v3792 = vpop.f32.mrf.mxu0
      %v3793 = vadd.f32 0.0, %v3792
      %v3794 = vpop.f32.mrf.mxu0
      %3795 = vmatprep.mubr.bf16.mxu0 0
      %3796 = vmatmul.mubr.bf16.gmra.mxu0 %v3643
      %v3797 = vpop.f32.mrf.mxu0
      %v3798 = vadd.f32 0.0, %v3797
      %v3799 = vpop.f32.mrf.mxu0
      %v3800 = vpop.f32.mrf.mxu0
      %v3801 = vadd.f32 0.0, %v3800
      %v3802 = vpop.f32.mrf.mxu0
      %3803 = vmatprep.mubr.bf16.mxu0 0
      %3804 = vmatmul.mubr.bf16.gmra.mxu0 %v3646
      %v3805 = vpop.f32.mrf.mxu0
      %v3806 = vadd.f32 0.0, %v3805
      %v3807 = vpop.f32.mrf.mxu0
      %v3808 = vpop.f32.mrf.mxu0
      %v3809 = vadd.f32 0.0, %v3808
      %v3810 = vpop.f32.mrf.mxu0
      %3811 = vdwg.mxu0
      %v3812 = vadd.f32 %v3358, %v3686
      %v3813 = vadd.f32 %v3359, %v3689
      %v3814 = vadd.f32 %v3360, %v3694
      %v3815 = vadd.f32 %v3361, %v3697
      %v3816 = vadd.f32 %v3362, %v3702
      %v3817 = vadd.f32 %v3363, %v3705
      %v3818 = vadd.f32 %v3364, %v3710
      %v3819 = vadd.f32 %v3365, %v3713
      %v3820 = vadd.f32 %v3366, %v3718
      %v3821 = vadd.f32 %v3367, %v3721
      %v3822 = vadd.f32 %v3368, %v3726
      %v3823 = vadd.f32 %v3369, %v3729
      %v3824 = vadd.f32 %v3370, %v3734
      %v3825 = vadd.f32 %v3371, %v3737
      %v3826 = vadd.f32 %v3372, %v3742
      %v3827 = vadd.f32 %v3373, %v3745
      %v3828 = vadd.f32 %v3374, %v3750
      %v3829 = vadd.f32 %v3375, %v3753
      %v3830 = vadd.f32 %v3376, %v3758
      %v3831 = vadd.f32 %v3377, %v3761
      %v3832 = vadd.f32 %v3378, %v3766
      %v3833 = vadd.f32 %v3379, %v3769
      %v3834 = vadd.f32 %v3380, %v3774
      %v3835 = vadd.f32 %v3381, %v3777
      %v3836 = vadd.f32 %v3382, %v3782
      %v3837 = vadd.f32 %v3383, %v3785
      %v3838 = vadd.f32 %v3384, %v3790
      %v3839 = vadd.f32 %v3385, %v3793
      %v3840 = vadd.f32 %v3386, %v3798
      %v3841 = vadd.f32 %v3387, %v3801
      %v3842 = vadd.f32 %v3388, %v3806
      %v3843 = vadd.f32 %v3389, %v3809
      %v3844 = vpack.c.bf16 %v1710, %v1709
      %v3845 = vpack.c.bf16 %v1712, %v1711
      %v3846 = vpack.c.bf16 %v1714, %v1713
      %v3847 = vpack.c.bf16 %v1716, %v1715
      %v3848 = vpack.c.bf16 %v1718, %v1717
      %v3849 = vpack.c.bf16 %v1720, %v1719
      %v3850 = vpack.c.bf16 %v1722, %v1721
      %v3851 = vpack.c.bf16 %v1724, %v1723
      %v3852 = vpack.c.bf16 %v1726, %v1725
      %v3853 = vpack.c.bf16 %v1728, %v1727
      %v3854 = vpack.c.bf16 %v1730, %v1729
      %v3855 = vpack.c.bf16 %v1732, %v1731
      %v3856 = vpack.c.bf16 %v1734, %v1733
      %v3857 = vpack.c.bf16 %v1736, %v1735
      %v3858 = vpack.c.bf16 %v1738, %v1737
      %v3859 = vpack.c.bf16 %v1740, %v1739
      %s3860 = scalar_lea.vmem %s7, 8
      %v3861 = vld [vmem:[%s3860] sm:$0x3]
      %v3863 = vsel %vm801, %v3844, 0
      %v3866 = vsel %vm801, %v3845, 0
      %v3869 = vsel %vm801, %v3846, 0
      %v3872 = vsel %vm801, %v3847, 0
      %v3875 = vsel %vm801, %v3848, 0
      %v3878 = vsel %vm801, %v3849, 0
      %v3881 = vsel %vm801, %v3850, 0
      %v3884 = vsel %vm801, %v3851, 0
      %v3887 = vsel %vm801, %v3852, 0
      %v3890 = vsel %vm801, %v3853, 0
      %v3893 = vsel %vm801, %v3854, 0
      %v3896 = vsel %vm801, %v3855, 0
      %v3899 = vsel %vm801, %v3856, 0
      %v3902 = vsel %vm801, %v3857, 0
      %v3905 = vsel %vm801, %v3858, 0
      %v3908 = vsel %vm801, %v3859, 0
      %v3911 = vsel %vm1026, %v3861, 0
      %3913 = vmatprep.subr.bf16.mxu0 0
      %3914 = vmatpush1.bf16.msra.mxu0 0
      %3915 = vmatprep.subr.bf16.mxu0 0
      %3916 = vmatpush1.bf16.msra.mxu0 0
      %3917 = vmatprep.subr.bf16.mxu0 0
      %3918 = vmatpush1.bf16.msra.mxu0 0
      %3919 = vmatprep.subr.bf16.mxu0 0
      %3920 = vmatpush1.bf16.msra.mxu0 0
      %3921 = vmatprep.subr.bf16.mxu0 0
      %3922 = vmatpush1.bf16.msra.mxu0 0
      %3923 = vmatprep.subr.bf16.mxu0 0
      %3924 = vmatpush1.bf16.msra.mxu0 0
      %3925 = vmatprep.subr.bf16.mxu0 0
      %3926 = vmatpush1.bf16.msra.mxu0 0
      %3927 = vmatprep.subr.bf16.mxu0 0
      %3928 = vmatpush1.bf16.msra.mxu0 %v3911
      %3929 = vmatprep.subr.bf16.mxu0 0
      %3930 = vmatpush2.bf16.msra.mxu0 0
      %3931 = vmatprep.subr.bf16.mxu0 0
      %3932 = vmatpush2.bf16.msra.mxu0 0
      %3933 = vmatprep.subr.bf16.mxu0 0
      %3934 = vmatpush2.bf16.msra.mxu0 0
      %3935 = vmatprep.subr.bf16.mxu0 0
      %3936 = vmatpush2.bf16.msra.mxu0 0
      %3937 = vmatprep.subr.bf16.mxu0 0
      %3938 = vmatpush2.bf16.msra.mxu0 0
      %3939 = vmatprep.subr.bf16.mxu0 0
      %3940 = vmatpush2.bf16.msra.mxu0 0
      %3941 = vmatprep.subr.bf16.mxu0 0
      %3942 = vmatpush2.bf16.msra.mxu0 0
      %3943 = vmatprep.subr.bf16.mxu0 0
      %3944 = vmatpush2.bf16.msra.mxu0 0
      %3945 = vmatprep.mubr.bf16.mxu0 0
      %3946 = vmatmul.mubr.bf16.gmra.mxu0 %v3863
      %v3947 = vpop.f32.mrf.mxu0
      %v3948 = vadd.f32 0.0, %v3947
      %v3949 = vpop.f32.mrf.mxu0
      %v3950 = vpop.f32.mrf.mxu0
      %v3951 = vadd.f32 0.0, %v3950
      %v3952 = vpop.f32.mrf.mxu0
      %3953 = vmatprep.mubr.bf16.mxu0 0
      %3954 = vmatmul.mubr.bf16.gmra.mxu0 %v3866
      %v3955 = vpop.f32.mrf.mxu0
      %v3956 = vadd.f32 0.0, %v3955
      %v3957 = vpop.f32.mrf.mxu0
      %v3958 = vpop.f32.mrf.mxu0
      %v3959 = vadd.f32 0.0, %v3958
      %v3960 = vpop.f32.mrf.mxu0
      %3961 = vmatprep.mubr.bf16.mxu0 0
      %3962 = vmatmul.mubr.bf16.gmra.mxu0 %v3869
      %v3963 = vpop.f32.mrf.mxu0
      %v3964 = vadd.f32 0.0, %v3963
      %v3965 = vpop.f32.mrf.mxu0
      %v3966 = vpop.f32.mrf.mxu0
      %v3967 = vadd.f32 0.0, %v3966
      %v3968 = vpop.f32.mrf.mxu0
      %3969 = vmatprep.mubr.bf16.mxu0 0
      %3970 = vmatmul.mubr.bf16.gmra.mxu0 %v3872
      %v3971 = vpop.f32.mrf.mxu0
      %v3972 = vadd.f32 0.0, %v3971
      %v3973 = vpop.f32.mrf.mxu0
      %v3974 = vpop.f32.mrf.mxu0
      %v3975 = vadd.f32 0.0, %v3974
      %v3976 = vpop.f32.mrf.mxu0
      %3977 = vmatprep.mubr.bf16.mxu0 0
      %3978 = vmatmul.mubr.bf16.gmra.mxu0 %v3875
      %v3979 = vpop.f32.mrf.mxu0
      %v3980 = vadd.f32 0.0, %v3979
      %v3981 = vpop.f32.mrf.mxu0
      %v3982 = vpop.f32.mrf.mxu0
      %v3983 = vadd.f32 0.0, %v3982
      %v3984 = vpop.f32.mrf.mxu0
      %3985 = vmatprep.mubr.bf16.mxu0 0
      %3986 = vmatmul.mubr.bf16.gmra.mxu0 %v3878
      %v3987 = vpop.f32.mrf.mxu0
      %v3988 = vadd.f32 0.0, %v3987
      %v3989 = vpop.f32.mrf.mxu0
      %v3990 = vpop.f32.mrf.mxu0
      %v3991 = vadd.f32 0.0, %v3990
      %v3992 = vpop.f32.mrf.mxu0
      %3993 = vmatprep.mubr.bf16.mxu0 0
      %3994 = vmatmul.mubr.bf16.gmra.mxu0 %v3881
      %v3995 = vpop.f32.mrf.mxu0
      %v3996 = vadd.f32 0.0, %v3995
      %v3997 = vpop.f32.mrf.mxu0
      %v3998 = vpop.f32.mrf.mxu0
      %v3999 = vadd.f32 0.0, %v3998
      %v4000 = vpop.f32.mrf.mxu0
      %4001 = vmatprep.mubr.bf16.mxu0 0
      %4002 = vmatmul.mubr.bf16.gmra.mxu0 %v3884
      %v4003 = vpop.f32.mrf.mxu0
      %v4004 = vadd.f32 0.0, %v4003
      %v4005 = vpop.f32.mrf.mxu0
      %v4006 = vpop.f32.mrf.mxu0
      %v4007 = vadd.f32 0.0, %v4006
      %v4008 = vpop.f32.mrf.mxu0
      %4009 = vmatprep.mubr.bf16.mxu0 0
      %4010 = vmatmul.mubr.bf16.gmra.mxu0 %v3887
      %v4011 = vpop.f32.mrf.mxu0
      %v4012 = vadd.f32 0.0, %v4011
      %v4013 = vpop.f32.mrf.mxu0
      %v4014 = vpop.f32.mrf.mxu0
      %v4015 = vadd.f32 0.0, %v4014
      %v4016 = vpop.f32.mrf.mxu0
      %4017 = vmatprep.mubr.bf16.mxu0 0
      %4018 = vmatmul.mubr.bf16.gmra.mxu0 %v3890
      %v4019 = vpop.f32.mrf.mxu0
      %v4020 = vadd.f32 0.0, %v4019
      %v4021 = vpop.f32.mrf.mxu0
      %v4022 = vpop.f32.mrf.mxu0
      %v4023 = vadd.f32 0.0, %v4022
      %v4024 = vpop.f32.mrf.mxu0
      %4025 = vmatprep.mubr.bf16.mxu0 0
      %4026 = vmatmul.mubr.bf16.gmra.mxu0 %v3893
      %v4027 = vpop.f32.mrf.mxu0
      %v4028 = vadd.f32 0.0, %v4027
      %v4029 = vpop.f32.mrf.mxu0
      %v4030 = vpop.f32.mrf.mxu0
      %v4031 = vadd.f32 0.0, %v4030
      %v4032 = vpop.f32.mrf.mxu0
      %4033 = vmatprep.mubr.bf16.mxu0 0
      %4034 = vmatmul.mubr.bf16.gmra.mxu0 %v3896
      %v4035 = vpop.f32.mrf.mxu0
      %v4036 = vadd.f32 0.0, %v4035
      %v4037 = vpop.f32.mrf.mxu0
      %v4038 = vpop.f32.mrf.mxu0
      %v4039 = vadd.f32 0.0, %v4038
      %v4040 = vpop.f32.mrf.mxu0
      %4041 = vmatprep.mubr.bf16.mxu0 0
      %4042 = vmatmul.mubr.bf16.gmra.mxu0 %v3899
      %v4043 = vpop.f32.mrf.mxu0
      %v4044 = vadd.f32 0.0, %v4043
      %v4045 = vpop.f32.mrf.mxu0
      %v4046 = vpop.f32.mrf.mxu0
      %v4047 = vadd.f32 0.0, %v4046
      %v4048 = vpop.f32.mrf.mxu0
      %4049 = vmatprep.mubr.bf16.mxu0 0
      %4050 = vmatmul.mubr.bf16.gmra.mxu0 %v3902
      %v4051 = vpop.f32.mrf.mxu0
      %v4052 = vadd.f32 0.0, %v4051
      %v4053 = vpop.f32.mrf.mxu0
      %v4054 = vpop.f32.mrf.mxu0
      %v4055 = vadd.f32 0.0, %v4054
      %v4056 = vpop.f32.mrf.mxu0
      %4057 = vmatprep.mubr.bf16.mxu0 0
      %4058 = vmatmul.mubr.bf16.gmra.mxu0 %v3905
      %v4059 = vpop.f32.mrf.mxu0
      %v4060 = vadd.f32 0.0, %v4059
      %v4061 = vpop.f32.mrf.mxu0
      %v4062 = vpop.f32.mrf.mxu0
      %v4063 = vadd.f32 0.0, %v4062
      %v4064 = vpop.f32.mrf.mxu0
      %4065 = vmatprep.mubr.bf16.mxu0 0
      %4066 = vmatmul.mubr.bf16.gmra.mxu0 %v3908
      %v4067 = vpop.f32.mrf.mxu0
      %v4068 = vadd.f32 0.0, %v4067
      %v4069 = vpop.f32.mrf.mxu0
      %v4070 = vpop.f32.mrf.mxu0
      %v4071 = vadd.f32 0.0, %v4070
      %v4072 = vpop.f32.mrf.mxu0
      %4073 = vdwg.mxu0
      %v4074 = vadd.f32 %v3812, %v3948
      %v4075 = vadd.f32 %v3813, %v3951
      %v4076 = vadd.f32 %v3814, %v3956
      %v4077 = vadd.f32 %v3815, %v3959
      %v4078 = vadd.f32 %v3816, %v3964
      %v4079 = vadd.f32 %v3817, %v3967
      %v4080 = vadd.f32 %v3818, %v3972
      %v4081 = vadd.f32 %v3819, %v3975
      %v4082 = vadd.f32 %v3820, %v3980
      %v4083 = vadd.f32 %v3821, %v3983
      %v4084 = vadd.f32 %v3822, %v3988
      %v4085 = vadd.f32 %v3823, %v3991
      %v4086 = vadd.f32 %v3824, %v3996
      %v4087 = vadd.f32 %v3825, %v3999
      %v4088 = vadd.f32 %v3826, %v4004
      %v4089 = vadd.f32 %v3827, %v4007
      %v4090 = vadd.f32 %v3828, %v4012
      %v4091 = vadd.f32 %v3829, %v4015
      %v4092 = vadd.f32 %v3830, %v4020
      %v4093 = vadd.f32 %v3831, %v4023
      %v4094 = vadd.f32 %v3832, %v4028
      %v4095 = vadd.f32 %v3833, %v4031
      %v4096 = vadd.f32 %v3834, %v4036
      %v4097 = vadd.f32 %v3835, %v4039
      %v4098 = vadd.f32 %v3836, %v4044
      %v4099 = vadd.f32 %v3837, %v4047
      %v4100 = vadd.f32 %v3838, %v4052
      %v4101 = vadd.f32 %v3839, %v4055
      %v4102 = vadd.f32 %v3840, %v4060
      %v4103 = vadd.f32 %v3841, %v4063
      %v4104 = vadd.f32 %v3842, %v4068
      %v4105 = vadd.f32 %v3843, %v4071
      %v4106 = vsel %vm2808, 1, 0
      %v4107 = vsel %vm2809, 1, 0
      %v4108 = vsel %vm2810, 1, 0
      %v4109 = vsel %vm2811, 1, 0
      %v4110 = vsel %vm2812, 1, 0
      %v4111 = vsel %vm2813, 1, 0
      %v4112 = vsel %vm2814, 1, 0
      %v4113 = vsel %vm2815, 1, 0
      %v4114 = vsel %vm2816, 1, 0
      %v4115 = vsel %vm2817, 1, 0
      %v4116 = vsel %vm2818, 1, 0
      %v4117 = vsel %vm2819, 1, 0
      %v4118 = vsel %vm2820, 1, 0
      %v4119 = vsel %vm2821, 1, 0
      %v4120 = vsel %vm2822, 1, 0
      %v4121 = vsel %vm2823, 1, 0
      %v4122 = vsel %vm2824, 1, 0
      %v4123 = vsel %vm2825, 1, 0
      %v4124 = vsel %vm2826, 1, 0
      %v4125 = vsel %vm2827, 1, 0
      %v4126 = vsel %vm2828, 1, 0
      %v4127 = vsel %vm2829, 1, 0
      %v4128 = vsel %vm2830, 1, 0
      %v4129 = vsel %vm2831, 1, 0
      %v4130 = vsel %vm2832, 1, 0
      %v4131 = vsel %vm2833, 1, 0
      %v4132 = vsel %vm2834, 1, 0
      %v4133 = vsel %vm2835, 1, 0
      %v4134 = vsel %vm2836, 1, 0
      %v4135 = vsel %vm2837, 1, 0
      %v4136 = vsel %vm2838, 1, 0
      %v4137 = vsel %vm2839, 1, 0
      %4138 = vset.pattern.permute.xlu0 0
      %4139 = vperm.xlu0 %4138, %v4106
      %v4140 = vpop.permute.xlu0 %4139
      %4141 = vset.pattern.permute.xlu0 0
      %4142 = vperm.xlu0 %4141, %v4107
      %v4143 = vpop.permute.xlu0 %4142
      %4144 = vset.pattern.permute.xlu0 0
      %4145 = vperm.xlu0 %4144, %v4108
      %v4146 = vpop.permute.xlu0 %4145
      %4147 = vset.pattern.permute.xlu0 0
      %4148 = vperm.xlu0 %4147, %v4109
      %v4149 = vpop.permute.xlu0 %4148
      %4150 = vset.pattern.permute.xlu0 0
      %4151 = vperm.xlu0 %4150, %v4110
      %v4152 = vpop.permute.xlu0 %4151
      %4153 = vset.pattern.permute.xlu0 0
      %4154 = vperm.xlu0 %4153, %v4111
      %v4155 = vpop.permute.xlu0 %4154
      %4156 = vset.pattern.permute.xlu0 0
      %4157 = vperm.xlu0 %4156, %v4112
      %v4158 = vpop.permute.xlu0 %4157
      %4159 = vset.pattern.permute.xlu0 0
      %4160 = vperm.xlu0 %4159, %v4113
      %v4161 = vpop.permute.xlu0 %4160
      %4162 = vset.pattern.permute.xlu0 0
      %4163 = vperm.xlu0 %4162, %v4114
      %v4164 = vpop.permute.xlu0 %4163
      %4165 = vset.pattern.permute.xlu0 0
      %4166 = vperm.xlu0 %4165, %v4115
      %v4167 = vpop.permute.xlu0 %4166
      %4168 = vset.pattern.permute.xlu0 0
      %4169 = vperm.xlu0 %4168, %v4116
      %v4170 = vpop.permute.xlu0 %4169
      %4171 = vset.pattern.permute.xlu0 0
      %4172 = vperm.xlu0 %4171, %v4117
      %v4173 = vpop.permute.xlu0 %4172
      %4174 = vset.pattern.permute.xlu0 0
      %4175 = vperm.xlu0 %4174, %v4118
      %v4176 = vpop.permute.xlu0 %4175
      %4177 = vset.pattern.permute.xlu0 0
      %4178 = vperm.xlu0 %4177, %v4119
      %v4179 = vpop.permute.xlu0 %4178
      %4180 = vset.pattern.permute.xlu0 0
      %4181 = vperm.xlu0 %4180, %v4120
      %v4182 = vpop.permute.xlu0 %4181
      %4183 = vset.pattern.permute.xlu0 0
      %4184 = vperm.xlu0 %4183, %v4121
      %v4185 = vpop.permute.xlu0 %4184
      %4186 = vset.pattern.permute.xlu0 0
      %4187 = vperm.xlu0 %4186, %v4122
      %v4188 = vpop.permute.xlu0 %4187
      %4189 = vset.pattern.permute.xlu0 0
      %4190 = vperm.xlu0 %4189, %v4123
      %v4191 = vpop.permute.xlu0 %4190
      %4192 = vset.pattern.permute.xlu0 0
      %4193 = vperm.xlu0 %4192, %v4124
      %v4194 = vpop.permute.xlu0 %4193
      %4195 = vset.pattern.permute.xlu0 0
      %4196 = vperm.xlu0 %4195, %v4125
      %v4197 = vpop.permute.xlu0 %4196
      %4198 = vset.pattern.permute.xlu0 0
      %4199 = vperm.xlu0 %4198, %v4126
      %v4200 = vpop.permute.xlu0 %4199
      %4201 = vset.pattern.permute.xlu0 0
      %4202 = vperm.xlu0 %4201, %v4127
      %v4203 = vpop.permute.xlu0 %4202
      %4204 = vset.pattern.permute.xlu0 0
      %4205 = vperm.xlu0 %4204, %v4128
      %v4206 = vpop.permute.xlu0 %4205
      %4207 = vset.pattern.permute.xlu0 0
      %4208 = vperm.xlu0 %4207, %v4129
      %v4209 = vpop.permute.xlu0 %4208
      %4210 = vset.pattern.permute.xlu0 0
      %4211 = vperm.xlu0 %4210, %v4130
      %v4212 = vpop.permute.xlu0 %4211
      %4213 = vset.pattern.permute.xlu0 0
      %4214 = vperm.xlu0 %4213, %v4131
      %v4215 = vpop.permute.xlu0 %4214
      %4216 = vset.pattern.permute.xlu0 0
      %4217 = vperm.xlu0 %4216, %v4132
      %v4218 = vpop.permute.xlu0 %4217
      %4219 = vset.pattern.permute.xlu0 0
      %4220 = vperm.xlu0 %4219, %v4133
      %v4221 = vpop.permute.xlu0 %4220
      %4222 = vset.pattern.permute.xlu0 0
      %4223 = vperm.xlu0 %4222, %v4134
      %v4224 = vpop.permute.xlu0 %4223
      %4225 = vset.pattern.permute.xlu0 0
      %4226 = vperm.xlu0 %4225, %v4135
      %v4227 = vpop.permute.xlu0 %4226
      %4228 = vset.pattern.permute.xlu0 0
      %4229 = vperm.xlu0 %4228, %v4136
      %v4230 = vpop.permute.xlu0 %4229
      %4231 = vset.pattern.permute.xlu0 0
      %4232 = vperm.xlu0 %4231, %v4137
      %v4233 = vpop.permute.xlu0 %4232
      %vm4234 = vcmp.eq.s32.totalorder %v4140, 1
      %vm4235 = vcmp.eq.s32.totalorder %v4143, 1
      %vm4236 = vcmp.eq.s32.totalorder %v4146, 1
      %vm4237 = vcmp.eq.s32.totalorder %v4149, 1
      %vm4238 = vcmp.eq.s32.totalorder %v4152, 1
      %vm4239 = vcmp.eq.s32.totalorder %v4155, 1
      %vm4240 = vcmp.eq.s32.totalorder %v4158, 1
      %vm4241 = vcmp.eq.s32.totalorder %v4161, 1
      %vm4242 = vcmp.eq.s32.totalorder %v4164, 1
      %vm4243 = vcmp.eq.s32.totalorder %v4167, 1
      %vm4244 = vcmp.eq.s32.totalorder %v4170, 1
      %vm4245 = vcmp.eq.s32.totalorder %v4173, 1
      %vm4246 = vcmp.eq.s32.totalorder %v4176, 1
      %vm4247 = vcmp.eq.s32.totalorder %v4179, 1
      %vm4248 = vcmp.eq.s32.totalorder %v4182, 1
      %vm4249 = vcmp.eq.s32.totalorder %v4185, 1
      %vm4250 = vcmp.eq.s32.totalorder %v4188, 1
      %vm4251 = vcmp.eq.s32.totalorder %v4191, 1
      %vm4252 = vcmp.eq.s32.totalorder %v4194, 1
      %vm4253 = vcmp.eq.s32.totalorder %v4197, 1
      %vm4254 = vcmp.eq.s32.totalorder %v4200, 1
      %vm4255 = vcmp.eq.s32.totalorder %v4203, 1
      %vm4256 = vcmp.eq.s32.totalorder %v4206, 1
      %vm4257 = vcmp.eq.s32.totalorder %v4209, 1
      %vm4258 = vcmp.eq.s32.totalorder %v4212, 1
      %vm4259 = vcmp.eq.s32.totalorder %v4215, 1
      %vm4260 = vcmp.eq.s32.totalorder %v4218, 1
      %vm4261 = vcmp.eq.s32.totalorder %v4221, 1
      %vm4262 = vcmp.eq.s32.totalorder %v4224, 1
      %vm4263 = vcmp.eq.s32.totalorder %v4227, 1
      %vm4264 = vcmp.eq.s32.totalorder %v4230, 1
      %vm4265 = vcmp.eq.s32.totalorder %v4233, 1
      %v4266 = vsel %vm4234, %v2934, 0.0
      %v4267 = vsel %vm4235, %v2933, 0.0
      %v4268 = vsel %vm4236, %v2932, 0.0
      %v4269 = vsel %vm4237, %v2931, 0.0
      %v4270 = vsel %vm4238, %v2930, 0.0
      %v4271 = vsel %vm4239, %v2929, 0.0
      %v4272 = vsel %vm4240, %v2928, 0.0
      %v4273 = vsel %vm4241, %v2927, 0.0
      %v4274 = vsel %vm4242, %v2926, 0.0
      %v4275 = vsel %vm4243, %v2925, 0.0
      %v4276 = vsel %vm4244, %v2924, 0.0
      %v4277 = vsel %vm4245, %v2923, 0.0
      %v4278 = vsel %vm4246, %v2922, 0.0
      %v4279 = vsel %vm4247, %v2921, 0.0
      %v4280 = vsel %vm4248, %v2920, 0.0
      %v4281 = vsel %vm4249, %v2919, 0.0
      %v4282 = vsel %vm4250, %v2918, 0.0
      %v4283 = vsel %vm4251, %v2917, 0.0
      %v4284 = vsel %vm4252, %v2916, 0.0
      %v4285 = vsel %vm4253, %v2915, 0.0
      %v4286 = vsel %vm4254, %v2914, 0.0
      %v4287 = vsel %vm4255, %v2913, 0.0
      %v4288 = vsel %vm4256, %v2912, 0.0
      %v4289 = vsel %vm4257, %v2911, 0.0
      %v4290 = vsel %vm4258, %v2910, 0.0
      %v4291 = vsel %vm4259, %v2909, 0.0
      %v4292 = vsel %vm4260, %v2908, 0.0
      %v4293 = vsel %vm4261, %v2907, 0.0
      %v4294 = vsel %vm4262, %v2906, 0.0
      %v4295 = vsel %vm4263, %v2905, 0.0
      %v4296 = vsel %vm4264, %v2904, 0.0
      %v4297 = vsel %vm4265, %v2935, 0.0
      %v4298 = vpack.c.bf16 %v4267, %v4266
      %v4299 = vpack.c.bf16 %v4269, %v4268
      %v4300 = vpack.c.bf16 %v4271, %v4270
      %v4301 = vpack.c.bf16 %v4273, %v4272
      %v4302 = vpack.c.bf16 %v4275, %v4274
      %v4303 = vpack.c.bf16 %v4277, %v4276
      %v4304 = vpack.c.bf16 %v4279, %v4278
      %v4305 = vpack.c.bf16 %v4281, %v4280
      %v4306 = vpack.c.bf16 %v4283, %v4282
      %v4307 = vpack.c.bf16 %v4285, %v4284
      %v4308 = vpack.c.bf16 %v4287, %v4286
      %v4309 = vpack.c.bf16 %v4289, %v4288
      %v4310 = vpack.c.bf16 %v4291, %v4290
      %v4311 = vpack.c.bf16 %v4293, %v4292
      %v4312 = vpack.c.bf16 %v4295, %v4294
      %v4313 = vpack.c.bf16 %v4297, %v4296
      %s4314 = scalar_lea.vmem %s7, 10
      %v4315 = vld [vmem:[%s4314] sm:$0x3]
      %v4317 = vsel %vm801, %v4298, 0
      %v4320 = vsel %vm801, %v4299, 0
      %v4323 = vsel %vm801, %v4300, 0
      %v4326 = vsel %vm801, %v4301, 0
      %v4329 = vsel %vm801, %v4302, 0
      %v4332 = vsel %vm801, %v4303, 0
      %v4335 = vsel %vm801, %v4304, 0
      %v4338 = vsel %vm801, %v4305, 0
      %v4341 = vsel %vm801, %v4306, 0
      %v4344 = vsel %vm801, %v4307, 0
      %v4347 = vsel %vm801, %v4308, 0
      %v4350 = vsel %vm801, %v4309, 0
      %v4353 = vsel %vm801, %v4310, 0
      %v4356 = vsel %vm801, %v4311, 0
      %v4359 = vsel %vm801, %v4312, 0
      %v4362 = vsel %vm801, %v4313, 0
      %v4365 = vsel %vm1026, %v4315, 0
      %4367 = vmatprep.subr.bf16.mxu0 0
      %4368 = vmatpush1.bf16.msra.mxu0 0
      %4369 = vmatprep.subr.bf16.mxu0 0
      %4370 = vmatpush1.bf16.msra.mxu0 0
      %4371 = vmatprep.subr.bf16.mxu0 0
      %4372 = vmatpush1.bf16.msra.mxu0 0
      %4373 = vmatprep.subr.bf16.mxu0 0
      %4374 = vmatpush1.bf16.msra.mxu0 0
      %4375 = vmatprep.subr.bf16.mxu0 0
      %4376 = vmatpush1.bf16.msra.mxu0 0
      %4377 = vmatprep.subr.bf16.mxu0 0
      %4378 = vmatpush1.bf16.msra.mxu0 0
      %4379 = vmatprep.subr.bf16.mxu0 0
      %4380 = vmatpush1.bf16.msra.mxu0 0
      %4381 = vmatprep.subr.bf16.mxu0 0
      %4382 = vmatpush1.bf16.msra.mxu0 %v4365
      %4383 = vmatprep.subr.bf16.mxu0 0
      %4384 = vmatpush2.bf16.msra.mxu0 0
      %4385 = vmatprep.subr.bf16.mxu0 0
      %4386 = vmatpush2.bf16.msra.mxu0 0
      %4387 = vmatprep.subr.bf16.mxu0 0
      %4388 = vmatpush2.bf16.msra.mxu0 0
      %4389 = vmatprep.subr.bf16.mxu0 0
      %4390 = vmatpush2.bf16.msra.mxu0 0
      %4391 = vmatprep.subr.bf16.mxu0 0
      %4392 = vmatpush2.bf16.msra.mxu0 0
      %4393 = vmatprep.subr.bf16.mxu0 0
      %4394 = vmatpush2.bf16.msra.mxu0 0
      %4395 = vmatprep.subr.bf16.mxu0 0
      %4396 = vmatpush2.bf16.msra.mxu0 0
      %4397 = vmatprep.subr.bf16.mxu0 0
      %4398 = vmatpush2.bf16.msra.mxu0 0
      %4399 = vmatprep.mubr.bf16.mxu0 0
      %4400 = vmatmul.mubr.bf16.gmra.mxu0 %v4317
      %v4401 = vpop.f32.mrf.mxu0
      %v4402 = vadd.f32 0.0, %v4401
      %v4403 = vpop.f32.mrf.mxu0
      %v4404 = vpop.f32.mrf.mxu0
      %v4405 = vadd.f32 0.0, %v4404
      %v4406 = vpop.f32.mrf.mxu0
      %4407 = vmatprep.mubr.bf16.mxu0 0
      %4408 = vmatmul.mubr.bf16.gmra.mxu0 %v4320
      %v4409 = vpop.f32.mrf.mxu0
      %v4410 = vadd.f32 0.0, %v4409
      %v4411 = vpop.f32.mrf.mxu0
      %v4412 = vpop.f32.mrf.mxu0
      %v4413 = vadd.f32 0.0, %v4412
      %v4414 = vpop.f32.mrf.mxu0
      %4415 = vmatprep.mubr.bf16.mxu0 0
      %4416 = vmatmul.mubr.bf16.gmra.mxu0 %v4323
      %v4417 = vpop.f32.mrf.mxu0
      %v4418 = vadd.f32 0.0, %v4417
      %v4419 = vpop.f32.mrf.mxu0
      %v4420 = vpop.f32.mrf.mxu0
      %v4421 = vadd.f32 0.0, %v4420
      %v4422 = vpop.f32.mrf.mxu0
      %4423 = vmatprep.mubr.bf16.mxu0 0
      %4424 = vmatmul.mubr.bf16.gmra.mxu0 %v4326
      %v4425 = vpop.f32.mrf.mxu0
      %v4426 = vadd.f32 0.0, %v4425
      %v4427 = vpop.f32.mrf.mxu0
      %v4428 = vpop.f32.mrf.mxu0
      %v4429 = vadd.f32 0.0, %v4428
      %v4430 = vpop.f32.mrf.mxu0
      %4431 = vmatprep.mubr.bf16.mxu0 0
      %4432 = vmatmul.mubr.bf16.gmra.mxu0 %v4329
      %v4433 = vpop.f32.mrf.mxu0
      %v4434 = vadd.f32 0.0, %v4433
      %v4435 = vpop.f32.mrf.mxu0
      %v4436 = vpop.f32.mrf.mxu0
      %v4437 = vadd.f32 0.0, %v4436
      %v4438 = vpop.f32.mrf.mxu0
      %4439 = vmatprep.mubr.bf16.mxu0 0
      %4440 = vmatmul.mubr.bf16.gmra.mxu0 %v4332
      %v4441 = vpop.f32.mrf.mxu0
      %v4442 = vadd.f32 0.0, %v4441
      %v4443 = vpop.f32.mrf.mxu0
      %v4444 = vpop.f32.mrf.mxu0
      %v4445 = vadd.f32 0.0, %v4444
      %v4446 = vpop.f32.mrf.mxu0
      %4447 = vmatprep.mubr.bf16.mxu0 0
      %4448 = vmatmul.mubr.bf16.gmra.mxu0 %v4335
      %v4449 = vpop.f32.mrf.mxu0
      %v4450 = vadd.f32 0.0, %v4449
      %v4451 = vpop.f32.mrf.mxu0
      %v4452 = vpop.f32.mrf.mxu0
      %v4453 = vadd.f32 0.0, %v4452
      %v4454 = vpop.f32.mrf.mxu0
      %4455 = vmatprep.mubr.bf16.mxu0 0
      %4456 = vmatmul.mubr.bf16.gmra.mxu0 %v4338
      %v4457 = vpop.f32.mrf.mxu0
      %v4458 = vadd.f32 0.0, %v4457
      %v4459 = vpop.f32.mrf.mxu0
      %v4460 = vpop.f32.mrf.mxu0
      %v4461 = vadd.f32 0.0, %v4460
      %v4462 = vpop.f32.mrf.mxu0
      %4463 = vmatprep.mubr.bf16.mxu0 0
      %4464 = vmatmul.mubr.bf16.gmra.mxu0 %v4341
      %v4465 = vpop.f32.mrf.mxu0
      %v4466 = vadd.f32 0.0, %v4465
      %v4467 = vpop.f32.mrf.mxu0
      %v4468 = vpop.f32.mrf.mxu0
      %v4469 = vadd.f32 0.0, %v4468
      %v4470 = vpop.f32.mrf.mxu0
      %4471 = vmatprep.mubr.bf16.mxu0 0
      %4472 = vmatmul.mubr.bf16.gmra.mxu0 %v4344
      %v4473 = vpop.f32.mrf.mxu0
      %v4474 = vadd.f32 0.0, %v4473
      %v4475 = vpop.f32.mrf.mxu0
      %v4476 = vpop.f32.mrf.mxu0
      %v4477 = vadd.f32 0.0, %v4476
      %v4478 = vpop.f32.mrf.mxu0
      %4479 = vmatprep.mubr.bf16.mxu0 0
      %4480 = vmatmul.mubr.bf16.gmra.mxu0 %v4347
      %v4481 = vpop.f32.mrf.mxu0
      %v4482 = vadd.f32 0.0, %v4481
      %v4483 = vpop.f32.mrf.mxu0
      %v4484 = vpop.f32.mrf.mxu0
      %v4485 = vadd.f32 0.0, %v4484
      %v4486 = vpop.f32.mrf.mxu0
      %4487 = vmatprep.mubr.bf16.mxu0 0
      %4488 = vmatmul.mubr.bf16.gmra.mxu0 %v4350
      %v4489 = vpop.f32.mrf.mxu0
      %v4490 = vadd.f32 0.0, %v4489
      %v4491 = vpop.f32.mrf.mxu0
      %v4492 = vpop.f32.mrf.mxu0
      %v4493 = vadd.f32 0.0, %v4492
      %v4494 = vpop.f32.mrf.mxu0
      %4495 = vmatprep.mubr.bf16.mxu0 0
      %4496 = vmatmul.mubr.bf16.gmra.mxu0 %v4353
      %v4497 = vpop.f32.mrf.mxu0
      %v4498 = vadd.f32 0.0, %v4497
      %v4499 = vpop.f32.mrf.mxu0
      %v4500 = vpop.f32.mrf.mxu0
      %v4501 = vadd.f32 0.0, %v4500
      %v4502 = vpop.f32.mrf.mxu0
      %4503 = vmatprep.mubr.bf16.mxu0 0
      %4504 = vmatmul.mubr.bf16.gmra.mxu0 %v4356
      %v4505 = vpop.f32.mrf.mxu0
      %v4506 = vadd.f32 0.0, %v4505
      %v4507 = vpop.f32.mrf.mxu0
      %v4508 = vpop.f32.mrf.mxu0
      %v4509 = vadd.f32 0.0, %v4508
      %v4510 = vpop.f32.mrf.mxu0
      %4511 = vmatprep.mubr.bf16.mxu0 0
      %4512 = vmatmul.mubr.bf16.gmra.mxu0 %v4359
      %v4513 = vpop.f32.mrf.mxu0
      %v4514 = vadd.f32 0.0, %v4513
      %v4515 = vpop.f32.mrf.mxu0
      %v4516 = vpop.f32.mrf.mxu0
      %v4517 = vadd.f32 0.0, %v4516
      %v4518 = vpop.f32.mrf.mxu0
      %4519 = vmatprep.mubr.bf16.mxu0 0
      %4520 = vmatmul.mubr.bf16.gmra.mxu0 %v4362
      %v4521 = vpop.f32.mrf.mxu0
      %v4522 = vadd.f32 0.0, %v4521
      %v4523 = vpop.f32.mrf.mxu0
      %v4524 = vpop.f32.mrf.mxu0
      %v4525 = vadd.f32 0.0, %v4524
      %v4526 = vpop.f32.mrf.mxu0
      %4527 = vdwg.mxu0
      %v4528 = vadd.f32 %v4074, %v4402
      %v4529 = vadd.f32 %v4075, %v4405
      %v4530 = vadd.f32 %v4076, %v4410
      %v4531 = vadd.f32 %v4077, %v4413
      %v4532 = vadd.f32 %v4078, %v4418
      %v4533 = vadd.f32 %v4079, %v4421
      %v4534 = vadd.f32 %v4080, %v4426
      %v4535 = vadd.f32 %v4081, %v4429
      %v4536 = vadd.f32 %v4082, %v4434
      %v4537 = vadd.f32 %v4083, %v4437
      %v4538 = vadd.f32 %v4084, %v4442
      %v4539 = vadd.f32 %v4085, %v4445
      %v4540 = vadd.f32 %v4086, %v4450
      %v4541 = vadd.f32 %v4087, %v4453
      %v4542 = vadd.f32 %v4088, %v4458
      %v4543 = vadd.f32 %v4089, %v4461
      %v4544 = vadd.f32 %v4090, %v4466
      %v4545 = vadd.f32 %v4091, %v4469
      %v4546 = vadd.f32 %v4092, %v4474
      %v4547 = vadd.f32 %v4093, %v4477
      %v4548 = vadd.f32 %v4094, %v4482
      %v4549 = vadd.f32 %v4095, %v4485
      %v4550 = vadd.f32 %v4096, %v4490
      %v4551 = vadd.f32 %v4097, %v4493
      %v4552 = vadd.f32 %v4098, %v4498
      %v4553 = vadd.f32 %v4099, %v4501
      %v4554 = vadd.f32 %v4100, %v4506
      %v4555 = vadd.f32 %v4101, %v4509
      %v4556 = vadd.f32 %v4102, %v4514
      %v4557 = vadd.f32 %v4103, %v4517
      %v4558 = vadd.f32 %v4104, %v4522
      %v4559 = vadd.f32 %v4105, %v4525
      %vm4560 = vcmp.le.s32.totalorder %v1741, 14
      %vm4561 = vcmp.le.s32.totalorder %v1742, 14
      %vm4562 = vcmp.le.s32.totalorder %v1743, 14
      %vm4563 = vcmp.le.s32.totalorder %v1744, 14
      %vm4564 = vcmp.le.s32.totalorder %v1745, 14
      %vm4565 = vcmp.le.s32.totalorder %v1746, 14
      %vm4566 = vcmp.le.s32.totalorder %v1747, 14
      %vm4567 = vcmp.le.s32.totalorder %v1748, 14
      %vm4568 = vcmp.le.s32.totalorder %v1749, 14
      %vm4569 = vcmp.le.s32.totalorder %v1750, 14
      %vm4570 = vcmp.le.s32.totalorder %v1751, 14
      %vm4571 = vcmp.le.s32.totalorder %v1752, 14
      %vm4572 = vcmp.le.s32.totalorder %v1753, 14
      %vm4573 = vcmp.le.s32.totalorder %v1754, 14
      %vm4574 = vcmp.le.s32.totalorder %v1755, 14
      %vm4575 = vcmp.le.s32.totalorder %v1756, 14
      %vm4576 = vcmp.le.s32.totalorder %v1757, 14
      %vm4577 = vcmp.le.s32.totalorder %v1758, 14
      %vm4578 = vcmp.le.s32.totalorder %v1759, 14
      %vm4579 = vcmp.le.s32.totalorder %v1760, 14
      %vm4580 = vcmp.le.s32.totalorder %v1761, 14
      %vm4581 = vcmp.le.s32.totalorder %v1762, 14
      %vm4582 = vcmp.le.s32.totalorder %v1763, 14
      %vm4583 = vcmp.le.s32.totalorder %v1764, 14
      %vm4584 = vcmp.le.s32.totalorder %v1765, 14
      %vm4585 = vcmp.le.s32.totalorder %v1766, 14
      %vm4586 = vcmp.le.s32.totalorder %v1767, 14
      %vm4587 = vcmp.le.s32.totalorder %v1768, 14
      %vm4588 = vcmp.le.s32.totalorder %v1769, 14
      %vm4589 = vcmp.le.s32.totalorder %v1770, 14
      %vm4590 = vcmp.le.s32.totalorder %v1771, 14
      %vm4591 = vcmp.le.s32.totalorder %v1772, 14
      %vm4592 = vmand %vm4560, %vm1837
      %vm4593 = vmand %vm4561, %vm1838
      %vm4594 = vmand %vm4562, %vm1839
      %vm4595 = vmand %vm4563, %vm1840
      %vm4596 = vmand %vm4564, %vm1841
      %vm4597 = vmand %vm4565, %vm1842
      %vm4598 = vmand %vm4566, %vm1843
      %vm4599 = vmand %vm4567, %vm1844
      %vm4600 = vmand %vm4568, %vm1845
      %vm4601 = vmand %vm4569, %vm1846
      %vm4602 = vmand %vm4570, %vm1847
      %vm4603 = vmand %vm4571, %vm1848
      %vm4604 = vmand %vm4572, %vm1849
      %vm4605 = vmand %vm4573, %vm1850
      %vm4606 = vmand %vm4574, %vm1851
      %vm4607 = vmand %vm4575, %vm1852
      %vm4608 = vmand %vm4576, %vm1853
      %vm4609 = vmand %vm4577, %vm1854
      %vm4610 = vmand %vm4578, %vm1855
      %vm4611 = vmand %vm4579, %vm1856
      %vm4612 = vmand %vm4580, %vm1857
      %vm4613 = vmand %vm4581, %vm1858
      %vm4614 = vmand %vm4582, %vm1859
      %vm4615 = vmand %vm4583, %vm1860
      %vm4616 = vmand %vm4584, %vm1861
      %vm4617 = vmand %vm4585, %vm1862
      %vm4618 = vmand %vm4586, %vm1863
      %vm4619 = vmand %vm4587, %vm1864
      %vm4620 = vmand %vm4588, %vm1865
      %vm4621 = vmand %vm4589, %vm1866
      %vm4622 = vmand %vm4590, %vm1867
      %vm4623 = vmand %vm4591, %vm1868
      %v4624 = vsel %vm4592, 1, 0
      %v4625 = vsel %vm4593, 1, 0
      %v4626 = vsel %vm4594, 1, 0
      %v4627 = vsel %vm4595, 1, 0
      %v4628 = vsel %vm4596, 1, 0
      %v4629 = vsel %vm4597, 1, 0
      %v4630 = vsel %vm4598, 1, 0
      %v4631 = vsel %vm4599, 1, 0
      %v4632 = vsel %vm4600, 1, 0
      %v4633 = vsel %vm4601, 1, 0
      %v4634 = vsel %vm4602, 1, 0
      %v4635 = vsel %vm4603, 1, 0
      %v4636 = vsel %vm4604, 1, 0
      %v4637 = vsel %vm4605, 1, 0
      %v4638 = vsel %vm4606, 1, 0
      %v4639 = vsel %vm4607, 1, 0
      %v4640 = vsel %vm4608, 1, 0
      %v4641 = vsel %vm4609, 1, 0
      %v4642 = vsel %vm4610, 1, 0
      %v4643 = vsel %vm4611, 1, 0
      %v4644 = vsel %vm4612, 1, 0
      %v4645 = vsel %vm4613, 1, 0
      %v4646 = vsel %vm4614, 1, 0
      %v4647 = vsel %vm4615, 1, 0
      %v4648 = vsel %vm4616, 1, 0
      %v4649 = vsel %vm4617, 1, 0
      %v4650 = vsel %vm4618, 1, 0
      %v4651 = vsel %vm4619, 1, 0
      %v4652 = vsel %vm4620, 1, 0
      %v4653 = vsel %vm4621, 1, 0
      %v4654 = vsel %vm4622, 1, 0
      %v4655 = vsel %vm4623, 1, 0
      %4656 = vset.pattern.permute.xlu0 0
      %4657 = vperm.xlu0 %4656, %v4624
      %v4658 = vpop.permute.xlu0 %4657
      %4659 = vset.pattern.permute.xlu0 0
      %4660 = vperm.xlu0 %4659, %v4625
      %v4661 = vpop.permute.xlu0 %4660
      %4662 = vset.pattern.permute.xlu0 0
      %4663 = vperm.xlu0 %4662, %v4626
      %v4664 = vpop.permute.xlu0 %4663
      %4665 = vset.pattern.permute.xlu0 0
      %4666 = vperm.xlu0 %4665, %v4627
      %v4667 = vpop.permute.xlu0 %4666
      %4668 = vset.pattern.permute.xlu0 0
      %4669 = vperm.xlu0 %4668, %v4628
      %v4670 = vpop.permute.xlu0 %4669
      %4671 = vset.pattern.permute.xlu0 0
      %4672 = vperm.xlu0 %4671, %v4629
      %v4673 = vpop.permute.xlu0 %4672
      %4674 = vset.pattern.permute.xlu0 0
      %4675 = vperm.xlu0 %4674, %v4630
      %v4676 = vpop.permute.xlu0 %4675
      %4677 = vset.pattern.permute.xlu0 0
      %4678 = vperm.xlu0 %4677, %v4631
      %v4679 = vpop.permute.xlu0 %4678
      %4680 = vset.pattern.permute.xlu0 0
      %4681 = vperm.xlu0 %4680, %v4632
      %v4682 = vpop.permute.xlu0 %4681
      %4683 = vset.pattern.permute.xlu0 0
      %4684 = vperm.xlu0 %4683, %v4633
      %v4685 = vpop.permute.xlu0 %4684
      %4686 = vset.pattern.permute.xlu0 0
      %4687 = vperm.xlu0 %4686, %v4634
      %v4688 = vpop.permute.xlu0 %4687
      %4689 = vset.pattern.permute.xlu0 0
      %4690 = vperm.xlu0 %4689, %v4635
      %v4691 = vpop.permute.xlu0 %4690
      %4692 = vset.pattern.permute.xlu0 0
      %4693 = vperm.xlu0 %4692, %v4636
      %v4694 = vpop.permute.xlu0 %4693
      %4695 = vset.pattern.permute.xlu0 0
      %4696 = vperm.xlu0 %4695, %v4637
      %v4697 = vpop.permute.xlu0 %4696
      %4698 = vset.pattern.permute.xlu0 0
      %4699 = vperm.xlu0 %4698, %v4638
      %v4700 = vpop.permute.xlu0 %4699
      %4701 = vset.pattern.permute.xlu0 0
      %4702 = vperm.xlu0 %4701, %v4639
      %v4703 = vpop.permute.xlu0 %4702
      %4704 = vset.pattern.permute.xlu0 0
      %4705 = vperm.xlu0 %4704, %v4640
      %v4706 = vpop.permute.xlu0 %4705
      %4707 = vset.pattern.permute.xlu0 0
      %4708 = vperm.xlu0 %4707, %v4641
      %v4709 = vpop.permute.xlu0 %4708
      %4710 = vset.pattern.permute.xlu0 0
      %4711 = vperm.xlu0 %4710, %v4642
      %v4712 = vpop.permute.xlu0 %4711
      %4713 = vset.pattern.permute.xlu0 0
      %4714 = vperm.xlu0 %4713, %v4643
      %v4715 = vpop.permute.xlu0 %4714
      %4716 = vset.pattern.permute.xlu0 0
      %4717 = vperm.xlu0 %4716, %v4644
      %v4718 = vpop.permute.xlu0 %4717
      %4719 = vset.pattern.permute.xlu0 0
      %4720 = vperm.xlu0 %4719, %v4645
      %v4721 = vpop.permute.xlu0 %4720
      %4722 = vset.pattern.permute.xlu0 0
      %4723 = vperm.xlu0 %4722, %v4646
      %v4724 = vpop.permute.xlu0 %4723
      %4725 = vset.pattern.permute.xlu0 0
      %4726 = vperm.xlu0 %4725, %v4647
      %v4727 = vpop.permute.xlu0 %4726
      %4728 = vset.pattern.permute.xlu0 0
      %4729 = vperm.xlu0 %4728, %v4648
      %v4730 = vpop.permute.xlu0 %4729
      %4731 = vset.pattern.permute.xlu0 0
      %4732 = vperm.xlu0 %4731, %v4649
      %v4733 = vpop.permute.xlu0 %4732
      %4734 = vset.pattern.permute.xlu0 0
      %4735 = vperm.xlu0 %4734, %v4650
      %v4736 = vpop.permute.xlu0 %4735
      %4737 = vset.pattern.permute.xlu0 0
      %4738 = vperm.xlu0 %4737, %v4651
      %v4739 = vpop.permute.xlu0 %4738
      %4740 = vset.pattern.permute.xlu0 0
      %4741 = vperm.xlu0 %4740, %v4652
      %v4742 = vpop.permute.xlu0 %4741
      %4743 = vset.pattern.permute.xlu0 0
      %4744 = vperm.xlu0 %4743, %v4653
      %v4745 = vpop.permute.xlu0 %4744
      %4746 = vset.pattern.permute.xlu0 0
      %4747 = vperm.xlu0 %4746, %v4654
      %v4748 = vpop.permute.xlu0 %4747
      %4749 = vset.pattern.permute.xlu0 0
      %4750 = vperm.xlu0 %4749, %v4655
      %v4751 = vpop.permute.xlu0 %4750
      %vm4752 = vcmp.eq.s32.totalorder %v4658, 1
      %vm4753 = vcmp.eq.s32.totalorder %v4661, 1
      %vm4754 = vcmp.eq.s32.totalorder %v4664, 1
      %vm4755 = vcmp.eq.s32.totalorder %v4667, 1
      %vm4756 = vcmp.eq.s32.totalorder %v4670, 1
      %vm4757 = vcmp.eq.s32.totalorder %v4673, 1
      %vm4758 = vcmp.eq.s32.totalorder %v4676, 1
      %vm4759 = vcmp.eq.s32.totalorder %v4679, 1
      %vm4760 = vcmp.eq.s32.totalorder %v4682, 1
      %vm4761 = vcmp.eq.s32.totalorder %v4685, 1
      %vm4762 = vcmp.eq.s32.totalorder %v4688, 1
      %vm4763 = vcmp.eq.s32.totalorder %v4691, 1
      %vm4764 = vcmp.eq.s32.totalorder %v4694, 1
      %vm4765 = vcmp.eq.s32.totalorder %v4697, 1
      %vm4766 = vcmp.eq.s32.totalorder %v4700, 1
      %vm4767 = vcmp.eq.s32.totalorder %v4703, 1
      %vm4768 = vcmp.eq.s32.totalorder %v4706, 1
      %vm4769 = vcmp.eq.s32.totalorder %v4709, 1
      %vm4770 = vcmp.eq.s32.totalorder %v4712, 1
      %vm4771 = vcmp.eq.s32.totalorder %v4715, 1
      %vm4772 = vcmp.eq.s32.totalorder %v4718, 1
      %vm4773 = vcmp.eq.s32.totalorder %v4721, 1
      %vm4774 = vcmp.eq.s32.totalorder %v4724, 1
      %vm4775 = vcmp.eq.s32.totalorder %v4727, 1
      %vm4776 = vcmp.eq.s32.totalorder %v4730, 1
      %vm4777 = vcmp.eq.s32.totalorder %v4733, 1
      %vm4778 = vcmp.eq.s32.totalorder %v4736, 1
      %vm4779 = vcmp.eq.s32.totalorder %v4739, 1
      %vm4780 = vcmp.eq.s32.totalorder %v4742, 1
      %vm4781 = vcmp.eq.s32.totalorder %v4745, 1
      %vm4782 = vcmp.eq.s32.totalorder %v4748, 1
      %vm4783 = vcmp.eq.s32.totalorder %v4751, 1
      %v4784 = vsel %vm4752, %v1962, 0.0
      %v4785 = vsel %vm4753, %v1961, 0.0
      %v4786 = vsel %vm4754, %v1960, 0.0
      %v4787 = vsel %vm4755, %v1959, 0.0
      %v4788 = vsel %vm4756, %v1958, 0.0
      %v4789 = vsel %vm4757, %v1957, 0.0
      %v4790 = vsel %vm4758, %v1956, 0.0
      %v4791 = vsel %vm4759, %v1955, 0.0
      %v4792 = vsel %vm4760, %v1954, 0.0
      %v4793 = vsel %vm4761, %v1953, 0.0
      %v4794 = vsel %vm4762, %v1952, 0.0
      %v4795 = vsel %vm4763, %v1951, 0.0
      %v4796 = vsel %vm4764, %v1950, 0.0
      %v4797 = vsel %vm4765, %v1949, 0.0
      %v4798 = vsel %vm4766, %v1948, 0.0
      %v4799 = vsel %vm4767, %v1947, 0.0
      %v4800 = vsel %vm4768, %v1946, 0.0
      %v4801 = vsel %vm4769, %v1945, 0.0
      %v4802 = vsel %vm4770, %v1944, 0.0
      %v4803 = vsel %vm4771, %v1943, 0.0
      %v4804 = vsel %vm4772, %v1942, 0.0
      %v4805 = vsel %vm4773, %v1941, 0.0
      %v4806 = vsel %vm4774, %v1940, 0.0
      %v4807 = vsel %vm4775, %v1939, 0.0
      %v4808 = vsel %vm4776, %v1938, 0.0
      %v4809 = vsel %vm4777, %v1937, 0.0
      %v4810 = vsel %vm4778, %v1936, 0.0
      %v4811 = vsel %vm4779, %v1935, 0.0
      %v4812 = vsel %vm4780, %v1934, 0.0
      %v4813 = vsel %vm4781, %v1933, 0.0
      %v4814 = vsel %vm4782, %v1964, 0.0
      %v4815 = vsel %vm4783, %v1963, 0.0
      %v4816 = vpack.c.bf16 %v4785, %v4784
      %v4817 = vpack.c.bf16 %v4787, %v4786
      %v4818 = vpack.c.bf16 %v4789, %v4788
      %v4819 = vpack.c.bf16 %v4791, %v4790
      %v4820 = vpack.c.bf16 %v4793, %v4792
      %v4821 = vpack.c.bf16 %v4795, %v4794
      %v4822 = vpack.c.bf16 %v4797, %v4796
      %v4823 = vpack.c.bf16 %v4799, %v4798
      %v4824 = vpack.c.bf16 %v4801, %v4800
      %v4825 = vpack.c.bf16 %v4803, %v4802
      %v4826 = vpack.c.bf16 %v4805, %v4804
      %v4827 = vpack.c.bf16 %v4807, %v4806
      %v4828 = vpack.c.bf16 %v4809, %v4808
      %v4829 = vpack.c.bf16 %v4811, %v4810
      %v4830 = vpack.c.bf16 %v4813, %v4812
      %v4831 = vpack.c.bf16 %v4815, %v4814
      %s4832 = scalar_lea.vmem %s7, 12
      %v4833 = vld [vmem:[%s4832] sm:$0x3]
      %v4835 = vsel %vm801, %v4816, 0
      %v4838 = vsel %vm801, %v4817, 0
      %v4841 = vsel %vm801, %v4818, 0
      %v4844 = vsel %vm801, %v4819, 0
      %v4847 = vsel %vm801, %v4820, 0
      %v4850 = vsel %vm801, %v4821, 0
      %v4853 = vsel %vm801, %v4822, 0
      %v4856 = vsel %vm801, %v4823, 0
      %v4859 = vsel %vm801, %v4824, 0
      %v4862 = vsel %vm801, %v4825, 0
      %v4865 = vsel %vm801, %v4826, 0
      %v4868 = vsel %vm801, %v4827, 0
      %v4871 = vsel %vm801, %v4828, 0
      %v4874 = vsel %vm801, %v4829, 0
      %v4877 = vsel %vm801, %v4830, 0
      %v4880 = vsel %vm801, %v4831, 0
      %v4883 = vsel %vm1026, %v4833, 0
      %4885 = vmatprep.subr.bf16.mxu0 0
      %4886 = vmatpush1.bf16.msra.mxu0 0
      %4887 = vmatprep.subr.bf16.mxu0 0
      %4888 = vmatpush1.bf16.msra.mxu0 0
      %4889 = vmatprep.subr.bf16.mxu0 0
      %4890 = vmatpush1.bf16.msra.mxu0 0
      %4891 = vmatprep.subr.bf16.mxu0 0
      %4892 = vmatpush1.bf16.msra.mxu0 0
      %4893 = vmatprep.subr.bf16.mxu0 0
      %4894 = vmatpush1.bf16.msra.mxu0 0
      %4895 = vmatprep.subr.bf16.mxu0 0
      %4896 = vmatpush1.bf16.msra.mxu0 0
      %4897 = vmatprep.subr.bf16.mxu0 0
      %4898 = vmatpush1.bf16.msra.mxu0 0
      %4899 = vmatprep.subr.bf16.mxu0 0
      %4900 = vmatpush1.bf16.msra.mxu0 %v4883
      %4901 = vmatprep.subr.bf16.mxu0 0
      %4902 = vmatpush2.bf16.msra.mxu0 0
      %4903 = vmatprep.subr.bf16.mxu0 0
      %4904 = vmatpush2.bf16.msra.mxu0 0
      %4905 = vmatprep.subr.bf16.mxu0 0
      %4906 = vmatpush2.bf16.msra.mxu0 0
      %4907 = vmatprep.subr.bf16.mxu0 0
      %4908 = vmatpush2.bf16.msra.mxu0 0
      %4909 = vmatprep.subr.bf16.mxu0 0
      %4910 = vmatpush2.bf16.msra.mxu0 0
      %4911 = vmatprep.subr.bf16.mxu0 0
      %4912 = vmatpush2.bf16.msra.mxu0 0
      %4913 = vmatprep.subr.bf16.mxu0 0
      %4914 = vmatpush2.bf16.msra.mxu0 0
      %4915 = vmatprep.subr.bf16.mxu0 0
      %4916 = vmatpush2.bf16.msra.mxu0 0
      %4917 = vmatprep.mubr.bf16.mxu0 0
      %4918 = vmatmul.mubr.bf16.gmra.mxu0 %v4835
      %v4919 = vpop.f32.mrf.mxu0
      %v4920 = vadd.f32 0.0, %v4919
      %v4921 = vpop.f32.mrf.mxu0
      %v4922 = vpop.f32.mrf.mxu0
      %v4923 = vadd.f32 0.0, %v4922
      %v4924 = vpop.f32.mrf.mxu0
      %4925 = vmatprep.mubr.bf16.mxu0 0
      %4926 = vmatmul.mubr.bf16.gmra.mxu0 %v4838
      %v4927 = vpop.f32.mrf.mxu0
      %v4928 = vadd.f32 0.0, %v4927
      %v4929 = vpop.f32.mrf.mxu0
      %v4930 = vpop.f32.mrf.mxu0
      %v4931 = vadd.f32 0.0, %v4930
      %v4932 = vpop.f32.mrf.mxu0
      %4933 = vmatprep.mubr.bf16.mxu0 0
      %4934 = vmatmul.mubr.bf16.gmra.mxu0 %v4841
      %v4935 = vpop.f32.mrf.mxu0
      %v4936 = vadd.f32 0.0, %v4935
      %v4937 = vpop.f32.mrf.mxu0
      %v4938 = vpop.f32.mrf.mxu0
      %v4939 = vadd.f32 0.0, %v4938
      %v4940 = vpop.f32.mrf.mxu0
      %4941 = vmatprep.mubr.bf16.mxu0 0
      %4942 = vmatmul.mubr.bf16.gmra.mxu0 %v4844
      %v4943 = vpop.f32.mrf.mxu0
      %v4944 = vadd.f32 0.0, %v4943
      %v4945 = vpop.f32.mrf.mxu0
      %v4946 = vpop.f32.mrf.mxu0
      %v4947 = vadd.f32 0.0, %v4946
      %v4948 = vpop.f32.mrf.mxu0
      %4949 = vmatprep.mubr.bf16.mxu0 0
      %4950 = vmatmul.mubr.bf16.gmra.mxu0 %v4847
      %v4951 = vpop.f32.mrf.mxu0
      %v4952 = vadd.f32 0.0, %v4951
      %v4953 = vpop.f32.mrf.mxu0
      %v4954 = vpop.f32.mrf.mxu0
      %v4955 = vadd.f32 0.0, %v4954
      %v4956 = vpop.f32.mrf.mxu0
      %4957 = vmatprep.mubr.bf16.mxu0 0
      %4958 = vmatmul.mubr.bf16.gmra.mxu0 %v4850
      %v4959 = vpop.f32.mrf.mxu0
      %v4960 = vadd.f32 0.0, %v4959
      %v4961 = vpop.f32.mrf.mxu0
      %v4962 = vpop.f32.mrf.mxu0
      %v4963 = vadd.f32 0.0, %v4962
      %v4964 = vpop.f32.mrf.mxu0
      %4965 = vmatprep.mubr.bf16.mxu0 0
      %4966 = vmatmul.mubr.bf16.gmra.mxu0 %v4853
      %v4967 = vpop.f32.mrf.mxu0
      %v4968 = vadd.f32 0.0, %v4967
      %v4969 = vpop.f32.mrf.mxu0
      %v4970 = vpop.f32.mrf.mxu0
      %v4971 = vadd.f32 0.0, %v4970
      %v4972 = vpop.f32.mrf.mxu0
      %4973 = vmatprep.mubr.bf16.mxu0 0
      %4974 = vmatmul.mubr.bf16.gmra.mxu0 %v4856
      %v4975 = vpop.f32.mrf.mxu0
      %v4976 = vadd.f32 0.0, %v4975
      %v4977 = vpop.f32.mrf.mxu0
      %v4978 = vpop.f32.mrf.mxu0
      %v4979 = vadd.f32 0.0, %v4978
      %v4980 = vpop.f32.mrf.mxu0
      %4981 = vmatprep.mubr.bf16.mxu0 0
      %4982 = vmatmul.mubr.bf16.gmra.mxu0 %v4859
      %v4983 = vpop.f32.mrf.mxu0
      %v4984 = vadd.f32 0.0, %v4983
      %v4985 = vpop.f32.mrf.mxu0
      %v4986 = vpop.f32.mrf.mxu0
      %v4987 = vadd.f32 0.0, %v4986
      %v4988 = vpop.f32.mrf.mxu0
      %4989 = vmatprep.mubr.bf16.mxu0 0
      %4990 = vmatmul.mubr.bf16.gmra.mxu0 %v4862
      %v4991 = vpop.f32.mrf.mxu0
      %v4992 = vadd.f32 0.0, %v4991
      %v4993 = vpop.f32.mrf.mxu0
      %v4994 = vpop.f32.mrf.mxu0
      %v4995 = vadd.f32 0.0, %v4994
      %v4996 = vpop.f32.mrf.mxu0
      %4997 = vmatprep.mubr.bf16.mxu0 0
      %4998 = vmatmul.mubr.bf16.gmra.mxu0 %v4865
      %v4999 = vpop.f32.mrf.mxu0
      %v5000 = vadd.f32 0.0, %v4999
      %v5001 = vpop.f32.mrf.mxu0
      %v5002 = vpop.f32.mrf.mxu0
      %v5003 = vadd.f32 0.0, %v5002
      %v5004 = vpop.f32.mrf.mxu0
      %5005 = vmatprep.mubr.bf16.mxu0 0
      %5006 = vmatmul.mubr.bf16.gmra.mxu0 %v4868
      %v5007 = vpop.f32.mrf.mxu0
      %v5008 = vadd.f32 0.0, %v5007
      %v5009 = vpop.f32.mrf.mxu0
      %v5010 = vpop.f32.mrf.mxu0
      %v5011 = vadd.f32 0.0, %v5010
      %v5012 = vpop.f32.mrf.mxu0
      %5013 = vmatprep.mubr.bf16.mxu0 0
      %5014 = vmatmul.mubr.bf16.gmra.mxu0 %v4871
      %v5015 = vpop.f32.mrf.mxu0
      %v5016 = vadd.f32 0.0, %v5015
      %v5017 = vpop.f32.mrf.mxu0
      %v5018 = vpop.f32.mrf.mxu0
      %v5019 = vadd.f32 0.0, %v5018
      %v5020 = vpop.f32.mrf.mxu0
      %5021 = vmatprep.mubr.bf16.mxu0 0
      %5022 = vmatmul.mubr.bf16.gmra.mxu0 %v4874
      %v5023 = vpop.f32.mrf.mxu0
      %v5024 = vadd.f32 0.0, %v5023
      %v5025 = vpop.f32.mrf.mxu0
      %v5026 = vpop.f32.mrf.mxu0
      %v5027 = vadd.f32 0.0, %v5026
      %v5028 = vpop.f32.mrf.mxu0
      %5029 = vmatprep.mubr.bf16.mxu0 0
      %5030 = vmatmul.mubr.bf16.gmra.mxu0 %v4877
      %v5031 = vpop.f32.mrf.mxu0
      %v5032 = vadd.f32 0.0, %v5031
      %v5033 = vpop.f32.mrf.mxu0
      %v5034 = vpop.f32.mrf.mxu0
      %v5035 = vadd.f32 0.0, %v5034
      %v5036 = vpop.f32.mrf.mxu0
      %5037 = vmatprep.mubr.bf16.mxu0 0
      %5038 = vmatmul.mubr.bf16.gmra.mxu0 %v4880
      %v5039 = vpop.f32.mrf.mxu0
      %v5040 = vadd.f32 0.0, %v5039
      %v5041 = vpop.f32.mrf.mxu0
      %v5042 = vpop.f32.mrf.mxu0
      %v5043 = vadd.f32 0.0, %v5042
      %v5044 = vpop.f32.mrf.mxu0
      %5045 = vdwg.mxu0
      %v5046 = vadd.f32 %v4528, %v4920
      %v5047 = vadd.f32 %v4529, %v4923
      %v5048 = vadd.f32 %v4530, %v4928
      %v5049 = vadd.f32 %v4531, %v4931
      %v5050 = vadd.f32 %v4532, %v4936
      %v5051 = vadd.f32 %v4533, %v4939
      %v5052 = vadd.f32 %v4534, %v4944
      %v5053 = vadd.f32 %v4535, %v4947
      %v5054 = vadd.f32 %v4536, %v4952
      %v5055 = vadd.f32 %v4537, %v4955
      %v5056 = vadd.f32 %v4538, %v4960
      %v5057 = vadd.f32 %v4539, %v4963
      %v5058 = vadd.f32 %v4540, %v4968
      %v5059 = vadd.f32 %v4541, %v4971
      %v5060 = vadd.f32 %v4542, %v4976
      %v5061 = vadd.f32 %v4543, %v4979
      %v5062 = vadd.f32 %v4544, %v4984
      %v5063 = vadd.f32 %v4545, %v4987
      %v5064 = vadd.f32 %v4546, %v4992
      %v5065 = vadd.f32 %v4547, %v4995
      %v5066 = vadd.f32 %v4548, %v5000
      %v5067 = vadd.f32 %v4549, %v5003
      %v5068 = vadd.f32 %v4550, %v5008
      %v5069 = vadd.f32 %v4551, %v5011
      %v5070 = vadd.f32 %v4552, %v5016
      %v5071 = vadd.f32 %v4553, %v5019
      %v5072 = vadd.f32 %v4554, %v5024
      %v5073 = vadd.f32 %v4555, %v5027
      %v5074 = vadd.f32 %v4556, %v5032
      %v5075 = vadd.f32 %v4557, %v5035
      %v5076 = vadd.f32 %v4558, %v5040
      %v5077 = vadd.f32 %v4559, %v5043
      %v5078 = vsel %vm4560, 1, 0
      %v5079 = vsel %vm4561, 1, 0
      %v5080 = vsel %vm4562, 1, 0
      %v5081 = vsel %vm4563, 1, 0
      %v5082 = vsel %vm4564, 1, 0
      %v5083 = vsel %vm4565, 1, 0
      %v5084 = vsel %vm4566, 1, 0
      %v5085 = vsel %vm4567, 1, 0
      %v5086 = vsel %vm4568, 1, 0
      %v5087 = vsel %vm4569, 1, 0
      %v5088 = vsel %vm4570, 1, 0
      %v5089 = vsel %vm4571, 1, 0
      %v5090 = vsel %vm4572, 1, 0
      %v5091 = vsel %vm4573, 1, 0
      %v5092 = vsel %vm4574, 1, 0
      %v5093 = vsel %vm4575, 1, 0
      %v5094 = vsel %vm4576, 1, 0
      %v5095 = vsel %vm4577, 1, 0
      %v5096 = vsel %vm4578, 1, 0
      %v5097 = vsel %vm4579, 1, 0
      %v5098 = vsel %vm4580, 1, 0
      %v5099 = vsel %vm4581, 1, 0
      %v5100 = vsel %vm4582, 1, 0
      %v5101 = vsel %vm4583, 1, 0
      %v5102 = vsel %vm4584, 1, 0
      %v5103 = vsel %vm4585, 1, 0
      %v5104 = vsel %vm4586, 1, 0
      %v5105 = vsel %vm4587, 1, 0
      %v5106 = vsel %vm4588, 1, 0
      %v5107 = vsel %vm4589, 1, 0
      %v5108 = vsel %vm4590, 1, 0
      %v5109 = vsel %vm4591, 1, 0
      %5110 = vset.pattern.permute.xlu0 0
      %5111 = vperm.xlu0 %5110, %v5078
      %v5112 = vpop.permute.xlu0 %5111
      %5113 = vset.pattern.permute.xlu0 0
      %5114 = vperm.xlu0 %5113, %v5079
      %v5115 = vpop.permute.xlu0 %5114
      %5116 = vset.pattern.permute.xlu0 0
      %5117 = vperm.xlu0 %5116, %v5080
      %v5118 = vpop.permute.xlu0 %5117
      %5119 = vset.pattern.permute.xlu0 0
      %5120 = vperm.xlu0 %5119, %v5081
      %v5121 = vpop.permute.xlu0 %5120
      %5122 = vset.pattern.permute.xlu0 0
      %5123 = vperm.xlu0 %5122, %v5082
      %v5124 = vpop.permute.xlu0 %5123
      %5125 = vset.pattern.permute.xlu0 0
      %5126 = vperm.xlu0 %5125, %v5083
      %v5127 = vpop.permute.xlu0 %5126
      %5128 = vset.pattern.permute.xlu0 0
      %5129 = vperm.xlu0 %5128, %v5084
      %v5130 = vpop.permute.xlu0 %5129
      %5131 = vset.pattern.permute.xlu0 0
      %5132 = vperm.xlu0 %5131, %v5085
      %v5133 = vpop.permute.xlu0 %5132
      %5134 = vset.pattern.permute.xlu0 0
      %5135 = vperm.xlu0 %5134, %v5086
      %v5136 = vpop.permute.xlu0 %5135
      %5137 = vset.pattern.permute.xlu0 0
      %5138 = vperm.xlu0 %5137, %v5087
      %v5139 = vpop.permute.xlu0 %5138
      %5140 = vset.pattern.permute.xlu0 0
      %5141 = vperm.xlu0 %5140, %v5088
      %v5142 = vpop.permute.xlu0 %5141
      %5143 = vset.pattern.permute.xlu0 0
      %5144 = vperm.xlu0 %5143, %v5089
      %v5145 = vpop.permute.xlu0 %5144
      %5146 = vset.pattern.permute.xlu0 0
      %5147 = vperm.xlu0 %5146, %v5090
      %v5148 = vpop.permute.xlu0 %5147
      %5149 = vset.pattern.permute.xlu0 0
      %5150 = vperm.xlu0 %5149, %v5091
      %v5151 = vpop.permute.xlu0 %5150
      %5152 = vset.pattern.permute.xlu0 0
      %5153 = vperm.xlu0 %5152, %v5092
      %v5154 = vpop.permute.xlu0 %5153
      %5155 = vset.pattern.permute.xlu0 0
      %5156 = vperm.xlu0 %5155, %v5093
      %v5157 = vpop.permute.xlu0 %5156
      %5158 = vset.pattern.permute.xlu0 0
      %5159 = vperm.xlu0 %5158, %v5094
      %v5160 = vpop.permute.xlu0 %5159
      %5161 = vset.pattern.permute.xlu0 0
      %5162 = vperm.xlu0 %5161, %v5095
      %v5163 = vpop.permute.xlu0 %5162
      %5164 = vset.pattern.permute.xlu0 0
      %5165 = vperm.xlu0 %5164, %v5096
      %v5166 = vpop.permute.xlu0 %5165
      %5167 = vset.pattern.permute.xlu0 0
      %5168 = vperm.xlu0 %5167, %v5097
      %v5169 = vpop.permute.xlu0 %5168
      %5170 = vset.pattern.permute.xlu0 0
      %5171 = vperm.xlu0 %5170, %v5098
      %v5172 = vpop.permute.xlu0 %5171
      %5173 = vset.pattern.permute.xlu0 0
      %5174 = vperm.xlu0 %5173, %v5099
      %v5175 = vpop.permute.xlu0 %5174
      %5176 = vset.pattern.permute.xlu0 0
      %5177 = vperm.xlu0 %5176, %v5100
      %v5178 = vpop.permute.xlu0 %5177
      %5179 = vset.pattern.permute.xlu0 0
      %5180 = vperm.xlu0 %5179, %v5101
      %v5181 = vpop.permute.xlu0 %5180
      %5182 = vset.pattern.permute.xlu0 0
      %5183 = vperm.xlu0 %5182, %v5102
      %v5184 = vpop.permute.xlu0 %5183
      %5185 = vset.pattern.permute.xlu0 0
      %5186 = vperm.xlu0 %5185, %v5103
      %v5187 = vpop.permute.xlu0 %5186
      %5188 = vset.pattern.permute.xlu0 0
      %5189 = vperm.xlu0 %5188, %v5104
      %v5190 = vpop.permute.xlu0 %5189
      %5191 = vset.pattern.permute.xlu0 0
      %5192 = vperm.xlu0 %5191, %v5105
      %v5193 = vpop.permute.xlu0 %5192
      %5194 = vset.pattern.permute.xlu0 0
      %5195 = vperm.xlu0 %5194, %v5106
      %v5196 = vpop.permute.xlu0 %5195
      %5197 = vset.pattern.permute.xlu0 0
      %5198 = vperm.xlu0 %5197, %v5107
      %v5199 = vpop.permute.xlu0 %5198
      %5200 = vset.pattern.permute.xlu0 0
      %5201 = vperm.xlu0 %5200, %v5108
      %v5202 = vpop.permute.xlu0 %5201
      %5203 = vset.pattern.permute.xlu0 0
      %5204 = vperm.xlu0 %5203, %v5109
      %v5205 = vpop.permute.xlu0 %5204
      %vm5206 = vcmp.eq.s32.totalorder %v5112, 1
      %vm5207 = vcmp.eq.s32.totalorder %v5115, 1
      %vm5208 = vcmp.eq.s32.totalorder %v5118, 1
      %vm5209 = vcmp.eq.s32.totalorder %v5121, 1
      %vm5210 = vcmp.eq.s32.totalorder %v5124, 1
      %vm5211 = vcmp.eq.s32.totalorder %v5127, 1
      %vm5212 = vcmp.eq.s32.totalorder %v5130, 1
      %vm5213 = vcmp.eq.s32.totalorder %v5133, 1
      %vm5214 = vcmp.eq.s32.totalorder %v5136, 1
      %vm5215 = vcmp.eq.s32.totalorder %v5139, 1
      %vm5216 = vcmp.eq.s32.totalorder %v5142, 1
      %vm5217 = vcmp.eq.s32.totalorder %v5145, 1
      %vm5218 = vcmp.eq.s32.totalorder %v5148, 1
      %vm5219 = vcmp.eq.s32.totalorder %v5151, 1
      %vm5220 = vcmp.eq.s32.totalorder %v5154, 1
      %vm5221 = vcmp.eq.s32.totalorder %v5157, 1
      %vm5222 = vcmp.eq.s32.totalorder %v5160, 1
      %vm5223 = vcmp.eq.s32.totalorder %v5163, 1
      %vm5224 = vcmp.eq.s32.totalorder %v5166, 1
      %vm5225 = vcmp.eq.s32.totalorder %v5169, 1
      %vm5226 = vcmp.eq.s32.totalorder %v5172, 1
      %vm5227 = vcmp.eq.s32.totalorder %v5175, 1
      %vm5228 = vcmp.eq.s32.totalorder %v5178, 1
      %vm5229 = vcmp.eq.s32.totalorder %v5181, 1
      %vm5230 = vcmp.eq.s32.totalorder %v5184, 1
      %vm5231 = vcmp.eq.s32.totalorder %v5187, 1
      %vm5232 = vcmp.eq.s32.totalorder %v5190, 1
      %vm5233 = vcmp.eq.s32.totalorder %v5193, 1
      %vm5234 = vcmp.eq.s32.totalorder %v5196, 1
      %vm5235 = vcmp.eq.s32.totalorder %v5199, 1
      %vm5236 = vcmp.eq.s32.totalorder %v5202, 1
      %vm5237 = vcmp.eq.s32.totalorder %v5205, 1
      %v5238 = vsel %vm5206, %v1711, 0.0
      %v5239 = vsel %vm5207, %v1712, 0.0
      %v5240 = vsel %vm5208, %v1713, 0.0
      %v5241 = vsel %vm5209, %v1714, 0.0
      %v5242 = vsel %vm5210, %v1715, 0.0
      %v5243 = vsel %vm5211, %v1716, 0.0
      %v5244 = vsel %vm5212, %v1717, 0.0
      %v5245 = vsel %vm5213, %v1718, 0.0
      %v5246 = vsel %vm5214, %v1719, 0.0
      %v5247 = vsel %vm5215, %v1720, 0.0
      %v5248 = vsel %vm5216, %v1721, 0.0
      %v5249 = vsel %vm5217, %v1722, 0.0
      %v5250 = vsel %vm5218, %v1723, 0.0
      %v5251 = vsel %vm5219, %v1724, 0.0
      %v5252 = vsel %vm5220, %v1725, 0.0
      %v5253 = vsel %vm5221, %v1726, 0.0
      %v5254 = vsel %vm5222, %v1727, 0.0
      %v5255 = vsel %vm5223, %v1728, 0.0
      %v5256 = vsel %vm5224, %v1729, 0.0
      %v5257 = vsel %vm5225, %v1730, 0.0
      %v5258 = vsel %vm5226, %v1731, 0.0
      %v5259 = vsel %vm5227, %v1732, 0.0
      %v5260 = vsel %vm5228, %v1733, 0.0
      %v5261 = vsel %vm5229, %v1734, 0.0
      %v5262 = vsel %vm5230, %v1735, 0.0
      %v5263 = vsel %vm5231, %v1736, 0.0
      %v5264 = vsel %vm5232, %v1737, 0.0
      %v5265 = vsel %vm5233, %v1738, 0.0
      %v5266 = vsel %vm5234, %v1739, 0.0
      %v5267 = vsel %vm5235, %v1740, 0.0
      %v5268 = vsel %vm5236, %v1709, 0.0
      %v5269 = vsel %vm5237, %v1710, 0.0
      %v5270 = vpack.c.bf16 %v5239, %v5238
      %v5271 = vpack.c.bf16 %v5241, %v5240
      %v5272 = vpack.c.bf16 %v5243, %v5242
      %v5273 = vpack.c.bf16 %v5245, %v5244
      %v5274 = vpack.c.bf16 %v5247, %v5246
      %v5275 = vpack.c.bf16 %v5249, %v5248
      %v5276 = vpack.c.bf16 %v5251, %v5250
      %v5277 = vpack.c.bf16 %v5253, %v5252
      %v5278 = vpack.c.bf16 %v5255, %v5254
      %v5279 = vpack.c.bf16 %v5257, %v5256
      %v5280 = vpack.c.bf16 %v5259, %v5258
      %v5281 = vpack.c.bf16 %v5261, %v5260
      %v5282 = vpack.c.bf16 %v5263, %v5262
      %v5283 = vpack.c.bf16 %v5265, %v5264
      %v5284 = vpack.c.bf16 %v5267, %v5266
      %v5285 = vpack.c.bf16 %v5269, %v5268
      %s5286 = scalar_lea.vmem %s7, 14
      %v5287 = vld [vmem:[%s5286] sm:$0x3]
      %v5289 = vsel %vm801, %v5270, 0
      %v5292 = vsel %vm801, %v5271, 0
      %v5295 = vsel %vm801, %v5272, 0
      %v5298 = vsel %vm801, %v5273, 0
      %v5301 = vsel %vm801, %v5274, 0
      %v5304 = vsel %vm801, %v5275, 0
      %v5307 = vsel %vm801, %v5276, 0
      %v5310 = vsel %vm801, %v5277, 0
      %v5313 = vsel %vm801, %v5278, 0
      %v5316 = vsel %vm801, %v5279, 0
      %v5319 = vsel %vm801, %v5280, 0
      %v5322 = vsel %vm801, %v5281, 0
      %v5325 = vsel %vm801, %v5282, 0
      %v5328 = vsel %vm801, %v5283, 0
      %v5331 = vsel %vm801, %v5284, 0
      %v5334 = vsel %vm801, %v5285, 0
      %v5337 = vsel %vm1026, %v5287, 0
      %5339 = vmatprep.subr.bf16.mxu0 0
      %5340 = vmatpush1.bf16.msra.mxu0 0
      %5341 = vmatprep.subr.bf16.mxu0 0
      %5342 = vmatpush1.bf16.msra.mxu0 0
      %5343 = vmatprep.subr.bf16.mxu0 0
      %5344 = vmatpush1.bf16.msra.mxu0 0
      %5345 = vmatprep.subr.bf16.mxu0 0
      %5346 = vmatpush1.bf16.msra.mxu0 0
      %5347 = vmatprep.subr.bf16.mxu0 0
      %5348 = vmatpush1.bf16.msra.mxu0 0
      %5349 = vmatprep.subr.bf16.mxu0 0
      %5350 = vmatpush1.bf16.msra.mxu0 0
      %5351 = vmatprep.subr.bf16.mxu0 0
      %5352 = vmatpush1.bf16.msra.mxu0 0
      %5353 = vmatprep.subr.bf16.mxu0 0
      %5354 = vmatpush1.bf16.msra.mxu0 %v5337
      %5355 = vmatprep.subr.bf16.mxu0 0
      %5356 = vmatpush2.bf16.msra.mxu0 0
      %5357 = vmatprep.subr.bf16.mxu0 0
      %5358 = vmatpush2.bf16.msra.mxu0 0
      %5359 = vmatprep.subr.bf16.mxu0 0
      %5360 = vmatpush2.bf16.msra.mxu0 0
      %5361 = vmatprep.subr.bf16.mxu0 0
      %5362 = vmatpush2.bf16.msra.mxu0 0
      %5363 = vmatprep.subr.bf16.mxu0 0
      %5364 = vmatpush2.bf16.msra.mxu0 0
      %5365 = vmatprep.subr.bf16.mxu0 0
      %5366 = vmatpush2.bf16.msra.mxu0 0
      %5367 = vmatprep.subr.bf16.mxu0 0
      %5368 = vmatpush2.bf16.msra.mxu0 0
      %5369 = vmatprep.subr.bf16.mxu0 0
      %5370 = vmatpush2.bf16.msra.mxu0 0
      %5371 = vmatprep.mubr.bf16.mxu0 0
      %5372 = vmatmul.mubr.bf16.gmra.mxu0 %v5289
      %v5373 = vpop.f32.mrf.mxu0
      %v5374 = vadd.f32 0.0, %v5373
      %v5375 = vpop.f32.mrf.mxu0
      %v5376 = vpop.f32.mrf.mxu0
      %v5377 = vadd.f32 0.0, %v5376
      %v5378 = vpop.f32.mrf.mxu0
      %5379 = vmatprep.mubr.bf16.mxu0 0
      %5380 = vmatmul.mubr.bf16.gmra.mxu0 %v5292
      %v5381 = vpop.f32.mrf.mxu0
      %v5382 = vadd.f32 0.0, %v5381
      %v5383 = vpop.f32.mrf.mxu0
      %v5384 = vpop.f32.mrf.mxu0
      %v5385 = vadd.f32 0.0, %v5384
      %v5386 = vpop.f32.mrf.mxu0
      %5387 = vmatprep.mubr.bf16.mxu0 0
      %5388 = vmatmul.mubr.bf16.gmra.mxu0 %v5295
      %v5389 = vpop.f32.mrf.mxu0
      %v5390 = vadd.f32 0.0, %v5389
      %v5391 = vpop.f32.mrf.mxu0
      %v5392 = vpop.f32.mrf.mxu0
      %v5393 = vadd.f32 0.0, %v5392
      %v5394 = vpop.f32.mrf.mxu0
      %5395 = vmatprep.mubr.bf16.mxu0 0
      %5396 = vmatmul.mubr.bf16.gmra.mxu0 %v5298
      %v5397 = vpop.f32.mrf.mxu0
      %v5398 = vadd.f32 0.0, %v5397
      %v5399 = vpop.f32.mrf.mxu0
      %v5400 = vpop.f32.mrf.mxu0
      %v5401 = vadd.f32 0.0, %v5400
      %v5402 = vpop.f32.mrf.mxu0
      %5403 = vmatprep.mubr.bf16.mxu0 0
      %5404 = vmatmul.mubr.bf16.gmra.mxu0 %v5301
      %v5405 = vpop.f32.mrf.mxu0
      %v5406 = vadd.f32 0.0, %v5405
      %v5407 = vpop.f32.mrf.mxu0
      %v5408 = vpop.f32.mrf.mxu0
      %v5409 = vadd.f32 0.0, %v5408
      %v5410 = vpop.f32.mrf.mxu0
      %5411 = vmatprep.mubr.bf16.mxu0 0
      %5412 = vmatmul.mubr.bf16.gmra.mxu0 %v5304
      %v5413 = vpop.f32.mrf.mxu0
      %v5414 = vadd.f32 0.0, %v5413
      %v5415 = vpop.f32.mrf.mxu0
      %v5416 = vpop.f32.mrf.mxu0
      %v5417 = vadd.f32 0.0, %v5416
      %v5418 = vpop.f32.mrf.mxu0
      %5419 = vmatprep.mubr.bf16.mxu0 0
      %5420 = vmatmul.mubr.bf16.gmra.mxu0 %v5307
      %v5421 = vpop.f32.mrf.mxu0
      %v5422 = vadd.f32 0.0, %v5421
      %v5423 = vpop.f32.mrf.mxu0
      %v5424 = vpop.f32.mrf.mxu0
      %v5425 = vadd.f32 0.0, %v5424
      %v5426 = vpop.f32.mrf.mxu0
      %5427 = vmatprep.mubr.bf16.mxu0 0
      %5428 = vmatmul.mubr.bf16.gmra.mxu0 %v5310
      %v5429 = vpop.f32.mrf.mxu0
      %v5430 = vadd.f32 0.0, %v5429
      %v5431 = vpop.f32.mrf.mxu0
      %v5432 = vpop.f32.mrf.mxu0
      %v5433 = vadd.f32 0.0, %v5432
      %v5434 = vpop.f32.mrf.mxu0
      %5435 = vmatprep.mubr.bf16.mxu0 0
      %5436 = vmatmul.mubr.bf16.gmra.mxu0 %v5313
      %v5437 = vpop.f32.mrf.mxu0
      %v5438 = vadd.f32 0.0, %v5437
      %v5439 = vpop.f32.mrf.mxu0
      %v5440 = vpop.f32.mrf.mxu0
      %v5441 = vadd.f32 0.0, %v5440
      %v5442 = vpop.f32.mrf.mxu0
      %5443 = vmatprep.mubr.bf16.mxu0 0
      %5444 = vmatmul.mubr.bf16.gmra.mxu0 %v5316
      %v5445 = vpop.f32.mrf.mxu0
      %v5446 = vadd.f32 0.0, %v5445
      %v5447 = vpop.f32.mrf.mxu0
      %v5448 = vpop.f32.mrf.mxu0
      %v5449 = vadd.f32 0.0, %v5448
      %v5450 = vpop.f32.mrf.mxu0
      %5451 = vmatprep.mubr.bf16.mxu0 0
      %5452 = vmatmul.mubr.bf16.gmra.mxu0 %v5319
      %v5453 = vpop.f32.mrf.mxu0
      %v5454 = vadd.f32 0.0, %v5453
      %v5455 = vpop.f32.mrf.mxu0
      %v5456 = vpop.f32.mrf.mxu0
      %v5457 = vadd.f32 0.0, %v5456
      %v5458 = vpop.f32.mrf.mxu0
      %5459 = vmatprep.mubr.bf16.mxu0 0
      %5460 = vmatmul.mubr.bf16.gmra.mxu0 %v5322
      %v5461 = vpop.f32.mrf.mxu0
      %v5462 = vadd.f32 0.0, %v5461
      %v5463 = vpop.f32.mrf.mxu0
      %v5464 = vpop.f32.mrf.mxu0
      %v5465 = vadd.f32 0.0, %v5464
      %v5466 = vpop.f32.mrf.mxu0
      %5467 = vmatprep.mubr.bf16.mxu0 0
      %5468 = vmatmul.mubr.bf16.gmra.mxu0 %v5325
      %v5469 = vpop.f32.mrf.mxu0
      %v5470 = vadd.f32 0.0, %v5469
      %v5471 = vpop.f32.mrf.mxu0
      %v5472 = vpop.f32.mrf.mxu0
      %v5473 = vadd.f32 0.0, %v5472
      %v5474 = vpop.f32.mrf.mxu0
      %5475 = vmatprep.mubr.bf16.mxu0 0
      %5476 = vmatmul.mubr.bf16.gmra.mxu0 %v5328
      %v5477 = vpop.f32.mrf.mxu0
      %v5478 = vadd.f32 0.0, %v5477
      %v5479 = vpop.f32.mrf.mxu0
      %v5480 = vpop.f32.mrf.mxu0
      %v5481 = vadd.f32 0.0, %v5480
      %v5482 = vpop.f32.mrf.mxu0
      %5483 = vmatprep.mubr.bf16.mxu0 0
      %5484 = vmatmul.mubr.bf16.gmra.mxu0 %v5331
      %v5485 = vpop.f32.mrf.mxu0
      %v5486 = vadd.f32 0.0, %v5485
      %v5487 = vpop.f32.mrf.mxu0
      %v5488 = vpop.f32.mrf.mxu0
      %v5489 = vadd.f32 0.0, %v5488
      %v5490 = vpop.f32.mrf.mxu0
      %5491 = vmatprep.mubr.bf16.mxu0 0
      %5492 = vmatmul.mubr.bf16.gmra.mxu0 %v5334
      %v5493 = vpop.f32.mrf.mxu0
      %v5494 = vadd.f32 0.0, %v5493
      %v5495 = vpop.f32.mrf.mxu0
      %v5496 = vpop.f32.mrf.mxu0
      %v5497 = vadd.f32 0.0, %v5496
      %v5498 = vpop.f32.mrf.mxu0
      %5499 = vdwg.mxu0
      %v5500 = vadd.f32 %v5046, %v5374
      %v5501 = vadd.f32 %v5047, %v5377
      %v5502 = vadd.f32 %v5048, %v5382
      %v5503 = vadd.f32 %v5049, %v5385
      %v5504 = vadd.f32 %v5050, %v5390
      %v5505 = vadd.f32 %v5051, %v5393
      %v5506 = vadd.f32 %v5052, %v5398
      %v5507 = vadd.f32 %v5053, %v5401
      %v5508 = vadd.f32 %v5054, %v5406
      %v5509 = vadd.f32 %v5055, %v5409
      %v5510 = vadd.f32 %v5056, %v5414
      %v5511 = vadd.f32 %v5057, %v5417
      %v5512 = vadd.f32 %v5058, %v5422
      %v5513 = vadd.f32 %v5059, %v5425
      %v5514 = vadd.f32 %v5060, %v5430
      %v5515 = vadd.f32 %v5061, %v5433
      %v5516 = vadd.f32 %v5062, %v5438
      %v5517 = vadd.f32 %v5063, %v5441
      %v5518 = vadd.f32 %v5064, %v5446
      %v5519 = vadd.f32 %v5065, %v5449
      %v5520 = vadd.f32 %v5066, %v5454
      %v5521 = vadd.f32 %v5067, %v5457
      %v5522 = vadd.f32 %v5068, %v5462
      %v5523 = vadd.f32 %v5069, %v5465
      %v5524 = vadd.f32 %v5070, %v5470
      %v5525 = vadd.f32 %v5071, %v5473
      %v5526 = vadd.f32 %v5072, %v5478
      %v5527 = vadd.f32 %v5073, %v5481
      %v5528 = vadd.f32 %v5074, %v5486
      %v5529 = vadd.f32 %v5075, %v5489
      %v5530 = vadd.f32 %v5076, %v5494
      %v5531 = vadd.f32 %v5077, %v5497
      %vm5532 = vmand %vm4560, %vm2808
      %vm5533 = vmand %vm4561, %vm2809
      %vm5534 = vmand %vm4562, %vm2810
      %vm5535 = vmand %vm4563, %vm2811
      %vm5536 = vmand %vm4564, %vm2812
      %vm5537 = vmand %vm4565, %vm2813
      %vm5538 = vmand %vm4566, %vm2814
      %vm5539 = vmand %vm4567, %vm2815
      %vm5540 = vmand %vm4568, %vm2816
      %vm5541 = vmand %vm4569, %vm2817
      %vm5542 = vmand %vm4570, %vm2818
      %vm5543 = vmand %vm4571, %vm2819
      %vm5544 = vmand %vm4572, %vm2820
      %vm5545 = vmand %vm4573, %vm2821
      %vm5546 = vmand %vm4574, %vm2822
      %vm5547 = vmand %vm4575, %vm2823
      %vm5548 = vmand %vm4576, %vm2824
      %vm5549 = vmand %vm4577, %vm2825
      %vm5550 = vmand %vm4578, %vm2826
      %vm5551 = vmand %vm4579, %vm2827
      %vm5552 = vmand %vm4580, %vm2828
      %vm5553 = vmand %vm4581, %vm2829
      %vm5554 = vmand %vm4582, %vm2830
      %vm5555 = vmand %vm4583, %vm2831
      %vm5556 = vmand %vm4584, %vm2832
      %vm5557 = vmand %vm4585, %vm2833
      %vm5558 = vmand %vm4586, %vm2834
      %vm5559 = vmand %vm4587, %vm2835
      %vm5560 = vmand %vm4588, %vm2836
      %vm5561 = vmand %vm4589, %vm2837
      %vm5562 = vmand %vm4590, %vm2838
      %vm5563 = vmand %vm4591, %vm2839
      %v5564 = vsel %vm5532, 1, 0
      %v5565 = vsel %vm5533, 1, 0
      %v5566 = vsel %vm5534, 1, 0
      %v5567 = vsel %vm5535, 1, 0
      %v5568 = vsel %vm5536, 1, 0
      %v5569 = vsel %vm5537, 1, 0
      %v5570 = vsel %vm5538, 1, 0
      %v5571 = vsel %vm5539, 1, 0
      %v5572 = vsel %vm5540, 1, 0
      %v5573 = vsel %vm5541, 1, 0
      %v5574 = vsel %vm5542, 1, 0
      %v5575 = vsel %vm5543, 1, 0
      %v5576 = vsel %vm5544, 1, 0
      %v5577 = vsel %vm5545, 1, 0
      %v5578 = vsel %vm5546, 1, 0
      %v5579 = vsel %vm5547, 1, 0
      %v5580 = vsel %vm5548, 1, 0
      %v5581 = vsel %vm5549, 1, 0
      %v5582 = vsel %vm5550, 1, 0
      %v5583 = vsel %vm5551, 1, 0
      %v5584 = vsel %vm5552, 1, 0
      %v5585 = vsel %vm5553, 1, 0
      %v5586 = vsel %vm5554, 1, 0
      %v5587 = vsel %vm5555, 1, 0
      %v5588 = vsel %vm5556, 1, 0
      %v5589 = vsel %vm5557, 1, 0
      %v5590 = vsel %vm5558, 1, 0
      %v5591 = vsel %vm5559, 1, 0
      %v5592 = vsel %vm5560, 1, 0
      %v5593 = vsel %vm5561, 1, 0
      %v5594 = vsel %vm5562, 1, 0
      %v5595 = vsel %vm5563, 1, 0
      %5596 = vset.pattern.permute.xlu0 0
      %5597 = vperm.xlu0 %5596, %v5564
      %v5598 = vpop.permute.xlu0 %5597
      %5599 = vset.pattern.permute.xlu0 0
      %5600 = vperm.xlu0 %5599, %v5565
      %v5601 = vpop.permute.xlu0 %5600
      %5602 = vset.pattern.permute.xlu0 0
      %5603 = vperm.xlu0 %5602, %v5566
      %v5604 = vpop.permute.xlu0 %5603
      %5605 = vset.pattern.permute.xlu0 0
      %5606 = vperm.xlu0 %5605, %v5567
      %v5607 = vpop.permute.xlu0 %5606
      %5608 = vset.pattern.permute.xlu0 0
      %5609 = vperm.xlu0 %5608, %v5568
      %v5610 = vpop.permute.xlu0 %5609
      %5611 = vset.pattern.permute.xlu0 0
      %5612 = vperm.xlu0 %5611, %v5569
      %v5613 = vpop.permute.xlu0 %5612
      %5614 = vset.pattern.permute.xlu0 0
      %5615 = vperm.xlu0 %5614, %v5570
      %v5616 = vpop.permute.xlu0 %5615
      %5617 = vset.pattern.permute.xlu0 0
      %5618 = vperm.xlu0 %5617, %v5571
      %v5619 = vpop.permute.xlu0 %5618
      %5620 = vset.pattern.permute.xlu0 0
      %5621 = vperm.xlu0 %5620, %v5572
      %v5622 = vpop.permute.xlu0 %5621
      %5623 = vset.pattern.permute.xlu0 0
      %5624 = vperm.xlu0 %5623, %v5573
      %v5625 = vpop.permute.xlu0 %5624
      %5626 = vset.pattern.permute.xlu0 0
      %5627 = vperm.xlu0 %5626, %v5574
      %v5628 = vpop.permute.xlu0 %5627
      %5629 = vset.pattern.permute.xlu0 0
      %5630 = vperm.xlu0 %5629, %v5575
      %v5631 = vpop.permute.xlu0 %5630
      %5632 = vset.pattern.permute.xlu0 0
      %5633 = vperm.xlu0 %5632, %v5576
      %v5634 = vpop.permute.xlu0 %5633
      %5635 = vset.pattern.permute.xlu0 0
      %5636 = vperm.xlu0 %5635, %v5577
      %v5637 = vpop.permute.xlu0 %5636
      %5638 = vset.pattern.permute.xlu0 0
      %5639 = vperm.xlu0 %5638, %v5578
      %v5640 = vpop.permute.xlu0 %5639
      %5641 = vset.pattern.permute.xlu0 0
      %5642 = vperm.xlu0 %5641, %v5579
      %v5643 = vpop.permute.xlu0 %5642
      %5644 = vset.pattern.permute.xlu0 0
      %5645 = vperm.xlu0 %5644, %v5580
      %v5646 = vpop.permute.xlu0 %5645
      %5647 = vset.pattern.permute.xlu0 0
      %5648 = vperm.xlu0 %5647, %v5581
      %v5649 = vpop.permute.xlu0 %5648
      %5650 = vset.pattern.permute.xlu0 0
      %5651 = vperm.xlu0 %5650, %v5582
      %v5652 = vpop.permute.xlu0 %5651
      %5653 = vset.pattern.permute.xlu0 0
      %5654 = vperm.xlu0 %5653, %v5583
      %v5655 = vpop.permute.xlu0 %5654
      %5656 = vset.pattern.permute.xlu0 0
      %5657 = vperm.xlu0 %5656, %v5584
      %v5658 = vpop.permute.xlu0 %5657
      %5659 = vset.pattern.permute.xlu0 0
      %5660 = vperm.xlu0 %5659, %v5585
      %v5661 = vpop.permute.xlu0 %5660
      %5662 = vset.pattern.permute.xlu0 0
      %5663 = vperm.xlu0 %5662, %v5586
      %v5664 = vpop.permute.xlu0 %5663
      %5665 = vset.pattern.permute.xlu0 0
      %5666 = vperm.xlu0 %5665, %v5587
      %v5667 = vpop.permute.xlu0 %5666
      %5668 = vset.pattern.permute.xlu0 0
      %5669 = vperm.xlu0 %5668, %v5588
      %v5670 = vpop.permute.xlu0 %5669
      %5671 = vset.pattern.permute.xlu0 0
      %5672 = vperm.xlu0 %5671, %v5589
      %v5673 = vpop.permute.xlu0 %5672
      %5674 = vset.pattern.permute.xlu0 0
      %5675 = vperm.xlu0 %5674, %v5590
      %v5676 = vpop.permute.xlu0 %5675
      %5677 = vset.pattern.permute.xlu0 0
      %5678 = vperm.xlu0 %5677, %v5591
      %v5679 = vpop.permute.xlu0 %5678
      %5680 = vset.pattern.permute.xlu0 0
      %5681 = vperm.xlu0 %5680, %v5592
      %v5682 = vpop.permute.xlu0 %5681
      %5683 = vset.pattern.permute.xlu0 0
      %5684 = vperm.xlu0 %5683, %v5593
      %v5685 = vpop.permute.xlu0 %5684
      %5686 = vset.pattern.permute.xlu0 0
      %5687 = vperm.xlu0 %5686, %v5594
      %v5688 = vpop.permute.xlu0 %5687
      %5689 = vset.pattern.permute.xlu0 0
      %5690 = vperm.xlu0 %5689, %v5595
      %v5691 = vpop.permute.xlu0 %5690
      %vm5692 = vcmp.eq.s32.totalorder %v5598, 1
      %vm5693 = vcmp.eq.s32.totalorder %v5601, 1
      %vm5694 = vcmp.eq.s32.totalorder %v5604, 1
      %vm5695 = vcmp.eq.s32.totalorder %v5607, 1
      %vm5696 = vcmp.eq.s32.totalorder %v5610, 1
      %vm5697 = vcmp.eq.s32.totalorder %v5613, 1
      %vm5698 = vcmp.eq.s32.totalorder %v5616, 1
      %vm5699 = vcmp.eq.s32.totalorder %v5619, 1
      %vm5700 = vcmp.eq.s32.totalorder %v5622, 1
      %vm5701 = vcmp.eq.s32.totalorder %v5625, 1
      %vm5702 = vcmp.eq.s32.totalorder %v5628, 1
      %vm5703 = vcmp.eq.s32.totalorder %v5631, 1
      %vm5704 = vcmp.eq.s32.totalorder %v5634, 1
      %vm5705 = vcmp.eq.s32.totalorder %v5637, 1
      %vm5706 = vcmp.eq.s32.totalorder %v5640, 1
      %vm5707 = vcmp.eq.s32.totalorder %v5643, 1
      %vm5708 = vcmp.eq.s32.totalorder %v5646, 1
      %vm5709 = vcmp.eq.s32.totalorder %v5649, 1
      %vm5710 = vcmp.eq.s32.totalorder %v5652, 1
      %vm5711 = vcmp.eq.s32.totalorder %v5655, 1
      %vm5712 = vcmp.eq.s32.totalorder %v5658, 1
      %vm5713 = vcmp.eq.s32.totalorder %v5661, 1
      %vm5714 = vcmp.eq.s32.totalorder %v5664, 1
      %vm5715 = vcmp.eq.s32.totalorder %v5667, 1
      %vm5716 = vcmp.eq.s32.totalorder %v5670, 1
      %vm5717 = vcmp.eq.s32.totalorder %v5673, 1
      %vm5718 = vcmp.eq.s32.totalorder %v5676, 1
      %vm5719 = vcmp.eq.s32.totalorder %v5679, 1
      %vm5720 = vcmp.eq.s32.totalorder %v5682, 1
      %vm5721 = vcmp.eq.s32.totalorder %v5685, 1
      %vm5722 = vcmp.eq.s32.totalorder %v5688, 1
      %vm5723 = vcmp.eq.s32.totalorder %v5691, 1
      %v5724 = vsel %vm5692, %v2932, 0.0
      %v5725 = vsel %vm5693, %v2931, 0.0
      %v5726 = vsel %vm5694, %v2930, 0.0
      %v5727 = vsel %vm5695, %v2929, 0.0
      %v5728 = vsel %vm5696, %v2928, 0.0
      %v5729 = vsel %vm5697, %v2927, 0.0
      %v5730 = vsel %vm5698, %v2926, 0.0
      %v5731 = vsel %vm5699, %v2925, 0.0
      %v5732 = vsel %vm5700, %v2924, 0.0
      %v5733 = vsel %vm5701, %v2923, 0.0
      %v5734 = vsel %vm5702, %v2922, 0.0
      %v5735 = vsel %vm5703, %v2921, 0.0
      %v5736 = vsel %vm5704, %v2920, 0.0
      %v5737 = vsel %vm5705, %v2919, 0.0
      %v5738 = vsel %vm5706, %v2918, 0.0
      %v5739 = vsel %vm5707, %v2917, 0.0
      %v5740 = vsel %vm5708, %v2916, 0.0
      %v5741 = vsel %vm5709, %v2915, 0.0
      %v5742 = vsel %vm5710, %v2914, 0.0
      %v5743 = vsel %vm5711, %v2913, 0.0
      %v5744 = vsel %vm5712, %v2912, 0.0
      %v5745 = vsel %vm5713, %v2911, 0.0
      %v5746 = vsel %vm5714, %v2910, 0.0
      %v5747 = vsel %vm5715, %v2909, 0.0
      %v5748 = vsel %vm5716, %v2908, 0.0
      %v5749 = vsel %vm5717, %v2907, 0.0
      %v5750 = vsel %vm5718, %v2906, 0.0
      %v5751 = vsel %vm5719, %v2905, 0.0
      %v5752 = vsel %vm5720, %v2904, 0.0
      %v5753 = vsel %vm5721, %v2935, 0.0
      %v5754 = vsel %vm5722, %v2934, 0.0
      %v5755 = vsel %vm5723, %v2933, 0.0
      %v5756 = vpack.c.bf16 %v5725, %v5724
      %v5757 = vpack.c.bf16 %v5727, %v5726
      %v5758 = vpack.c.bf16 %v5729, %v5728
      %v5759 = vpack.c.bf16 %v5731, %v5730
      %v5760 = vpack.c.bf16 %v5733, %v5732
      %v5761 = vpack.c.bf16 %v5735, %v5734
      %v5762 = vpack.c.bf16 %v5737, %v5736
      %v5763 = vpack.c.bf16 %v5739, %v5738
      %v5764 = vpack.c.bf16 %v5741, %v5740
      %v5765 = vpack.c.bf16 %v5743, %v5742
      %v5766 = vpack.c.bf16 %v5745, %v5744
      %v5767 = vpack.c.bf16 %v5747, %v5746
      %v5768 = vpack.c.bf16 %v5749, %v5748
      %v5769 = vpack.c.bf16 %v5751, %v5750
      %v5770 = vpack.c.bf16 %v5753, %v5752
      %v5771 = vpack.c.bf16 %v5755, %v5754
      %s5772 = scalar_lea.vmem %s7, 16
      %v5773 = vld [vmem:[%s5772] sm:$0x3]
      %v5775 = vsel %vm801, %v5756, 0
      %v5778 = vsel %vm801, %v5757, 0
      %v5781 = vsel %vm801, %v5758, 0
      %v5784 = vsel %vm801, %v5759, 0
      %v5787 = vsel %vm801, %v5760, 0
      %v5790 = vsel %vm801, %v5761, 0
      %v5793 = vsel %vm801, %v5762, 0
      %v5796 = vsel %vm801, %v5763, 0
      %v5799 = vsel %vm801, %v5764, 0
      %v5802 = vsel %vm801, %v5765, 0
      %v5805 = vsel %vm801, %v5766, 0
      %v5808 = vsel %vm801, %v5767, 0
      %v5811 = vsel %vm801, %v5768, 0
      %v5814 = vsel %vm801, %v5769, 0
      %v5817 = vsel %vm801, %v5770, 0
      %v5820 = vsel %vm801, %v5771, 0
      %v5823 = vsel %vm1026, %v5773, 0
      %5825 = vmatprep.subr.bf16.mxu0 0
      %5826 = vmatpush1.bf16.msra.mxu0 0
      %5827 = vmatprep.subr.bf16.mxu0 0
      %5828 = vmatpush1.bf16.msra.mxu0 0
      %5829 = vmatprep.subr.bf16.mxu0 0
      %5830 = vmatpush1.bf16.msra.mxu0 0
      %5831 = vmatprep.subr.bf16.mxu0 0
      %5832 = vmatpush1.bf16.msra.mxu0 0
      %5833 = vmatprep.subr.bf16.mxu0 0
      %5834 = vmatpush1.bf16.msra.mxu0 0
      %5835 = vmatprep.subr.bf16.mxu0 0
      %5836 = vmatpush1.bf16.msra.mxu0 0
      %5837 = vmatprep.subr.bf16.mxu0 0
      %5838 = vmatpush1.bf16.msra.mxu0 0
      %5839 = vmatprep.subr.bf16.mxu0 0
      %5840 = vmatpush1.bf16.msra.mxu0 %v5823
      %5841 = vmatprep.subr.bf16.mxu0 0
      %5842 = vmatpush2.bf16.msra.mxu0 0
      %5843 = vmatprep.subr.bf16.mxu0 0
      %5844 = vmatpush2.bf16.msra.mxu0 0
      %5845 = vmatprep.subr.bf16.mxu0 0
      %5846 = vmatpush2.bf16.msra.mxu0 0
      %5847 = vmatprep.subr.bf16.mxu0 0
      %5848 = vmatpush2.bf16.msra.mxu0 0
      %5849 = vmatprep.subr.bf16.mxu0 0
      %5850 = vmatpush2.bf16.msra.mxu0 0
      %5851 = vmatprep.subr.bf16.mxu0 0
      %5852 = vmatpush2.bf16.msra.mxu0 0
      %5853 = vmatprep.subr.bf16.mxu0 0
      %5854 = vmatpush2.bf16.msra.mxu0 0
      %5855 = vmatprep.subr.bf16.mxu0 0
      %5856 = vmatpush2.bf16.msra.mxu0 0
      %5857 = vmatprep.mubr.bf16.mxu0 0
      %5858 = vmatmul.mubr.bf16.gmra.mxu0 %v5775
      %v5859 = vpop.f32.mrf.mxu0
      %v5860 = vadd.f32 0.0, %v5859
      %v5861 = vpop.f32.mrf.mxu0
      %v5862 = vpop.f32.mrf.mxu0
      %v5863 = vadd.f32 0.0, %v5862
      %v5864 = vpop.f32.mrf.mxu0
      %5865 = vmatprep.mubr.bf16.mxu0 0
      %5866 = vmatmul.mubr.bf16.gmra.mxu0 %v5778
      %v5867 = vpop.f32.mrf.mxu0
      %v5868 = vadd.f32 0.0, %v5867
      %v5869 = vpop.f32.mrf.mxu0
      %v5870 = vpop.f32.mrf.mxu0
      %v5871 = vadd.f32 0.0, %v5870
      %v5872 = vpop.f32.mrf.mxu0
      %5873 = vmatprep.mubr.bf16.mxu0 0
      %5874 = vmatmul.mubr.bf16.gmra.mxu0 %v5781
      %v5875 = vpop.f32.mrf.mxu0
      %v5876 = vadd.f32 0.0, %v5875
      %v5877 = vpop.f32.mrf.mxu0
      %v5878 = vpop.f32.mrf.mxu0
      %v5879 = vadd.f32 0.0, %v5878
      %v5880 = vpop.f32.mrf.mxu0
      %5881 = vmatprep.mubr.bf16.mxu0 0
      %5882 = vmatmul.mubr.bf16.gmra.mxu0 %v5784
      %v5883 = vpop.f32.mrf.mxu0
      %v5884 = vadd.f32 0.0, %v5883
      %v5885 = vpop.f32.mrf.mxu0
      %v5886 = vpop.f32.mrf.mxu0
      %v5887 = vadd.f32 0.0, %v5886
      %v5888 = vpop.f32.mrf.mxu0
      %5889 = vmatprep.mubr.bf16.mxu0 0
      %5890 = vmatmul.mubr.bf16.gmra.mxu0 %v5787
      %v5891 = vpop.f32.mrf.mxu0
      %v5892 = vadd.f32 0.0, %v5891
      %v5893 = vpop.f32.mrf.mxu0
      %v5894 = vpop.f32.mrf.mxu0
      %v5895 = vadd.f32 0.0, %v5894
      %v5896 = vpop.f32.mrf.mxu0
      %5897 = vmatprep.mubr.bf16.mxu0 0
      %5898 = vmatmul.mubr.bf16.gmra.mxu0 %v5790
      %v5899 = vpop.f32.mrf.mxu0
      %v5900 = vadd.f32 0.0, %v5899
      %v5901 = vpop.f32.mrf.mxu0
      %v5902 = vpop.f32.mrf.mxu0
      %v5903 = vadd.f32 0.0, %v5902
      %v5904 = vpop.f32.mrf.mxu0
      %5905 = vmatprep.mubr.bf16.mxu0 0
      %5906 = vmatmul.mubr.bf16.gmra.mxu0 %v5793
      %v5907 = vpop.f32.mrf.mxu0
      %v5908 = vadd.f32 0.0, %v5907
      %v5909 = vpop.f32.mrf.mxu0
      %v5910 = vpop.f32.mrf.mxu0
      %v5911 = vadd.f32 0.0, %v5910
      %v5912 = vpop.f32.mrf.mxu0
      %5913 = vmatprep.mubr.bf16.mxu0 0
      %5914 = vmatmul.mubr.bf16.gmra.mxu0 %v5796
      %v5915 = vpop.f32.mrf.mxu0
      %v5916 = vadd.f32 0.0, %v5915
      %v5917 = vpop.f32.mrf.mxu0
      %v5918 = vpop.f32.mrf.mxu0
      %v5919 = vadd.f32 0.0, %v5918
      %v5920 = vpop.f32.mrf.mxu0
      %5921 = vmatprep.mubr.bf16.mxu0 0
      %5922 = vmatmul.mubr.bf16.gmra.mxu0 %v5799
      %v5923 = vpop.f32.mrf.mxu0
      %v5924 = vadd.f32 0.0, %v5923
      %v5925 = vpop.f32.mrf.mxu0
      %v5926 = vpop.f32.mrf.mxu0
      %v5927 = vadd.f32 0.0, %v5926
      %v5928 = vpop.f32.mrf.mxu0
      %5929 = vmatprep.mubr.bf16.mxu0 0
      %5930 = vmatmul.mubr.bf16.gmra.mxu0 %v5802
      %v5931 = vpop.f32.mrf.mxu0
      %v5932 = vadd.f32 0.0, %v5931
      %v5933 = vpop.f32.mrf.mxu0
      %v5934 = vpop.f32.mrf.mxu0
      %v5935 = vadd.f32 0.0, %v5934
      %v5936 = vpop.f32.mrf.mxu0
      %5937 = vmatprep.mubr.bf16.mxu0 0
      %5938 = vmatmul.mubr.bf16.gmra.mxu0 %v5805
      %v5939 = vpop.f32.mrf.mxu0
      %v5940 = vadd.f32 0.0, %v5939
      %v5941 = vpop.f32.mrf.mxu0
      %v5942 = vpop.f32.mrf.mxu0
      %v5943 = vadd.f32 0.0, %v5942
      %v5944 = vpop.f32.mrf.mxu0
      %5945 = vmatprep.mubr.bf16.mxu0 0
      %5946 = vmatmul.mubr.bf16.gmra.mxu0 %v5808
      %v5947 = vpop.f32.mrf.mxu0
      %v5948 = vadd.f32 0.0, %v5947
      %v5949 = vpop.f32.mrf.mxu0
      %v5950 = vpop.f32.mrf.mxu0
      %v5951 = vadd.f32 0.0, %v5950
      %v5952 = vpop.f32.mrf.mxu0
      %5953 = vmatprep.mubr.bf16.mxu0 0
      %5954 = vmatmul.mubr.bf16.gmra.mxu0 %v5811
      %v5955 = vpop.f32.mrf.mxu0
      %v5956 = vadd.f32 0.0, %v5955
      %v5957 = vpop.f32.mrf.mxu0
      %v5958 = vpop.f32.mrf.mxu0
      %v5959 = vadd.f32 0.0, %v5958
      %v5960 = vpop.f32.mrf.mxu0
      %5961 = vmatprep.mubr.bf16.mxu0 0
      %5962 = vmatmul.mubr.bf16.gmra.mxu0 %v5814
      %v5963 = vpop.f32.mrf.mxu0
      %v5964 = vadd.f32 0.0, %v5963
      %v5965 = vpop.f32.mrf.mxu0
      %v5966 = vpop.f32.mrf.mxu0
      %v5967 = vadd.f32 0.0, %v5966
      %v5968 = vpop.f32.mrf.mxu0
      %5969 = vmatprep.mubr.bf16.mxu0 0
      %5970 = vmatmul.mubr.bf16.gmra.mxu0 %v5817
      %v5971 = vpop.f32.mrf.mxu0
      %v5972 = vadd.f32 0.0, %v5971
      %v5973 = vpop.f32.mrf.mxu0
      %v5974 = vpop.f32.mrf.mxu0
      %v5975 = vadd.f32 0.0, %v5974
      %v5976 = vpop.f32.mrf.mxu0
      %5977 = vmatprep.mubr.bf16.mxu0 0
      %5978 = vmatmul.mubr.bf16.gmra.mxu0 %v5820
      %v5979 = vpop.f32.mrf.mxu0
      %v5980 = vadd.f32 0.0, %v5979
      %v5981 = vpop.f32.mrf.mxu0
      %v5982 = vpop.f32.mrf.mxu0
      %v5983 = vadd.f32 0.0, %v5982
      %v5984 = vpop.f32.mrf.mxu0
      %5985 = vdwg.mxu0
      %v5986 = vadd.f32 %v5500, %v5860
      %v5987 = vadd.f32 %v5501, %v5863
      %v5988 = vadd.f32 %v5502, %v5868
      %v5989 = vadd.f32 %v5503, %v5871
      %v5990 = vadd.f32 %v5504, %v5876
      %v5991 = vadd.f32 %v5505, %v5879
      %v5992 = vadd.f32 %v5506, %v5884
      %v5993 = vadd.f32 %v5507, %v5887
      %v5994 = vadd.f32 %v5508, %v5892
      %v5995 = vadd.f32 %v5509, %v5895
      %v5996 = vadd.f32 %v5510, %v5900
      %v5997 = vadd.f32 %v5511, %v5903
      %v5998 = vadd.f32 %v5512, %v5908
      %v5999 = vadd.f32 %v5513, %v5911
      %v6000 = vadd.f32 %v5514, %v5916
      %v6001 = vadd.f32 %v5515, %v5919
      %v6002 = vadd.f32 %v5516, %v5924
      %v6003 = vadd.f32 %v5517, %v5927
      %v6004 = vadd.f32 %v5518, %v5932
      %v6005 = vadd.f32 %v5519, %v5935
      %v6006 = vadd.f32 %v5520, %v5940
      %v6007 = vadd.f32 %v5521, %v5943
      %v6008 = vadd.f32 %v5522, %v5948
      %v6009 = vadd.f32 %v5523, %v5951
      %v6010 = vadd.f32 %v5524, %v5956
      %v6011 = vadd.f32 %v5525, %v5959
      %v6012 = vadd.f32 %v5526, %v5964
      %v6013 = vadd.f32 %v5527, %v5967
      %v6014 = vadd.f32 %v5528, %v5972
      %v6015 = vadd.f32 %v5529, %v5975
      %v6016 = vadd.f32 %v5530, %v5980
      %v6017 = vadd.f32 %v5531, %v5983
      %v6018 = vld [vmem:[%s8] sm:$0x1]
      %v6020 = vlaneseq
      %v6021 = vshrl.u32 %v6020, 7
      %v6022 = vsub.s32 0, %v6021
      %v6023 = vrot.slane %v6018, %v6022
      %v6025 = vadd.f32 %v5986, %v6023
      %v6026 = vadd.f32 %v5987, %v6023
      %v6027 = vadd.f32 %v5988, %v6023
      %v6028 = vadd.f32 %v5989, %v6023
      %v6029 = vadd.f32 %v5990, %v6023
      %v6030 = vadd.f32 %v5991, %v6023
      %v6031 = vadd.f32 %v5992, %v6023
      %v6032 = vadd.f32 %v5993, %v6023
      %v6033 = vadd.f32 %v5994, %v6023
      %v6034 = vadd.f32 %v5995, %v6023
      %v6035 = vadd.f32 %v5996, %v6023
      %v6036 = vadd.f32 %v5997, %v6023
      %v6037 = vadd.f32 %v5998, %v6023
      %v6038 = vadd.f32 %v5999, %v6023
      %v6039 = vadd.f32 %v6000, %v6023
      %v6040 = vadd.f32 %v6001, %v6023
      %v6041 = vadd.f32 %v6002, %v6023
      %v6042 = vadd.f32 %v6003, %v6023
      %v6043 = vadd.f32 %v6004, %v6023
      %v6044 = vadd.f32 %v6005, %v6023
      %v6045 = vadd.f32 %v6006, %v6023
      %v6046 = vadd.f32 %v6007, %v6023
      %v6047 = vadd.f32 %v6008, %v6023
      %v6048 = vadd.f32 %v6009, %v6023
      %v6049 = vadd.f32 %v6010, %v6023
      %v6050 = vadd.f32 %v6011, %v6023
      %v6051 = vadd.f32 %v6012, %v6023
      %v6052 = vadd.f32 %v6013, %v6023
      %v6053 = vadd.f32 %v6014, %v6023
      %v6054 = vadd.f32 %v6015, %v6023
      %v6055 = vadd.f32 %v6016, %v6023
      %v6056 = vadd.f32 %v6017, %v6023
      %v6057 = vmax.f32 %v6025, 0.0
      %v6058 = vmax.f32 %v6026, 0.0
      %v6059 = vmax.f32 %v6027, 0.0
      %v6060 = vmax.f32 %v6028, 0.0
      %v6061 = vmax.f32 %v6029, 0.0
      %v6062 = vmax.f32 %v6030, 0.0
      %v6063 = vmax.f32 %v6031, 0.0
      %v6064 = vmax.f32 %v6032, 0.0
      %v6065 = vmax.f32 %v6033, 0.0
      %v6066 = vmax.f32 %v6034, 0.0
      %v6067 = vmax.f32 %v6035, 0.0
      %v6068 = vmax.f32 %v6036, 0.0
      %v6069 = vmax.f32 %v6037, 0.0
      %v6070 = vmax.f32 %v6038, 0.0
      %v6071 = vmax.f32 %v6039, 0.0
      %v6072 = vmax.f32 %v6040, 0.0
      %v6073 = vmax.f32 %v6041, 0.0
      %v6074 = vmax.f32 %v6042, 0.0
      %v6075 = vmax.f32 %v6043, 0.0
      %v6076 = vmax.f32 %v6044, 0.0
      %v6077 = vmax.f32 %v6045, 0.0
      %v6078 = vmax.f32 %v6046, 0.0
      %v6079 = vmax.f32 %v6047, 0.0
      %v6080 = vmax.f32 %v6048, 0.0
      %v6081 = vmax.f32 %v6049, 0.0
      %v6082 = vmax.f32 %v6050, 0.0
      %v6083 = vmax.f32 %v6051, 0.0
      %v6084 = vmax.f32 %v6052, 0.0
      %v6085 = vmax.f32 %v6053, 0.0
      %v6086 = vmax.f32 %v6054, 0.0
      %v6087 = vmax.f32 %v6055, 0.0
      %v6088 = vmax.f32 %v6056, 0.0
      %v6089 = vpack.c.bf16 %v6058, %v6057
      %v6090 = vpack.c.bf16 %v6060, %v6059
      %v6091 = vpack.c.bf16 %v6062, %v6061
      %v6092 = vpack.c.bf16 %v6064, %v6063
      %v6093 = vpack.c.bf16 %v6066, %v6065
      %v6094 = vpack.c.bf16 %v6068, %v6067
      %v6095 = vpack.c.bf16 %v6070, %v6069
      %v6096 = vpack.c.bf16 %v6072, %v6071
      %v6097 = vpack.c.bf16 %v6074, %v6073
      %v6098 = vpack.c.bf16 %v6076, %v6075
      %v6099 = vpack.c.bf16 %v6078, %v6077
      %v6100 = vpack.c.bf16 %v6080, %v6079
      %v6101 = vpack.c.bf16 %v6082, %v6081
      %v6102 = vpack.c.bf16 %v6084, %v6083
      %v6103 = vpack.c.bf16 %v6086, %v6085
      %v6104 = vpack.c.bf16 %v6088, %v6087
      %v6105 = vld [vmem:[%s9] sm:$0x3]
      %v6106 = vld [vmem:[%s10] sm:$0x1]
      %v6108 = vlaneseq
      %v6109 = vshrl.u32 %v6108, 7
      %v6110 = vsub.s32 0, %v6109
      %v6111 = vrot.slane %v6106, %v6110
      %v6114 = vsel %vm801, %v6089, 0
      %v6117 = vsel %vm801, %v6090, 0
      %v6120 = vsel %vm801, %v6091, 0
      %v6123 = vsel %vm801, %v6092, 0
      %v6126 = vsel %vm801, %v6093, 0
      %v6129 = vsel %vm801, %v6094, 0
      %v6132 = vsel %vm801, %v6095, 0
      %v6135 = vsel %vm801, %v6096, 0
      %v6138 = vsel %vm801, %v6097, 0
      %v6141 = vsel %vm801, %v6098, 0
      %v6144 = vsel %vm801, %v6099, 0
      %v6147 = vsel %vm801, %v6100, 0
      %v6150 = vsel %vm801, %v6101, 0
      %v6153 = vsel %vm801, %v6102, 0
      %v6156 = vsel %vm801, %v6103, 0
      %v6159 = vsel %vm801, %v6104, 0
      %v6162 = vsel %vm1026, %v6105, 0
      %6164 = vmatprep.subr.bf16.mxu0 0
      %6165 = vmatpush1.bf16.msra.mxu0 0
      %6166 = vmatprep.subr.bf16.mxu0 0
      %6167 = vmatpush1.bf16.msra.mxu0 0
      %6168 = vmatprep.subr.bf16.mxu0 0
      %6169 = vmatpush1.bf16.msra.mxu0 0
      %6170 = vmatprep.subr.bf16.mxu0 0
      %6171 = vmatpush1.bf16.msra.mxu0 0
      %6172 = vmatprep.subr.bf16.mxu0 0
      %6173 = vmatpush1.bf16.msra.mxu0 0
      %6174 = vmatprep.subr.bf16.mxu0 0
      %6175 = vmatpush1.bf16.msra.mxu0 0
      %6176 = vmatprep.subr.bf16.mxu0 0
      %6177 = vmatpush1.bf16.msra.mxu0 0
      %6178 = vmatprep.subr.bf16.mxu0 0
      %6179 = vmatpush1.bf16.msra.mxu0 %v6162
      %6180 = vmatprep.subr.bf16.mxu0 0
      %6181 = vmatpush2.bf16.msra.mxu0 0
      %6182 = vmatprep.subr.bf16.mxu0 0
      %6183 = vmatpush2.bf16.msra.mxu0 0
      %6184 = vmatprep.subr.bf16.mxu0 0
      %6185 = vmatpush2.bf16.msra.mxu0 0
      %6186 = vmatprep.subr.bf16.mxu0 0
      %6187 = vmatpush2.bf16.msra.mxu0 0
      %6188 = vmatprep.subr.bf16.mxu0 0
      %6189 = vmatpush2.bf16.msra.mxu0 0
      %6190 = vmatprep.subr.bf16.mxu0 0
      %6191 = vmatpush2.bf16.msra.mxu0 0
      %6192 = vmatprep.subr.bf16.mxu0 0
      %6193 = vmatpush2.bf16.msra.mxu0 0
      %6194 = vmatprep.subr.bf16.mxu0 0
      %6195 = vmatpush2.bf16.msra.mxu0 0
      %6196 = vmatprep.mubr.bf16.mxu0 0
      %6197 = vmatmul.mubr.bf16.gmra.mxu0 %v6114
      %v6198 = vpop.f32.mrf.mxu0
      %v6199 = vadd.f32 %v6111, %v6198
      %v6200 = vpop.f32.mrf.mxu0
      %v6201 = vpop.f32.mrf.mxu0
      %v6202 = vadd.f32 %v6111, %v6201
      %v6203 = vpop.f32.mrf.mxu0
      %6204 = vmatprep.mubr.bf16.mxu0 0
      %6205 = vmatmul.mubr.bf16.gmra.mxu0 %v6117
      %v6206 = vpop.f32.mrf.mxu0
      %v6207 = vadd.f32 %v6111, %v6206
      %v6208 = vpop.f32.mrf.mxu0
      %v6209 = vpop.f32.mrf.mxu0
      %v6210 = vadd.f32 %v6111, %v6209
      %v6211 = vpop.f32.mrf.mxu0
      %6212 = vmatprep.mubr.bf16.mxu0 0
      %6213 = vmatmul.mubr.bf16.gmra.mxu0 %v6120
      %v6214 = vpop.f32.mrf.mxu0
      %v6215 = vadd.f32 %v6111, %v6214
      %v6216 = vpop.f32.mrf.mxu0
      %v6217 = vpop.f32.mrf.mxu0
      %v6218 = vadd.f32 %v6111, %v6217
      %v6219 = vpop.f32.mrf.mxu0
      %6220 = vmatprep.mubr.bf16.mxu0 0
      %6221 = vmatmul.mubr.bf16.gmra.mxu0 %v6123
      %v6222 = vpop.f32.mrf.mxu0
      %v6223 = vadd.f32 %v6111, %v6222
      %v6224 = vpop.f32.mrf.mxu0
      %v6225 = vpop.f32.mrf.mxu0
      %v6226 = vadd.f32 %v6111, %v6225
      %v6227 = vpop.f32.mrf.mxu0
      %6228 = vmatprep.mubr.bf16.mxu0 0
      %6229 = vmatmul.mubr.bf16.gmra.mxu0 %v6126
      %v6230 = vpop.f32.mrf.mxu0
      %v6231 = vadd.f32 %v6111, %v6230
      %v6232 = vpop.f32.mrf.mxu0
      %v6233 = vpop.f32.mrf.mxu0
      %v6234 = vadd.f32 %v6111, %v6233
      %v6235 = vpop.f32.mrf.mxu0
      %6236 = vmatprep.mubr.bf16.mxu0 0
      %6237 = vmatmul.mubr.bf16.gmra.mxu0 %v6129
      %v6238 = vpop.f32.mrf.mxu0
      %v6239 = vadd.f32 %v6111, %v6238
      %v6240 = vpop.f32.mrf.mxu0
      %v6241 = vpop.f32.mrf.mxu0
      %v6242 = vadd.f32 %v6111, %v6241
      %v6243 = vpop.f32.mrf.mxu0
      %6244 = vmatprep.mubr.bf16.mxu0 0
      %6245 = vmatmul.mubr.bf16.gmra.mxu0 %v6132
      %v6246 = vpop.f32.mrf.mxu0
      %v6247 = vadd.f32 %v6111, %v6246
      %v6248 = vpop.f32.mrf.mxu0
      %v6249 = vpop.f32.mrf.mxu0
      %v6250 = vadd.f32 %v6111, %v6249
      %v6251 = vpop.f32.mrf.mxu0
      %6252 = vmatprep.mubr.bf16.mxu0 0
      %6253 = vmatmul.mubr.bf16.gmra.mxu0 %v6135
      %v6254 = vpop.f32.mrf.mxu0
      %v6255 = vadd.f32 %v6111, %v6254
      %v6256 = vpop.f32.mrf.mxu0
      %v6257 = vpop.f32.mrf.mxu0
      %v6258 = vadd.f32 %v6111, %v6257
      %v6259 = vpop.f32.mrf.mxu0
      %6260 = vmatprep.mubr.bf16.mxu0 0
      %6261 = vmatmul.mubr.bf16.gmra.mxu0 %v6138
      %v6262 = vpop.f32.mrf.mxu0
      %v6263 = vadd.f32 %v6111, %v6262
      %v6264 = vpop.f32.mrf.mxu0
      %v6265 = vpop.f32.mrf.mxu0
      %v6266 = vadd.f32 %v6111, %v6265
      %v6267 = vpop.f32.mrf.mxu0
      %6268 = vmatprep.mubr.bf16.mxu0 0
      %6269 = vmatmul.mubr.bf16.gmra.mxu0 %v6141
      %v6270 = vpop.f32.mrf.mxu0
      %v6271 = vadd.f32 %v6111, %v6270
      %v6272 = vpop.f32.mrf.mxu0
      %v6273 = vpop.f32.mrf.mxu0
      %v6274 = vadd.f32 %v6111, %v6273
      %v6275 = vpop.f32.mrf.mxu0
      %6276 = vmatprep.mubr.bf16.mxu0 0
      %6277 = vmatmul.mubr.bf16.gmra.mxu0 %v6144
      %v6278 = vpop.f32.mrf.mxu0
      %v6279 = vadd.f32 %v6111, %v6278
      %v6280 = vpop.f32.mrf.mxu0
      %v6281 = vpop.f32.mrf.mxu0
      %v6282 = vadd.f32 %v6111, %v6281
      %v6283 = vpop.f32.mrf.mxu0
      %6284 = vmatprep.mubr.bf16.mxu0 0
      %6285 = vmatmul.mubr.bf16.gmra.mxu0 %v6147
      %v6286 = vpop.f32.mrf.mxu0
      %v6287 = vadd.f32 %v6111, %v6286
      %v6288 = vpop.f32.mrf.mxu0
      %v6289 = vpop.f32.mrf.mxu0
      %v6290 = vadd.f32 %v6111, %v6289
      %v6291 = vpop.f32.mrf.mxu0
      %6292 = vmatprep.mubr.bf16.mxu0 0
      %6293 = vmatmul.mubr.bf16.gmra.mxu0 %v6150
      %v6294 = vpop.f32.mrf.mxu0
      %v6295 = vadd.f32 %v6111, %v6294
      %v6296 = vpop.f32.mrf.mxu0
      %v6297 = vpop.f32.mrf.mxu0
      %v6298 = vadd.f32 %v6111, %v6297
      %v6299 = vpop.f32.mrf.mxu0
      %6300 = vmatprep.mubr.bf16.mxu0 0
      %6301 = vmatmul.mubr.bf16.gmra.mxu0 %v6153
      %v6302 = vpop.f32.mrf.mxu0
      %v6303 = vadd.f32 %v6111, %v6302
      %v6304 = vpop.f32.mrf.mxu0
      %v6305 = vpop.f32.mrf.mxu0
      %v6306 = vadd.f32 %v6111, %v6305
      %v6307 = vpop.f32.mrf.mxu0
      %6308 = vmatprep.mubr.bf16.mxu0 0
      %6309 = vmatmul.mubr.bf16.gmra.mxu0 %v6156
      %v6310 = vpop.f32.mrf.mxu0
      %v6311 = vadd.f32 %v6111, %v6310
      %v6312 = vpop.f32.mrf.mxu0
      %v6313 = vpop.f32.mrf.mxu0
      %v6314 = vadd.f32 %v6111, %v6313
      %v6315 = vpop.f32.mrf.mxu0
      %6316 = vmatprep.mubr.bf16.mxu0 0
      %6317 = vmatmul.mubr.bf16.gmra.mxu0 %v6159
      %v6318 = vpop.f32.mrf.mxu0
      %v6319 = vadd.f32 %v6111, %v6318
      %v6320 = vpop.f32.mrf.mxu0
      %v6321 = vpop.f32.mrf.mxu0
      %v6322 = vadd.f32 %v6111, %v6321
      %v6323 = vpop.f32.mrf.mxu0
      %6324 = vdwg.mxu0
      %v6325 = vadd.f32 %v496, %v6199
      %v6326 = vadd.f32 %v497, %v6202
      %v6327 = vadd.f32 %v498, %v6207
      %v6328 = vadd.f32 %v499, %v6210
      %v6329 = vadd.f32 %v500, %v6215
      %v6330 = vadd.f32 %v501, %v6218
      %v6331 = vadd.f32 %v502, %v6223
      %v6332 = vadd.f32 %v503, %v6226
      %v6333 = vadd.f32 %v504, %v6231
      %v6334 = vadd.f32 %v505, %v6234
      %v6335 = vadd.f32 %v506, %v6239
      %v6336 = vadd.f32 %v507, %v6242
      %v6337 = vadd.f32 %v508, %v6247
      %v6338 = vadd.f32 %v509, %v6250
      %v6339 = vadd.f32 %v510, %v6255
      %v6340 = vadd.f32 %v511, %v6258
      %v6341 = vadd.f32 %v512, %v6263
      %v6342 = vadd.f32 %v513, %v6266
      %v6343 = vadd.f32 %v514, %v6271
      %v6344 = vadd.f32 %v515, %v6274
      %v6345 = vadd.f32 %v516, %v6279
      %v6346 = vadd.f32 %v517, %v6282
      %v6347 = vadd.f32 %v518, %v6287
      %v6348 = vadd.f32 %v519, %v6290
      %v6349 = vadd.f32 %v520, %v6295
      %v6350 = vadd.f32 %v521, %v6298
      %v6351 = vadd.f32 %v522, %v6303
      %v6352 = vadd.f32 %v523, %v6306
      %v6353 = vadd.f32 %v524, %v6311
      %v6354 = vadd.f32 %v525, %v6314
      %v6355 = vadd.f32 %v526, %v6319
      %v6356 = vadd.f32 %v527, %v6322
      %v6357 = vmax.f32 %v6325, 0.0
      %v6358 = vmax.f32 %v6326, 0.0
      %v6359 = vmax.f32 %v6327, 0.0
      %v6360 = vmax.f32 %v6328, 0.0
      %v6361 = vmax.f32 %v6329, 0.0
      %v6362 = vmax.f32 %v6330, 0.0
      %v6363 = vmax.f32 %v6331, 0.0
      %v6364 = vmax.f32 %v6332, 0.0
      %v6365 = vmax.f32 %v6333, 0.0
      %v6366 = vmax.f32 %v6334, 0.0
      %v6367 = vmax.f32 %v6335, 0.0
      %v6368 = vmax.f32 %v6336, 0.0
      %v6369 = vmax.f32 %v6337, 0.0
      %v6370 = vmax.f32 %v6338, 0.0
      %v6371 = vmax.f32 %v6339, 0.0
      %v6372 = vmax.f32 %v6340, 0.0
      %v6373 = vmax.f32 %v6341, 0.0
      %v6374 = vmax.f32 %v6342, 0.0
      %v6375 = vmax.f32 %v6343, 0.0
      %v6376 = vmax.f32 %v6344, 0.0
      %v6377 = vmax.f32 %v6345, 0.0
      %v6378 = vmax.f32 %v6346, 0.0
      %v6379 = vmax.f32 %v6347, 0.0
      %v6380 = vmax.f32 %v6348, 0.0
      %v6381 = vmax.f32 %v6349, 0.0
      %v6382 = vmax.f32 %v6350, 0.0
      %v6383 = vmax.f32 %v6351, 0.0
      %v6384 = vmax.f32 %v6352, 0.0
      %v6385 = vmax.f32 %v6353, 0.0
      %v6386 = vmax.f32 %v6354, 0.0
      %v6387 = vmax.f32 %v6355, 0.0
      %v6388 = vmax.f32 %v6356, 0.0
      %6389 = vst.msk [vmem:[%s494] sm:$0xff] %vm559, %v6357
      %6390 = vst.msk [vmem:[%s494 + $0x8] sm:$0xff] %vm559, %v6358
      %6391 = vst.msk [vmem:[%s494 + $0x10] sm:$0xff] %vm559, %v6359
      %6392 = vst.msk [vmem:[%s494 + $0x18] sm:$0xff] %vm559, %v6360
      %6393 = vst.msk [vmem:[%s494 + $0x20] sm:$0xff] %vm559, %v6361
      %6394 = vst.msk [vmem:[%s494 + $0x28] sm:$0xff] %vm559, %v6362
      %6395 = vst.msk [vmem:[%s494 + $0x30] sm:$0xff] %vm559, %v6363
      %6396 = vst.msk [vmem:[%s494 + $0x38] sm:$0xff] %vm559, %v6364
      %6397 = vst.msk [vmem:[%s494 + $0x40] sm:$0xff] %vm559, %v6365
      %6398 = vst.msk [vmem:[%s494 + $0x48] sm:$0xff] %vm559, %v6366
      %6399 = vst.msk [vmem:[%s494 + $0x50] sm:$0xff] %vm559, %v6367
      %6400 = vst.msk [vmem:[%s494 + $0x58] sm:$0xff] %vm559, %v6368
      %6401 = vst.msk [vmem:[%s494 + $0x60] sm:$0xff] %vm559, %v6369
      %6402 = vst.msk [vmem:[%s494 + $0x68] sm:$0xff] %vm559, %v6370
      %6403 = vst.msk [vmem:[%s494 + $0x70] sm:$0xff] %vm559, %v6371
      %6404 = vst.msk [vmem:[%s494 + $0x78] sm:$0xff] %vm559, %v6372
      %6405 = vst.msk [vmem:[%s494 + $0x80] sm:$0xff] %vm559, %v6373
      %6406 = vst.msk [vmem:[%s494 + $0x88] sm:$0xff] %vm559, %v6374
      %6407 = vst.msk [vmem:[%s494 + $0x90] sm:$0xff] %vm559, %v6375
      %6408 = vst.msk [vmem:[%s494 + $0x98] sm:$0xff] %vm559, %v6376
      %6409 = vst.msk [vmem:[%s494 + $0xa0] sm:$0xff] %vm559, %v6377
      %6410 = vst.msk [vmem:[%s494 + $0xa8] sm:$0xff] %vm559, %v6378
      %6411 = vst.msk [vmem:[%s494 + $0xb0] sm:$0xff] %vm559, %v6379
      %6412 = vst.msk [vmem:[%s494 + $0xb8] sm:$0xff] %vm559, %v6380
      %6413 = vst.msk [vmem:[%s494 + $0xc0] sm:$0xff] %vm559, %v6381
      %6414 = vst.msk [vmem:[%s494 + $0xc8] sm:$0xff] %vm559, %v6382
      %6415 = vst.msk [vmem:[%s494 + $0xd0] sm:$0xff] %vm559, %v6383
      %6416 = vst.msk [vmem:[%s494 + $0xd8] sm:$0xff] %vm559, %v6384
      %6417 = vst.msk [vmem:[%s494 + $0xe0] sm:$0xff] %vm559, %v6385
      %6418 = vst.msk [vmem:[%s494 + $0xe8] sm:$0xff] %vm559, %v6386
      %6419 = vst.msk [vmem:[%s494 + $0xf0] sm:$0xff] %vm559, %v6387
      %6420 = vst.msk [vmem:[%s494 + $0xf8] sm:$0xff] %vm559, %v6388
      %p6421 = scmp.lt.s32.totalorder %s26, 1
      %s6422 = scalar_select %p6421, %s26, 1
      %s6423 = smul.addr %s6422, 32
      %s6424 = smul.addr %s6423, 8
      %s6425 = scalar_lea.vmem %s15, %s6424
      // Predicated region
      $region81: #{tpu_custom_call.1} parent=79 // pred_check
        %p6426 = pneg %p364
      $region82: #{tpu_custom_call.1} parent=79 // pred_check_branch
        %6428 = sbr.rel (%p6426) target = $region84
      $region83: #{tpu_custom_call.1} parent=79 // pred_region
        _
      $region84: #{tpu_custom_call.1} parent=79 // pred_fallthru
        _
    $region80: #{tpu_custom_call.1} parent=5 // pred_fallthru
      _
    %p6429 = scmp.le.s32.totalorder 2, %s21
    // Predicated region
    $region85: #{tpu_custom_call.1} parent=5 // pred_check
      %p6430 = pneg %p6429
    $region86: #{tpu_custom_call.1} parent=5 // pred_check_branch
      %6432 = sbr.rel (%p6430) target = $region88
    $region87: #{tpu_custom_call.1} parent=5 // pred_region
      %s6433 = ssub.s32 %s21, 2
      // Predicated region
      $region89: #{tpu_custom_call.1} parent=87 // pred_check
        %p6434 = pneg %p370
      $region90: #{tpu_custom_call.1} parent=87 // pred_check_branch
        %6436 = sbr.rel (%p6434) target = $region92
      $region91: #{tpu_custom_call.1} parent=87 // pred_region
        %p6437 = scmp.lt.s32.totalorder %s27, 1
        %s6438 = scalar_select %p6437, %s27, 1
        %s6439 = smul.addr %s6438, 32
        %s6440 = smul.addr %s6439, 8
        %s6441 = scalar_lea.vmem %s15, %s6440
      $region92: #{tpu_custom_call.1} parent=87 // pred_fallthru
        _
    $region88: #{tpu_custom_call.1} parent=5 // pred_fallthru
      _
  $region6: #{tpu_custom_call.1} parent=0 // loop_footer
    %s25 = sadd.s32 1, %s21
  $region7: #{tpu_custom_call.1} parent=0 // loop_footer_branch
    %20 = sbr.rel target = $region3
  $region8: #{tpu_custom_call.1} parent=0 // loop_exit
    _

</llo_original>
